<compile_context>
chip_gen: v6e
topology: v6e:2x2x1
jax: 0.10.0
libtpu: 0.0.40
codegen_flags: <defaults>
</compile_context>

<pallas_src>
import functools
import math

import jax
import jax.numpy as jnp
from jax.experimental import pallas as pl
from jax.experimental.pallas import tpu as pltpu


def _layernorm(x, gamma, beta, eps=1e-5):
    mu = jnp.mean(x, axis=-1, keepdims=True)
    var = jnp.mean((x - mu) ** 2, axis=-1, keepdims=True)
    return (x - mu) * jax.lax.rsqrt(var + eps) * gamma + beta


def sdf_transformer_kernel(
    x_ref,
    w_emb_ref, b_emb_ref,
    wqkv_ref, bqkv_ref, wo_ref, bo_ref,
    g1_ref, be1_ref, w1_ref, b1_ref, w2_ref, b2_ref, g2_ref, be2_ref,
    wh1_ref, bh1_ref, wh2_ref, bh2_ref,
    o_ref,
    *, num_layers, nhead, batch_block, seq_len,
):
    M = x_ref.shape[0]                      # = batch_block * seq_len rows
    E = w_emb_ref.shape[1]
    hd = E // nhead
    Bblk, S = batch_block, seq_len

    # Embedding: one (M, 3*Din) @ (3*Din, E) matmul on the flattened row slab.
    h = (jnp.dot(x_ref[...], w_emb_ref[...], preferred_element_type=jnp.float32)
         + b_emb_ref[...])

    for l in range(num_layers):
        # --- self attention (post-norm encoder layer, eval mode) ---
        # Single fused QKV projection: N = 3E output lanes, one MXU push.
        # (1/sqrt(hd) is already folded into the Q columns of wqkv/bqkv.)
        qkv = (jnp.dot(h, wqkv_ref[l], preferred_element_type=jnp.float32)
               + bqkv_ref[l])                       # (M, 3E)
        qkv3 = qkv.reshape(Bblk, S, 3 * E)          # sublane regroup only

        heads = []
        for hh in range(nhead):
            qh = qkv3[:, :, 0 * E + hh * hd: 0 * E + (hh + 1) * hd]
            kh = qkv3[:, :, 1 * E + hh * hd: 1 * E + (hh + 1) * hd]
            vh = qkv3[:, :, 2 * E + hh * hd: 2 * E + (hh + 1) * hd]
            # Attention core batched over the batch block (softmax over keys).
            s = jnp.einsum('bqd,bkd->bqk', qh, kh,
                           preferred_element_type=jnp.float32)
            s = s - jnp.max(s, axis=-1, keepdims=True)
            p = jnp.exp(s)
            p = p * pl.reciprocal(jnp.sum(p, axis=-1, keepdims=True),
                                  approx=False)
            heads.append(jnp.einsum('bqk,bkd->bqd', p, vh,
                                    preferred_element_type=jnp.float32))

        # Fused output projection: concat heads on lanes, single K=E matmul.
        ctx = jnp.concatenate(heads, axis=-1).reshape(M, E)
        attn = (jnp.dot(ctx, wo_ref[l], preferred_element_type=jnp.float32)
                + bo_ref[l])
        h = _layernorm(h + attn, g1_ref[l], be1_ref[l])

        # --- feed forward ---
        ff = jnp.maximum(
            jnp.dot(h, w1_ref[l], preferred_element_type=jnp.float32) + b1_ref[l],
            0.0)
        ff = jnp.dot(ff, w2_ref[l], preferred_element_type=jnp.float32) + b2_ref[l]
        h = _layernorm(h + ff, g2_ref[l], be2_ref[l])

    # --- output head: Linear -> ReLU -> Linear (padded to 128 output lanes) ---
    y = jnp.maximum(
        jnp.dot(h, wh1_ref[...], preferred_element_type=jnp.float32) + bh1_ref[...],
        0.0)
    y = jnp.dot(y, wh2_ref[...], preferred_element_type=jnp.float32) + bh2_ref[...]
    o_ref[...] = y                                   # (M, 128), unmasked vst


def forward_pallas(x, p, *, num_layer, nhead, output_dim, batch_block=None):
    B, S, Din = x.shape
    L = num_layer
    E = p["w_emb"].shape[1]
    F = p["w1"].shape[2]
    hd = E // nhead
    scale = 1.0 / math.sqrt(hd)

    # Concatenate features once on the host side -> single embedding matmul.
    xf = jnp.concatenate([x, jnp.sin(x), jnp.cos(x)], axis=-1)   # (B, S, 3*Din)
    Dc = xf.shape[-1]

    # Batch blocking. Default: one block (grid=(1,)) -- v5e/v6e are single-TC
    # so a split is pure serial-grid overhead and halves matmul M. Only split
    # 2-way when each block still keeps >= 64 rows (useful on v7x's 2 TCs).
    if batch_block is None:
        rows = B * S
        batch_block = B // 2 if (rows >= 128 and B % 2 == 0) else B
    nblk = pl.cdiv(B, batch_block)
    Bpad = nblk * batch_block
    if Bpad != B:
        xf = jnp.pad(xf, ((0, Bpad - B), (0, 0), (0, 0)))

    # Flatten rows host-side (free layout plumbing; avoids an in-kernel
    # relayout on the sub-tile Dc=9 last dim).
    xf2 = xf.reshape(Bpad * S, Dc)

    # Fused QKV weights with the attention scale folded into the Q columns.
    w_qkv = jnp.concatenate([p["wq"] * scale, p["wk"], p["wv"]], axis=-1)  # (L,E,3E)
    b_qkv = jnp.concatenate([p["bq"] * scale, p["bk"], p["bv"]], axis=-1)  # (L,1,3E)

    # Lane-dense output head: pad the final projection to 128 output lanes.
    OUT_PAD = 128
    wh2p = jnp.zeros((F, OUT_PAD), jnp.float32).at[:, :output_dim].set(p["wh2"])
    bh2p = jnp.zeros((1, OUT_PAD), jnp.float32).at[:, :output_dim].set(p["bh2"])

    weights = [
        p["w_emb"], p["b_emb"],
        w_qkv, b_qkv, p["wo"], p["bo"],
        p["g1"], p["be1"], p["w1"], p["b1"], p["w2"], p["b2"], p["g2"], p["be2"],
        p["wh1"], p["bh1"], wh2p, bh2p,
    ]

    def wspec(a):
        nd = a.ndim
        return pl.BlockSpec(a.shape, lambda b, nd=nd: (0,) * nd)

    Mblk = batch_block * S
    kern = functools.partial(sdf_transformer_kernel, num_layers=L, nhead=nhead,
                             batch_block=batch_block, seq_len=S)

    out = pl.pallas_call(
        kern,
        grid=(nblk,),
        in_specs=[pl.BlockSpec((Mblk, Dc), lambda b: (b, 0))]
        + [wspec(a) for a in weights],
        out_specs=pl.BlockSpec((Mblk, OUT_PAD), lambda b: (b, 0)),
        out_shape=jax.ShapeDtypeStruct((Bpad * S, OUT_PAD), jnp.float32),
        compiler_params=pltpu.CompilerParams(dimension_semantics=("parallel",)),
    )(xf2, *weights)

    out = out.reshape(Bpad, S, OUT_PAD)
    return out[:B, :, :output_dim]


def forward_reference(x, p, *, num_layer, nhead):
    """Pure-JAX reference mirroring PyTorch eval-mode semantics."""
    def single(xb):  # (S, Din)
        xf = jnp.concatenate([xb, jnp.sin(xb), jnp.cos(xb)], axis=-1)
        h = xf @ p["w_emb"] + p["b_emb"][0]
        E = h.shape[-1]
        hd = E // nhead
        scale = 1.0 / math.sqrt(hd)
        for l in range(num_layer):
            q = h @ p["wq"][l] + p["bq"][l, 0]
            k = h @ p["wk"][l] + p["bk"][l, 0]
            v = h @ p["wv"][l] + p["bv"][l, 0]
            heads = []
            for hh in range(nhead):
                qh = q[:, hh * hd:(hh + 1) * hd] * scale
                kh = k[:, hh * hd:(hh + 1) * hd]
                vh = v[:, hh * hd:(hh + 1) * hd]
                s = jax.nn.softmax(qh @ kh.T, axis=-1)
                heads.append(s @ vh)
            attn = jnp.concatenate(heads, -1) @ p["wo"][l] + p["bo"][l, 0]
            h = _layernorm(h + attn, p["g1"][l, 0], p["be1"][l, 0])
            ff = jax.nn.relu(h @ p["w1"][l] + p["b1"][l, 0]) @ p["w2"][l] + p["b2"][l, 0]
            h = _layernorm(h + ff, p["g2"][l, 0], p["be2"][l, 0])
        y = jax.nn.relu(h @ p["wh1"] + p["bh1"][0]) @ p["wh2"] + p["bh2"][0]
        return y
    return jax.vmap(single)(x)


def init_params(key, *, input_dim, output_dim, num_layer, embed_dim, nhead, ff_dim):
    """Deterministic synthetic parameters (PyTorch-like uniform init).
    Weights are stored pre-transposed: (in_features, out_features)."""
    ks = iter(jax.random.split(key, 64))

    def lin(kw, kb, fan_in, fan_out):
        bound = 1.0 / math.sqrt(fan_in)
        w = jax.random.uniform(kw, (fan_in, fan_out), jnp.float32, -bound, bound)
        b = jax.random.uniform(kb, (1, fan_out), jnp.float32, -bound, bound)
        return w, b

    p = {}
    # linear_embedding: Linear(3*input_dim, embed_dim)
    p["w_emb"], p["b_emb"] = lin(next(ks), next(ks), 3 * input_dim, embed_dim)

    def stack_lin(fan_in, fan_out):
        ws, bs = [], []
        for _ in range(num_layer):
            w, b = lin(next(ks), next(ks), fan_in, fan_out)
            ws.append(w)
            bs.append(b)
        return jnp.stack(ws), jnp.stack(bs)

    # per-layer: qkv in_proj (split), out_proj, layernorms, ffn
    p["wq"], p["bq"] = stack_lin(embed_dim, embed_dim)
    p["wk"], p["bk"] = stack_lin(embed_dim, embed_dim)
    p["wv"], p["bv"] = stack_lin(embed_dim, embed_dim)
    p["wo"], p["bo"] = stack_lin(embed_dim, embed_dim)
    p["w1"], p["b1"] = stack_lin(embed_dim, ff_dim)
    p["w2"], p["b2"] = stack_lin(ff_dim, embed_dim)
    p["g1"] = jnp.ones((num_layer, 1, embed_dim), jnp.float32)
    p["be1"] = jnp.zeros((num_layer, 1, embed_dim), jnp.float32)
    p["g2"] = jnp.ones((num_layer, 1, embed_dim), jnp.float32)
    p["be2"] = jnp.zeros((num_layer, 1, embed_dim), jnp.float32)

    # feedforward head: Linear(embed, ff) -> ReLU -> Linear(ff, out)
    p["wh1"], p["bh1"] = lin(next(ks), next(ks), embed_dim, ff_dim)
    p["wh2"], p["bh2"] = lin(next(ks), next(ks), ff_dim, output_dim)
    return p


if __name__ == "__main__":
    # Small config consistent with the module's constructor.
    input_dim, output_dim = 3, 1
    num_layer, embed_dim, nhead, ff_dim = 2, 32, 4, 64
    B, S = 4, 8

    key = jax.random.PRNGKey(0)
    kx, kp = jax.random.split(key)
    x = jax.random.normal(kx, (B, S, input_dim), jnp.float32)
    params = init_params(kp, input_dim=input_dim, output_dim=output_dim,
                         num_layer=num_layer, embed_dim=embed_dim,
                         nhead=nhead, ff_dim=ff_dim)

    out = forward_pallas(x, params, num_layer=num_layer, nhead=nhead,
                         output_dim=output_dim)
    out = jax.block_until_ready(out)

    ref = jax.block_until_ready(
        forward_reference(x, params, num_layer=num_layer, nhead=nhead))

    assert out.shape == (B, S, output_dim)
    assert jnp.allclose(out, ref, rtol=1e-4, atol=1e-4), (
        f"mismatch: max abs err {jnp.max(jnp.abs(out - ref))}")
    print("KERNEL_OK")
</pallas_src>

<mosaic_0001>
module attributes {stable_mosaic.version = 11 : i64} {
  func.func @sdf_transformer_kernel(%arg0: i32, %arg1: memref<32x9xf32, #tpu.memory_space<vmem>>, %arg2: memref<9x32xf32, #tpu.memory_space<vmem>>, %arg3: memref<1x32xf32, #tpu.memory_space<vmem>>, %arg4: memref<2x32x96xf32, #tpu.memory_space<vmem>>, %arg5: memref<2x1x96xf32, #tpu.memory_space<vmem>>, %arg6: memref<2x32x32xf32, #tpu.memory_space<vmem>>, %arg7: memref<2x1x32xf32, #tpu.memory_space<vmem>>, %arg8: memref<2x1x32xf32, #tpu.memory_space<vmem>>, %arg9: memref<2x1x32xf32, #tpu.memory_space<vmem>>, %arg10: memref<2x32x64xf32, #tpu.memory_space<vmem>>, %arg11: memref<2x1x64xf32, #tpu.memory_space<vmem>>, %arg12: memref<2x64x32xf32, #tpu.memory_space<vmem>>, %arg13: memref<2x1x32xf32, #tpu.memory_space<vmem>>, %arg14: memref<2x1x32xf32, #tpu.memory_space<vmem>>, %arg15: memref<2x1x32xf32, #tpu.memory_space<vmem>>, %arg16: memref<32x64xf32, #tpu.memory_space<vmem>>, %arg17: memref<1x64xf32, #tpu.memory_space<vmem>>, %arg18: memref<64x128xf32, #tpu.memory_space<vmem>>, %arg19: memref<1x128xf32, #tpu.memory_space<vmem>>, %arg20: memref<32x128xf32, #tpu.memory_space<vmem>>) attributes {dimension_semantics = [#tpu.dimension_semantics<parallel>], iteration_bounds = array<i64: 1>, scalar_prefetch = 0 : i64, scratch_operands = 0 : i64, tpu.core_type = #tpu.core_type<tc>, window_params = [{transform_indices = @transform_0, window_bounds = array<i64: 32, 9>}, {pipeline_mode = #tpu.pipeline_mode<synchronous>, transform_indices = @transform_1, window_bounds = array<i64: 9, 32>}, {pipeline_mode = #tpu.pipeline_mode<synchronous>, transform_indices = @transform_2, window_bounds = array<i64: 1, 32>}, {pipeline_mode = #tpu.pipeline_mode<synchronous>, transform_indices = @transform_3, window_bounds = array<i64: 2, 32, 96>}, {pipeline_mode = #tpu.pipeline_mode<synchronous>, transform_indices = @transform_4, window_bounds = array<i64: 2, 1, 96>}, {pipeline_mode = #tpu.pipeline_mode<synchronous>, transform_indices = @transform_5, window_bounds = array<i64: 2, 32, 32>}, {pipeline_mode = #tpu.pipeline_mode<synchronous>, transform_indices = @transform_6, window_bounds = array<i64: 2, 1, 32>}, {pipeline_mode = #tpu.pipeline_mode<synchronous>, transform_indices = @transform_7, window_bounds = array<i64: 2, 1, 32>}, {pipeline_mode = #tpu.pipeline_mode<synchronous>, transform_indices = @transform_8, window_bounds = array<i64: 2, 1, 32>}, {pipeline_mode = #tpu.pipeline_mode<synchronous>, transform_indices = @transform_9, window_bounds = array<i64: 2, 32, 64>}, {pipeline_mode = #tpu.pipeline_mode<synchronous>, transform_indices = @transform_10, window_bounds = array<i64: 2, 1, 64>}, {pipeline_mode = #tpu.pipeline_mode<synchronous>, transform_indices = @transform_11, window_bounds = array<i64: 2, 64, 32>}, {pipeline_mode = #tpu.pipeline_mode<synchronous>, transform_indices = @transform_12, window_bounds = array<i64: 2, 1, 32>}, {pipeline_mode = #tpu.pipeline_mode<synchronous>, transform_indices = @transform_13, window_bounds = array<i64: 2, 1, 32>}, {pipeline_mode = #tpu.pipeline_mode<synchronous>, transform_indices = @transform_14, window_bounds = array<i64: 2, 1, 32>}, {pipeline_mode = #tpu.pipeline_mode<synchronous>, transform_indices = @transform_15, window_bounds = array<i64: 32, 64>}, {pipeline_mode = #tpu.pipeline_mode<synchronous>, transform_indices = @transform_16, window_bounds = array<i64: 1, 64>}, {pipeline_mode = #tpu.pipeline_mode<synchronous>, transform_indices = @transform_17, window_bounds = array<i64: 64, 128>}, {pipeline_mode = #tpu.pipeline_mode<synchronous>, transform_indices = @transform_18, window_bounds = array<i64: 1, 128>}, {transform_indices = @transform_19, window_bounds = array<i64: 32, 128>}]} {
    %c0 = arith.constant 0 : index
    %c0_0 = arith.constant 0 : index
    %0 = vector.load %arg1[%c0, %c0_0] : memref<32x9xf32, #tpu.memory_space<vmem>>, vector<32x9xf32>
    %c0_1 = arith.constant 0 : index
    %c0_2 = arith.constant 0 : index
    %1 = vector.load %arg2[%c0_1, %c0_2] : memref<9x32xf32, #tpu.memory_space<vmem>>, vector<9x32xf32>
    %cst = arith.constant dense<0.000000e+00> : vector<32x32xf32>
    %2 = tpu.matmul %0, %1, %cst {dimension_numbers = #tpu.dot_dimension_numbers<[1], [0], [0], [1], [0, 0, 1, 1], [], []>} : vector<32x9xf32>, vector<9x32xf32>, vector<32x32xf32> -> vector<32x32xf32>
    %c0_3 = arith.constant 0 : index
    %c0_4 = arith.constant 0 : index
    %3 = vector.load %arg3[%c0_3, %c0_4] : memref<1x32xf32, #tpu.memory_space<vmem>>, vector<1x32xf32>
    %4 = vector.broadcast %3 : vector<1x32xf32> to vector<32x32xf32>
    %5 = arith.addf %2, %4 : vector<32x32xf32>
    %c0_5 = arith.constant 0 : index
    %c0_6 = arith.constant 0 : index
    %c0_7 = arith.constant 0 : index
    %6 = vector.load %arg4[%c0_5, %c0_6, %c0_7] : memref<2x32x96xf32, #tpu.memory_space<vmem>>, vector<1x32x96xf32>
    %7 = vector.shape_cast %6 : vector<1x32x96xf32> to vector<32x96xf32>
    %cst_8 = arith.constant dense<0.000000e+00> : vector<32x96xf32>
    %8 = tpu.matmul %5, %7, %cst_8 {dimension_numbers = #tpu.dot_dimension_numbers<[1], [0], [0], [1], [0, 0, 1, 1], [], []>} : vector<32x32xf32>, vector<32x96xf32>, vector<32x96xf32> -> vector<32x96xf32>
    %c0_9 = arith.constant 0 : index
    %c0_10 = arith.constant 0 : index
    %c0_11 = arith.constant 0 : index
    %9 = vector.load %arg5[%c0_9, %c0_10, %c0_11] : memref<2x1x96xf32, #tpu.memory_space<vmem>>, vector<1x1x96xf32>
    %10 = vector.shape_cast %9 : vector<1x1x96xf32> to vector<1x96xf32>
    %11 = vector.broadcast %10 : vector<1x96xf32> to vector<32x96xf32>
    %12 = arith.addf %8, %11 : vector<32x96xf32>
    %13 = vector.shape_cast %12 : vector<32x96xf32> to vector<4x8x96xf32>
    %14 = vector.extract_strided_slice %13 {offsets = [0, 0, 0], sizes = [4, 8, 8], strides = [1, 1, 1]} : vector<4x8x96xf32> to vector<4x8x8xf32>
    %15 = vector.extract_strided_slice %13 {offsets = [0, 0, 32], sizes = [4, 8, 8], strides = [1, 1, 1]} : vector<4x8x96xf32> to vector<4x8x8xf32>
    %16 = vector.extract_strided_slice %13 {offsets = [0, 0, 64], sizes = [4, 8, 8], strides = [1, 1, 1]} : vector<4x8x96xf32> to vector<4x8x8xf32>
    "tpu.trace_start"() <{level = 10 : i32, message = "bqd,bkd->bqk"}> : () -> ()
    %cst_12 = arith.constant dense<0.000000e+00> : vector<4x8x8xf32>
    %17 = tpu.matmul %14, %15, %cst_12 {dimension_numbers = #tpu.dot_dimension_numbers<[2], [2], [1], [1], [0, 0, 0, 1, 1, 1], [0], [0]>} : vector<4x8x8xf32>, vector<4x8x8xf32>, vector<4x8x8xf32> -> vector<4x8x8xf32>
    "tpu.trace_stop"() : () -> ()
    %cst_13 = arith.constant dense<0xFF800000> : vector<4x8xf32>
    %18 = vector.multi_reduction <maximumf>, %17, %cst_13 [2] : vector<4x8x8xf32> to vector<4x8xf32>
    %19 = vector.shape_cast %18 : vector<4x8xf32> to vector<4x8x1xf32>
    %20 = vector.broadcast %19 : vector<4x8x1xf32> to vector<4x8x8xf32>
    %21 = arith.subf %17, %20 : vector<4x8x8xf32>
    %22 = math.exp %21 : vector<4x8x8xf32>
    %cst_14 = arith.constant dense<0.000000e+00> : vector<4x8xf32>
    %23 = vector.multi_reduction <add>, %22, %cst_14 [2] : vector<4x8x8xf32> to vector<4x8xf32>
    %24 = vector.shape_cast %23 : vector<4x8xf32> to vector<4x8x1xf32>
    %25 = tpu.reciprocal %24 : vector<4x8x1xf32> -> vector<4x8x1xf32>
    %26 = vector.broadcast %25 : vector<4x8x1xf32> to vector<4x8x8xf32>
    %27 = arith.mulf %22, %26 : vector<4x8x8xf32>
    "tpu.trace_start"() <{level = 10 : i32, message = "bqk,bkd->bqd"}> : () -> ()
    %cst_15 = arith.constant dense<0.000000e+00> : vector<4x8x8xf32>
    %28 = tpu.matmul %27, %16, %cst_15 {dimension_numbers = #tpu.dot_dimension_numbers<[2], [1], [1], [2], [0, 0, 0, 1, 1, 2], [0], [0]>} : vector<4x8x8xf32>, vector<4x8x8xf32>, vector<4x8x8xf32> -> vector<4x8x8xf32>
    "tpu.trace_stop"() : () -> ()
    %29 = vector.extract_strided_slice %13 {offsets = [0, 0, 8], sizes = [4, 8, 8], strides = [1, 1, 1]} : vector<4x8x96xf32> to vector<4x8x8xf32>
    %30 = vector.extract_strided_slice %13 {offsets = [0, 0, 40], sizes = [4, 8, 8], strides = [1, 1, 1]} : vector<4x8x96xf32> to vector<4x8x8xf32>
    %31 = vector.extract_strided_slice %13 {offsets = [0, 0, 72], sizes = [4, 8, 8], strides = [1, 1, 1]} : vector<4x8x96xf32> to vector<4x8x8xf32>
    "tpu.trace_start"() <{level = 10 : i32, message = "bqd,bkd->bqk"}> : () -> ()
    %cst_16 = arith.constant dense<0.000000e+00> : vector<4x8x8xf32>
    %32 = tpu.matmul %29, %30, %cst_16 {dimension_numbers = #tpu.dot_dimension_numbers<[2], [2], [1], [1], [0, 0, 0, 1, 1, 1], [0], [0]>} : vector<4x8x8xf32>, vector<4x8x8xf32>, vector<4x8x8xf32> -> vector<4x8x8xf32>
    "tpu.trace_stop"() : () -> ()
    %cst_17 = arith.constant dense<0xFF800000> : vector<4x8xf32>
    %33 = vector.multi_reduction <maximumf>, %32, %cst_17 [2] : vector<4x8x8xf32> to vector<4x8xf32>
    %34 = vector.shape_cast %33 : vector<4x8xf32> to vector<4x8x1xf32>
    %35 = vector.broadcast %34 : vector<4x8x1xf32> to vector<4x8x8xf32>
    %36 = arith.subf %32, %35 : vector<4x8x8xf32>
    %37 = math.exp %36 : vector<4x8x8xf32>
    %cst_18 = arith.constant dense<0.000000e+00> : vector<4x8xf32>
    %38 = vector.multi_reduction <add>, %37, %cst_18 [2] : vector<4x8x8xf32> to vector<4x8xf32>
    %39 = vector.shape_cast %38 : vector<4x8xf32> to vector<4x8x1xf32>
    %40 = tpu.reciprocal %39 : vector<4x8x1xf32> -> vector<4x8x1xf32>
    %41 = vector.broadcast %40 : vector<4x8x1xf32> to vector<4x8x8xf32>
    %42 = arith.mulf %37, %41 : vector<4x8x8xf32>
    "tpu.trace_start"() <{level = 10 : i32, message = "bqk,bkd->bqd"}> : () -> ()
    %cst_19 = arith.constant dense<0.000000e+00> : vector<4x8x8xf32>
    %43 = tpu.matmul %42, %31, %cst_19 {dimension_numbers = #tpu.dot_dimension_numbers<[2], [1], [1], [2], [0, 0, 0, 1, 1, 2], [0], [0]>} : vector<4x8x8xf32>, vector<4x8x8xf32>, vector<4x8x8xf32> -> vector<4x8x8xf32>
    "tpu.trace_stop"() : () -> ()
    %44 = vector.extract_strided_slice %13 {offsets = [0, 0, 16], sizes = [4, 8, 8], strides = [1, 1, 1]} : vector<4x8x96xf32> to vector<4x8x8xf32>
    %45 = vector.extract_strided_slice %13 {offsets = [0, 0, 48], sizes = [4, 8, 8], strides = [1, 1, 1]} : vector<4x8x96xf32> to vector<4x8x8xf32>
    %46 = vector.extract_strided_slice %13 {offsets = [0, 0, 80], sizes = [4, 8, 8], strides = [1, 1, 1]} : vector<4x8x96xf32> to vector<4x8x8xf32>
    "tpu.trace_start"() <{level = 10 : i32, message = "bqd,bkd->bqk"}> : () -> ()
    %cst_20 = arith.constant dense<0.000000e+00> : vector<4x8x8xf32>
    %47 = tpu.matmul %44, %45, %cst_20 {dimension_numbers = #tpu.dot_dimension_numbers<[2], [2], [1], [1], [0, 0, 0, 1, 1, 1], [0], [0]>} : vector<4x8x8xf32>, vector<4x8x8xf32>, vector<4x8x8xf32> -> vector<4x8x8xf32>
    "tpu.trace_stop"() : () -> ()
    %cst_21 = arith.constant dense<0xFF800000> : vector<4x8xf32>
    %48 = vector.multi_reduction <maximumf>, %47, %cst_21 [2] : vector<4x8x8xf32> to vector<4x8xf32>
    %49 = vector.shape_cast %48 : vector<4x8xf32> to vector<4x8x1xf32>
    %50 = vector.broadcast %49 : vector<4x8x1xf32> to vector<4x8x8xf32>
    %51 = arith.subf %47, %50 : vector<4x8x8xf32>
    %52 = math.exp %51 : vector<4x8x8xf32>
    %cst_22 = arith.constant dense<0.000000e+00> : vector<4x8xf32>
    %53 = vector.multi_reduction <add>, %52, %cst_22 [2] : vector<4x8x8xf32> to vector<4x8xf32>
    %54 = vector.shape_cast %53 : vector<4x8xf32> to vector<4x8x1xf32>
    %55 = tpu.reciprocal %54 : vector<4x8x1xf32> -> vector<4x8x1xf32>
    %56 = vector.broadcast %55 : vector<4x8x1xf32> to vector<4x8x8xf32>
    %57 = arith.mulf %52, %56 : vector<4x8x8xf32>
    "tpu.trace_start"() <{level = 10 : i32, message = "bqk,bkd->bqd"}> : () -> ()
    %cst_23 = arith.constant dense<0.000000e+00> : vector<4x8x8xf32>
    %58 = tpu.matmul %57, %46, %cst_23 {dimension_numbers = #tpu.dot_dimension_numbers<[2], [1], [1], [2], [0, 0, 0, 1, 1, 2], [0], [0]>} : vector<4x8x8xf32>, vector<4x8x8xf32>, vector<4x8x8xf32> -> vector<4x8x8xf32>
    "tpu.trace_stop"() : () -> ()
    %59 = vector.extract_strided_slice %13 {offsets = [0, 0, 24], sizes = [4, 8, 8], strides = [1, 1, 1]} : vector<4x8x96xf32> to vector<4x8x8xf32>
    %60 = vector.extract_strided_slice %13 {offsets = [0, 0, 56], sizes = [4, 8, 8], strides = [1, 1, 1]} : vector<4x8x96xf32> to vector<4x8x8xf32>
    %61 = vector.extract_strided_slice %13 {offsets = [0, 0, 88], sizes = [4, 8, 8], strides = [1, 1, 1]} : vector<4x8x96xf32> to vector<4x8x8xf32>
    "tpu.trace_start"() <{level = 10 : i32, message = "bqd,bkd->bqk"}> : () -> ()
    %cst_24 = arith.constant dense<0.000000e+00> : vector<4x8x8xf32>
    %62 = tpu.matmul %59, %60, %cst_24 {dimension_numbers = #tpu.dot_dimension_numbers<[2], [2], [1], [1], [0, 0, 0, 1, 1, 1], [0], [0]>} : vector<4x8x8xf32>, vector<4x8x8xf32>, vector<4x8x8xf32> -> vector<4x8x8xf32>
    "tpu.trace_stop"() : () -> ()
    %cst_25 = arith.constant dense<0xFF800000> : vector<4x8xf32>
    %63 = vector.multi_reduction <maximumf>, %62, %cst_25 [2] : vector<4x8x8xf32> to vector<4x8xf32>
    %64 = vector.shape_cast %63 : vector<4x8xf32> to vector<4x8x1xf32>
    %65 = vector.broadcast %64 : vector<4x8x1xf32> to vector<4x8x8xf32>
    %66 = arith.subf %62, %65 : vector<4x8x8xf32>
    %67 = math.exp %66 : vector<4x8x8xf32>
    %cst_26 = arith.constant dense<0.000000e+00> : vector<4x8xf32>
    %68 = vector.multi_reduction <add>, %67, %cst_26 [2] : vector<4x8x8xf32> to vector<4x8xf32>
    %69 = vector.shape_cast %68 : vector<4x8xf32> to vector<4x8x1xf32>
    %70 = tpu.reciprocal %69 : vector<4x8x1xf32> -> vector<4x8x1xf32>
    %71 = vector.broadcast %70 : vector<4x8x1xf32> to vector<4x8x8xf32>
    %72 = arith.mulf %67, %71 : vector<4x8x8xf32>
    "tpu.trace_start"() <{level = 10 : i32, message = "bqk,bkd->bqd"}> : () -> ()
    %cst_27 = arith.constant dense<0.000000e+00> : vector<4x8x8xf32>
    %73 = tpu.matmul %72, %61, %cst_27 {dimension_numbers = #tpu.dot_dimension_numbers<[2], [1], [1], [2], [0, 0, 0, 1, 1, 2], [0], [0]>} : vector<4x8x8xf32>, vector<4x8x8xf32>, vector<4x8x8xf32> -> vector<4x8x8xf32>
    "tpu.trace_stop"() : () -> ()
    %74 = tpu.concatenate %28, %43, %58, %73 in 2 : vector<4x8x8xf32>, vector<4x8x8xf32>, vector<4x8x8xf32>, vector<4x8x8xf32> -> vector<4x8x32xf32>
    %75 = vector.shape_cast %74 : vector<4x8x32xf32> to vector<32x32xf32>
    %c0_28 = arith.constant 0 : index
    %c0_29 = arith.constant 0 : index
    %c0_30 = arith.constant 0 : index
    %76 = vector.load %arg6[%c0_28, %c0_29, %c0_30] : memref<2x32x32xf32, #tpu.memory_space<vmem>>, vector<1x32x32xf32>
    %77 = vector.shape_cast %76 : vector<1x32x32xf32> to vector<32x32xf32>
    %cst_31 = arith.constant dense<0.000000e+00> : vector<32x32xf32>
    %78 = tpu.matmul %75, %77, %cst_31 {dimension_numbers = #tpu.dot_dimension_numbers<[1], [0], [0], [1], [0, 0, 1, 1], [], []>} : vector<32x32xf32>, vector<32x32xf32>, vector<32x32xf32> -> vector<32x32xf32>
    %c0_32 = arith.constant 0 : index
    %c0_33 = arith.constant 0 : index
    %c0_34 = arith.constant 0 : index
    %79 = vector.load %arg7[%c0_32, %c0_33, %c0_34] : memref<2x1x32xf32, #tpu.memory_space<vmem>>, vector<1x1x32xf32>
    %80 = vector.shape_cast %79 : vector<1x1x32xf32> to vector<1x32xf32>
    %81 = vector.broadcast %80 : vector<1x32xf32> to vector<32x32xf32>
    %82 = arith.addf %78, %81 : vector<32x32xf32>
    %83 = arith.addf %5, %82 : vector<32x32xf32>
    %c0_35 = arith.constant 0 : index
    %c0_36 = arith.constant 0 : index
    %c0_37 = arith.constant 0 : index
    %84 = vector.load %arg8[%c0_35, %c0_36, %c0_37] : memref<2x1x32xf32, #tpu.memory_space<vmem>>, vector<1x1x32xf32>
    %85 = vector.shape_cast %84 : vector<1x1x32xf32> to vector<1x32xf32>
    %c0_38 = arith.constant 0 : index
    %c0_39 = arith.constant 0 : index
    %c0_40 = arith.constant 0 : index
    %86 = vector.load %arg9[%c0_38, %c0_39, %c0_40] : memref<2x1x32xf32, #tpu.memory_space<vmem>>, vector<1x1x32xf32>
    %87 = vector.shape_cast %86 : vector<1x1x32xf32> to vector<1x32xf32>
    %cst_41 = arith.constant dense<0.000000e+00> : vector<32xf32>
    %88 = vector.multi_reduction <add>, %83, %cst_41 [1] : vector<32x32xf32> to vector<32xf32>
    %89 = vector.shape_cast %88 : vector<32xf32> to vector<32x1xf32>
    %cst_42 = arith.constant 3.200000e+01 : f32
    %90 = vector.broadcast %cst_42 : f32 to vector<32x1xf32>
    %91 = arith.divf %89, %90 : vector<32x1xf32>
    %92 = vector.broadcast %91 : vector<32x1xf32> to vector<32x32xf32>
    %93 = arith.subf %83, %92 : vector<32x32xf32>
    %94 = arith.mulf %93, %93 : vector<32x32xf32>
    %cst_43 = arith.constant dense<0.000000e+00> : vector<32xf32>
    %95 = vector.multi_reduction <add>, %94, %cst_43 [1] : vector<32x32xf32> to vector<32xf32>
    %96 = vector.shape_cast %95 : vector<32xf32> to vector<32x1xf32>
    %cst_44 = arith.constant 3.200000e+01 : f32
    %97 = vector.broadcast %cst_44 : f32 to vector<32x1xf32>
    %98 = arith.divf %96, %97 : vector<32x1xf32>
    %99 = vector.broadcast %91 : vector<32x1xf32> to vector<32x32xf32>
    %100 = arith.subf %83, %99 : vector<32x32xf32>
    %cst_45 = arith.constant 9.99999974E-6 : f32
    %101 = vector.broadcast %cst_45 : f32 to vector<32x1xf32>
    %102 = arith.addf %98, %101 : vector<32x1xf32>
    %103 = math.rsqrt %102 : vector<32x1xf32>
    %104 = vector.broadcast %103 : vector<32x1xf32> to vector<32x32xf32>
    %105 = arith.mulf %100, %104 : vector<32x32xf32>
    %106 = vector.broadcast %85 : vector<1x32xf32> to vector<32x32xf32>
    %107 = arith.mulf %105, %106 : vector<32x32xf32>
    %108 = vector.broadcast %87 : vector<1x32xf32> to vector<32x32xf32>
    %109 = arith.addf %107, %108 : vector<32x32xf32>
    %c0_46 = arith.constant 0 : index
    %c0_47 = arith.constant 0 : index
    %c0_48 = arith.constant 0 : index
    %110 = vector.load %arg10[%c0_46, %c0_47, %c0_48] : memref<2x32x64xf32, #tpu.memory_space<vmem>>, vector<1x32x64xf32>
    %111 = vector.shape_cast %110 : vector<1x32x64xf32> to vector<32x64xf32>
    %cst_49 = arith.constant dense<0.000000e+00> : vector<32x64xf32>
    %112 = tpu.matmul %109, %111, %cst_49 {dimension_numbers = #tpu.dot_dimension_numbers<[1], [0], [0], [1], [0, 0, 1, 1], [], []>} : vector<32x32xf32>, vector<32x64xf32>, vector<32x64xf32> -> vector<32x64xf32>
    %c0_50 = arith.constant 0 : index
    %c0_51 = arith.constant 0 : index
    %c0_52 = arith.constant 0 : index
    %113 = vector.load %arg11[%c0_50, %c0_51, %c0_52] : memref<2x1x64xf32, #tpu.memory_space<vmem>>, vector<1x1x64xf32>
    %114 = vector.shape_cast %113 : vector<1x1x64xf32> to vector<1x64xf32>
    %115 = vector.broadcast %114 : vector<1x64xf32> to vector<32x64xf32>
    %116 = arith.addf %112, %115 : vector<32x64xf32>
    %cst_53 = arith.constant 0.000000e+00 : f32
    %117 = vector.broadcast %cst_53 : f32 to vector<32x64xf32>
    %118 = arith.maximumf %116, %117 : vector<32x64xf32>
    %c0_54 = arith.constant 0 : index
    %c0_55 = arith.constant 0 : index
    %c0_56 = arith.constant 0 : index
    %119 = vector.load %arg12[%c0_54, %c0_55, %c0_56] : memref<2x64x32xf32, #tpu.memory_space<vmem>>, vector<1x64x32xf32>
    %120 = vector.shape_cast %119 : vector<1x64x32xf32> to vector<64x32xf32>
    %cst_57 = arith.constant dense<0.000000e+00> : vector<32x32xf32>
    %121 = tpu.matmul %118, %120, %cst_57 {dimension_numbers = #tpu.dot_dimension_numbers<[1], [0], [0], [1], [0, 0, 1, 1], [], []>} : vector<32x64xf32>, vector<64x32xf32>, vector<32x32xf32> -> vector<32x32xf32>
    %c0_58 = arith.constant 0 : index
    %c0_59 = arith.constant 0 : index
    %c0_60 = arith.constant 0 : index
    %122 = vector.load %arg13[%c0_58, %c0_59, %c0_60] : memref<2x1x32xf32, #tpu.memory_space<vmem>>, vector<1x1x32xf32>
    %123 = vector.shape_cast %122 : vector<1x1x32xf32> to vector<1x32xf32>
    %124 = vector.broadcast %123 : vector<1x32xf32> to vector<32x32xf32>
    %125 = arith.addf %121, %124 : vector<32x32xf32>
    %126 = arith.addf %109, %125 : vector<32x32xf32>
    %c0_61 = arith.constant 0 : index
    %c0_62 = arith.constant 0 : index
    %c0_63 = arith.constant 0 : index
    %127 = vector.load %arg14[%c0_61, %c0_62, %c0_63] : memref<2x1x32xf32, #tpu.memory_space<vmem>>, vector<1x1x32xf32>
    %128 = vector.shape_cast %127 : vector<1x1x32xf32> to vector<1x32xf32>
    %c0_64 = arith.constant 0 : index
    %c0_65 = arith.constant 0 : index
    %c0_66 = arith.constant 0 : index
    %129 = vector.load %arg15[%c0_64, %c0_65, %c0_66] : memref<2x1x32xf32, #tpu.memory_space<vmem>>, vector<1x1x32xf32>
    %130 = vector.shape_cast %129 : vector<1x1x32xf32> to vector<1x32xf32>
    %cst_67 = arith.constant dense<0.000000e+00> : vector<32xf32>
    %131 = vector.multi_reduction <add>, %126, %cst_67 [1] : vector<32x32xf32> to vector<32xf32>
    %132 = vector.shape_cast %131 : vector<32xf32> to vector<32x1xf32>
    %cst_68 = arith.constant 3.200000e+01 : f32
    %133 = vector.broadcast %cst_68 : f32 to vector<32x1xf32>
    %134 = arith.divf %132, %133 : vector<32x1xf32>
    %135 = vector.broadcast %134 : vector<32x1xf32> to vector<32x32xf32>
    %136 = arith.subf %126, %135 : vector<32x32xf32>
    %137 = arith.mulf %136, %136 : vector<32x32xf32>
    %cst_69 = arith.constant dense<0.000000e+00> : vector<32xf32>
    %138 = vector.multi_reduction <add>, %137, %cst_69 [1] : vector<32x32xf32> to vector<32xf32>
    %139 = vector.shape_cast %138 : vector<32xf32> to vector<32x1xf32>
    %cst_70 = arith.constant 3.200000e+01 : f32
    %140 = vector.broadcast %cst_70 : f32 to vector<32x1xf32>
    %141 = arith.divf %139, %140 : vector<32x1xf32>
    %142 = vector.broadcast %134 : vector<32x1xf32> to vector<32x32xf32>
    %143 = arith.subf %126, %142 : vector<32x32xf32>
    %cst_71 = arith.constant 9.99999974E-6 : f32
    %144 = vector.broadcast %cst_71 : f32 to vector<32x1xf32>
    %145 = arith.addf %141, %144 : vector<32x1xf32>
    %146 = math.rsqrt %145 : vector<32x1xf32>
    %147 = vector.broadcast %146 : vector<32x1xf32> to vector<32x32xf32>
    %148 = arith.mulf %143, %147 : vector<32x32xf32>
    %149 = vector.broadcast %128 : vector<1x32xf32> to vector<32x32xf32>
    %150 = arith.mulf %148, %149 : vector<32x32xf32>
    %151 = vector.broadcast %130 : vector<1x32xf32> to vector<32x32xf32>
    %152 = arith.addf %150, %151 : vector<32x32xf32>
    %c1 = arith.constant 1 : index
    %c0_72 = arith.constant 0 : index
    %c0_73 = arith.constant 0 : index
    %153 = vector.load %arg4[%c1, %c0_72, %c0_73] : memref<2x32x96xf32, #tpu.memory_space<vmem>>, vector<1x32x96xf32>
    %154 = vector.shape_cast %153 : vector<1x32x96xf32> to vector<32x96xf32>
    %cst_74 = arith.constant dense<0.000000e+00> : vector<32x96xf32>
    %155 = tpu.matmul %152, %154, %cst_74 {dimension_numbers = #tpu.dot_dimension_numbers<[1], [0], [0], [1], [0, 0, 1, 1], [], []>} : vector<32x32xf32>, vector<32x96xf32>, vector<32x96xf32> -> vector<32x96xf32>
    %c1_75 = arith.constant 1 : index
    %c0_76 = arith.constant 0 : index
    %c0_77 = arith.constant 0 : index
    %156 = vector.load %arg5[%c1_75, %c0_76, %c0_77] : memref<2x1x96xf32, #tpu.memory_space<vmem>>, vector<1x1x96xf32>
    %157 = vector.shape_cast %156 : vector<1x1x96xf32> to vector<1x96xf32>
    %158 = vector.broadcast %157 : vector<1x96xf32> to vector<32x96xf32>
    %159 = arith.addf %155, %158 : vector<32x96xf32>
    %160 = vector.shape_cast %159 : vector<32x96xf32> to vector<4x8x96xf32>
    %161 = vector.extract_strided_slice %160 {offsets = [0, 0, 0], sizes = [4, 8, 8], strides = [1, 1, 1]} : vector<4x8x96xf32> to vector<4x8x8xf32>
    %162 = vector.extract_strided_slice %160 {offsets = [0, 0, 32], sizes = [4, 8, 8], strides = [1, 1, 1]} : vector<4x8x96xf32> to vector<4x8x8xf32>
    %163 = vector.extract_strided_slice %160 {offsets = [0, 0, 64], sizes = [4, 8, 8], strides = [1, 1, 1]} : vector<4x8x96xf32> to vector<4x8x8xf32>
    "tpu.trace_start"() <{level = 10 : i32, message = "bqd,bkd->bqk"}> : () -> ()
    %cst_78 = arith.constant dense<0.000000e+00> : vector<4x8x8xf32>
    %164 = tpu.matmul %161, %162, %cst_78 {dimension_numbers = #tpu.dot_dimension_numbers<[2], [2], [1], [1], [0, 0, 0, 1, 1, 1], [0], [0]>} : vector<4x8x8xf32>, vector<4x8x8xf32>, vector<4x8x8xf32> -> vector<4x8x8xf32>
    "tpu.trace_stop"() : () -> ()
    %cst_79 = arith.constant dense<0xFF800000> : vector<4x8xf32>
    %165 = vector.multi_reduction <maximumf>, %164, %cst_79 [2] : vector<4x8x8xf32> to vector<4x8xf32>
    %166 = vector.shape_cast %165 : vector<4x8xf32> to vector<4x8x1xf32>
    %167 = vector.broadcast %166 : vector<4x8x1xf32> to vector<4x8x8xf32>
    %168 = arith.subf %164, %167 : vector<4x8x8xf32>
    %169 = math.exp %168 : vector<4x8x8xf32>
    %cst_80 = arith.constant dense<0.000000e+00> : vector<4x8xf32>
    %170 = vector.multi_reduction <add>, %169, %cst_80 [2] : vector<4x8x8xf32> to vector<4x8xf32>
    %171 = vector.shape_cast %170 : vector<4x8xf32> to vector<4x8x1xf32>
    %172 = tpu.reciprocal %171 : vector<4x8x1xf32> -> vector<4x8x1xf32>
    %173 = vector.broadcast %172 : vector<4x8x1xf32> to vector<4x8x8xf32>
    %174 = arith.mulf %169, %173 : vector<4x8x8xf32>
    "tpu.trace_start"() <{level = 10 : i32, message = "bqk,bkd->bqd"}> : () -> ()
    %cst_81 = arith.constant dense<0.000000e+00> : vector<4x8x8xf32>
    %175 = tpu.matmul %174, %163, %cst_81 {dimension_numbers = #tpu.dot_dimension_numbers<[2], [1], [1], [2], [0, 0, 0, 1, 1, 2], [0], [0]>} : vector<4x8x8xf32>, vector<4x8x8xf32>, vector<4x8x8xf32> -> vector<4x8x8xf32>
    "tpu.trace_stop"() : () -> ()
    %176 = vector.extract_strided_slice %160 {offsets = [0, 0, 8], sizes = [4, 8, 8], strides = [1, 1, 1]} : vector<4x8x96xf32> to vector<4x8x8xf32>
    %177 = vector.extract_strided_slice %160 {offsets = [0, 0, 40], sizes = [4, 8, 8], strides = [1, 1, 1]} : vector<4x8x96xf32> to vector<4x8x8xf32>
    %178 = vector.extract_strided_slice %160 {offsets = [0, 0, 72], sizes = [4, 8, 8], strides = [1, 1, 1]} : vector<4x8x96xf32> to vector<4x8x8xf32>
    "tpu.trace_start"() <{level = 10 : i32, message = "bqd,bkd->bqk"}> : () -> ()
    %cst_82 = arith.constant dense<0.000000e+00> : vector<4x8x8xf32>
    %179 = tpu.matmul %176, %177, %cst_82 {dimension_numbers = #tpu.dot_dimension_numbers<[2], [2], [1], [1], [0, 0, 0, 1, 1, 1], [0], [0]>} : vector<4x8x8xf32>, vector<4x8x8xf32>, vector<4x8x8xf32> -> vector<4x8x8xf32>
    "tpu.trace_stop"() : () -> ()
    %cst_83 = arith.constant dense<0xFF800000> : vector<4x8xf32>
    %180 = vector.multi_reduction <maximumf>, %179, %cst_83 [2] : vector<4x8x8xf32> to vector<4x8xf32>
    %181 = vector.shape_cast %180 : vector<4x8xf32> to vector<4x8x1xf32>
    %182 = vector.broadcast %181 : vector<4x8x1xf32> to vector<4x8x8xf32>
    %183 = arith.subf %179, %182 : vector<4x8x8xf32>
    %184 = math.exp %183 : vector<4x8x8xf32>
    %cst_84 = arith.constant dense<0.000000e+00> : vector<4x8xf32>
    %185 = vector.multi_reduction <add>, %184, %cst_84 [2] : vector<4x8x8xf32> to vector<4x8xf32>
    %186 = vector.shape_cast %185 : vector<4x8xf32> to vector<4x8x1xf32>
    %187 = tpu.reciprocal %186 : vector<4x8x1xf32> -> vector<4x8x1xf32>
    %188 = vector.broadcast %187 : vector<4x8x1xf32> to vector<4x8x8xf32>
    %189 = arith.mulf %184, %188 : vector<4x8x8xf32>
    "tpu.trace_start"() <{level = 10 : i32, message = "bqk,bkd->bqd"}> : () -> ()
    %cst_85 = arith.constant dense<0.000000e+00> : vector<4x8x8xf32>
    %190 = tpu.matmul %189, %178, %cst_85 {dimension_numbers = #tpu.dot_dimension_numbers<[2], [1], [1], [2], [0, 0, 0, 1, 1, 2], [0], [0]>} : vector<4x8x8xf32>, vector<4x8x8xf32>, vector<4x8x8xf32> -> vector<4x8x8xf32>
    "tpu.trace_stop"() : () -> ()
    %191 = vector.extract_strided_slice %160 {offsets = [0, 0, 16], sizes = [4, 8, 8], strides = [1, 1, 1]} : vector<4x8x96xf32> to vector<4x8x8xf32>
    %192 = vector.extract_strided_slice %160 {offsets = [0, 0, 48], sizes = [4, 8, 8], strides = [1, 1, 1]} : vector<4x8x96xf32> to vector<4x8x8xf32>
    %193 = vector.extract_strided_slice %160 {offsets = [0, 0, 80], sizes = [4, 8, 8], strides = [1, 1, 1]} : vector<4x8x96xf32> to vector<4x8x8xf32>
    "tpu.trace_start"() <{level = 10 : i32, message = "bqd,bkd->bqk"}> : () -> ()
    %cst_86 = arith.constant dense<0.000000e+00> : vector<4x8x8xf32>
    %194 = tpu.matmul %191, %192, %cst_86 {dimension_numbers = #tpu.dot_dimension_numbers<[2], [2], [1], [1], [0, 0, 0, 1, 1, 1], [0], [0]>} : vector<4x8x8xf32>, vector<4x8x8xf32>, vector<4x8x8xf32> -> vector<4x8x8xf32>
    "tpu.trace_stop"() : () -> ()
    %cst_87 = arith.constant dense<0xFF800000> : vector<4x8xf32>
    %195 = vector.multi_reduction <maximumf>, %194, %cst_87 [2] : vector<4x8x8xf32> to vector<4x8xf32>
    %196 = vector.shape_cast %195 : vector<4x8xf32> to vector<4x8x1xf32>
    %197 = vector.broadcast %196 : vector<4x8x1xf32> to vector<4x8x8xf32>
    %198 = arith.subf %194, %197 : vector<4x8x8xf32>
    %199 = math.exp %198 : vector<4x8x8xf32>
    %cst_88 = arith.constant dense<0.000000e+00> : vector<4x8xf32>
    %200 = vector.multi_reduction <add>, %199, %cst_88 [2] : vector<4x8x8xf32> to vector<4x8xf32>
    %201 = vector.shape_cast %200 : vector<4x8xf32> to vector<4x8x1xf32>
    %202 = tpu.reciprocal %201 : vector<4x8x1xf32> -> vector<4x8x1xf32>
    %203 = vector.broadcast %202 : vector<4x8x1xf32> to vector<4x8x8xf32>
    %204 = arith.mulf %199, %203 : vector<4x8x8xf32>
    "tpu.trace_start"() <{level = 10 : i32, message = "bqk,bkd->bqd"}> : () -> ()
    %cst_89 = arith.constant dense<0.000000e+00> : vector<4x8x8xf32>
    %205 = tpu.matmul %204, %193, %cst_89 {dimension_numbers = #tpu.dot_dimension_numbers<[2], [1], [1], [2], [0, 0, 0, 1, 1, 2], [0], [0]>} : vector<4x8x8xf32>, vector<4x8x8xf32>, vector<4x8x8xf32> -> vector<4x8x8xf32>
    "tpu.trace_stop"() : () -> ()
    %206 = vector.extract_strided_slice %160 {offsets = [0, 0, 24], sizes = [4, 8, 8], strides = [1, 1, 1]} : vector<4x8x96xf32> to vector<4x8x8xf32>
    %207 = vector.extract_strided_slice %160 {offsets = [0, 0, 56], sizes = [4, 8, 8], strides = [1, 1, 1]} : vector<4x8x96xf32> to vector<4x8x8xf32>
    %208 = vector.extract_strided_slice %160 {offsets = [0, 0, 88], sizes = [4, 8, 8], strides = [1, 1, 1]} : vector<4x8x96xf32> to vector<4x8x8xf32>
    "tpu.trace_start"() <{level = 10 : i32, message = "bqd,bkd->bqk"}> : () -> ()
    %cst_90 = arith.constant dense<0.000000e+00> : vector<4x8x8xf32>
    %209 = tpu.matmul %206, %207, %cst_90 {dimension_numbers = #tpu.dot_dimension_numbers<[2], [2], [1], [1], [0, 0, 0, 1, 1, 1], [0], [0]>} : vector<4x8x8xf32>, vector<4x8x8xf32>, vector<4x8x8xf32> -> vector<4x8x8xf32>
    "tpu.trace_stop"() : () -> ()
    %cst_91 = arith.constant dense<0xFF800000> : vector<4x8xf32>
    %210 = vector.multi_reduction <maximumf>, %209, %cst_91 [2] : vector<4x8x8xf32> to vector<4x8xf32>
    %211 = vector.shape_cast %210 : vector<4x8xf32> to vector<4x8x1xf32>
    %212 = vector.broadcast %211 : vector<4x8x1xf32> to vector<4x8x8xf32>
    %213 = arith.subf %209, %212 : vector<4x8x8xf32>
    %214 = math.exp %213 : vector<4x8x8xf32>
    %cst_92 = arith.constant dense<0.000000e+00> : vector<4x8xf32>
    %215 = vector.multi_reduction <add>, %214, %cst_92 [2] : vector<4x8x8xf32> to vector<4x8xf32>
    %216 = vector.shape_cast %215 : vector<4x8xf32> to vector<4x8x1xf32>
    %217 = tpu.reciprocal %216 : vector<4x8x1xf32> -> vector<4x8x1xf32>
    %218 = vector.broadcast %217 : vector<4x8x1xf32> to vector<4x8x8xf32>
    %219 = arith.mulf %214, %218 : vector<4x8x8xf32>
    "tpu.trace_start"() <{level = 10 : i32, message = "bqk,bkd->bqd"}> : () -> ()
    %cst_93 = arith.constant dense<0.000000e+00> : vector<4x8x8xf32>
    %220 = tpu.matmul %219, %208, %cst_93 {dimension_numbers = #tpu.dot_dimension_numbers<[2], [1], [1], [2], [0, 0, 0, 1, 1, 2], [0], [0]>} : vector<4x8x8xf32>, vector<4x8x8xf32>, vector<4x8x8xf32> -> vector<4x8x8xf32>
    "tpu.trace_stop"() : () -> ()
    %221 = tpu.concatenate %175, %190, %205, %220 in 2 : vector<4x8x8xf32>, vector<4x8x8xf32>, vector<4x8x8xf32>, vector<4x8x8xf32> -> vector<4x8x32xf32>
    %222 = vector.shape_cast %221 : vector<4x8x32xf32> to vector<32x32xf32>
    %c1_94 = arith.constant 1 : index
    %c0_95 = arith.constant 0 : index
    %c0_96 = arith.constant 0 : index
    %223 = vector.load %arg6[%c1_94, %c0_95, %c0_96] : memref<2x32x32xf32, #tpu.memory_space<vmem>>, vector<1x32x32xf32>
    %224 = vector.shape_cast %223 : vector<1x32x32xf32> to vector<32x32xf32>
    %cst_97 = arith.constant dense<0.000000e+00> : vector<32x32xf32>
    %225 = tpu.matmul %222, %224, %cst_97 {dimension_numbers = #tpu.dot_dimension_numbers<[1], [0], [0], [1], [0, 0, 1, 1], [], []>} : vector<32x32xf32>, vector<32x32xf32>, vector<32x32xf32> -> vector<32x32xf32>
    %c1_98 = arith.constant 1 : index
    %c0_99 = arith.constant 0 : index
    %c0_100 = arith.constant 0 : index
    %226 = vector.load %arg7[%c1_98, %c0_99, %c0_100] : memref<2x1x32xf32, #tpu.memory_space<vmem>>, vector<1x1x32xf32>
    %227 = vector.shape_cast %226 : vector<1x1x32xf32> to vector<1x32xf32>
    %228 = vector.broadcast %227 : vector<1x32xf32> to vector<32x32xf32>
    %229 = arith.addf %225, %228 : vector<32x32xf32>
    %230 = arith.addf %152, %229 : vector<32x32xf32>
    %c1_101 = arith.constant 1 : index
    %c0_102 = arith.constant 0 : index
    %c0_103 = arith.constant 0 : index
    %231 = vector.load %arg8[%c1_101, %c0_102, %c0_103] : memref<2x1x32xf32, #tpu.memory_space<vmem>>, vector<1x1x32xf32>
    %232 = vector.shape_cast %231 : vector<1x1x32xf32> to vector<1x32xf32>
    %c1_104 = arith.constant 1 : index
    %c0_105 = arith.constant 0 : index
    %c0_106 = arith.constant 0 : index
    %233 = vector.load %arg9[%c1_104, %c0_105, %c0_106] : memref<2x1x32xf32, #tpu.memory_space<vmem>>, vector<1x1x32xf32>
    %234 = vector.shape_cast %233 : vector<1x1x32xf32> to vector<1x32xf32>
    %cst_107 = arith.constant dense<0.000000e+00> : vector<32xf32>
    %235 = vector.multi_reduction <add>, %230, %cst_107 [1] : vector<32x32xf32> to vector<32xf32>
    %236 = vector.shape_cast %235 : vector<32xf32> to vector<32x1xf32>
    %cst_108 = arith.constant 3.200000e+01 : f32
    %237 = vector.broadcast %cst_108 : f32 to vector<32x1xf32>
    %238 = arith.divf %236, %237 : vector<32x1xf32>
    %239 = vector.broadcast %238 : vector<32x1xf32> to vector<32x32xf32>
    %240 = arith.subf %230, %239 : vector<32x32xf32>
    %241 = arith.mulf %240, %240 : vector<32x32xf32>
    %cst_109 = arith.constant dense<0.000000e+00> : vector<32xf32>
    %242 = vector.multi_reduction <add>, %241, %cst_109 [1] : vector<32x32xf32> to vector<32xf32>
    %243 = vector.shape_cast %242 : vector<32xf32> to vector<32x1xf32>
    %cst_110 = arith.constant 3.200000e+01 : f32
    %244 = vector.broadcast %cst_110 : f32 to vector<32x1xf32>
    %245 = arith.divf %243, %244 : vector<32x1xf32>
    %246 = vector.broadcast %238 : vector<32x1xf32> to vector<32x32xf32>
    %247 = arith.subf %230, %246 : vector<32x32xf32>
    %cst_111 = arith.constant 9.99999974E-6 : f32
    %248 = vector.broadcast %cst_111 : f32 to vector<32x1xf32>
    %249 = arith.addf %245, %248 : vector<32x1xf32>
    %250 = math.rsqrt %249 : vector<32x1xf32>
    %251 = vector.broadcast %250 : vector<32x1xf32> to vector<32x32xf32>
    %252 = arith.mulf %247, %251 : vector<32x32xf32>
    %253 = vector.broadcast %232 : vector<1x32xf32> to vector<32x32xf32>
    %254 = arith.mulf %252, %253 : vector<32x32xf32>
    %255 = vector.broadcast %234 : vector<1x32xf32> to vector<32x32xf32>
    %256 = arith.addf %254, %255 : vector<32x32xf32>
    %c1_112 = arith.constant 1 : index
    %c0_113 = arith.constant 0 : index
    %c0_114 = arith.constant 0 : index
    %257 = vector.load %arg10[%c1_112, %c0_113, %c0_114] : memref<2x32x64xf32, #tpu.memory_space<vmem>>, vector<1x32x64xf32>
    %258 = vector.shape_cast %257 : vector<1x32x64xf32> to vector<32x64xf32>
    %cst_115 = arith.constant dense<0.000000e+00> : vector<32x64xf32>
    %259 = tpu.matmul %256, %258, %cst_115 {dimension_numbers = #tpu.dot_dimension_numbers<[1], [0], [0], [1], [0, 0, 1, 1], [], []>} : vector<32x32xf32>, vector<32x64xf32>, vector<32x64xf32> -> vector<32x64xf32>
    %c1_116 = arith.constant 1 : index
    %c0_117 = arith.constant 0 : index
    %c0_118 = arith.constant 0 : index
    %260 = vector.load %arg11[%c1_116, %c0_117, %c0_118] : memref<2x1x64xf32, #tpu.memory_space<vmem>>, vector<1x1x64xf32>
    %261 = vector.shape_cast %260 : vector<1x1x64xf32> to vector<1x64xf32>
    %262 = vector.broadcast %261 : vector<1x64xf32> to vector<32x64xf32>
    %263 = arith.addf %259, %262 : vector<32x64xf32>
    %cst_119 = arith.constant 0.000000e+00 : f32
    %264 = vector.broadcast %cst_119 : f32 to vector<32x64xf32>
    %265 = arith.maximumf %263, %264 : vector<32x64xf32>
    %c1_120 = arith.constant 1 : index
    %c0_121 = arith.constant 0 : index
    %c0_122 = arith.constant 0 : index
    %266 = vector.load %arg12[%c1_120, %c0_121, %c0_122] : memref<2x64x32xf32, #tpu.memory_space<vmem>>, vector<1x64x32xf32>
    %267 = vector.shape_cast %266 : vector<1x64x32xf32> to vector<64x32xf32>
    %cst_123 = arith.constant dense<0.000000e+00> : vector<32x32xf32>
    %268 = tpu.matmul %265, %267, %cst_123 {dimension_numbers = #tpu.dot_dimension_numbers<[1], [0], [0], [1], [0, 0, 1, 1], [], []>} : vector<32x64xf32>, vector<64x32xf32>, vector<32x32xf32> -> vector<32x32xf32>
    %c1_124 = arith.constant 1 : index
    %c0_125 = arith.constant 0 : index
    %c0_126 = arith.constant 0 : index
    %269 = vector.load %arg13[%c1_124, %c0_125, %c0_126] : memref<2x1x32xf32, #tpu.memory_space<vmem>>, vector<1x1x32xf32>
    %270 = vector.shape_cast %269 : vector<1x1x32xf32> to vector<1x32xf32>
    %271 = vector.broadcast %270 : vector<1x32xf32> to vector<32x32xf32>
    %272 = arith.addf %268, %271 : vector<32x32xf32>
    %273 = arith.addf %256, %272 : vector<32x32xf32>
    %c1_127 = arith.constant 1 : index
    %c0_128 = arith.constant 0 : index
    %c0_129 = arith.constant 0 : index
    %274 = vector.load %arg14[%c1_127, %c0_128, %c0_129] : memref<2x1x32xf32, #tpu.memory_space<vmem>>, vector<1x1x32xf32>
    %275 = vector.shape_cast %274 : vector<1x1x32xf32> to vector<1x32xf32>
    %c1_130 = arith.constant 1 : index
    %c0_131 = arith.constant 0 : index
    %c0_132 = arith.constant 0 : index
    %276 = vector.load %arg15[%c1_130, %c0_131, %c0_132] : memref<2x1x32xf32, #tpu.memory_space<vmem>>, vector<1x1x32xf32>
    %277 = vector.shape_cast %276 : vector<1x1x32xf32> to vector<1x32xf32>
    %cst_133 = arith.constant dense<0.000000e+00> : vector<32xf32>
    %278 = vector.multi_reduction <add>, %273, %cst_133 [1] : vector<32x32xf32> to vector<32xf32>
    %279 = vector.shape_cast %278 : vector<32xf32> to vector<32x1xf32>
    %cst_134 = arith.constant 3.200000e+01 : f32
    %280 = vector.broadcast %cst_134 : f32 to vector<32x1xf32>
    %281 = arith.divf %279, %280 : vector<32x1xf32>
    %282 = vector.broadcast %281 : vector<32x1xf32> to vector<32x32xf32>
    %283 = arith.subf %273, %282 : vector<32x32xf32>
    %284 = arith.mulf %283, %283 : vector<32x32xf32>
    %cst_135 = arith.constant dense<0.000000e+00> : vector<32xf32>
    %285 = vector.multi_reduction <add>, %284, %cst_135 [1] : vector<32x32xf32> to vector<32xf32>
    %286 = vector.shape_cast %285 : vector<32xf32> to vector<32x1xf32>
    %cst_136 = arith.constant 3.200000e+01 : f32
    %287 = vector.broadcast %cst_136 : f32 to vector<32x1xf32>
    %288 = arith.divf %286, %287 : vector<32x1xf32>
    %289 = vector.broadcast %281 : vector<32x1xf32> to vector<32x32xf32>
    %290 = arith.subf %273, %289 : vector<32x32xf32>
    %cst_137 = arith.constant 9.99999974E-6 : f32
    %291 = vector.broadcast %cst_137 : f32 to vector<32x1xf32>
    %292 = arith.addf %288, %291 : vector<32x1xf32>
    %293 = math.rsqrt %292 : vector<32x1xf32>
    %294 = vector.broadcast %293 : vector<32x1xf32> to vector<32x32xf32>
    %295 = arith.mulf %290, %294 : vector<32x32xf32>
    %296 = vector.broadcast %275 : vector<1x32xf32> to vector<32x32xf32>
    %297 = arith.mulf %295, %296 : vector<32x32xf32>
    %298 = vector.broadcast %277 : vector<1x32xf32> to vector<32x32xf32>
    %299 = arith.addf %297, %298 : vector<32x32xf32>
    %c0_138 = arith.constant 0 : index
    %c0_139 = arith.constant 0 : index
    %300 = vector.load %arg16[%c0_138, %c0_139] : memref<32x64xf32, #tpu.memory_space<vmem>>, vector<32x64xf32>
    %cst_140 = arith.constant dense<0.000000e+00> : vector<32x64xf32>
    %301 = tpu.matmul %299, %300, %cst_140 {dimension_numbers = #tpu.dot_dimension_numbers<[1], [0], [0], [1], [0, 0, 1, 1], [], []>} : vector<32x32xf32>, vector<32x64xf32>, vector<32x64xf32> -> vector<32x64xf32>
    %c0_141 = arith.constant 0 : index
    %c0_142 = arith.constant 0 : index
    %302 = vector.load %arg17[%c0_141, %c0_142] : memref<1x64xf32, #tpu.memory_space<vmem>>, vector<1x64xf32>
    %303 = vector.broadcast %302 : vector<1x64xf32> to vector<32x64xf32>
    %304 = arith.addf %301, %303 : vector<32x64xf32>
    %cst_143 = arith.constant 0.000000e+00 : f32
    %305 = vector.broadcast %cst_143 : f32 to vector<32x64xf32>
    %306 = arith.maximumf %304, %305 : vector<32x64xf32>
    %c0_144 = arith.constant 0 : index
    %c0_145 = arith.constant 0 : index
    %307 = vector.load %arg18[%c0_144, %c0_145] : memref<64x128xf32, #tpu.memory_space<vmem>>, vector<64x128xf32>
    %cst_146 = arith.constant dense<0.000000e+00> : vector<32x128xf32>
    %308 = tpu.matmul %306, %307, %cst_146 {dimension_numbers = #tpu.dot_dimension_numbers<[1], [0], [0], [1], [0, 0, 1, 1], [], []>} : vector<32x64xf32>, vector<64x128xf32>, vector<32x128xf32> -> vector<32x128xf32>
    %c0_147 = arith.constant 0 : index
    %c0_148 = arith.constant 0 : index
    %309 = vector.load %arg19[%c0_147, %c0_148] : memref<1x128xf32, #tpu.memory_space<vmem>>, vector<1x128xf32>
    %310 = vector.broadcast %309 : vector<1x128xf32> to vector<32x128xf32>
    %311 = arith.addf %308, %310 : vector<32x128xf32>
    %c0_149 = arith.constant 0 : index
    %c0_150 = arith.constant 0 : index
    %312 = vector.load %arg20[%c0_149, %c0_150] : memref<32x128xf32, #tpu.memory_space<vmem>>, vector<32x128xf32>
    tpu.vector_store %arg20[%c0_149, %c0_150], %311 {strides = array<i32>} : memref<32x128xf32, #tpu.memory_space<vmem>>, vector<32x128xf32>,
    return
  }
  func.func @transform_0(%arg0: i32) -> (i32, i32) {
    %c0_i32 = arith.constant 0 : i32
    %c0_i32_0 = arith.constant 0 : i32
    return %arg0, %c0_i32 : i32, i32
  }
  func.func @transform_1(%arg0: i32) -> (i32, i32) {
    %c0_i32 = arith.constant 0 : i32
    %c0_i32_0 = arith.constant 0 : i32
    %c0_i32_1 = arith.constant 0 : i32
    return %c0_i32, %c0_i32_0 : i32, i32
  }
  func.func @transform_2(%arg0: i32) -> (i32, i32) {
    %c0_i32 = arith.constant 0 : i32
    %c0_i32_0 = arith.constant 0 : i32
    %c0_i32_1 = arith.constant 0 : i32
    return %c0_i32, %c0_i32_0 : i32, i32
  }
  func.func @transform_3(%arg0: i32) -> (i32, i32, i32) {
    %c0_i32 = arith.constant 0 : i32
    %c0_i32_0 = arith.constant 0 : i32
    %c0_i32_1 = arith.constant 0 : i32
    %c0_i32_2 = arith.constant 0 : i32
    return %c0_i32, %c0_i32_0, %c0_i32_1 : i32, i32, i32
  }
  func.func @transform_4(%arg0: i32) -> (i32, i32, i32) {
    %c0_i32 = arith.constant 0 : i32
    %c0_i32_0 = arith.constant 0 : i32
    %c0_i32_1 = arith.constant 0 : i32
    %c0_i32_2 = arith.constant 0 : i32
    return %c0_i32, %c0_i32_0, %c0_i32_1 : i32, i32, i32
  }
  func.func @transform_5(%arg0: i32) -> (i32, i32, i32) {
    %c0_i32 = arith.constant 0 : i32
    %c0_i32_0 = arith.constant 0 : i32
    %c0_i32_1 = arith.constant 0 : i32
    %c0_i32_2 = arith.constant 0 : i32
    return %c0_i32, %c0_i32_0, %c0_i32_1 : i32, i32, i32
  }
  func.func @transform_6(%arg0: i32) -> (i32, i32, i32) {
    %c0_i32 = arith.constant 0 : i32
    %c0_i32_0 = arith.constant 0 : i32
    %c0_i32_1 = arith.constant 0 : i32
    %c0_i32_2 = arith.constant 0 : i32
    return %c0_i32, %c0_i32_0, %c0_i32_1 : i32, i32, i32
  }
  func.func @transform_7(%arg0: i32) -> (i32, i32, i32) {
    %c0_i32 = arith.constant 0 : i32
    %c0_i32_0 = arith.constant 0 : i32
    %c0_i32_1 = arith.constant 0 : i32
    %c0_i32_2 = arith.constant 0 : i32
    return %c0_i32, %c0_i32_0, %c0_i32_1 : i32, i32, i32
  }
  func.func @transform_8(%arg0: i32) -> (i32, i32, i32) {
    %c0_i32 = arith.constant 0 : i32
    %c0_i32_0 = arith.constant 0 : i32
    %c0_i32_1 = arith.constant 0 : i32
    %c0_i32_2 = arith.constant 0 : i32
    return %c0_i32, %c0_i32_0, %c0_i32_1 : i32, i32, i32
  }
  func.func @transform_9(%arg0: i32) -> (i32, i32, i32) {
    %c0_i32 = arith.constant 0 : i32
    %c0_i32_0 = arith.constant 0 : i32
    %c0_i32_1 = arith.constant 0 : i32
    %c0_i32_2 = arith.constant 0 : i32
    return %c0_i32, %c0_i32_0, %c0_i32_1 : i32, i32, i32
  }
  func.func @transform_10(%arg0: i32) -> (i32, i32, i32) {
    %c0_i32 = arith.constant 0 : i32
    %c0_i32_0 = arith.constant 0 : i32
    %c0_i32_1 = arith.constant 0 : i32
    %c0_i32_2 = arith.constant 0 : i32
    return %c0_i32, %c0_i32_0, %c0_i32_1 : i32, i32, i32
  }
  func.func @transform_11(%arg0: i32) -> (i32, i32, i32) {
    %c0_i32 = arith.constant 0 : i32
    %c0_i32_0 = arith.constant 0 : i32
    %c0_i32_1 = arith.constant 0 : i32
    %c0_i32_2 = arith.constant 0 : i32
    return %c0_i32, %c0_i32_0, %c0_i32_1 : i32, i32, i32
  }
  func.func @transform_12(%arg0: i32) -> (i32, i32, i32) {
    %c0_i32 = arith.constant 0 : i32
    %c0_i32_0 = arith.constant 0 : i32
    %c0_i32_1 = arith.constant 0 : i32
    %c0_i32_2 = arith.constant 0 : i32
    return %c0_i32, %c0_i32_0, %c0_i32_1 : i32, i32, i32
  }
  func.func @transform_13(%arg0: i32) -> (i32, i32, i32) {
    %c0_i32 = arith.constant 0 : i32
    %c0_i32_0 = arith.constant 0 : i32
    %c0_i32_1 = arith.constant 0 : i32
    %c0_i32_2 = arith.constant 0 : i32
    return %c0_i32, %c0_i32_0, %c0_i32_1 : i32, i32, i32
  }
  func.func @transform_14(%arg0: i32) -> (i32, i32, i32) {
    %c0_i32 = arith.constant 0 : i32
    %c0_i32_0 = arith.constant 0 : i32
    %c0_i32_1 = arith.constant 0 : i32
    %c0_i32_2 = arith.constant 0 : i32
    return %c0_i32, %c0_i32_0, %c0_i32_1 : i32, i32, i32
  }
  func.func @transform_15(%arg0: i32) -> (i32, i32) {
    %c0_i32 = arith.constant 0 : i32
    %c0_i32_0 = arith.constant 0 : i32
    %c0_i32_1 = arith.constant 0 : i32
    return %c0_i32, %c0_i32_0 : i32, i32
  }
  func.func @transform_16(%arg0: i32) -> (i32, i32) {
    %c0_i32 = arith.constant 0 : i32
    %c0_i32_0 = arith.constant 0 : i32
    %c0_i32_1 = arith.constant 0 : i32
    return %c0_i32, %c0_i32_0 : i32, i32
  }
  func.func @transform_17(%arg0: i32) -> (i32, i32) {
    %c0_i32 = arith.constant 0 : i32
    %c0_i32_0 = arith.constant 0 : i32
    %c0_i32_1 = arith.constant 0 : i32
    return %c0_i32, %c0_i32_0 : i32, i32
  }
  func.func @transform_18(%arg0: i32) -> (i32, i32) {
    %c0_i32 = arith.constant 0 : i32
    %c0_i32_0 = arith.constant 0 : i32
    %c0_i32_1 = arith.constant 0 : i32
    return %c0_i32, %c0_i32_0 : i32, i32
  }
  func.func @transform_19(%arg0: i32) -> (i32, i32) {
    %c0_i32 = arith.constant 0 : i32
    %c0_i32_0 = arith.constant 0 : i32
    return %arg0, %c0_i32 : i32, i32
  }
}

</mosaic_0001>

<llo_original>
// kernel: tpu_custom_call.1
$region0: #{tpu_custom_call.1}
  #allocation0 [shape = 'u32[]', space=smem, size = 0x4, offset = 0x4, fixed_abs, tag = 'smem constant byte address 0x4 - core index']
  #allocation1 [shape = 'u32[144,128]{1,0:T(1,128)}', space=vmem, size = 0x12000, scoped, tag = 'internal scratch']
  %s0 = inlined_call_operand.vmem [shape: f32[32,9], index: 0, kind: input, shape index: {}]
  %s1 = inlined_call_operand.hbm [shape: f32[9,32], index: 1, kind: input, shape index: {}]
  %s2 = inlined_call_operand.hbm [shape: f32[1,32], index: 2, kind: input, shape index: {}]
  %s3 = inlined_call_operand.vmem [shape: f32[2,32,96], index: 3, kind: input, shape index: {}]
  %s4 = inlined_call_operand.vmem [shape: f32[2,1,96], index: 4, kind: input, shape index: {}]
  %s5 = inlined_call_operand.vmem [shape: f32[2,32,32], index: 5, kind: input, shape index: {}]
  %s6 = inlined_call_operand.vmem [shape: f32[2,1,32], index: 6, kind: input, shape index: {}]
  %s7 = inlined_call_operand.hbm [shape: f32[2,1,32], index: 7, kind: input, shape index: {}]
  %s8 = inlined_call_operand.hbm [shape: f32[2,1,32], index: 8, kind: input, shape index: {}]
  %s9 = inlined_call_operand.vmem [shape: f32[2,32,64], index: 9, kind: input, shape index: {}]
  %s10 = inlined_call_operand.hbm [shape: f32[2,1,64], index: 10, kind: input, shape index: {}]
  %s11 = inlined_call_operand.vmem [shape: f32[2,64,32], index: 11, kind: input, shape index: {}]
  %s12 = inlined_call_operand.hbm [shape: f32[2,1,32], index: 12, kind: input, shape index: {}]
  %s13 = inlined_call_operand.hbm [shape: f32[2,1,32], index: 13, kind: input, shape index: {}]
  %s14 = inlined_call_operand.vmem [shape: f32[2,1,32], index: 14, kind: input, shape index: {}]
  %s15 = inlined_call_operand.hbm [shape: f32[32,64], index: 15, kind: input, shape index: {}]
  %s16 = inlined_call_operand.vmem [shape: f32[1,64], index: 16, kind: input, shape index: {}]
  %s17 = inlined_call_operand.hbm [shape: f32[64,128], index: 17, kind: input, shape index: {}]
  %s18 = inlined_call_operand.vmem [shape: f32[1,128], index: 18, kind: input, shape index: {}]
  %s19 = inlined_call_operand.hbm [shape: f32[32,128], index: 19, kind: output, shape index: {}]
  %s20 = sld [smem:[#allocation0]]
  $region122: #{tpu_custom_call.1} parent=0
    _
  %s22 = ssub.s32 1, %s20
  %s23 = scalar_select 0, %s22, %s20
  $region1: #{tpu_custom_call.1} parent=0
    #allocation2 [shape = 'u8[8192]{0}', space=vmem, size = 0x2000, scoped, tag = 'input window, operand 1, single buffered']
    #allocation3 [shape = 's32[1]{0}', space=sflag, size = 0x4, scoped, tag = 'scoped memory for tpu_custom_call.1']
    #allocation4 [shape = 's32[1]{0}', space=sflag, size = 0x4, scoped, tag = 'scoped memory for tpu_custom_call.1']
    #allocation5 [shape = 'u8[512]{0}', space=vmem, size = 0x400, scoped, tag = 'input window, operand 2, single buffered']
    #allocation6 [shape = 's32[1]{0}', space=sflag, size = 0x4, scoped, tag = 'scoped memory for tpu_custom_call.1']
    #allocation7 [shape = 'u8[1024]{0}', space=vmem, size = 0x400, scoped, tag = 'input window, operand 7, single buffered']
    #allocation8 [shape = 'u8[1024]{0}', space=vmem, size = 0x400, scoped, tag = 'input window, operand 8, single buffered']
    #allocation9 [shape = 's32[1]{0}', space=sflag, size = 0x4, scoped, tag = 'scoped memory for tpu_custom_call.1']
    #allocation10 [shape = 'u8[1024]{0}', space=vmem, size = 0x400, scoped, tag = 'input window, operand 10, single buffered']
    #allocation11 [shape = 'u8[1024]{0}', space=vmem, size = 0x400, scoped, tag = 'input window, operand 12, single buffered']
    #allocation12 [shape = 's32[1]{0}', space=sflag, size = 0x4, scoped, tag = 'scoped memory for tpu_custom_call.1']
    #allocation13 [shape = 'u8[1024]{0}', space=vmem, size = 0x400, scoped, tag = 'input window, operand 13, single buffered']
    #allocation14 [shape = 'u8[16384]{0}', space=vmem, size = 0x4000, scoped, tag = 'input window, operand 15, single buffered']
    #allocation15 [shape = 's32[1]{0}', space=sflag, size = 0x4, scoped, tag = 'scoped memory for tpu_custom_call.1']
    #allocation16 [shape = 'u8[32768]{0}', space=vmem, size = 0x8000, scoped, tag = 'input window, operand 17, single buffered']
    #allocation17 [shape = 'u8[16384]{0}', space=vmem, size = 0x4000, scoped, tag = 'output window, operand 0, single buffered']
    %24 = vsyncpa [#allocation3], 0
    %25 = vsyncpa [#allocation6], 0
    %26 = vsyncpa [#allocation9], 0
    %27 = vsyncpa [#allocation12], 0
    %28 = vsyncpa [#allocation15], 0
    %29 = vsyncpa [#allocation4], 0
    // Predicated region
    $region2: #{tpu_custom_call.1} parent=1 // pred_check
      _
    $region3: #{tpu_custom_call.1} parent=1 // pred_check_branch
      %31 = sbr.rel (0) target = $region5
    $region4: #{tpu_custom_call.1} parent=1 // pred_region
      _
    $region5: #{tpu_custom_call.1} parent=1 // pred_fallthru
      _
    // Predicated region
    $region6: #{tpu_custom_call.1} parent=1 // pred_check
      _
    $region7: #{tpu_custom_call.1} parent=1 // pred_check_branch
      %33 = sbr.rel (0) target = $region9
    $region8: #{tpu_custom_call.1} parent=1 // pred_region
      %s35 = ssub.s32 256, 256
      %36 = vsyncadd [#allocation3], %s35
      %s37 = sshll.u32 [#allocation2], 4
      %s38 = int_to_ptr.vmem [resolvable:$true] %s37
      %43 = dma.hbm_to_vmem [thread:$0]  %s1, 256, %s38, [#allocation3], 128, 128, 8
    $region9: #{tpu_custom_call.1} parent=1 // pred_fallthru
      _
    // Predicated region
    $region10: #{tpu_custom_call.1} parent=1 // pred_check
      _
    $region11: #{tpu_custom_call.1} parent=1 // pred_check_branch
      %45 = sbr.rel (0) target = $region13
    $region12: #{tpu_custom_call.1} parent=1 // pred_region
      %s47 = ssub.s32 16, 16
      %48 = vsyncadd [#allocation6], %s47
      %s50 = sshll.u32 [#allocation5], 4
      %s51 = int_to_ptr.vmem [resolvable:$true] %s50
      %53 = dma.hbm_to_vmem [thread:$0]  %s2, 16, %s51, [#allocation6]
    $region13: #{tpu_custom_call.1} parent=1 // pred_fallthru
      _
    // Predicated region
    $region14: #{tpu_custom_call.1} parent=1 // pred_check
      _
    $region15: #{tpu_custom_call.1} parent=1 // pred_check_branch
      %55 = sbr.rel (0) target = $region17
    $region16: #{tpu_custom_call.1} parent=1 // pred_region
      _
    $region17: #{tpu_custom_call.1} parent=1 // pred_fallthru
      _
    // Predicated region
    $region18: #{tpu_custom_call.1} parent=1 // pred_check
      _
    $region19: #{tpu_custom_call.1} parent=1 // pred_check_branch
      %57 = sbr.rel (0) target = $region21
    $region20: #{tpu_custom_call.1} parent=1 // pred_region
      _
    $region21: #{tpu_custom_call.1} parent=1 // pred_fallthru
      _
    // Predicated region
    $region22: #{tpu_custom_call.1} parent=1 // pred_check
      _
    $region23: #{tpu_custom_call.1} parent=1 // pred_check_branch
      %59 = sbr.rel (0) target = $region25
    $region24: #{tpu_custom_call.1} parent=1 // pred_region
      _
    $region25: #{tpu_custom_call.1} parent=1 // pred_fallthru
      _
    // Predicated region
    $region26: #{tpu_custom_call.1} parent=1 // pred_check
      _
    $region27: #{tpu_custom_call.1} parent=1 // pred_check_branch
      %61 = sbr.rel (0) target = $region29
    $region28: #{tpu_custom_call.1} parent=1 // pred_region
      _
    $region29: #{tpu_custom_call.1} parent=1 // pred_fallthru
      _
    // Predicated region
    $region30: #{tpu_custom_call.1} parent=1 // pred_check
      _
    $region31: #{tpu_custom_call.1} parent=1 // pred_check_branch
      %63 = sbr.rel (0) target = $region33
    $region32: #{tpu_custom_call.1} parent=1 // pred_region
      %s65 = ssub.s32 32, 32
      %66 = vsyncadd [#allocation6], %s65
      %s67 = sshll.u32 [#allocation7], 4
      %s68 = int_to_ptr.vmem [resolvable:$true] %s67
      %73 = dma.hbm_to_vmem [thread:$0]  %s7, 32, %s68, [#allocation6], 16, 16, 1
    $region33: #{tpu_custom_call.1} parent=1 // pred_fallthru
      _
    // Predicated region
    $region34: #{tpu_custom_call.1} parent=1 // pred_check
      _
    $region35: #{tpu_custom_call.1} parent=1 // pred_check_branch
      %75 = sbr.rel (0) target = $region37
    $region36: #{tpu_custom_call.1} parent=1 // pred_region
      %s77 = ssub.s32 32, 32
      %78 = vsyncadd [#allocation9], %s77
      %s79 = sshll.u32 [#allocation8], 4
      %s80 = int_to_ptr.vmem [resolvable:$true] %s79
      %85 = dma.hbm_to_vmem [thread:$0]  %s8, 32, %s80, [#allocation9], 16, 16, 1
    $region37: #{tpu_custom_call.1} parent=1 // pred_fallthru
      _
    // Predicated region
    $region38: #{tpu_custom_call.1} parent=1 // pred_check
      _
    $region39: #{tpu_custom_call.1} parent=1 // pred_check_branch
      %87 = sbr.rel (0) target = $region41
    $region40: #{tpu_custom_call.1} parent=1 // pred_region
      _
    $region41: #{tpu_custom_call.1} parent=1 // pred_fallthru
      _
    // Predicated region
    $region42: #{tpu_custom_call.1} parent=1 // pred_check
      _
    $region43: #{tpu_custom_call.1} parent=1 // pred_check_branch
      %89 = sbr.rel (0) target = $region45
    $region44: #{tpu_custom_call.1} parent=1 // pred_region
      %s91 = ssub.s32 32, 32
      %92 = vsyncadd [#allocation9], %s91
      %s93 = sshll.u32 [#allocation10], 4
      %s94 = int_to_ptr.vmem [resolvable:$true] %s93
      %99 = dma.hbm_to_vmem [thread:$0]  %s10, 32, %s94, [#allocation9], 16, 16, 1
    $region45: #{tpu_custom_call.1} parent=1 // pred_fallthru
      _
    // Predicated region
    $region46: #{tpu_custom_call.1} parent=1 // pred_check
      _
    $region47: #{tpu_custom_call.1} parent=1 // pred_check_branch
      %101 = sbr.rel (0) target = $region49
    $region48: #{tpu_custom_call.1} parent=1 // pred_region
      _
    $region49: #{tpu_custom_call.1} parent=1 // pred_fallthru
      _
    // Predicated region
    $region50: #{tpu_custom_call.1} parent=1 // pred_check
      _
    $region51: #{tpu_custom_call.1} parent=1 // pred_check_branch
      %103 = sbr.rel (0) target = $region53
    $region52: #{tpu_custom_call.1} parent=1 // pred_region
      %s105 = ssub.s32 32, 32
      %106 = vsyncadd [#allocation12], %s105
      %s107 = sshll.u32 [#allocation11], 4
      %s108 = int_to_ptr.vmem [resolvable:$true] %s107
      %113 = dma.hbm_to_vmem [thread:$0]  %s12, 32, %s108, [#allocation12], 16, 16, 1
    $region53: #{tpu_custom_call.1} parent=1 // pred_fallthru
      _
    // Predicated region
    $region54: #{tpu_custom_call.1} parent=1 // pred_check
      _
    $region55: #{tpu_custom_call.1} parent=1 // pred_check_branch
      %115 = sbr.rel (0) target = $region57
    $region56: #{tpu_custom_call.1} parent=1 // pred_region
      %s117 = ssub.s32 32, 32
      %118 = vsyncadd [#allocation12], %s117
      %s119 = sshll.u32 [#allocation13], 4
      %s120 = int_to_ptr.vmem [resolvable:$true] %s119
      %125 = dma.hbm_to_vmem [thread:$0]  %s13, 32, %s120, [#allocation12], 16, 16, 1
    $region57: #{tpu_custom_call.1} parent=1 // pred_fallthru
      _
    // Predicated region
    $region58: #{tpu_custom_call.1} parent=1 // pred_check
      _
    $region59: #{tpu_custom_call.1} parent=1 // pred_check_branch
      %127 = sbr.rel (0) target = $region61
    $region60: #{tpu_custom_call.1} parent=1 // pred_region
      _
    $region61: #{tpu_custom_call.1} parent=1 // pred_fallthru
      _
    // Predicated region
    $region62: #{tpu_custom_call.1} parent=1 // pred_check
      _
    $region63: #{tpu_custom_call.1} parent=1 // pred_check_branch
      %129 = sbr.rel (0) target = $region65
    $region64: #{tpu_custom_call.1} parent=1 // pred_region
      %s131 = ssub.s32 512, 512
      %132 = vsyncadd [#allocation15], %s131
      %s133 = sshll.u32 [#allocation14], 4
      %s134 = int_to_ptr.vmem [resolvable:$true] %s133
      %139 = dma.hbm_to_vmem [thread:$0]  %s15, 512, %s134, [#allocation15], 128, 128, 8
    $region65: #{tpu_custom_call.1} parent=1 // pred_fallthru
      _
    // Predicated region
    $region66: #{tpu_custom_call.1} parent=1 // pred_check
      _
    $region67: #{tpu_custom_call.1} parent=1 // pred_check_branch
      %141 = sbr.rel (0) target = $region69
    $region68: #{tpu_custom_call.1} parent=1 // pred_region
      _
    $region69: #{tpu_custom_call.1} parent=1 // pred_fallthru
      _
    // Predicated region
    $region70: #{tpu_custom_call.1} parent=1 // pred_check
      _
    $region71: #{tpu_custom_call.1} parent=1 // pred_check_branch
      %143 = sbr.rel (0) target = $region73
    $region72: #{tpu_custom_call.1} parent=1 // pred_region
      %s145 = ssub.s32 1024, 1024
      %146 = vsyncadd [#allocation15], %s145
      %s147 = sshll.u32 [#allocation16], 4
      %s148 = int_to_ptr.vmem [resolvable:$true] %s147
      %153 = dma.hbm_to_vmem [thread:$0]  %s17, 1024, %s148, [#allocation15], 128, 128, 8
    $region73: #{tpu_custom_call.1} parent=1 // pred_fallthru
      _
    // Predicated region
    $region74: #{tpu_custom_call.1} parent=1 // pred_check
      _
    $region75: #{tpu_custom_call.1} parent=1 // pred_check_branch
      %155 = sbr.rel (0) target = $region77
    $region76: #{tpu_custom_call.1} parent=1 // pred_region
      _
    $region77: #{tpu_custom_call.1} parent=1 // pred_fallthru
      _
    // Predicated region
    $region78: #{tpu_custom_call.1} parent=1 // pred_check
      _
    $region79: #{tpu_custom_call.1} parent=1 // pred_check_branch
      %157 = sbr.rel (0) target = $region81
    $region80: #{tpu_custom_call.1} parent=1 // pred_region
      %158 = dma.done [#allocation3], 256
    $region81: #{tpu_custom_call.1} parent=1 // pred_fallthru
      _
    // Predicated region
    $region82: #{tpu_custom_call.1} parent=1 // pred_check
      _
    $region83: #{tpu_custom_call.1} parent=1 // pred_check_branch
      %160 = sbr.rel (0) target = $region85
    $region84: #{tpu_custom_call.1} parent=1 // pred_region
      %161 = dma.done [#allocation6], 16
    $region85: #{tpu_custom_call.1} parent=1 // pred_fallthru
      _
    // Predicated region
    $region86: #{tpu_custom_call.1} parent=1 // pred_check
      _
    $region87: #{tpu_custom_call.1} parent=1 // pred_check_branch
      %163 = sbr.rel (0) target = $region89
    $region88: #{tpu_custom_call.1} parent=1 // pred_region
      %164 = dma.done [#allocation6], 32
    $region89: #{tpu_custom_call.1} parent=1 // pred_fallthru
      _
    // Predicated region
    $region90: #{tpu_custom_call.1} parent=1 // pred_check
      _
    $region91: #{tpu_custom_call.1} parent=1 // pred_check_branch
      %166 = sbr.rel (0) target = $region93
    $region92: #{tpu_custom_call.1} parent=1 // pred_region
      %167 = dma.done [#allocation9], 32
    $region93: #{tpu_custom_call.1} parent=1 // pred_fallthru
      _
    // Predicated region
    $region94: #{tpu_custom_call.1} parent=1 // pred_check
      _
    $region95: #{tpu_custom_call.1} parent=1 // pred_check_branch
      %169 = sbr.rel (0) target = $region97
    $region96: #{tpu_custom_call.1} parent=1 // pred_region
      %170 = dma.done [#allocation9], 32
    $region97: #{tpu_custom_call.1} parent=1 // pred_fallthru
      _
    // Predicated region
    $region98: #{tpu_custom_call.1} parent=1 // pred_check
      _
    $region99: #{tpu_custom_call.1} parent=1 // pred_check_branch
      %172 = sbr.rel (0) target = $region101
    $region100: #{tpu_custom_call.1} parent=1 // pred_region
      %173 = dma.done [#allocation12], 32
    $region101: #{tpu_custom_call.1} parent=1 // pred_fallthru
      _
    // Predicated region
    $region102: #{tpu_custom_call.1} parent=1 // pred_check
      _
    $region103: #{tpu_custom_call.1} parent=1 // pred_check_branch
      %175 = sbr.rel (0) target = $region105
    $region104: #{tpu_custom_call.1} parent=1 // pred_region
      %176 = dma.done [#allocation12], 32
    $region105: #{tpu_custom_call.1} parent=1 // pred_fallthru
      _
    // Predicated region
    $region106: #{tpu_custom_call.1} parent=1 // pred_check
      _
    $region107: #{tpu_custom_call.1} parent=1 // pred_check_branch
      %178 = sbr.rel (0) target = $region109
    $region108: #{tpu_custom_call.1} parent=1 // pred_region
      %179 = dma.done [#allocation15], 512
    $region109: #{tpu_custom_call.1} parent=1 // pred_fallthru
      _
    // Predicated region
    $region110: #{tpu_custom_call.1} parent=1 // pred_check
      _
    $region111: #{tpu_custom_call.1} parent=1 // pred_check_branch
      %181 = sbr.rel (0) target = $region113
    $region112: #{tpu_custom_call.1} parent=1 // pred_region
      %182 = dma.done [#allocation15], 1024
    $region113: #{tpu_custom_call.1} parent=1 // pred_fallthru
      _
    %v183 = vld [vmem:[%s0] sm:$0xff]
    %v184 = vld [vmem:[%s0 + $0x8] sm:$0xff]
    %v185 = vld [vmem:[%s0 + $0x10] sm:$0xff]
    %v186 = vld [vmem:[%s0 + $0x18] sm:$0xff]
    %v187 = vld [vmem:[#allocation2] sm:$0xff]
    %v188 = vld [vmem:[#allocation2 + $0x8] sm:$0x1]
    %v189 = vld [vmem:[#allocation5] sm:$0x1]
    %v191 = vlaneseq
    %v192 = vshrl.u32 %v191, 7
    %v193 = vsub.s32 0, %v192
    %v194 = vrot.slane %v189, %v193
    %vm196 = vcmask 72704
    %v198 = vsel %vm196, %v183, 0
    %v201 = vsel %vm196, %v184, 0
    %v204 = vsel %vm196, %v185, 0
    %v207 = vsel %vm196, %v186, 0
    %vm209 = vcmask 1040384
    %v211 = vsel %vm209, %v188, 0
    %213 = vmatprep.subr.mxu0 0.0
    %214 = vmatpush1.msra.mxu0 0.0
    %215 = vmatprep.subr.mxu0 0.0
    %216 = vmatpush1.msra.mxu0 0.0
    %217 = vmatprep.subr.mxu0 0.0
    %218 = vmatpush1.msra.mxu0 0.0
    %219 = vmatprep.subr.mxu0 0.0
    %220 = vmatpush1.msra.mxu0 0.0
    %221 = vmatprep.subr.mxu0 0.0
    %222 = vmatpush1.msra.mxu0 0.0
    %223 = vmatprep.subr.mxu0 0.0
    %224 = vmatpush1.msra.mxu0 0.0
    %225 = vmatprep.subr.mxu0 0.0
    %226 = vmatpush1.msra.mxu0 0.0
    %227 = vmatprep.subr.mxu0 0.0
    %228 = vmatpush1.msra.mxu0 0.0
    %229 = vmatprep.subr.mxu0 0.0
    %230 = vmatpush1.msra.mxu0 0.0
    %231 = vmatprep.subr.mxu0 0.0
    %232 = vmatpush1.msra.mxu0 0.0
    %233 = vmatprep.subr.mxu0 0.0
    %234 = vmatpush1.msra.mxu0 0.0
    %235 = vmatprep.subr.mxu0 0.0
    %236 = vmatpush1.msra.mxu0 0.0
    %237 = vmatprep.subr.mxu0 0.0
    %238 = vmatpush1.msra.mxu0 0.0
    %239 = vmatprep.subr.mxu0 0.0
    %240 = vmatpush1.msra.mxu0 0.0
    %241 = vmatprep.subr.mxu0 0.0
    %242 = vmatpush1.msra.mxu0 %v211
    %243 = vmatprep.subr.mxu0 0.0
    %244 = vmatpush1.msra.mxu0 %v187
    %245 = vmatprep.subr.mxu0 0.0
    %246 = vmatpush2.msra.mxu0 0.0
    %247 = vmatprep.subr.mxu0 0.0
    %248 = vmatpush2.msra.mxu0 0.0
    %249 = vmatprep.subr.mxu0 0.0
    %250 = vmatpush2.msra.mxu0 0.0
    %251 = vmatprep.subr.mxu0 0.0
    %252 = vmatpush2.msra.mxu0 0.0
    %253 = vmatprep.subr.mxu0 0.0
    %254 = vmatpush2.msra.mxu0 0.0
    %255 = vmatprep.subr.mxu0 0.0
    %256 = vmatpush2.msra.mxu0 0.0
    %257 = vmatprep.subr.mxu0 0.0
    %258 = vmatpush2.msra.mxu0 0.0
    %259 = vmatprep.subr.mxu0 0.0
    %260 = vmatpush2.msra.mxu0 0.0
    %261 = vmatprep.subr.mxu0 0.0
    %262 = vmatpush2.msra.mxu0 0.0
    %263 = vmatprep.subr.mxu0 0.0
    %264 = vmatpush2.msra.mxu0 0.0
    %265 = vmatprep.subr.mxu0 0.0
    %266 = vmatpush2.msra.mxu0 0.0
    %267 = vmatprep.subr.mxu0 0.0
    %268 = vmatpush2.msra.mxu0 0.0
    %269 = vmatprep.subr.mxu0 0.0
    %270 = vmatpush2.msra.mxu0 0.0
    %271 = vmatprep.subr.mxu0 0.0
    %272 = vmatpush2.msra.mxu0 0.0
    %273 = vmatprep.subr.mxu0 0.0
    %274 = vmatpush2.msra.mxu0 0.0
    %275 = vmatprep.subr.mxu0 0.0
    %276 = vmatpush2.msra.mxu0 0.0
    %277 = vmatprep.mubr.f32.mxu0 0.0
    %278 = vmatmul.mubr.f32.gmra.mxu0 %v198
    %v279 = vpop.f32.mrf.mxu0
    %v280 = vadd.f32 %v194, %v279
    %v281 = vpop.f32.mrf.mxu0
    %282 = vmatprep.mubr.f32.mxu0 0.0
    %283 = vmatmul.mubr.f32.gmra.mxu0 %v201
    %v284 = vpop.f32.mrf.mxu0
    %v285 = vadd.f32 %v194, %v284
    %v286 = vpop.f32.mrf.mxu0
    %287 = vmatprep.mubr.f32.mxu0 0.0
    %288 = vmatmul.mubr.f32.gmra.mxu0 %v204
    %v289 = vpop.f32.mrf.mxu0
    %v290 = vadd.f32 %v194, %v289
    %v291 = vpop.f32.mrf.mxu0
    %292 = vmatprep.mubr.f32.mxu0 0.0
    %293 = vmatmul.mubr.f32.gmra.mxu0 %v207
    %v294 = vpop.f32.mrf.mxu0
    %v295 = vadd.f32 %v194, %v294
    %v296 = vpop.f32.mrf.mxu0
    %297 = vdwg.mxu0
    %v298 = vld [vmem:[%s3] sm:$0xff]
    %v299 = vld [vmem:[%s3 + $0x8] sm:$0xff]
    %v300 = vld [vmem:[%s3 + $0x10] sm:$0xff]
    %v301 = vld [vmem:[%s3 + $0x18] sm:$0xff]
    %v302 = vld [vmem:[%s4] sm:$0x1]
    %v304 = vlaneseq
    %v305 = vshrl.u32 %v304, 7
    %v306 = vsub.s32 0, %v305
    %v307 = vrot.slane %v302, %v306
    %vm309 = vcmask 261120
    %v311 = vsel %vm309, %v280, 0
    %v314 = vsel %vm309, %v285, 0
    %v317 = vsel %vm309, %v290, 0
    %v320 = vsel %vm309, %v295, 0
    %322 = vmatprep.subr.mxu0 0.0
    %323 = vmatpush1.msra.mxu0 0.0
    %324 = vmatprep.subr.mxu0 0.0
    %325 = vmatpush1.msra.mxu0 0.0
    %326 = vmatprep.subr.mxu0 0.0
    %327 = vmatpush1.msra.mxu0 0.0
    %328 = vmatprep.subr.mxu0 0.0
    %329 = vmatpush1.msra.mxu0 0.0
    %330 = vmatprep.subr.mxu0 0.0
    %331 = vmatpush1.msra.mxu0 0.0
    %332 = vmatprep.subr.mxu0 0.0
    %333 = vmatpush1.msra.mxu0 0.0
    %334 = vmatprep.subr.mxu0 0.0
    %335 = vmatpush1.msra.mxu0 0.0
    %336 = vmatprep.subr.mxu0 0.0
    %337 = vmatpush1.msra.mxu0 0.0
    %338 = vmatprep.subr.mxu0 0.0
    %339 = vmatpush1.msra.mxu0 0.0
    %340 = vmatprep.subr.mxu0 0.0
    %341 = vmatpush1.msra.mxu0 0.0
    %342 = vmatprep.subr.mxu0 0.0
    %343 = vmatpush1.msra.mxu0 0.0
    %344 = vmatprep.subr.mxu0 0.0
    %345 = vmatpush1.msra.mxu0 0.0
    %346 = vmatprep.subr.mxu0 0.0
    %347 = vmatpush1.msra.mxu0 %v301
    %348 = vmatprep.subr.mxu0 0.0
    %349 = vmatpush1.msra.mxu0 %v300
    %350 = vmatprep.subr.mxu0 0.0
    %351 = vmatpush1.msra.mxu0 %v299
    %352 = vmatprep.subr.mxu0 0.0
    %353 = vmatpush1.msra.mxu0 %v298
    %354 = vmatprep.subr.mxu0 0.0
    %355 = vmatpush2.msra.mxu0 0.0
    %356 = vmatprep.subr.mxu0 0.0
    %357 = vmatpush2.msra.mxu0 0.0
    %358 = vmatprep.subr.mxu0 0.0
    %359 = vmatpush2.msra.mxu0 0.0
    %360 = vmatprep.subr.mxu0 0.0
    %361 = vmatpush2.msra.mxu0 0.0
    %362 = vmatprep.subr.mxu0 0.0
    %363 = vmatpush2.msra.mxu0 0.0
    %364 = vmatprep.subr.mxu0 0.0
    %365 = vmatpush2.msra.mxu0 0.0
    %366 = vmatprep.subr.mxu0 0.0
    %367 = vmatpush2.msra.mxu0 0.0
    %368 = vmatprep.subr.mxu0 0.0
    %369 = vmatpush2.msra.mxu0 0.0
    %370 = vmatprep.subr.mxu0 0.0
    %371 = vmatpush2.msra.mxu0 0.0
    %372 = vmatprep.subr.mxu0 0.0
    %373 = vmatpush2.msra.mxu0 0.0
    %374 = vmatprep.subr.mxu0 0.0
    %375 = vmatpush2.msra.mxu0 0.0
    %376 = vmatprep.subr.mxu0 0.0
    %377 = vmatpush2.msra.mxu0 0.0
    %378 = vmatprep.subr.mxu0 0.0
    %379 = vmatpush2.msra.mxu0 0.0
    %380 = vmatprep.subr.mxu0 0.0
    %381 = vmatpush2.msra.mxu0 0.0
    %382 = vmatprep.subr.mxu0 0.0
    %383 = vmatpush2.msra.mxu0 0.0
    %384 = vmatprep.subr.mxu0 0.0
    %385 = vmatpush2.msra.mxu0 0.0
    %386 = vmatprep.mubr.f32.mxu0 0.0
    %387 = vmatmul.mubr.f32.gmra.mxu0 %v311
    %v388 = vpop.f32.mrf.mxu0
    %v389 = vadd.f32 %v307, %v388
    %v390 = vpop.f32.mrf.mxu0
    %391 = vmatprep.mubr.f32.mxu0 0.0
    %392 = vmatmul.mubr.f32.gmra.mxu0 %v314
    %v393 = vpop.f32.mrf.mxu0
    %v394 = vadd.f32 %v307, %v393
    %v395 = vpop.f32.mrf.mxu0
    %396 = vmatprep.mubr.f32.mxu0 0.0
    %397 = vmatmul.mubr.f32.gmra.mxu0 %v317
    %v398 = vpop.f32.mrf.mxu0
    %v399 = vadd.f32 %v307, %v398
    %v400 = vpop.f32.mrf.mxu0
    %401 = vmatprep.mubr.f32.mxu0 0.0
    %402 = vmatmul.mubr.f32.gmra.mxu0 %v320
    %v403 = vpop.f32.mrf.mxu0
    %v404 = vadd.f32 %v307, %v403
    %v405 = vpop.f32.mrf.mxu0
    %406 = vdwg.mxu0
    %408 = vrot.lane.b32.xlu0 %v389, 96
    %v409 = vpop.permute.xlu0 %408
    %vm410 = vcmask 64512
    %v411 = vsel %vm410, %v389, 0
    %v413 = vsel %vm410, %v409, 0
    %415 = vmatprep.subr.mxu0 0.0
    %416 = vmatpush1.xpose.msra.mxu0 0.0
    %417 = vmatprep.subr.mxu0 0.0
    %418 = vmatpush1.xpose.msra.mxu0 0.0
    %419 = vmatprep.subr.mxu0 0.0
    %420 = vmatpush1.xpose.msra.mxu0 0.0
    %421 = vmatprep.subr.mxu0 0.0
    %422 = vmatpush1.xpose.msra.mxu0 0.0
    %423 = vmatprep.subr.mxu0 0.0
    %424 = vmatpush1.xpose.msra.mxu0 0.0
    %425 = vmatprep.subr.mxu0 0.0
    %426 = vmatpush1.xpose.msra.mxu0 0.0
    %427 = vmatprep.subr.mxu0 0.0
    %428 = vmatpush1.xpose.msra.mxu0 0.0
    %429 = vmatprep.subr.mxu0 0.0
    %430 = vmatpush1.xpose.msra.mxu0 0.0
    %431 = vmatprep.subr.mxu0 0.0
    %432 = vmatpush1.xpose.msra.mxu0 0.0
    %433 = vmatprep.subr.mxu0 0.0
    %434 = vmatpush1.xpose.msra.mxu0 0.0
    %435 = vmatprep.subr.mxu0 0.0
    %436 = vmatpush1.xpose.msra.mxu0 0.0
    %437 = vmatprep.subr.mxu0 0.0
    %438 = vmatpush1.xpose.msra.mxu0 0.0
    %439 = vmatprep.subr.mxu0 0.0
    %440 = vmatpush1.xpose.msra.mxu0 0.0
    %441 = vmatprep.subr.mxu0 0.0
    %442 = vmatpush1.xpose.msra.mxu0 0.0
    %443 = vmatprep.subr.mxu0 0.0
    %444 = vmatpush1.xpose.msra.mxu0 0.0
    %445 = vmatprep.subr.mxu0 0.0
    %446 = vmatpush1.xpose.msra.mxu0 %v413
    %447 = vmatprep.subr.mxu0 0.0
    %448 = vmatpush2.xpose.msra.mxu0 0.0
    %449 = vmatprep.subr.mxu0 0.0
    %450 = vmatpush2.xpose.msra.mxu0 0.0
    %451 = vmatprep.subr.mxu0 0.0
    %452 = vmatpush2.xpose.msra.mxu0 0.0
    %453 = vmatprep.subr.mxu0 0.0
    %454 = vmatpush2.xpose.msra.mxu0 0.0
    %455 = vmatprep.subr.mxu0 0.0
    %456 = vmatpush2.xpose.msra.mxu0 0.0
    %457 = vmatprep.subr.mxu0 0.0
    %458 = vmatpush2.xpose.msra.mxu0 0.0
    %459 = vmatprep.subr.mxu0 0.0
    %460 = vmatpush2.xpose.msra.mxu0 0.0
    %461 = vmatprep.subr.mxu0 0.0
    %462 = vmatpush2.xpose.msra.mxu0 0.0
    %463 = vmatprep.subr.mxu0 0.0
    %464 = vmatpush2.xpose.msra.mxu0 0.0
    %465 = vmatprep.subr.mxu0 0.0
    %466 = vmatpush2.xpose.msra.mxu0 0.0
    %467 = vmatprep.subr.mxu0 0.0
    %468 = vmatpush2.xpose.msra.mxu0 0.0
    %469 = vmatprep.subr.mxu0 0.0
    %470 = vmatpush2.xpose.msra.mxu0 0.0
    %471 = vmatprep.subr.mxu0 0.0
    %472 = vmatpush2.xpose.msra.mxu0 0.0
    %473 = vmatprep.subr.mxu0 0.0
    %474 = vmatpush2.xpose.msra.mxu0 0.0
    %475 = vmatprep.subr.mxu0 0.0
    %476 = vmatpush2.xpose.msra.mxu0 0.0
    %477 = vmatprep.subr.mxu0 0.0
    %478 = vmatpush2.xpose.msra.mxu0 0.0
    %479 = vmatprep.mubr.f32.mxu0 0.0
    %480 = vmatmul.mubr.f32.gmra.mxu0 %v411
    %v481 = vpop.f32.mrf.mxu0
    %v482 = vadd.f32 0.0, %v481
    %v483 = vpop.f32.mrf.mxu0
    %484 = vdwg.mxu0
    %486 = vrot.lane.b32.xlu0 %v394, 96
    %v487 = vpop.permute.xlu0 %486
    %v488 = vsel %vm410, %v394, 0
    %v490 = vsel %vm410, %v487, 0
    %492 = vmatprep.subr.mxu0 0.0
    %493 = vmatpush1.xpose.msra.mxu0 0.0
    %494 = vmatprep.subr.mxu0 0.0
    %495 = vmatpush1.xpose.msra.mxu0 0.0
    %496 = vmatprep.subr.mxu0 0.0
    %497 = vmatpush1.xpose.msra.mxu0 0.0
    %498 = vmatprep.subr.mxu0 0.0
    %499 = vmatpush1.xpose.msra.mxu0 0.0
    %500 = vmatprep.subr.mxu0 0.0
    %501 = vmatpush1.xpose.msra.mxu0 0.0
    %502 = vmatprep.subr.mxu0 0.0
    %503 = vmatpush1.xpose.msra.mxu0 0.0
    %504 = vmatprep.subr.mxu0 0.0
    %505 = vmatpush1.xpose.msra.mxu0 0.0
    %506 = vmatprep.subr.mxu0 0.0
    %507 = vmatpush1.xpose.msra.mxu0 0.0
    %508 = vmatprep.subr.mxu0 0.0
    %509 = vmatpush1.xpose.msra.mxu0 0.0
    %510 = vmatprep.subr.mxu0 0.0
    %511 = vmatpush1.xpose.msra.mxu0 0.0
    %512 = vmatprep.subr.mxu0 0.0
    %513 = vmatpush1.xpose.msra.mxu0 0.0
    %514 = vmatprep.subr.mxu0 0.0
    %515 = vmatpush1.xpose.msra.mxu0 0.0
    %516 = vmatprep.subr.mxu0 0.0
    %517 = vmatpush1.xpose.msra.mxu0 0.0
    %518 = vmatprep.subr.mxu0 0.0
    %519 = vmatpush1.xpose.msra.mxu0 0.0
    %520 = vmatprep.subr.mxu0 0.0
    %521 = vmatpush1.xpose.msra.mxu0 0.0
    %522 = vmatprep.subr.mxu0 0.0
    %523 = vmatpush1.xpose.msra.mxu0 %v490
    %524 = vmatprep.subr.mxu0 0.0
    %525 = vmatpush2.xpose.msra.mxu0 0.0
    %526 = vmatprep.subr.mxu0 0.0
    %527 = vmatpush2.xpose.msra.mxu0 0.0
    %528 = vmatprep.subr.mxu0 0.0
    %529 = vmatpush2.xpose.msra.mxu0 0.0
    %530 = vmatprep.subr.mxu0 0.0
    %531 = vmatpush2.xpose.msra.mxu0 0.0
    %532 = vmatprep.subr.mxu0 0.0
    %533 = vmatpush2.xpose.msra.mxu0 0.0
    %534 = vmatprep.subr.mxu0 0.0
    %535 = vmatpush2.xpose.msra.mxu0 0.0
    %536 = vmatprep.subr.mxu0 0.0
    %537 = vmatpush2.xpose.msra.mxu0 0.0
    %538 = vmatprep.subr.mxu0 0.0
    %539 = vmatpush2.xpose.msra.mxu0 0.0
    %540 = vmatprep.subr.mxu0 0.0
    %541 = vmatpush2.xpose.msra.mxu0 0.0
    %542 = vmatprep.subr.mxu0 0.0
    %543 = vmatpush2.xpose.msra.mxu0 0.0
    %544 = vmatprep.subr.mxu0 0.0
    %545 = vmatpush2.xpose.msra.mxu0 0.0
    %546 = vmatprep.subr.mxu0 0.0
    %547 = vmatpush2.xpose.msra.mxu0 0.0
    %548 = vmatprep.subr.mxu0 0.0
    %549 = vmatpush2.xpose.msra.mxu0 0.0
    %550 = vmatprep.subr.mxu0 0.0
    %551 = vmatpush2.xpose.msra.mxu0 0.0
    %552 = vmatprep.subr.mxu0 0.0
    %553 = vmatpush2.xpose.msra.mxu0 0.0
    %554 = vmatprep.subr.mxu0 0.0
    %555 = vmatpush2.xpose.msra.mxu0 0.0
    %556 = vmatprep.mubr.f32.mxu0 0.0
    %557 = vmatmul.mubr.f32.gmra.mxu0 %v488
    %v558 = vpop.f32.mrf.mxu0
    %v559 = vadd.f32 0.0, %v558
    %v560 = vpop.f32.mrf.mxu0
    %561 = vdwg.mxu0
    %563 = vrot.lane.b32.xlu0 %v399, 96
    %v564 = vpop.permute.xlu0 %563
    %v565 = vsel %vm410, %v399, 0
    %v567 = vsel %vm410, %v564, 0
    %569 = vmatprep.subr.mxu0 0.0
    %570 = vmatpush1.xpose.msra.mxu0 0.0
    %571 = vmatprep.subr.mxu0 0.0
    %572 = vmatpush1.xpose.msra.mxu0 0.0
    %573 = vmatprep.subr.mxu0 0.0
    %574 = vmatpush1.xpose.msra.mxu0 0.0
    %575 = vmatprep.subr.mxu0 0.0
    %576 = vmatpush1.xpose.msra.mxu0 0.0
    %577 = vmatprep.subr.mxu0 0.0
    %578 = vmatpush1.xpose.msra.mxu0 0.0
    %579 = vmatprep.subr.mxu0 0.0
    %580 = vmatpush1.xpose.msra.mxu0 0.0
    %581 = vmatprep.subr.mxu0 0.0
    %582 = vmatpush1.xpose.msra.mxu0 0.0
    %583 = vmatprep.subr.mxu0 0.0
    %584 = vmatpush1.xpose.msra.mxu0 0.0
    %585 = vmatprep.subr.mxu0 0.0
    %586 = vmatpush1.xpose.msra.mxu0 0.0
    %587 = vmatprep.subr.mxu0 0.0
    %588 = vmatpush1.xpose.msra.mxu0 0.0
    %589 = vmatprep.subr.mxu0 0.0
    %590 = vmatpush1.xpose.msra.mxu0 0.0
    %591 = vmatprep.subr.mxu0 0.0
    %592 = vmatpush1.xpose.msra.mxu0 0.0
    %593 = vmatprep.subr.mxu0 0.0
    %594 = vmatpush1.xpose.msra.mxu0 0.0
    %595 = vmatprep.subr.mxu0 0.0
    %596 = vmatpush1.xpose.msra.mxu0 0.0
    %597 = vmatprep.subr.mxu0 0.0
    %598 = vmatpush1.xpose.msra.mxu0 0.0
    %599 = vmatprep.subr.mxu0 0.0
    %600 = vmatpush1.xpose.msra.mxu0 %v567
    %601 = vmatprep.subr.mxu0 0.0
    %602 = vmatpush2.xpose.msra.mxu0 0.0
    %603 = vmatprep.subr.mxu0 0.0
    %604 = vmatpush2.xpose.msra.mxu0 0.0
    %605 = vmatprep.subr.mxu0 0.0
    %606 = vmatpush2.xpose.msra.mxu0 0.0
    %607 = vmatprep.subr.mxu0 0.0
    %608 = vmatpush2.xpose.msra.mxu0 0.0
    %609 = vmatprep.subr.mxu0 0.0
    %610 = vmatpush2.xpose.msra.mxu0 0.0
    %611 = vmatprep.subr.mxu0 0.0
    %612 = vmatpush2.xpose.msra.mxu0 0.0
    %613 = vmatprep.subr.mxu0 0.0
    %614 = vmatpush2.xpose.msra.mxu0 0.0
    %615 = vmatprep.subr.mxu0 0.0
    %616 = vmatpush2.xpose.msra.mxu0 0.0
    %617 = vmatprep.subr.mxu0 0.0
    %618 = vmatpush2.xpose.msra.mxu0 0.0
    %619 = vmatprep.subr.mxu0 0.0
    %620 = vmatpush2.xpose.msra.mxu0 0.0
    %621 = vmatprep.subr.mxu0 0.0
    %622 = vmatpush2.xpose.msra.mxu0 0.0
    %623 = vmatprep.subr.mxu0 0.0
    %624 = vmatpush2.xpose.msra.mxu0 0.0
    %625 = vmatprep.subr.mxu0 0.0
    %626 = vmatpush2.xpose.msra.mxu0 0.0
    %627 = vmatprep.subr.mxu0 0.0
    %628 = vmatpush2.xpose.msra.mxu0 0.0
    %629 = vmatprep.subr.mxu0 0.0
    %630 = vmatpush2.xpose.msra.mxu0 0.0
    %631 = vmatprep.subr.mxu0 0.0
    %632 = vmatpush2.xpose.msra.mxu0 0.0
    %633 = vmatprep.mubr.f32.mxu0 0.0
    %634 = vmatmul.mubr.f32.gmra.mxu0 %v565
    %v635 = vpop.f32.mrf.mxu0
    %v636 = vadd.f32 0.0, %v635
    %v637 = vpop.f32.mrf.mxu0
    %638 = vdwg.mxu0
    %640 = vrot.lane.b32.xlu0 %v404, 96
    %v641 = vpop.permute.xlu0 %640
    %v642 = vsel %vm410, %v404, 0
    %v644 = vsel %vm410, %v641, 0
    %646 = vmatprep.subr.mxu0 0.0
    %647 = vmatpush1.xpose.msra.mxu0 0.0
    %648 = vmatprep.subr.mxu0 0.0
    %649 = vmatpush1.xpose.msra.mxu0 0.0
    %650 = vmatprep.subr.mxu0 0.0
    %651 = vmatpush1.xpose.msra.mxu0 0.0
    %652 = vmatprep.subr.mxu0 0.0
    %653 = vmatpush1.xpose.msra.mxu0 0.0
    %654 = vmatprep.subr.mxu0 0.0
    %655 = vmatpush1.xpose.msra.mxu0 0.0
    %656 = vmatprep.subr.mxu0 0.0
    %657 = vmatpush1.xpose.msra.mxu0 0.0
    %658 = vmatprep.subr.mxu0 0.0
    %659 = vmatpush1.xpose.msra.mxu0 0.0
    %660 = vmatprep.subr.mxu0 0.0
    %661 = vmatpush1.xpose.msra.mxu0 0.0
    %662 = vmatprep.subr.mxu0 0.0
    %663 = vmatpush1.xpose.msra.mxu0 0.0
    %664 = vmatprep.subr.mxu0 0.0
    %665 = vmatpush1.xpose.msra.mxu0 0.0
    %666 = vmatprep.subr.mxu0 0.0
    %667 = vmatpush1.xpose.msra.mxu0 0.0
    %668 = vmatprep.subr.mxu0 0.0
    %669 = vmatpush1.xpose.msra.mxu0 0.0
    %670 = vmatprep.subr.mxu0 0.0
    %671 = vmatpush1.xpose.msra.mxu0 0.0
    %672 = vmatprep.subr.mxu0 0.0
    %673 = vmatpush1.xpose.msra.mxu0 0.0
    %674 = vmatprep.subr.mxu0 0.0
    %675 = vmatpush1.xpose.msra.mxu0 0.0
    %676 = vmatprep.subr.mxu0 0.0
    %677 = vmatpush1.xpose.msra.mxu0 %v644
    %678 = vmatprep.subr.mxu0 0.0
    %679 = vmatpush2.xpose.msra.mxu0 0.0
    %680 = vmatprep.subr.mxu0 0.0
    %681 = vmatpush2.xpose.msra.mxu0 0.0
    %682 = vmatprep.subr.mxu0 0.0
    %683 = vmatpush2.xpose.msra.mxu0 0.0
    %684 = vmatprep.subr.mxu0 0.0
    %685 = vmatpush2.xpose.msra.mxu0 0.0
    %686 = vmatprep.subr.mxu0 0.0
    %687 = vmatpush2.xpose.msra.mxu0 0.0
    %688 = vmatprep.subr.mxu0 0.0
    %689 = vmatpush2.xpose.msra.mxu0 0.0
    %690 = vmatprep.subr.mxu0 0.0
    %691 = vmatpush2.xpose.msra.mxu0 0.0
    %692 = vmatprep.subr.mxu0 0.0
    %693 = vmatpush2.xpose.msra.mxu0 0.0
    %694 = vmatprep.subr.mxu0 0.0
    %695 = vmatpush2.xpose.msra.mxu0 0.0
    %696 = vmatprep.subr.mxu0 0.0
    %697 = vmatpush2.xpose.msra.mxu0 0.0
    %698 = vmatprep.subr.mxu0 0.0
    %699 = vmatpush2.xpose.msra.mxu0 0.0
    %700 = vmatprep.subr.mxu0 0.0
    %701 = vmatpush2.xpose.msra.mxu0 0.0
    %702 = vmatprep.subr.mxu0 0.0
    %703 = vmatpush2.xpose.msra.mxu0 0.0
    %704 = vmatprep.subr.mxu0 0.0
    %705 = vmatpush2.xpose.msra.mxu0 0.0
    %706 = vmatprep.subr.mxu0 0.0
    %707 = vmatpush2.xpose.msra.mxu0 0.0
    %708 = vmatprep.subr.mxu0 0.0
    %709 = vmatpush2.xpose.msra.mxu0 0.0
    %710 = vmatprep.mubr.f32.mxu0 0.0
    %711 = vmatmul.mubr.f32.gmra.mxu0 %v642
    %v712 = vpop.f32.mrf.mxu0
    %v713 = vadd.f32 0.0, %v712
    %v714 = vpop.f32.mrf.mxu0
    %715 = vdwg.mxu0
    %v716 = vsel %vm410, %v482, -inf
    %717 = vmax.xlane.f32.xlu0 %v716
    %v718 = vpop.xlane.xlu0 %717
    %v719 = vsel %vm410, %v559, -inf
    %720 = vmax.xlane.f32.xlu0 %v719
    %v721 = vpop.xlane.xlu0 %720
    %v722 = vsel %vm410, %v636, -inf
    %723 = vmax.xlane.f32.xlu0 %v722
    %v724 = vpop.xlane.xlu0 %723
    %v725 = vsel %vm410, %v713, -inf
    %726 = vmax.xlane.f32.xlu0 %v725
    %v727 = vpop.xlane.xlu0 %726
    %v728 = vsub.f32 %v482, %v718
    %v729 = vsub.f32 %v559, %v721
    %v730 = vsub.f32 %v636, %v724
    %v731 = vsub.f32 %v713, %v727
    %v732 = vmul.f32 %v728, 1.442695
    %v733 = vpow.pop %v732
    %v734 = vmul.f32 %v729, 1.442695
    %v735 = vpow.pop %v734
    %v736 = vmul.f32 %v730, 1.442695
    %v737 = vpow.pop %v736
    %v738 = vmul.f32 %v731, 1.442695
    %v739 = vpow.pop %v738
    %v740 = vsel %vm410, %v733, 0.0
    %741 = vadd.xlane.f32.xlu0 %v740
    %v742 = vpop.xlane.xlu0 %741
    %v743 = vsel %vm410, %v735, 0.0
    %744 = vadd.xlane.f32.xlu0 %v743
    %v745 = vpop.xlane.xlu0 %744
    %v746 = vsel %vm410, %v737, 0.0
    %747 = vadd.xlane.f32.xlu0 %v746
    %v748 = vpop.xlane.xlu0 %747
    %v749 = vsel %vm410, %v739, 0.0
    %750 = vadd.xlane.f32.xlu0 %v749
    %v751 = vpop.xlane.xlu0 %750
    %v752 = vrcp.pop %v742
    %v753 = vrcp.pop %v745
    %v754 = vrcp.pop %v748
    %v755 = vrcp.pop %v751
    %v756 = vmul.f32 %v733, %v752
    %v757 = vmul.f32 %v735, %v753
    %v758 = vmul.f32 %v737, %v754
    %v759 = vmul.f32 %v739, %v755
    %760 = vrot.lane.b32.xlu0 %v389, 64
    %v761 = vpop.permute.xlu0 %760
    %v764 = vsel %vm410, %v756, 0
    %766 = vmatprep.subr.mxu0 0.0
    %767 = vmatpush1.msra.mxu0 0.0
    %768 = vmatprep.subr.mxu0 0.0
    %769 = vmatpush1.msra.mxu0 0.0
    %770 = vmatprep.subr.mxu0 0.0
    %771 = vmatpush1.msra.mxu0 0.0
    %772 = vmatprep.subr.mxu0 0.0
    %773 = vmatpush1.msra.mxu0 0.0
    %774 = vmatprep.subr.mxu0 0.0
    %775 = vmatpush1.msra.mxu0 0.0
    %776 = vmatprep.subr.mxu0 0.0
    %777 = vmatpush1.msra.mxu0 0.0
    %778 = vmatprep.subr.mxu0 0.0
    %779 = vmatpush1.msra.mxu0 0.0
    %780 = vmatprep.subr.mxu0 0.0
    %781 = vmatpush1.msra.mxu0 0.0
    %782 = vmatprep.subr.mxu0 0.0
    %783 = vmatpush1.msra.mxu0 0.0
    %784 = vmatprep.subr.mxu0 0.0
    %785 = vmatpush1.msra.mxu0 0.0
    %786 = vmatprep.subr.mxu0 0.0
    %787 = vmatpush1.msra.mxu0 0.0
    %788 = vmatprep.subr.mxu0 0.0
    %789 = vmatpush1.msra.mxu0 0.0
    %790 = vmatprep.subr.mxu0 0.0
    %791 = vmatpush1.msra.mxu0 0.0
    %792 = vmatprep.subr.mxu0 0.0
    %793 = vmatpush1.msra.mxu0 0.0
    %794 = vmatprep.subr.mxu0 0.0
    %795 = vmatpush1.msra.mxu0 0.0
    %796 = vmatprep.subr.mxu0 0.0
    %797 = vmatpush1.msra.mxu0 %v761
    %798 = vmatprep.subr.mxu0 0.0
    %799 = vmatpush2.msra.mxu0 0.0
    %800 = vmatprep.subr.mxu0 0.0
    %801 = vmatpush2.msra.mxu0 0.0
    %802 = vmatprep.subr.mxu0 0.0
    %803 = vmatpush2.msra.mxu0 0.0
    %804 = vmatprep.subr.mxu0 0.0
    %805 = vmatpush2.msra.mxu0 0.0
    %806 = vmatprep.subr.mxu0 0.0
    %807 = vmatpush2.msra.mxu0 0.0
    %808 = vmatprep.subr.mxu0 0.0
    %809 = vmatpush2.msra.mxu0 0.0
    %810 = vmatprep.subr.mxu0 0.0
    %811 = vmatpush2.msra.mxu0 0.0
    %812 = vmatprep.subr.mxu0 0.0
    %813 = vmatpush2.msra.mxu0 0.0
    %814 = vmatprep.subr.mxu0 0.0
    %815 = vmatpush2.msra.mxu0 0.0
    %816 = vmatprep.subr.mxu0 0.0
    %817 = vmatpush2.msra.mxu0 0.0
    %818 = vmatprep.subr.mxu0 0.0
    %819 = vmatpush2.msra.mxu0 0.0
    %820 = vmatprep.subr.mxu0 0.0
    %821 = vmatpush2.msra.mxu0 0.0
    %822 = vmatprep.subr.mxu0 0.0
    %823 = vmatpush2.msra.mxu0 0.0
    %824 = vmatprep.subr.mxu0 0.0
    %825 = vmatpush2.msra.mxu0 0.0
    %826 = vmatprep.subr.mxu0 0.0
    %827 = vmatpush2.msra.mxu0 0.0
    %828 = vmatprep.subr.mxu0 0.0
    %829 = vmatpush2.msra.mxu0 0.0
    %830 = vmatprep.mubr.f32.mxu0 0.0
    %831 = vmatmul.mubr.f32.gmra.mxu0 %v764
    %v832 = vpop.f32.mrf.mxu0
    %v833 = vadd.f32 0.0, %v832
    %v834 = vpop.f32.mrf.mxu0
    %835 = vdwg.mxu0
    %836 = vrot.lane.b32.xlu0 %v394, 64
    %v837 = vpop.permute.xlu0 %836
    %v840 = vsel %vm410, %v757, 0
    %842 = vmatprep.subr.mxu0 0.0
    %843 = vmatpush1.msra.mxu0 0.0
    %844 = vmatprep.subr.mxu0 0.0
    %845 = vmatpush1.msra.mxu0 0.0
    %846 = vmatprep.subr.mxu0 0.0
    %847 = vmatpush1.msra.mxu0 0.0
    %848 = vmatprep.subr.mxu0 0.0
    %849 = vmatpush1.msra.mxu0 0.0
    %850 = vmatprep.subr.mxu0 0.0
    %851 = vmatpush1.msra.mxu0 0.0
    %852 = vmatprep.subr.mxu0 0.0
    %853 = vmatpush1.msra.mxu0 0.0
    %854 = vmatprep.subr.mxu0 0.0
    %855 = vmatpush1.msra.mxu0 0.0
    %856 = vmatprep.subr.mxu0 0.0
    %857 = vmatpush1.msra.mxu0 0.0
    %858 = vmatprep.subr.mxu0 0.0
    %859 = vmatpush1.msra.mxu0 0.0
    %860 = vmatprep.subr.mxu0 0.0
    %861 = vmatpush1.msra.mxu0 0.0
    %862 = vmatprep.subr.mxu0 0.0
    %863 = vmatpush1.msra.mxu0 0.0
    %864 = vmatprep.subr.mxu0 0.0
    %865 = vmatpush1.msra.mxu0 0.0
    %866 = vmatprep.subr.mxu0 0.0
    %867 = vmatpush1.msra.mxu0 0.0
    %868 = vmatprep.subr.mxu0 0.0
    %869 = vmatpush1.msra.mxu0 0.0
    %870 = vmatprep.subr.mxu0 0.0
    %871 = vmatpush1.msra.mxu0 0.0
    %872 = vmatprep.subr.mxu0 0.0
    %873 = vmatpush1.msra.mxu0 %v837
    %874 = vmatprep.subr.mxu0 0.0
    %875 = vmatpush2.msra.mxu0 0.0
    %876 = vmatprep.subr.mxu0 0.0
    %877 = vmatpush2.msra.mxu0 0.0
    %878 = vmatprep.subr.mxu0 0.0
    %879 = vmatpush2.msra.mxu0 0.0
    %880 = vmatprep.subr.mxu0 0.0
    %881 = vmatpush2.msra.mxu0 0.0
    %882 = vmatprep.subr.mxu0 0.0
    %883 = vmatpush2.msra.mxu0 0.0
    %884 = vmatprep.subr.mxu0 0.0
    %885 = vmatpush2.msra.mxu0 0.0
    %886 = vmatprep.subr.mxu0 0.0
    %887 = vmatpush2.msra.mxu0 0.0
    %888 = vmatprep.subr.mxu0 0.0
    %889 = vmatpush2.msra.mxu0 0.0
    %890 = vmatprep.subr.mxu0 0.0
    %891 = vmatpush2.msra.mxu0 0.0
    %892 = vmatprep.subr.mxu0 0.0
    %893 = vmatpush2.msra.mxu0 0.0
    %894 = vmatprep.subr.mxu0 0.0
    %895 = vmatpush2.msra.mxu0 0.0
    %896 = vmatprep.subr.mxu0 0.0
    %897 = vmatpush2.msra.mxu0 0.0
    %898 = vmatprep.subr.mxu0 0.0
    %899 = vmatpush2.msra.mxu0 0.0
    %900 = vmatprep.subr.mxu0 0.0
    %901 = vmatpush2.msra.mxu0 0.0
    %902 = vmatprep.subr.mxu0 0.0
    %903 = vmatpush2.msra.mxu0 0.0
    %904 = vmatprep.subr.mxu0 0.0
    %905 = vmatpush2.msra.mxu0 0.0
    %906 = vmatprep.mubr.f32.mxu0 0.0
    %907 = vmatmul.mubr.f32.gmra.mxu0 %v840
    %v908 = vpop.f32.mrf.mxu0
    %v909 = vadd.f32 0.0, %v908
    %v910 = vpop.f32.mrf.mxu0
    %911 = vdwg.mxu0
    %912 = vrot.lane.b32.xlu0 %v399, 64
    %v913 = vpop.permute.xlu0 %912
    %v916 = vsel %vm410, %v758, 0
    %918 = vmatprep.subr.mxu0 0.0
    %919 = vmatpush1.msra.mxu0 0.0
    %920 = vmatprep.subr.mxu0 0.0
    %921 = vmatpush1.msra.mxu0 0.0
    %922 = vmatprep.subr.mxu0 0.0
    %923 = vmatpush1.msra.mxu0 0.0
    %924 = vmatprep.subr.mxu0 0.0
    %925 = vmatpush1.msra.mxu0 0.0
    %926 = vmatprep.subr.mxu0 0.0
    %927 = vmatpush1.msra.mxu0 0.0
    %928 = vmatprep.subr.mxu0 0.0
    %929 = vmatpush1.msra.mxu0 0.0
    %930 = vmatprep.subr.mxu0 0.0
    %931 = vmatpush1.msra.mxu0 0.0
    %932 = vmatprep.subr.mxu0 0.0
    %933 = vmatpush1.msra.mxu0 0.0
    %934 = vmatprep.subr.mxu0 0.0
    %935 = vmatpush1.msra.mxu0 0.0
    %936 = vmatprep.subr.mxu0 0.0
    %937 = vmatpush1.msra.mxu0 0.0
    %938 = vmatprep.subr.mxu0 0.0
    %939 = vmatpush1.msra.mxu0 0.0
    %940 = vmatprep.subr.mxu0 0.0
    %941 = vmatpush1.msra.mxu0 0.0
    %942 = vmatprep.subr.mxu0 0.0
    %943 = vmatpush1.msra.mxu0 0.0
    %944 = vmatprep.subr.mxu0 0.0
    %945 = vmatpush1.msra.mxu0 0.0
    %946 = vmatprep.subr.mxu0 0.0
    %947 = vmatpush1.msra.mxu0 0.0
    %948 = vmatprep.subr.mxu0 0.0
    %949 = vmatpush1.msra.mxu0 %v913
    %950 = vmatprep.subr.mxu0 0.0
    %951 = vmatpush2.msra.mxu0 0.0
    %952 = vmatprep.subr.mxu0 0.0
    %953 = vmatpush2.msra.mxu0 0.0
    %954 = vmatprep.subr.mxu0 0.0
    %955 = vmatpush2.msra.mxu0 0.0
    %956 = vmatprep.subr.mxu0 0.0
    %957 = vmatpush2.msra.mxu0 0.0
    %958 = vmatprep.subr.mxu0 0.0
    %959 = vmatpush2.msra.mxu0 0.0
    %960 = vmatprep.subr.mxu0 0.0
    %961 = vmatpush2.msra.mxu0 0.0
    %962 = vmatprep.subr.mxu0 0.0
    %963 = vmatpush2.msra.mxu0 0.0
    %964 = vmatprep.subr.mxu0 0.0
    %965 = vmatpush2.msra.mxu0 0.0
    %966 = vmatprep.subr.mxu0 0.0
    %967 = vmatpush2.msra.mxu0 0.0
    %968 = vmatprep.subr.mxu0 0.0
    %969 = vmatpush2.msra.mxu0 0.0
    %970 = vmatprep.subr.mxu0 0.0
    %971 = vmatpush2.msra.mxu0 0.0
    %972 = vmatprep.subr.mxu0 0.0
    %973 = vmatpush2.msra.mxu0 0.0
    %974 = vmatprep.subr.mxu0 0.0
    %975 = vmatpush2.msra.mxu0 0.0
    %976 = vmatprep.subr.mxu0 0.0
    %977 = vmatpush2.msra.mxu0 0.0
    %978 = vmatprep.subr.mxu0 0.0
    %979 = vmatpush2.msra.mxu0 0.0
    %980 = vmatprep.subr.mxu0 0.0
    %981 = vmatpush2.msra.mxu0 0.0
    %982 = vmatprep.mubr.f32.mxu0 0.0
    %983 = vmatmul.mubr.f32.gmra.mxu0 %v916
    %v984 = vpop.f32.mrf.mxu0
    %v985 = vadd.f32 0.0, %v984
    %v986 = vpop.f32.mrf.mxu0
    %987 = vdwg.mxu0
    %988 = vrot.lane.b32.xlu0 %v404, 64
    %v989 = vpop.permute.xlu0 %988
    %v992 = vsel %vm410, %v759, 0
    %994 = vmatprep.subr.mxu0 0.0
    %995 = vmatpush1.msra.mxu0 0.0
    %996 = vmatprep.subr.mxu0 0.0
    %997 = vmatpush1.msra.mxu0 0.0
    %998 = vmatprep.subr.mxu0 0.0
    %999 = vmatpush1.msra.mxu0 0.0
    %1000 = vmatprep.subr.mxu0 0.0
    %1001 = vmatpush1.msra.mxu0 0.0
    %1002 = vmatprep.subr.mxu0 0.0
    %1003 = vmatpush1.msra.mxu0 0.0
    %1004 = vmatprep.subr.mxu0 0.0
    %1005 = vmatpush1.msra.mxu0 0.0
    %1006 = vmatprep.subr.mxu0 0.0
    %1007 = vmatpush1.msra.mxu0 0.0
    %1008 = vmatprep.subr.mxu0 0.0
    %1009 = vmatpush1.msra.mxu0 0.0
    %1010 = vmatprep.subr.mxu0 0.0
    %1011 = vmatpush1.msra.mxu0 0.0
    %1012 = vmatprep.subr.mxu0 0.0
    %1013 = vmatpush1.msra.mxu0 0.0
    %1014 = vmatprep.subr.mxu0 0.0
    %1015 = vmatpush1.msra.mxu0 0.0
    %1016 = vmatprep.subr.mxu0 0.0
    %1017 = vmatpush1.msra.mxu0 0.0
    %1018 = vmatprep.subr.mxu0 0.0
    %1019 = vmatpush1.msra.mxu0 0.0
    %1020 = vmatprep.subr.mxu0 0.0
    %1021 = vmatpush1.msra.mxu0 0.0
    %1022 = vmatprep.subr.mxu0 0.0
    %1023 = vmatpush1.msra.mxu0 0.0
    %1024 = vmatprep.subr.mxu0 0.0
    %1025 = vmatpush1.msra.mxu0 %v989
    %1026 = vmatprep.subr.mxu0 0.0
    %1027 = vmatpush2.msra.mxu0 0.0
    %1028 = vmatprep.subr.mxu0 0.0
    %1029 = vmatpush2.msra.mxu0 0.0
    %1030 = vmatprep.subr.mxu0 0.0
    %1031 = vmatpush2.msra.mxu0 0.0
    %1032 = vmatprep.subr.mxu0 0.0
    %1033 = vmatpush2.msra.mxu0 0.0
    %1034 = vmatprep.subr.mxu0 0.0
    %1035 = vmatpush2.msra.mxu0 0.0
    %1036 = vmatprep.subr.mxu0 0.0
    %1037 = vmatpush2.msra.mxu0 0.0
    %1038 = vmatprep.subr.mxu0 0.0
    %1039 = vmatpush2.msra.mxu0 0.0
    %1040 = vmatprep.subr.mxu0 0.0
    %1041 = vmatpush2.msra.mxu0 0.0
    %1042 = vmatprep.subr.mxu0 0.0
    %1043 = vmatpush2.msra.mxu0 0.0
    %1044 = vmatprep.subr.mxu0 0.0
    %1045 = vmatpush2.msra.mxu0 0.0
    %1046 = vmatprep.subr.mxu0 0.0
    %1047 = vmatpush2.msra.mxu0 0.0
    %1048 = vmatprep.subr.mxu0 0.0
    %1049 = vmatpush2.msra.mxu0 0.0
    %1050 = vmatprep.subr.mxu0 0.0
    %1051 = vmatpush2.msra.mxu0 0.0
    %1052 = vmatprep.subr.mxu0 0.0
    %1053 = vmatpush2.msra.mxu0 0.0
    %1054 = vmatprep.subr.mxu0 0.0
    %1055 = vmatpush2.msra.mxu0 0.0
    %1056 = vmatprep.subr.mxu0 0.0
    %1057 = vmatpush2.msra.mxu0 0.0
    %1058 = vmatprep.mubr.f32.mxu0 0.0
    %1059 = vmatmul.mubr.f32.gmra.mxu0 %v992
    %v1060 = vpop.f32.mrf.mxu0
    %v1061 = vadd.f32 0.0, %v1060
    %v1062 = vpop.f32.mrf.mxu0
    %1063 = vdwg.mxu0
    %1064 = vrot.lane.b32.xlu0 %v389, 120
    %v1065 = vpop.permute.xlu0 %1064
    %1066 = vrot.lane.b32.xlu0 %v389, 88
    %v1067 = vpop.permute.xlu0 %1066
    %v1068 = vsel %vm410, %v1065, 0
    %v1070 = vsel %vm410, %v1067, 0
    %1072 = vmatprep.subr.mxu0 0.0
    %1073 = vmatpush1.xpose.msra.mxu0 0.0
    %1074 = vmatprep.subr.mxu0 0.0
    %1075 = vmatpush1.xpose.msra.mxu0 0.0
    %1076 = vmatprep.subr.mxu0 0.0
    %1077 = vmatpush1.xpose.msra.mxu0 0.0
    %1078 = vmatprep.subr.mxu0 0.0
    %1079 = vmatpush1.xpose.msra.mxu0 0.0
    %1080 = vmatprep.subr.mxu0 0.0
    %1081 = vmatpush1.xpose.msra.mxu0 0.0
    %1082 = vmatprep.subr.mxu0 0.0
    %1083 = vmatpush1.xpose.msra.mxu0 0.0
    %1084 = vmatprep.subr.mxu0 0.0
    %1085 = vmatpush1.xpose.msra.mxu0 0.0
    %1086 = vmatprep.subr.mxu0 0.0
    %1087 = vmatpush1.xpose.msra.mxu0 0.0
    %1088 = vmatprep.subr.mxu0 0.0
    %1089 = vmatpush1.xpose.msra.mxu0 0.0
    %1090 = vmatprep.subr.mxu0 0.0
    %1091 = vmatpush1.xpose.msra.mxu0 0.0
    %1092 = vmatprep.subr.mxu0 0.0
    %1093 = vmatpush1.xpose.msra.mxu0 0.0
    %1094 = vmatprep.subr.mxu0 0.0
    %1095 = vmatpush1.xpose.msra.mxu0 0.0
    %1096 = vmatprep.subr.mxu0 0.0
    %1097 = vmatpush1.xpose.msra.mxu0 0.0
    %1098 = vmatprep.subr.mxu0 0.0
    %1099 = vmatpush1.xpose.msra.mxu0 0.0
    %1100 = vmatprep.subr.mxu0 0.0
    %1101 = vmatpush1.xpose.msra.mxu0 0.0
    %1102 = vmatprep.subr.mxu0 0.0
    %1103 = vmatpush1.xpose.msra.mxu0 %v1070
    %1104 = vmatprep.subr.mxu0 0.0
    %1105 = vmatpush2.xpose.msra.mxu0 0.0
    %1106 = vmatprep.subr.mxu0 0.0
    %1107 = vmatpush2.xpose.msra.mxu0 0.0
    %1108 = vmatprep.subr.mxu0 0.0
    %1109 = vmatpush2.xpose.msra.mxu0 0.0
    %1110 = vmatprep.subr.mxu0 0.0
    %1111 = vmatpush2.xpose.msra.mxu0 0.0
    %1112 = vmatprep.subr.mxu0 0.0
    %1113 = vmatpush2.xpose.msra.mxu0 0.0
    %1114 = vmatprep.subr.mxu0 0.0
    %1115 = vmatpush2.xpose.msra.mxu0 0.0
    %1116 = vmatprep.subr.mxu0 0.0
    %1117 = vmatpush2.xpose.msra.mxu0 0.0
    %1118 = vmatprep.subr.mxu0 0.0
    %1119 = vmatpush2.xpose.msra.mxu0 0.0
    %1120 = vmatprep.subr.mxu0 0.0
    %1121 = vmatpush2.xpose.msra.mxu0 0.0
    %1122 = vmatprep.subr.mxu0 0.0
    %1123 = vmatpush2.xpose.msra.mxu0 0.0
    %1124 = vmatprep.subr.mxu0 0.0
    %1125 = vmatpush2.xpose.msra.mxu0 0.0
    %1126 = vmatprep.subr.mxu0 0.0
    %1127 = vmatpush2.xpose.msra.mxu0 0.0
    %1128 = vmatprep.subr.mxu0 0.0
    %1129 = vmatpush2.xpose.msra.mxu0 0.0
    %1130 = vmatprep.subr.mxu0 0.0
    %1131 = vmatpush2.xpose.msra.mxu0 0.0
    %1132 = vmatprep.subr.mxu0 0.0
    %1133 = vmatpush2.xpose.msra.mxu0 0.0
    %1134 = vmatprep.subr.mxu0 0.0
    %1135 = vmatpush2.xpose.msra.mxu0 0.0
    %1136 = vmatprep.mubr.f32.mxu0 0.0
    %1137 = vmatmul.mubr.f32.gmra.mxu0 %v1068
    %v1138 = vpop.f32.mrf.mxu0
    %v1139 = vadd.f32 0.0, %v1138
    %v1140 = vpop.f32.mrf.mxu0
    %1141 = vdwg.mxu0
    %1142 = vrot.lane.b32.xlu0 %v394, 120
    %v1143 = vpop.permute.xlu0 %1142
    %1144 = vrot.lane.b32.xlu0 %v394, 88
    %v1145 = vpop.permute.xlu0 %1144
    %v1146 = vsel %vm410, %v1143, 0
    %v1148 = vsel %vm410, %v1145, 0
    %1150 = vmatprep.subr.mxu0 0.0
    %1151 = vmatpush1.xpose.msra.mxu0 0.0
    %1152 = vmatprep.subr.mxu0 0.0
    %1153 = vmatpush1.xpose.msra.mxu0 0.0
    %1154 = vmatprep.subr.mxu0 0.0
    %1155 = vmatpush1.xpose.msra.mxu0 0.0
    %1156 = vmatprep.subr.mxu0 0.0
    %1157 = vmatpush1.xpose.msra.mxu0 0.0
    %1158 = vmatprep.subr.mxu0 0.0
    %1159 = vmatpush1.xpose.msra.mxu0 0.0
    %1160 = vmatprep.subr.mxu0 0.0
    %1161 = vmatpush1.xpose.msra.mxu0 0.0
    %1162 = vmatprep.subr.mxu0 0.0
    %1163 = vmatpush1.xpose.msra.mxu0 0.0
    %1164 = vmatprep.subr.mxu0 0.0
    %1165 = vmatpush1.xpose.msra.mxu0 0.0
    %1166 = vmatprep.subr.mxu0 0.0
    %1167 = vmatpush1.xpose.msra.mxu0 0.0
    %1168 = vmatprep.subr.mxu0 0.0
    %1169 = vmatpush1.xpose.msra.mxu0 0.0
    %1170 = vmatprep.subr.mxu0 0.0
    %1171 = vmatpush1.xpose.msra.mxu0 0.0
    %1172 = vmatprep.subr.mxu0 0.0
    %1173 = vmatpush1.xpose.msra.mxu0 0.0
    %1174 = vmatprep.subr.mxu0 0.0
    %1175 = vmatpush1.xpose.msra.mxu0 0.0
    %1176 = vmatprep.subr.mxu0 0.0
    %1177 = vmatpush1.xpose.msra.mxu0 0.0
    %1178 = vmatprep.subr.mxu0 0.0
    %1179 = vmatpush1.xpose.msra.mxu0 0.0
    %1180 = vmatprep.subr.mxu0 0.0
    %1181 = vmatpush1.xpose.msra.mxu0 %v1148
    %1182 = vmatprep.subr.mxu0 0.0
    %1183 = vmatpush2.xpose.msra.mxu0 0.0
    %1184 = vmatprep.subr.mxu0 0.0
    %1185 = vmatpush2.xpose.msra.mxu0 0.0
    %1186 = vmatprep.subr.mxu0 0.0
    %1187 = vmatpush2.xpose.msra.mxu0 0.0
    %1188 = vmatprep.subr.mxu0 0.0
    %1189 = vmatpush2.xpose.msra.mxu0 0.0
    %1190 = vmatprep.subr.mxu0 0.0
    %1191 = vmatpush2.xpose.msra.mxu0 0.0
    %1192 = vmatprep.subr.mxu0 0.0
    %1193 = vmatpush2.xpose.msra.mxu0 0.0
    %1194 = vmatprep.subr.mxu0 0.0
    %1195 = vmatpush2.xpose.msra.mxu0 0.0
    %1196 = vmatprep.subr.mxu0 0.0
    %1197 = vmatpush2.xpose.msra.mxu0 0.0
    %1198 = vmatprep.subr.mxu0 0.0
    %1199 = vmatpush2.xpose.msra.mxu0 0.0
    %1200 = vmatprep.subr.mxu0 0.0
    %1201 = vmatpush2.xpose.msra.mxu0 0.0
    %1202 = vmatprep.subr.mxu0 0.0
    %1203 = vmatpush2.xpose.msra.mxu0 0.0
    %1204 = vmatprep.subr.mxu0 0.0
    %1205 = vmatpush2.xpose.msra.mxu0 0.0
    %1206 = vmatprep.subr.mxu0 0.0
    %1207 = vmatpush2.xpose.msra.mxu0 0.0
    %1208 = vmatprep.subr.mxu0 0.0
    %1209 = vmatpush2.xpose.msra.mxu0 0.0
    %1210 = vmatprep.subr.mxu0 0.0
    %1211 = vmatpush2.xpose.msra.mxu0 0.0
    %1212 = vmatprep.subr.mxu0 0.0
    %1213 = vmatpush2.xpose.msra.mxu0 0.0
    %1214 = vmatprep.mubr.f32.mxu0 0.0
    %1215 = vmatmul.mubr.f32.gmra.mxu0 %v1146
    %v1216 = vpop.f32.mrf.mxu0
    %v1217 = vadd.f32 0.0, %v1216
    %v1218 = vpop.f32.mrf.mxu0
    %1219 = vdwg.mxu0
    %1220 = vrot.lane.b32.xlu0 %v399, 120
    %v1221 = vpop.permute.xlu0 %1220
    %1222 = vrot.lane.b32.xlu0 %v399, 88
    %v1223 = vpop.permute.xlu0 %1222
    %v1224 = vsel %vm410, %v1221, 0
    %v1226 = vsel %vm410, %v1223, 0
    %1228 = vmatprep.subr.mxu0 0.0
    %1229 = vmatpush1.xpose.msra.mxu0 0.0
    %1230 = vmatprep.subr.mxu0 0.0
    %1231 = vmatpush1.xpose.msra.mxu0 0.0
    %1232 = vmatprep.subr.mxu0 0.0
    %1233 = vmatpush1.xpose.msra.mxu0 0.0
    %1234 = vmatprep.subr.mxu0 0.0
    %1235 = vmatpush1.xpose.msra.mxu0 0.0
    %1236 = vmatprep.subr.mxu0 0.0
    %1237 = vmatpush1.xpose.msra.mxu0 0.0
    %1238 = vmatprep.subr.mxu0 0.0
    %1239 = vmatpush1.xpose.msra.mxu0 0.0
    %1240 = vmatprep.subr.mxu0 0.0
    %1241 = vmatpush1.xpose.msra.mxu0 0.0
    %1242 = vmatprep.subr.mxu0 0.0
    %1243 = vmatpush1.xpose.msra.mxu0 0.0
    %1244 = vmatprep.subr.mxu0 0.0
    %1245 = vmatpush1.xpose.msra.mxu0 0.0
    %1246 = vmatprep.subr.mxu0 0.0
    %1247 = vmatpush1.xpose.msra.mxu0 0.0
    %1248 = vmatprep.subr.mxu0 0.0
    %1249 = vmatpush1.xpose.msra.mxu0 0.0
    %1250 = vmatprep.subr.mxu0 0.0
    %1251 = vmatpush1.xpose.msra.mxu0 0.0
    %1252 = vmatprep.subr.mxu0 0.0
    %1253 = vmatpush1.xpose.msra.mxu0 0.0
    %1254 = vmatprep.subr.mxu0 0.0
    %1255 = vmatpush1.xpose.msra.mxu0 0.0
    %1256 = vmatprep.subr.mxu0 0.0
    %1257 = vmatpush1.xpose.msra.mxu0 0.0
    %1258 = vmatprep.subr.mxu0 0.0
    %1259 = vmatpush1.xpose.msra.mxu0 %v1226
    %1260 = vmatprep.subr.mxu0 0.0
    %1261 = vmatpush2.xpose.msra.mxu0 0.0
    %1262 = vmatprep.subr.mxu0 0.0
    %1263 = vmatpush2.xpose.msra.mxu0 0.0
    %1264 = vmatprep.subr.mxu0 0.0
    %1265 = vmatpush2.xpose.msra.mxu0 0.0
    %1266 = vmatprep.subr.mxu0 0.0
    %1267 = vmatpush2.xpose.msra.mxu0 0.0
    %1268 = vmatprep.subr.mxu0 0.0
    %1269 = vmatpush2.xpose.msra.mxu0 0.0
    %1270 = vmatprep.subr.mxu0 0.0
    %1271 = vmatpush2.xpose.msra.mxu0 0.0
    %1272 = vmatprep.subr.mxu0 0.0
    %1273 = vmatpush2.xpose.msra.mxu0 0.0
    %1274 = vmatprep.subr.mxu0 0.0
    %1275 = vmatpush2.xpose.msra.mxu0 0.0
    %1276 = vmatprep.subr.mxu0 0.0
    %1277 = vmatpush2.xpose.msra.mxu0 0.0
    %1278 = vmatprep.subr.mxu0 0.0
    %1279 = vmatpush2.xpose.msra.mxu0 0.0
    %1280 = vmatprep.subr.mxu0 0.0
    %1281 = vmatpush2.xpose.msra.mxu0 0.0
    %1282 = vmatprep.subr.mxu0 0.0
    %1283 = vmatpush2.xpose.msra.mxu0 0.0
    %1284 = vmatprep.subr.mxu0 0.0
    %1285 = vmatpush2.xpose.msra.mxu0 0.0
    %1286 = vmatprep.subr.mxu0 0.0
    %1287 = vmatpush2.xpose.msra.mxu0 0.0
    %1288 = vmatprep.subr.mxu0 0.0
    %1289 = vmatpush2.xpose.msra.mxu0 0.0
    %1290 = vmatprep.subr.mxu0 0.0
    %1291 = vmatpush2.xpose.msra.mxu0 0.0
    %1292 = vmatprep.mubr.f32.mxu0 0.0
    %1293 = vmatmul.mubr.f32.gmra.mxu0 %v1224
    %v1294 = vpop.f32.mrf.mxu0
    %v1295 = vadd.f32 0.0, %v1294
    %v1296 = vpop.f32.mrf.mxu0
    %1297 = vdwg.mxu0
    %1298 = vrot.lane.b32.xlu0 %v404, 120
    %v1299 = vpop.permute.xlu0 %1298
    %1300 = vrot.lane.b32.xlu0 %v404, 88
    %v1301 = vpop.permute.xlu0 %1300
    %v1302 = vsel %vm410, %v1299, 0
    %v1304 = vsel %vm410, %v1301, 0
    %1306 = vmatprep.subr.mxu0 0.0
    %1307 = vmatpush1.xpose.msra.mxu0 0.0
    %1308 = vmatprep.subr.mxu0 0.0
    %1309 = vmatpush1.xpose.msra.mxu0 0.0
    %1310 = vmatprep.subr.mxu0 0.0
    %1311 = vmatpush1.xpose.msra.mxu0 0.0
    %1312 = vmatprep.subr.mxu0 0.0
    %1313 = vmatpush1.xpose.msra.mxu0 0.0
    %1314 = vmatprep.subr.mxu0 0.0
    %1315 = vmatpush1.xpose.msra.mxu0 0.0
    %1316 = vmatprep.subr.mxu0 0.0
    %1317 = vmatpush1.xpose.msra.mxu0 0.0
    %1318 = vmatprep.subr.mxu0 0.0
    %1319 = vmatpush1.xpose.msra.mxu0 0.0
    %1320 = vmatprep.subr.mxu0 0.0
    %1321 = vmatpush1.xpose.msra.mxu0 0.0
    %1322 = vmatprep.subr.mxu0 0.0
    %1323 = vmatpush1.xpose.msra.mxu0 0.0
    %1324 = vmatprep.subr.mxu0 0.0
    %1325 = vmatpush1.xpose.msra.mxu0 0.0
    %1326 = vmatprep.subr.mxu0 0.0
    %1327 = vmatpush1.xpose.msra.mxu0 0.0
    %1328 = vmatprep.subr.mxu0 0.0
    %1329 = vmatpush1.xpose.msra.mxu0 0.0
    %1330 = vmatprep.subr.mxu0 0.0
    %1331 = vmatpush1.xpose.msra.mxu0 0.0
    %1332 = vmatprep.subr.mxu0 0.0
    %1333 = vmatpush1.xpose.msra.mxu0 0.0
    %1334 = vmatprep.subr.mxu0 0.0
    %1335 = vmatpush1.xpose.msra.mxu0 0.0
    %1336 = vmatprep.subr.mxu0 0.0
    %1337 = vmatpush1.xpose.msra.mxu0 %v1304
    %1338 = vmatprep.subr.mxu0 0.0
    %1339 = vmatpush2.xpose.msra.mxu0 0.0
    %1340 = vmatprep.subr.mxu0 0.0
    %1341 = vmatpush2.xpose.msra.mxu0 0.0
    %1342 = vmatprep.subr.mxu0 0.0
    %1343 = vmatpush2.xpose.msra.mxu0 0.0
    %1344 = vmatprep.subr.mxu0 0.0
    %1345 = vmatpush2.xpose.msra.mxu0 0.0
    %1346 = vmatprep.subr.mxu0 0.0
    %1347 = vmatpush2.xpose.msra.mxu0 0.0
    %1348 = vmatprep.subr.mxu0 0.0
    %1349 = vmatpush2.xpose.msra.mxu0 0.0
    %1350 = vmatprep.subr.mxu0 0.0
    %1351 = vmatpush2.xpose.msra.mxu0 0.0
    %1352 = vmatprep.subr.mxu0 0.0
    %1353 = vmatpush2.xpose.msra.mxu0 0.0
    %1354 = vmatprep.subr.mxu0 0.0
    %1355 = vmatpush2.xpose.msra.mxu0 0.0
    %1356 = vmatprep.subr.mxu0 0.0
    %1357 = vmatpush2.xpose.msra.mxu0 0.0
    %1358 = vmatprep.subr.mxu0 0.0
    %1359 = vmatpush2.xpose.msra.mxu0 0.0
    %1360 = vmatprep.subr.mxu0 0.0
    %1361 = vmatpush2.xpose.msra.mxu0 0.0
    %1362 = vmatprep.subr.mxu0 0.0
    %1363 = vmatpush2.xpose.msra.mxu0 0.0
    %1364 = vmatprep.subr.mxu0 0.0
    %1365 = vmatpush2.xpose.msra.mxu0 0.0
    %1366 = vmatprep.subr.mxu0 0.0
    %1367 = vmatpush2.xpose.msra.mxu0 0.0
    %1368 = vmatprep.subr.mxu0 0.0
    %1369 = vmatpush2.xpose.msra.mxu0 0.0
    %1370 = vmatprep.mubr.f32.mxu0 0.0
    %1371 = vmatmul.mubr.f32.gmra.mxu0 %v1302
    %v1372 = vpop.f32.mrf.mxu0
    %v1373 = vadd.f32 0.0, %v1372
    %v1374 = vpop.f32.mrf.mxu0
    %1375 = vdwg.mxu0
    %v1376 = vsel %vm410, %v1139, -inf
    %1377 = vmax.xlane.f32.xlu0 %v1376
    %v1378 = vpop.xlane.xlu0 %1377
    %v1379 = vsel %vm410, %v1217, -inf
    %1380 = vmax.xlane.f32.xlu0 %v1379
    %v1381 = vpop.xlane.xlu0 %1380
    %v1382 = vsel %vm410, %v1295, -inf
    %1383 = vmax.xlane.f32.xlu0 %v1382
    %v1384 = vpop.xlane.xlu0 %1383
    %v1385 = vsel %vm410, %v1373, -inf
    %1386 = vmax.xlane.f32.xlu0 %v1385
    %v1387 = vpop.xlane.xlu0 %1386
    %v1388 = vsub.f32 %v1139, %v1378
    %v1389 = vsub.f32 %v1217, %v1381
    %v1390 = vsub.f32 %v1295, %v1384
    %v1391 = vsub.f32 %v1373, %v1387
    %v1392 = vmul.f32 %v1388, 1.442695
    %v1393 = vpow.pop %v1392
    %v1394 = vmul.f32 %v1389, 1.442695
    %v1395 = vpow.pop %v1394
    %v1396 = vmul.f32 %v1390, 1.442695
    %v1397 = vpow.pop %v1396
    %v1398 = vmul.f32 %v1391, 1.442695
    %v1399 = vpow.pop %v1398
    %v1400 = vsel %vm410, %v1393, 0.0
    %1401 = vadd.xlane.f32.xlu0 %v1400
    %v1402 = vpop.xlane.xlu0 %1401
    %v1403 = vsel %vm410, %v1395, 0.0
    %1404 = vadd.xlane.f32.xlu0 %v1403
    %v1405 = vpop.xlane.xlu0 %1404
    %v1406 = vsel %vm410, %v1397, 0.0
    %1407 = vadd.xlane.f32.xlu0 %v1406
    %v1408 = vpop.xlane.xlu0 %1407
    %v1409 = vsel %vm410, %v1399, 0.0
    %1410 = vadd.xlane.f32.xlu0 %v1409
    %v1411 = vpop.xlane.xlu0 %1410
    %v1412 = vrcp.pop %v1402
    %v1413 = vrcp.pop %v1405
    %v1414 = vrcp.pop %v1408
    %v1415 = vrcp.pop %v1411
    %v1416 = vmul.f32 %v1393, %v1412
    %v1417 = vmul.f32 %v1395, %v1413
    %v1418 = vmul.f32 %v1397, %v1414
    %v1419 = vmul.f32 %v1399, %v1415
    %1420 = vrot.lane.b32.xlu0 %v389, 56
    %v1421 = vpop.permute.xlu0 %1420
    %v1424 = vsel %vm410, %v1416, 0
    %1426 = vmatprep.subr.mxu0 0.0
    %1427 = vmatpush1.msra.mxu0 0.0
    %1428 = vmatprep.subr.mxu0 0.0
    %1429 = vmatpush1.msra.mxu0 0.0
    %1430 = vmatprep.subr.mxu0 0.0
    %1431 = vmatpush1.msra.mxu0 0.0
    %1432 = vmatprep.subr.mxu0 0.0
    %1433 = vmatpush1.msra.mxu0 0.0
    %1434 = vmatprep.subr.mxu0 0.0
    %1435 = vmatpush1.msra.mxu0 0.0
    %1436 = vmatprep.subr.mxu0 0.0
    %1437 = vmatpush1.msra.mxu0 0.0
    %1438 = vmatprep.subr.mxu0 0.0
    %1439 = vmatpush1.msra.mxu0 0.0
    %1440 = vmatprep.subr.mxu0 0.0
    %1441 = vmatpush1.msra.mxu0 0.0
    %1442 = vmatprep.subr.mxu0 0.0
    %1443 = vmatpush1.msra.mxu0 0.0
    %1444 = vmatprep.subr.mxu0 0.0
    %1445 = vmatpush1.msra.mxu0 0.0
    %1446 = vmatprep.subr.mxu0 0.0
    %1447 = vmatpush1.msra.mxu0 0.0
    %1448 = vmatprep.subr.mxu0 0.0
    %1449 = vmatpush1.msra.mxu0 0.0
    %1450 = vmatprep.subr.mxu0 0.0
    %1451 = vmatpush1.msra.mxu0 0.0
    %1452 = vmatprep.subr.mxu0 0.0
    %1453 = vmatpush1.msra.mxu0 0.0
    %1454 = vmatprep.subr.mxu0 0.0
    %1455 = vmatpush1.msra.mxu0 0.0
    %1456 = vmatprep.subr.mxu0 0.0
    %1457 = vmatpush1.msra.mxu0 %v1421
    %1458 = vmatprep.subr.mxu0 0.0
    %1459 = vmatpush2.msra.mxu0 0.0
    %1460 = vmatprep.subr.mxu0 0.0
    %1461 = vmatpush2.msra.mxu0 0.0
    %1462 = vmatprep.subr.mxu0 0.0
    %1463 = vmatpush2.msra.mxu0 0.0
    %1464 = vmatprep.subr.mxu0 0.0
    %1465 = vmatpush2.msra.mxu0 0.0
    %1466 = vmatprep.subr.mxu0 0.0
    %1467 = vmatpush2.msra.mxu0 0.0
    %1468 = vmatprep.subr.mxu0 0.0
    %1469 = vmatpush2.msra.mxu0 0.0
    %1470 = vmatprep.subr.mxu0 0.0
    %1471 = vmatpush2.msra.mxu0 0.0
    %1472 = vmatprep.subr.mxu0 0.0
    %1473 = vmatpush2.msra.mxu0 0.0
    %1474 = vmatprep.subr.mxu0 0.0
    %1475 = vmatpush2.msra.mxu0 0.0
    %1476 = vmatprep.subr.mxu0 0.0
    %1477 = vmatpush2.msra.mxu0 0.0
    %1478 = vmatprep.subr.mxu0 0.0
    %1479 = vmatpush2.msra.mxu0 0.0
    %1480 = vmatprep.subr.mxu0 0.0
    %1481 = vmatpush2.msra.mxu0 0.0
    %1482 = vmatprep.subr.mxu0 0.0
    %1483 = vmatpush2.msra.mxu0 0.0
    %1484 = vmatprep.subr.mxu0 0.0
    %1485 = vmatpush2.msra.mxu0 0.0
    %1486 = vmatprep.subr.mxu0 0.0
    %1487 = vmatpush2.msra.mxu0 0.0
    %1488 = vmatprep.subr.mxu0 0.0
    %1489 = vmatpush2.msra.mxu0 0.0
    %1490 = vmatprep.mubr.f32.mxu0 0.0
    %1491 = vmatmul.mubr.f32.gmra.mxu0 %v1424
    %v1492 = vpop.f32.mrf.mxu0
    %v1493 = vadd.f32 0.0, %v1492
    %v1494 = vpop.f32.mrf.mxu0
    %1495 = vdwg.mxu0
    %1496 = vrot.lane.b32.xlu0 %v394, 56
    %v1497 = vpop.permute.xlu0 %1496
    %v1500 = vsel %vm410, %v1417, 0
    %1502 = vmatprep.subr.mxu0 0.0
    %1503 = vmatpush1.msra.mxu0 0.0
    %1504 = vmatprep.subr.mxu0 0.0
    %1505 = vmatpush1.msra.mxu0 0.0
    %1506 = vmatprep.subr.mxu0 0.0
    %1507 = vmatpush1.msra.mxu0 0.0
    %1508 = vmatprep.subr.mxu0 0.0
    %1509 = vmatpush1.msra.mxu0 0.0
    %1510 = vmatprep.subr.mxu0 0.0
    %1511 = vmatpush1.msra.mxu0 0.0
    %1512 = vmatprep.subr.mxu0 0.0
    %1513 = vmatpush1.msra.mxu0 0.0
    %1514 = vmatprep.subr.mxu0 0.0
    %1515 = vmatpush1.msra.mxu0 0.0
    %1516 = vmatprep.subr.mxu0 0.0
    %1517 = vmatpush1.msra.mxu0 0.0
    %1518 = vmatprep.subr.mxu0 0.0
    %1519 = vmatpush1.msra.mxu0 0.0
    %1520 = vmatprep.subr.mxu0 0.0
    %1521 = vmatpush1.msra.mxu0 0.0
    %1522 = vmatprep.subr.mxu0 0.0
    %1523 = vmatpush1.msra.mxu0 0.0
    %1524 = vmatprep.subr.mxu0 0.0
    %1525 = vmatpush1.msra.mxu0 0.0
    %1526 = vmatprep.subr.mxu0 0.0
    %1527 = vmatpush1.msra.mxu0 0.0
    %1528 = vmatprep.subr.mxu0 0.0
    %1529 = vmatpush1.msra.mxu0 0.0
    %1530 = vmatprep.subr.mxu0 0.0
    %1531 = vmatpush1.msra.mxu0 0.0
    %1532 = vmatprep.subr.mxu0 0.0
    %1533 = vmatpush1.msra.mxu0 %v1497
    %1534 = vmatprep.subr.mxu0 0.0
    %1535 = vmatpush2.msra.mxu0 0.0
    %1536 = vmatprep.subr.mxu0 0.0
    %1537 = vmatpush2.msra.mxu0 0.0
    %1538 = vmatprep.subr.mxu0 0.0
    %1539 = vmatpush2.msra.mxu0 0.0
    %1540 = vmatprep.subr.mxu0 0.0
    %1541 = vmatpush2.msra.mxu0 0.0
    %1542 = vmatprep.subr.mxu0 0.0
    %1543 = vmatpush2.msra.mxu0 0.0
    %1544 = vmatprep.subr.mxu0 0.0
    %1545 = vmatpush2.msra.mxu0 0.0
    %1546 = vmatprep.subr.mxu0 0.0
    %1547 = vmatpush2.msra.mxu0 0.0
    %1548 = vmatprep.subr.mxu0 0.0
    %1549 = vmatpush2.msra.mxu0 0.0
    %1550 = vmatprep.subr.mxu0 0.0
    %1551 = vmatpush2.msra.mxu0 0.0
    %1552 = vmatprep.subr.mxu0 0.0
    %1553 = vmatpush2.msra.mxu0 0.0
    %1554 = vmatprep.subr.mxu0 0.0
    %1555 = vmatpush2.msra.mxu0 0.0
    %1556 = vmatprep.subr.mxu0 0.0
    %1557 = vmatpush2.msra.mxu0 0.0
    %1558 = vmatprep.subr.mxu0 0.0
    %1559 = vmatpush2.msra.mxu0 0.0
    %1560 = vmatprep.subr.mxu0 0.0
    %1561 = vmatpush2.msra.mxu0 0.0
    %1562 = vmatprep.subr.mxu0 0.0
    %1563 = vmatpush2.msra.mxu0 0.0
    %1564 = vmatprep.subr.mxu0 0.0
    %1565 = vmatpush2.msra.mxu0 0.0
    %1566 = vmatprep.mubr.f32.mxu0 0.0
    %1567 = vmatmul.mubr.f32.gmra.mxu0 %v1500
    %v1568 = vpop.f32.mrf.mxu0
    %v1569 = vadd.f32 0.0, %v1568
    %v1570 = vpop.f32.mrf.mxu0
    %1571 = vdwg.mxu0
    %1572 = vrot.lane.b32.xlu0 %v399, 56
    %v1573 = vpop.permute.xlu0 %1572
    %v1576 = vsel %vm410, %v1418, 0
    %1578 = vmatprep.subr.mxu0 0.0
    %1579 = vmatpush1.msra.mxu0 0.0
    %1580 = vmatprep.subr.mxu0 0.0
    %1581 = vmatpush1.msra.mxu0 0.0
    %1582 = vmatprep.subr.mxu0 0.0
    %1583 = vmatpush1.msra.mxu0 0.0
    %1584 = vmatprep.subr.mxu0 0.0
    %1585 = vmatpush1.msra.mxu0 0.0
    %1586 = vmatprep.subr.mxu0 0.0
    %1587 = vmatpush1.msra.mxu0 0.0
    %1588 = vmatprep.subr.mxu0 0.0
    %1589 = vmatpush1.msra.mxu0 0.0
    %1590 = vmatprep.subr.mxu0 0.0
    %1591 = vmatpush1.msra.mxu0 0.0
    %1592 = vmatprep.subr.mxu0 0.0
    %1593 = vmatpush1.msra.mxu0 0.0
    %1594 = vmatprep.subr.mxu0 0.0
    %1595 = vmatpush1.msra.mxu0 0.0
    %1596 = vmatprep.subr.mxu0 0.0
    %1597 = vmatpush1.msra.mxu0 0.0
    %1598 = vmatprep.subr.mxu0 0.0
    %1599 = vmatpush1.msra.mxu0 0.0
    %1600 = vmatprep.subr.mxu0 0.0
    %1601 = vmatpush1.msra.mxu0 0.0
    %1602 = vmatprep.subr.mxu0 0.0
    %1603 = vmatpush1.msra.mxu0 0.0
    %1604 = vmatprep.subr.mxu0 0.0
    %1605 = vmatpush1.msra.mxu0 0.0
    %1606 = vmatprep.subr.mxu0 0.0
    %1607 = vmatpush1.msra.mxu0 0.0
    %1608 = vmatprep.subr.mxu0 0.0
    %1609 = vmatpush1.msra.mxu0 %v1573
    %1610 = vmatprep.subr.mxu0 0.0
    %1611 = vmatpush2.msra.mxu0 0.0
    %1612 = vmatprep.subr.mxu0 0.0
    %1613 = vmatpush2.msra.mxu0 0.0
    %1614 = vmatprep.subr.mxu0 0.0
    %1615 = vmatpush2.msra.mxu0 0.0
    %1616 = vmatprep.subr.mxu0 0.0
    %1617 = vmatpush2.msra.mxu0 0.0
    %1618 = vmatprep.subr.mxu0 0.0
    %1619 = vmatpush2.msra.mxu0 0.0
    %1620 = vmatprep.subr.mxu0 0.0
    %1621 = vmatpush2.msra.mxu0 0.0
    %1622 = vmatprep.subr.mxu0 0.0
    %1623 = vmatpush2.msra.mxu0 0.0
    %1624 = vmatprep.subr.mxu0 0.0
    %1625 = vmatpush2.msra.mxu0 0.0
    %1626 = vmatprep.subr.mxu0 0.0
    %1627 = vmatpush2.msra.mxu0 0.0
    %1628 = vmatprep.subr.mxu0 0.0
    %1629 = vmatpush2.msra.mxu0 0.0
    %1630 = vmatprep.subr.mxu0 0.0
    %1631 = vmatpush2.msra.mxu0 0.0
    %1632 = vmatprep.subr.mxu0 0.0
    %1633 = vmatpush2.msra.mxu0 0.0
    %1634 = vmatprep.subr.mxu0 0.0
    %1635 = vmatpush2.msra.mxu0 0.0
    %1636 = vmatprep.subr.mxu0 0.0
    %1637 = vmatpush2.msra.mxu0 0.0
    %1638 = vmatprep.subr.mxu0 0.0
    %1639 = vmatpush2.msra.mxu0 0.0
    %1640 = vmatprep.subr.mxu0 0.0
    %1641 = vmatpush2.msra.mxu0 0.0
    %1642 = vmatprep.mubr.f32.mxu0 0.0
    %1643 = vmatmul.mubr.f32.gmra.mxu0 %v1576
    %v1644 = vpop.f32.mrf.mxu0
    %v1645 = vadd.f32 0.0, %v1644
    %v1646 = vpop.f32.mrf.mxu0
    %1647 = vdwg.mxu0
    %1648 = vrot.lane.b32.xlu0 %v404, 56
    %v1649 = vpop.permute.xlu0 %1648
    %v1652 = vsel %vm410, %v1419, 0
    %1654 = vmatprep.subr.mxu0 0.0
    %1655 = vmatpush1.msra.mxu0 0.0
    %1656 = vmatprep.subr.mxu0 0.0
    %1657 = vmatpush1.msra.mxu0 0.0
    %1658 = vmatprep.subr.mxu0 0.0
    %1659 = vmatpush1.msra.mxu0 0.0
    %1660 = vmatprep.subr.mxu0 0.0
    %1661 = vmatpush1.msra.mxu0 0.0
    %1662 = vmatprep.subr.mxu0 0.0
    %1663 = vmatpush1.msra.mxu0 0.0
    %1664 = vmatprep.subr.mxu0 0.0
    %1665 = vmatpush1.msra.mxu0 0.0
    %1666 = vmatprep.subr.mxu0 0.0
    %1667 = vmatpush1.msra.mxu0 0.0
    %1668 = vmatprep.subr.mxu0 0.0
    %1669 = vmatpush1.msra.mxu0 0.0
    %1670 = vmatprep.subr.mxu0 0.0
    %1671 = vmatpush1.msra.mxu0 0.0
    %1672 = vmatprep.subr.mxu0 0.0
    %1673 = vmatpush1.msra.mxu0 0.0
    %1674 = vmatprep.subr.mxu0 0.0
    %1675 = vmatpush1.msra.mxu0 0.0
    %1676 = vmatprep.subr.mxu0 0.0
    %1677 = vmatpush1.msra.mxu0 0.0
    %1678 = vmatprep.subr.mxu0 0.0
    %1679 = vmatpush1.msra.mxu0 0.0
    %1680 = vmatprep.subr.mxu0 0.0
    %1681 = vmatpush1.msra.mxu0 0.0
    %1682 = vmatprep.subr.mxu0 0.0
    %1683 = vmatpush1.msra.mxu0 0.0
    %1684 = vmatprep.subr.mxu0 0.0
    %1685 = vmatpush1.msra.mxu0 %v1649
    %1686 = vmatprep.subr.mxu0 0.0
    %1687 = vmatpush2.msra.mxu0 0.0
    %1688 = vmatprep.subr.mxu0 0.0
    %1689 = vmatpush2.msra.mxu0 0.0
    %1690 = vmatprep.subr.mxu0 0.0
    %1691 = vmatpush2.msra.mxu0 0.0
    %1692 = vmatprep.subr.mxu0 0.0
    %1693 = vmatpush2.msra.mxu0 0.0
    %1694 = vmatprep.subr.mxu0 0.0
    %1695 = vmatpush2.msra.mxu0 0.0
    %1696 = vmatprep.subr.mxu0 0.0
    %1697 = vmatpush2.msra.mxu0 0.0
    %1698 = vmatprep.subr.mxu0 0.0
    %1699 = vmatpush2.msra.mxu0 0.0
    %1700 = vmatprep.subr.mxu0 0.0
    %1701 = vmatpush2.msra.mxu0 0.0
    %1702 = vmatprep.subr.mxu0 0.0
    %1703 = vmatpush2.msra.mxu0 0.0
    %1704 = vmatprep.subr.mxu0 0.0
    %1705 = vmatpush2.msra.mxu0 0.0
    %1706 = vmatprep.subr.mxu0 0.0
    %1707 = vmatpush2.msra.mxu0 0.0
    %1708 = vmatprep.subr.mxu0 0.0
    %1709 = vmatpush2.msra.mxu0 0.0
    %1710 = vmatprep.subr.mxu0 0.0
    %1711 = vmatpush2.msra.mxu0 0.0
    %1712 = vmatprep.subr.mxu0 0.0
    %1713 = vmatpush2.msra.mxu0 0.0
    %1714 = vmatprep.subr.mxu0 0.0
    %1715 = vmatpush2.msra.mxu0 0.0
    %1716 = vmatprep.subr.mxu0 0.0
    %1717 = vmatpush2.msra.mxu0 0.0
    %1718 = vmatprep.mubr.f32.mxu0 0.0
    %1719 = vmatmul.mubr.f32.gmra.mxu0 %v1652
    %v1720 = vpop.f32.mrf.mxu0
    %v1721 = vadd.f32 0.0, %v1720
    %v1722 = vpop.f32.mrf.mxu0
    %1723 = vdwg.mxu0
    %1724 = vrot.lane.b32.xlu0 %v389, 112
    %v1725 = vpop.permute.xlu0 %1724
    %1726 = vrot.lane.b32.xlu0 %v389, 80
    %v1727 = vpop.permute.xlu0 %1726
    %v1728 = vsel %vm410, %v1725, 0
    %v1730 = vsel %vm410, %v1727, 0
    %1732 = vmatprep.subr.mxu0 0.0
    %1733 = vmatpush1.xpose.msra.mxu0 0.0
    %1734 = vmatprep.subr.mxu0 0.0
    %1735 = vmatpush1.xpose.msra.mxu0 0.0
    %1736 = vmatprep.subr.mxu0 0.0
    %1737 = vmatpush1.xpose.msra.mxu0 0.0
    %1738 = vmatprep.subr.mxu0 0.0
    %1739 = vmatpush1.xpose.msra.mxu0 0.0
    %1740 = vmatprep.subr.mxu0 0.0
    %1741 = vmatpush1.xpose.msra.mxu0 0.0
    %1742 = vmatprep.subr.mxu0 0.0
    %1743 = vmatpush1.xpose.msra.mxu0 0.0
    %1744 = vmatprep.subr.mxu0 0.0
    %1745 = vmatpush1.xpose.msra.mxu0 0.0
    %1746 = vmatprep.subr.mxu0 0.0
    %1747 = vmatpush1.xpose.msra.mxu0 0.0
    %1748 = vmatprep.subr.mxu0 0.0
    %1749 = vmatpush1.xpose.msra.mxu0 0.0
    %1750 = vmatprep.subr.mxu0 0.0
    %1751 = vmatpush1.xpose.msra.mxu0 0.0
    %1752 = vmatprep.subr.mxu0 0.0
    %1753 = vmatpush1.xpose.msra.mxu0 0.0
    %1754 = vmatprep.subr.mxu0 0.0
    %1755 = vmatpush1.xpose.msra.mxu0 0.0
    %1756 = vmatprep.subr.mxu0 0.0
    %1757 = vmatpush1.xpose.msra.mxu0 0.0
    %1758 = vmatprep.subr.mxu0 0.0
    %1759 = vmatpush1.xpose.msra.mxu0 0.0
    %1760 = vmatprep.subr.mxu0 0.0
    %1761 = vmatpush1.xpose.msra.mxu0 0.0
    %1762 = vmatprep.subr.mxu0 0.0
    %1763 = vmatpush1.xpose.msra.mxu0 %v1730
    %1764 = vmatprep.subr.mxu0 0.0
    %1765 = vmatpush2.xpose.msra.mxu0 0.0
    %1766 = vmatprep.subr.mxu0 0.0
    %1767 = vmatpush2.xpose.msra.mxu0 0.0
    %1768 = vmatprep.subr.mxu0 0.0
    %1769 = vmatpush2.xpose.msra.mxu0 0.0
    %1770 = vmatprep.subr.mxu0 0.0
    %1771 = vmatpush2.xpose.msra.mxu0 0.0
    %1772 = vmatprep.subr.mxu0 0.0
    %1773 = vmatpush2.xpose.msra.mxu0 0.0
    %1774 = vmatprep.subr.mxu0 0.0
    %1775 = vmatpush2.xpose.msra.mxu0 0.0
    %1776 = vmatprep.subr.mxu0 0.0
    %1777 = vmatpush2.xpose.msra.mxu0 0.0
    %1778 = vmatprep.subr.mxu0 0.0
    %1779 = vmatpush2.xpose.msra.mxu0 0.0
    %1780 = vmatprep.subr.mxu0 0.0
    %1781 = vmatpush2.xpose.msra.mxu0 0.0
    %1782 = vmatprep.subr.mxu0 0.0
    %1783 = vmatpush2.xpose.msra.mxu0 0.0
    %1784 = vmatprep.subr.mxu0 0.0
    %1785 = vmatpush2.xpose.msra.mxu0 0.0
    %1786 = vmatprep.subr.mxu0 0.0
    %1787 = vmatpush2.xpose.msra.mxu0 0.0
    %1788 = vmatprep.subr.mxu0 0.0
    %1789 = vmatpush2.xpose.msra.mxu0 0.0
    %1790 = vmatprep.subr.mxu0 0.0
    %1791 = vmatpush2.xpose.msra.mxu0 0.0
    %1792 = vmatprep.subr.mxu0 0.0
    %1793 = vmatpush2.xpose.msra.mxu0 0.0
    %1794 = vmatprep.subr.mxu0 0.0
    %1795 = vmatpush2.xpose.msra.mxu0 0.0
    %1796 = vmatprep.mubr.f32.mxu0 0.0
    %1797 = vmatmul.mubr.f32.gmra.mxu0 %v1728
    %v1798 = vpop.f32.mrf.mxu0
    %v1799 = vadd.f32 0.0, %v1798
    %v1800 = vpop.f32.mrf.mxu0
    %1801 = vdwg.mxu0
    %1802 = vrot.lane.b32.xlu0 %v394, 112
    %v1803 = vpop.permute.xlu0 %1802
    %1804 = vrot.lane.b32.xlu0 %v394, 80
    %v1805 = vpop.permute.xlu0 %1804
    %v1806 = vsel %vm410, %v1803, 0
    %v1808 = vsel %vm410, %v1805, 0
    %1810 = vmatprep.subr.mxu0 0.0
    %1811 = vmatpush1.xpose.msra.mxu0 0.0
    %1812 = vmatprep.subr.mxu0 0.0
    %1813 = vmatpush1.xpose.msra.mxu0 0.0
    %1814 = vmatprep.subr.mxu0 0.0
    %1815 = vmatpush1.xpose.msra.mxu0 0.0
    %1816 = vmatprep.subr.mxu0 0.0
    %1817 = vmatpush1.xpose.msra.mxu0 0.0
    %1818 = vmatprep.subr.mxu0 0.0
    %1819 = vmatpush1.xpose.msra.mxu0 0.0
    %1820 = vmatprep.subr.mxu0 0.0
    %1821 = vmatpush1.xpose.msra.mxu0 0.0
    %1822 = vmatprep.subr.mxu0 0.0
    %1823 = vmatpush1.xpose.msra.mxu0 0.0
    %1824 = vmatprep.subr.mxu0 0.0
    %1825 = vmatpush1.xpose.msra.mxu0 0.0
    %1826 = vmatprep.subr.mxu0 0.0
    %1827 = vmatpush1.xpose.msra.mxu0 0.0
    %1828 = vmatprep.subr.mxu0 0.0
    %1829 = vmatpush1.xpose.msra.mxu0 0.0
    %1830 = vmatprep.subr.mxu0 0.0
    %1831 = vmatpush1.xpose.msra.mxu0 0.0
    %1832 = vmatprep.subr.mxu0 0.0
    %1833 = vmatpush1.xpose.msra.mxu0 0.0
    %1834 = vmatprep.subr.mxu0 0.0
    %1835 = vmatpush1.xpose.msra.mxu0 0.0
    %1836 = vmatprep.subr.mxu0 0.0
    %1837 = vmatpush1.xpose.msra.mxu0 0.0
    %1838 = vmatprep.subr.mxu0 0.0
    %1839 = vmatpush1.xpose.msra.mxu0 0.0
    %1840 = vmatprep.subr.mxu0 0.0
    %1841 = vmatpush1.xpose.msra.mxu0 %v1808
    %1842 = vmatprep.subr.mxu0 0.0
    %1843 = vmatpush2.xpose.msra.mxu0 0.0
    %1844 = vmatprep.subr.mxu0 0.0
    %1845 = vmatpush2.xpose.msra.mxu0 0.0
    %1846 = vmatprep.subr.mxu0 0.0
    %1847 = vmatpush2.xpose.msra.mxu0 0.0
    %1848 = vmatprep.subr.mxu0 0.0
    %1849 = vmatpush2.xpose.msra.mxu0 0.0
    %1850 = vmatprep.subr.mxu0 0.0
    %1851 = vmatpush2.xpose.msra.mxu0 0.0
    %1852 = vmatprep.subr.mxu0 0.0
    %1853 = vmatpush2.xpose.msra.mxu0 0.0
    %1854 = vmatprep.subr.mxu0 0.0
    %1855 = vmatpush2.xpose.msra.mxu0 0.0
    %1856 = vmatprep.subr.mxu0 0.0
    %1857 = vmatpush2.xpose.msra.mxu0 0.0
    %1858 = vmatprep.subr.mxu0 0.0
    %1859 = vmatpush2.xpose.msra.mxu0 0.0
    %1860 = vmatprep.subr.mxu0 0.0
    %1861 = vmatpush2.xpose.msra.mxu0 0.0
    %1862 = vmatprep.subr.mxu0 0.0
    %1863 = vmatpush2.xpose.msra.mxu0 0.0
    %1864 = vmatprep.subr.mxu0 0.0
    %1865 = vmatpush2.xpose.msra.mxu0 0.0
    %1866 = vmatprep.subr.mxu0 0.0
    %1867 = vmatpush2.xpose.msra.mxu0 0.0
    %1868 = vmatprep.subr.mxu0 0.0
    %1869 = vmatpush2.xpose.msra.mxu0 0.0
    %1870 = vmatprep.subr.mxu0 0.0
    %1871 = vmatpush2.xpose.msra.mxu0 0.0
    %1872 = vmatprep.subr.mxu0 0.0
    %1873 = vmatpush2.xpose.msra.mxu0 0.0
    %1874 = vmatprep.mubr.f32.mxu0 0.0
    %1875 = vmatmul.mubr.f32.gmra.mxu0 %v1806
    %v1876 = vpop.f32.mrf.mxu0
    %v1877 = vadd.f32 0.0, %v1876
    %v1878 = vpop.f32.mrf.mxu0
    %1879 = vdwg.mxu0
    %1880 = vrot.lane.b32.xlu0 %v399, 112
    %v1881 = vpop.permute.xlu0 %1880
    %1882 = vrot.lane.b32.xlu0 %v399, 80
    %v1883 = vpop.permute.xlu0 %1882
    %v1884 = vsel %vm410, %v1881, 0
    %v1886 = vsel %vm410, %v1883, 0
    %1888 = vmatprep.subr.mxu0 0.0
    %1889 = vmatpush1.xpose.msra.mxu0 0.0
    %1890 = vmatprep.subr.mxu0 0.0
    %1891 = vmatpush1.xpose.msra.mxu0 0.0
    %1892 = vmatprep.subr.mxu0 0.0
    %1893 = vmatpush1.xpose.msra.mxu0 0.0
    %1894 = vmatprep.subr.mxu0 0.0
    %1895 = vmatpush1.xpose.msra.mxu0 0.0
    %1896 = vmatprep.subr.mxu0 0.0
    %1897 = vmatpush1.xpose.msra.mxu0 0.0
    %1898 = vmatprep.subr.mxu0 0.0
    %1899 = vmatpush1.xpose.msra.mxu0 0.0
    %1900 = vmatprep.subr.mxu0 0.0
    %1901 = vmatpush1.xpose.msra.mxu0 0.0
    %1902 = vmatprep.subr.mxu0 0.0
    %1903 = vmatpush1.xpose.msra.mxu0 0.0
    %1904 = vmatprep.subr.mxu0 0.0
    %1905 = vmatpush1.xpose.msra.mxu0 0.0
    %1906 = vmatprep.subr.mxu0 0.0
    %1907 = vmatpush1.xpose.msra.mxu0 0.0
    %1908 = vmatprep.subr.mxu0 0.0
    %1909 = vmatpush1.xpose.msra.mxu0 0.0
    %1910 = vmatprep.subr.mxu0 0.0
    %1911 = vmatpush1.xpose.msra.mxu0 0.0
    %1912 = vmatprep.subr.mxu0 0.0
    %1913 = vmatpush1.xpose.msra.mxu0 0.0
    %1914 = vmatprep.subr.mxu0 0.0
    %1915 = vmatpush1.xpose.msra.mxu0 0.0
    %1916 = vmatprep.subr.mxu0 0.0
    %1917 = vmatpush1.xpose.msra.mxu0 0.0
    %1918 = vmatprep.subr.mxu0 0.0
    %1919 = vmatpush1.xpose.msra.mxu0 %v1886
    %1920 = vmatprep.subr.mxu0 0.0
    %1921 = vmatpush2.xpose.msra.mxu0 0.0
    %1922 = vmatprep.subr.mxu0 0.0
    %1923 = vmatpush2.xpose.msra.mxu0 0.0
    %1924 = vmatprep.subr.mxu0 0.0
    %1925 = vmatpush2.xpose.msra.mxu0 0.0
    %1926 = vmatprep.subr.mxu0 0.0
    %1927 = vmatpush2.xpose.msra.mxu0 0.0
    %1928 = vmatprep.subr.mxu0 0.0
    %1929 = vmatpush2.xpose.msra.mxu0 0.0
    %1930 = vmatprep.subr.mxu0 0.0
    %1931 = vmatpush2.xpose.msra.mxu0 0.0
    %1932 = vmatprep.subr.mxu0 0.0
    %1933 = vmatpush2.xpose.msra.mxu0 0.0
    %1934 = vmatprep.subr.mxu0 0.0
    %1935 = vmatpush2.xpose.msra.mxu0 0.0
    %1936 = vmatprep.subr.mxu0 0.0
    %1937 = vmatpush2.xpose.msra.mxu0 0.0
    %1938 = vmatprep.subr.mxu0 0.0
    %1939 = vmatpush2.xpose.msra.mxu0 0.0
    %1940 = vmatprep.subr.mxu0 0.0
    %1941 = vmatpush2.xpose.msra.mxu0 0.0
    %1942 = vmatprep.subr.mxu0 0.0
    %1943 = vmatpush2.xpose.msra.mxu0 0.0
    %1944 = vmatprep.subr.mxu0 0.0
    %1945 = vmatpush2.xpose.msra.mxu0 0.0
    %1946 = vmatprep.subr.mxu0 0.0
    %1947 = vmatpush2.xpose.msra.mxu0 0.0
    %1948 = vmatprep.subr.mxu0 0.0
    %1949 = vmatpush2.xpose.msra.mxu0 0.0
    %1950 = vmatprep.subr.mxu0 0.0
    %1951 = vmatpush2.xpose.msra.mxu0 0.0
    %1952 = vmatprep.mubr.f32.mxu0 0.0
    %1953 = vmatmul.mubr.f32.gmra.mxu0 %v1884
    %v1954 = vpop.f32.mrf.mxu0
    %v1955 = vadd.f32 0.0, %v1954
    %v1956 = vpop.f32.mrf.mxu0
    %1957 = vdwg.mxu0
    %1958 = vrot.lane.b32.xlu0 %v404, 112
    %v1959 = vpop.permute.xlu0 %1958
    %1960 = vrot.lane.b32.xlu0 %v404, 80
    %v1961 = vpop.permute.xlu0 %1960
    %v1962 = vsel %vm410, %v1959, 0
    %v1964 = vsel %vm410, %v1961, 0
    %1966 = vmatprep.subr.mxu0 0.0
    %1967 = vmatpush1.xpose.msra.mxu0 0.0
    %1968 = vmatprep.subr.mxu0 0.0
    %1969 = vmatpush1.xpose.msra.mxu0 0.0
    %1970 = vmatprep.subr.mxu0 0.0
    %1971 = vmatpush1.xpose.msra.mxu0 0.0
    %1972 = vmatprep.subr.mxu0 0.0
    %1973 = vmatpush1.xpose.msra.mxu0 0.0
    %1974 = vmatprep.subr.mxu0 0.0
    %1975 = vmatpush1.xpose.msra.mxu0 0.0
    %1976 = vmatprep.subr.mxu0 0.0
    %1977 = vmatpush1.xpose.msra.mxu0 0.0
    %1978 = vmatprep.subr.mxu0 0.0
    %1979 = vmatpush1.xpose.msra.mxu0 0.0
    %1980 = vmatprep.subr.mxu0 0.0
    %1981 = vmatpush1.xpose.msra.mxu0 0.0
    %1982 = vmatprep.subr.mxu0 0.0
    %1983 = vmatpush1.xpose.msra.mxu0 0.0
    %1984 = vmatprep.subr.mxu0 0.0
    %1985 = vmatpush1.xpose.msra.mxu0 0.0
    %1986 = vmatprep.subr.mxu0 0.0
    %1987 = vmatpush1.xpose.msra.mxu0 0.0
    %1988 = vmatprep.subr.mxu0 0.0
    %1989 = vmatpush1.xpose.msra.mxu0 0.0
    %1990 = vmatprep.subr.mxu0 0.0
    %1991 = vmatpush1.xpose.msra.mxu0 0.0
    %1992 = vmatprep.subr.mxu0 0.0
    %1993 = vmatpush1.xpose.msra.mxu0 0.0
    %1994 = vmatprep.subr.mxu0 0.0
    %1995 = vmatpush1.xpose.msra.mxu0 0.0
    %1996 = vmatprep.subr.mxu0 0.0
    %1997 = vmatpush1.xpose.msra.mxu0 %v1964
    %1998 = vmatprep.subr.mxu0 0.0
    %1999 = vmatpush2.xpose.msra.mxu0 0.0
    %2000 = vmatprep.subr.mxu0 0.0
    %2001 = vmatpush2.xpose.msra.mxu0 0.0
    %2002 = vmatprep.subr.mxu0 0.0
    %2003 = vmatpush2.xpose.msra.mxu0 0.0
    %2004 = vmatprep.subr.mxu0 0.0
    %2005 = vmatpush2.xpose.msra.mxu0 0.0
    %2006 = vmatprep.subr.mxu0 0.0
    %2007 = vmatpush2.xpose.msra.mxu0 0.0
    %2008 = vmatprep.subr.mxu0 0.0
    %2009 = vmatpush2.xpose.msra.mxu0 0.0
    %2010 = vmatprep.subr.mxu0 0.0
    %2011 = vmatpush2.xpose.msra.mxu0 0.0
    %2012 = vmatprep.subr.mxu0 0.0
    %2013 = vmatpush2.xpose.msra.mxu0 0.0
    %2014 = vmatprep.subr.mxu0 0.0
    %2015 = vmatpush2.xpose.msra.mxu0 0.0
    %2016 = vmatprep.subr.mxu0 0.0
    %2017 = vmatpush2.xpose.msra.mxu0 0.0
    %2018 = vmatprep.subr.mxu0 0.0
    %2019 = vmatpush2.xpose.msra.mxu0 0.0
    %2020 = vmatprep.subr.mxu0 0.0
    %2021 = vmatpush2.xpose.msra.mxu0 0.0
    %2022 = vmatprep.subr.mxu0 0.0
    %2023 = vmatpush2.xpose.msra.mxu0 0.0
    %2024 = vmatprep.subr.mxu0 0.0
    %2025 = vmatpush2.xpose.msra.mxu0 0.0
    %2026 = vmatprep.subr.mxu0 0.0
    %2027 = vmatpush2.xpose.msra.mxu0 0.0
    %2028 = vmatprep.subr.mxu0 0.0
    %2029 = vmatpush2.xpose.msra.mxu0 0.0
    %2030 = vmatprep.mubr.f32.mxu0 0.0
    %2031 = vmatmul.mubr.f32.gmra.mxu0 %v1962
    %v2032 = vpop.f32.mrf.mxu0
    %v2033 = vadd.f32 0.0, %v2032
    %v2034 = vpop.f32.mrf.mxu0
    %2035 = vdwg.mxu0
    %v2036 = vsel %vm410, %v1799, -inf
    %2037 = vmax.xlane.f32.xlu0 %v2036
    %v2038 = vpop.xlane.xlu0 %2037
    %v2039 = vsel %vm410, %v1877, -inf
    %2040 = vmax.xlane.f32.xlu0 %v2039
    %v2041 = vpop.xlane.xlu0 %2040
    %v2042 = vsel %vm410, %v1955, -inf
    %2043 = vmax.xlane.f32.xlu0 %v2042
    %v2044 = vpop.xlane.xlu0 %2043
    %v2045 = vsel %vm410, %v2033, -inf
    %2046 = vmax.xlane.f32.xlu0 %v2045
    %v2047 = vpop.xlane.xlu0 %2046
    %v2048 = vsub.f32 %v1799, %v2038
    %v2049 = vsub.f32 %v1877, %v2041
    %v2050 = vsub.f32 %v1955, %v2044
    %v2051 = vsub.f32 %v2033, %v2047
    %v2052 = vmul.f32 %v2048, 1.442695
    %v2053 = vpow.pop %v2052
    %v2054 = vmul.f32 %v2049, 1.442695
    %v2055 = vpow.pop %v2054
    %v2056 = vmul.f32 %v2050, 1.442695
    %v2057 = vpow.pop %v2056
    %v2058 = vmul.f32 %v2051, 1.442695
    %v2059 = vpow.pop %v2058
    %v2060 = vsel %vm410, %v2053, 0.0
    %2061 = vadd.xlane.f32.xlu0 %v2060
    %v2062 = vpop.xlane.xlu0 %2061
    %v2063 = vsel %vm410, %v2055, 0.0
    %2064 = vadd.xlane.f32.xlu0 %v2063
    %v2065 = vpop.xlane.xlu0 %2064
    %v2066 = vsel %vm410, %v2057, 0.0
    %2067 = vadd.xlane.f32.xlu0 %v2066
    %v2068 = vpop.xlane.xlu0 %2067
    %v2069 = vsel %vm410, %v2059, 0.0
    %2070 = vadd.xlane.f32.xlu0 %v2069
    %v2071 = vpop.xlane.xlu0 %2070
    %v2072 = vrcp.pop %v2062
    %v2073 = vrcp.pop %v2065
    %v2074 = vrcp.pop %v2068
    %v2075 = vrcp.pop %v2071
    %v2076 = vmul.f32 %v2053, %v2072
    %v2077 = vmul.f32 %v2055, %v2073
    %v2078 = vmul.f32 %v2057, %v2074
    %v2079 = vmul.f32 %v2059, %v2075
    %2080 = vrot.lane.b32.xlu0 %v389, 48
    %v2081 = vpop.permute.xlu0 %2080
    %v2084 = vsel %vm410, %v2076, 0
    %2086 = vmatprep.subr.mxu0 0.0
    %2087 = vmatpush1.msra.mxu0 0.0
    %2088 = vmatprep.subr.mxu0 0.0
    %2089 = vmatpush1.msra.mxu0 0.0
    %2090 = vmatprep.subr.mxu0 0.0
    %2091 = vmatpush1.msra.mxu0 0.0
    %2092 = vmatprep.subr.mxu0 0.0
    %2093 = vmatpush1.msra.mxu0 0.0
    %2094 = vmatprep.subr.mxu0 0.0
    %2095 = vmatpush1.msra.mxu0 0.0
    %2096 = vmatprep.subr.mxu0 0.0
    %2097 = vmatpush1.msra.mxu0 0.0
    %2098 = vmatprep.subr.mxu0 0.0
    %2099 = vmatpush1.msra.mxu0 0.0
    %2100 = vmatprep.subr.mxu0 0.0
    %2101 = vmatpush1.msra.mxu0 0.0
    %2102 = vmatprep.subr.mxu0 0.0
    %2103 = vmatpush1.msra.mxu0 0.0
    %2104 = vmatprep.subr.mxu0 0.0
    %2105 = vmatpush1.msra.mxu0 0.0
    %2106 = vmatprep.subr.mxu0 0.0
    %2107 = vmatpush1.msra.mxu0 0.0
    %2108 = vmatprep.subr.mxu0 0.0
    %2109 = vmatpush1.msra.mxu0 0.0
    %2110 = vmatprep.subr.mxu0 0.0
    %2111 = vmatpush1.msra.mxu0 0.0
    %2112 = vmatprep.subr.mxu0 0.0
    %2113 = vmatpush1.msra.mxu0 0.0
    %2114 = vmatprep.subr.mxu0 0.0
    %2115 = vmatpush1.msra.mxu0 0.0
    %2116 = vmatprep.subr.mxu0 0.0
    %2117 = vmatpush1.msra.mxu0 %v2081
    %2118 = vmatprep.subr.mxu0 0.0
    %2119 = vmatpush2.msra.mxu0 0.0
    %2120 = vmatprep.subr.mxu0 0.0
    %2121 = vmatpush2.msra.mxu0 0.0
    %2122 = vmatprep.subr.mxu0 0.0
    %2123 = vmatpush2.msra.mxu0 0.0
    %2124 = vmatprep.subr.mxu0 0.0
    %2125 = vmatpush2.msra.mxu0 0.0
    %2126 = vmatprep.subr.mxu0 0.0
    %2127 = vmatpush2.msra.mxu0 0.0
    %2128 = vmatprep.subr.mxu0 0.0
    %2129 = vmatpush2.msra.mxu0 0.0
    %2130 = vmatprep.subr.mxu0 0.0
    %2131 = vmatpush2.msra.mxu0 0.0
    %2132 = vmatprep.subr.mxu0 0.0
    %2133 = vmatpush2.msra.mxu0 0.0
    %2134 = vmatprep.subr.mxu0 0.0
    %2135 = vmatpush2.msra.mxu0 0.0
    %2136 = vmatprep.subr.mxu0 0.0
    %2137 = vmatpush2.msra.mxu0 0.0
    %2138 = vmatprep.subr.mxu0 0.0
    %2139 = vmatpush2.msra.mxu0 0.0
    %2140 = vmatprep.subr.mxu0 0.0
    %2141 = vmatpush2.msra.mxu0 0.0
    %2142 = vmatprep.subr.mxu0 0.0
    %2143 = vmatpush2.msra.mxu0 0.0
    %2144 = vmatprep.subr.mxu0 0.0
    %2145 = vmatpush2.msra.mxu0 0.0
    %2146 = vmatprep.subr.mxu0 0.0
    %2147 = vmatpush2.msra.mxu0 0.0
    %2148 = vmatprep.subr.mxu0 0.0
    %2149 = vmatpush2.msra.mxu0 0.0
    %2150 = vmatprep.mubr.f32.mxu0 0.0
    %2151 = vmatmul.mubr.f32.gmra.mxu0 %v2084
    %v2152 = vpop.f32.mrf.mxu0
    %v2153 = vadd.f32 0.0, %v2152
    %v2154 = vpop.f32.mrf.mxu0
    %2155 = vdwg.mxu0
    %2156 = vrot.lane.b32.xlu0 %v394, 48
    %v2157 = vpop.permute.xlu0 %2156
    %v2160 = vsel %vm410, %v2077, 0
    %2162 = vmatprep.subr.mxu0 0.0
    %2163 = vmatpush1.msra.mxu0 0.0
    %2164 = vmatprep.subr.mxu0 0.0
    %2165 = vmatpush1.msra.mxu0 0.0
    %2166 = vmatprep.subr.mxu0 0.0
    %2167 = vmatpush1.msra.mxu0 0.0
    %2168 = vmatprep.subr.mxu0 0.0
    %2169 = vmatpush1.msra.mxu0 0.0
    %2170 = vmatprep.subr.mxu0 0.0
    %2171 = vmatpush1.msra.mxu0 0.0
    %2172 = vmatprep.subr.mxu0 0.0
    %2173 = vmatpush1.msra.mxu0 0.0
    %2174 = vmatprep.subr.mxu0 0.0
    %2175 = vmatpush1.msra.mxu0 0.0
    %2176 = vmatprep.subr.mxu0 0.0
    %2177 = vmatpush1.msra.mxu0 0.0
    %2178 = vmatprep.subr.mxu0 0.0
    %2179 = vmatpush1.msra.mxu0 0.0
    %2180 = vmatprep.subr.mxu0 0.0
    %2181 = vmatpush1.msra.mxu0 0.0
    %2182 = vmatprep.subr.mxu0 0.0
    %2183 = vmatpush1.msra.mxu0 0.0
    %2184 = vmatprep.subr.mxu0 0.0
    %2185 = vmatpush1.msra.mxu0 0.0
    %2186 = vmatprep.subr.mxu0 0.0
    %2187 = vmatpush1.msra.mxu0 0.0
    %2188 = vmatprep.subr.mxu0 0.0
    %2189 = vmatpush1.msra.mxu0 0.0
    %2190 = vmatprep.subr.mxu0 0.0
    %2191 = vmatpush1.msra.mxu0 0.0
    %2192 = vmatprep.subr.mxu0 0.0
    %2193 = vmatpush1.msra.mxu0 %v2157
    %2194 = vmatprep.subr.mxu0 0.0
    %2195 = vmatpush2.msra.mxu0 0.0
    %2196 = vmatprep.subr.mxu0 0.0
    %2197 = vmatpush2.msra.mxu0 0.0
    %2198 = vmatprep.subr.mxu0 0.0
    %2199 = vmatpush2.msra.mxu0 0.0
    %2200 = vmatprep.subr.mxu0 0.0
    %2201 = vmatpush2.msra.mxu0 0.0
    %2202 = vmatprep.subr.mxu0 0.0
    %2203 = vmatpush2.msra.mxu0 0.0
    %2204 = vmatprep.subr.mxu0 0.0
    %2205 = vmatpush2.msra.mxu0 0.0
    %2206 = vmatprep.subr.mxu0 0.0
    %2207 = vmatpush2.msra.mxu0 0.0
    %2208 = vmatprep.subr.mxu0 0.0
    %2209 = vmatpush2.msra.mxu0 0.0
    %2210 = vmatprep.subr.mxu0 0.0
    %2211 = vmatpush2.msra.mxu0 0.0
    %2212 = vmatprep.subr.mxu0 0.0
    %2213 = vmatpush2.msra.mxu0 0.0
    %2214 = vmatprep.subr.mxu0 0.0
    %2215 = vmatpush2.msra.mxu0 0.0
    %2216 = vmatprep.subr.mxu0 0.0
    %2217 = vmatpush2.msra.mxu0 0.0
    %2218 = vmatprep.subr.mxu0 0.0
    %2219 = vmatpush2.msra.mxu0 0.0
    %2220 = vmatprep.subr.mxu0 0.0
    %2221 = vmatpush2.msra.mxu0 0.0
    %2222 = vmatprep.subr.mxu0 0.0
    %2223 = vmatpush2.msra.mxu0 0.0
    %2224 = vmatprep.subr.mxu0 0.0
    %2225 = vmatpush2.msra.mxu0 0.0
    %2226 = vmatprep.mubr.f32.mxu0 0.0
    %2227 = vmatmul.mubr.f32.gmra.mxu0 %v2160
    %v2228 = vpop.f32.mrf.mxu0
    %v2229 = vadd.f32 0.0, %v2228
    %v2230 = vpop.f32.mrf.mxu0
    %2231 = vdwg.mxu0
    %2232 = vrot.lane.b32.xlu0 %v399, 48
    %v2233 = vpop.permute.xlu0 %2232
    %v2236 = vsel %vm410, %v2078, 0
    %2238 = vmatprep.subr.mxu0 0.0
    %2239 = vmatpush1.msra.mxu0 0.0
    %2240 = vmatprep.subr.mxu0 0.0
    %2241 = vmatpush1.msra.mxu0 0.0
    %2242 = vmatprep.subr.mxu0 0.0
    %2243 = vmatpush1.msra.mxu0 0.0
    %2244 = vmatprep.subr.mxu0 0.0
    %2245 = vmatpush1.msra.mxu0 0.0
    %2246 = vmatprep.subr.mxu0 0.0
    %2247 = vmatpush1.msra.mxu0 0.0
    %2248 = vmatprep.subr.mxu0 0.0
    %2249 = vmatpush1.msra.mxu0 0.0
    %2250 = vmatprep.subr.mxu0 0.0
    %2251 = vmatpush1.msra.mxu0 0.0
    %2252 = vmatprep.subr.mxu0 0.0
    %2253 = vmatpush1.msra.mxu0 0.0
    %2254 = vmatprep.subr.mxu0 0.0
    %2255 = vmatpush1.msra.mxu0 0.0
    %2256 = vmatprep.subr.mxu0 0.0
    %2257 = vmatpush1.msra.mxu0 0.0
    %2258 = vmatprep.subr.mxu0 0.0
    %2259 = vmatpush1.msra.mxu0 0.0
    %2260 = vmatprep.subr.mxu0 0.0
    %2261 = vmatpush1.msra.mxu0 0.0
    %2262 = vmatprep.subr.mxu0 0.0
    %2263 = vmatpush1.msra.mxu0 0.0
    %2264 = vmatprep.subr.mxu0 0.0
    %2265 = vmatpush1.msra.mxu0 0.0
    %2266 = vmatprep.subr.mxu0 0.0
    %2267 = vmatpush1.msra.mxu0 0.0
    %2268 = vmatprep.subr.mxu0 0.0
    %2269 = vmatpush1.msra.mxu0 %v2233
    %2270 = vmatprep.subr.mxu0 0.0
    %2271 = vmatpush2.msra.mxu0 0.0
    %2272 = vmatprep.subr.mxu0 0.0
    %2273 = vmatpush2.msra.mxu0 0.0
    %2274 = vmatprep.subr.mxu0 0.0
    %2275 = vmatpush2.msra.mxu0 0.0
    %2276 = vmatprep.subr.mxu0 0.0
    %2277 = vmatpush2.msra.mxu0 0.0
    %2278 = vmatprep.subr.mxu0 0.0
    %2279 = vmatpush2.msra.mxu0 0.0
    %2280 = vmatprep.subr.mxu0 0.0
    %2281 = vmatpush2.msra.mxu0 0.0
    %2282 = vmatprep.subr.mxu0 0.0
    %2283 = vmatpush2.msra.mxu0 0.0
    %2284 = vmatprep.subr.mxu0 0.0
    %2285 = vmatpush2.msra.mxu0 0.0
    %2286 = vmatprep.subr.mxu0 0.0
    %2287 = vmatpush2.msra.mxu0 0.0
    %2288 = vmatprep.subr.mxu0 0.0
    %2289 = vmatpush2.msra.mxu0 0.0
    %2290 = vmatprep.subr.mxu0 0.0
    %2291 = vmatpush2.msra.mxu0 0.0
    %2292 = vmatprep.subr.mxu0 0.0
    %2293 = vmatpush2.msra.mxu0 0.0
    %2294 = vmatprep.subr.mxu0 0.0
    %2295 = vmatpush2.msra.mxu0 0.0
    %2296 = vmatprep.subr.mxu0 0.0
    %2297 = vmatpush2.msra.mxu0 0.0
    %2298 = vmatprep.subr.mxu0 0.0
    %2299 = vmatpush2.msra.mxu0 0.0
    %2300 = vmatprep.subr.mxu0 0.0
    %2301 = vmatpush2.msra.mxu0 0.0
    %2302 = vmatprep.mubr.f32.mxu0 0.0
    %2303 = vmatmul.mubr.f32.gmra.mxu0 %v2236
    %v2304 = vpop.f32.mrf.mxu0
    %v2305 = vadd.f32 0.0, %v2304
    %v2306 = vpop.f32.mrf.mxu0
    %2307 = vdwg.mxu0
    %2308 = vrot.lane.b32.xlu0 %v404, 48
    %v2309 = vpop.permute.xlu0 %2308
    %v2312 = vsel %vm410, %v2079, 0
    %2314 = vmatprep.subr.mxu0 0.0
    %2315 = vmatpush1.msra.mxu0 0.0
    %2316 = vmatprep.subr.mxu0 0.0
    %2317 = vmatpush1.msra.mxu0 0.0
    %2318 = vmatprep.subr.mxu0 0.0
    %2319 = vmatpush1.msra.mxu0 0.0
    %2320 = vmatprep.subr.mxu0 0.0
    %2321 = vmatpush1.msra.mxu0 0.0
    %2322 = vmatprep.subr.mxu0 0.0
    %2323 = vmatpush1.msra.mxu0 0.0
    %2324 = vmatprep.subr.mxu0 0.0
    %2325 = vmatpush1.msra.mxu0 0.0
    %2326 = vmatprep.subr.mxu0 0.0
    %2327 = vmatpush1.msra.mxu0 0.0
    %2328 = vmatprep.subr.mxu0 0.0
    %2329 = vmatpush1.msra.mxu0 0.0
    %2330 = vmatprep.subr.mxu0 0.0
    %2331 = vmatpush1.msra.mxu0 0.0
    %2332 = vmatprep.subr.mxu0 0.0
    %2333 = vmatpush1.msra.mxu0 0.0
    %2334 = vmatprep.subr.mxu0 0.0
    %2335 = vmatpush1.msra.mxu0 0.0
    %2336 = vmatprep.subr.mxu0 0.0
    %2337 = vmatpush1.msra.mxu0 0.0
    %2338 = vmatprep.subr.mxu0 0.0
    %2339 = vmatpush1.msra.mxu0 0.0
    %2340 = vmatprep.subr.mxu0 0.0
    %2341 = vmatpush1.msra.mxu0 0.0
    %2342 = vmatprep.subr.mxu0 0.0
    %2343 = vmatpush1.msra.mxu0 0.0
    %2344 = vmatprep.subr.mxu0 0.0
    %2345 = vmatpush1.msra.mxu0 %v2309
    %2346 = vmatprep.subr.mxu0 0.0
    %2347 = vmatpush2.msra.mxu0 0.0
    %2348 = vmatprep.subr.mxu0 0.0
    %2349 = vmatpush2.msra.mxu0 0.0
    %2350 = vmatprep.subr.mxu0 0.0
    %2351 = vmatpush2.msra.mxu0 0.0
    %2352 = vmatprep.subr.mxu0 0.0
    %2353 = vmatpush2.msra.mxu0 0.0
    %2354 = vmatprep.subr.mxu0 0.0
    %2355 = vmatpush2.msra.mxu0 0.0
    %2356 = vmatprep.subr.mxu0 0.0
    %2357 = vmatpush2.msra.mxu0 0.0
    %2358 = vmatprep.subr.mxu0 0.0
    %2359 = vmatpush2.msra.mxu0 0.0
    %2360 = vmatprep.subr.mxu0 0.0
    %2361 = vmatpush2.msra.mxu0 0.0
    %2362 = vmatprep.subr.mxu0 0.0
    %2363 = vmatpush2.msra.mxu0 0.0
    %2364 = vmatprep.subr.mxu0 0.0
    %2365 = vmatpush2.msra.mxu0 0.0
    %2366 = vmatprep.subr.mxu0 0.0
    %2367 = vmatpush2.msra.mxu0 0.0
    %2368 = vmatprep.subr.mxu0 0.0
    %2369 = vmatpush2.msra.mxu0 0.0
    %2370 = vmatprep.subr.mxu0 0.0
    %2371 = vmatpush2.msra.mxu0 0.0
    %2372 = vmatprep.subr.mxu0 0.0
    %2373 = vmatpush2.msra.mxu0 0.0
    %2374 = vmatprep.subr.mxu0 0.0
    %2375 = vmatpush2.msra.mxu0 0.0
    %2376 = vmatprep.subr.mxu0 0.0
    %2377 = vmatpush2.msra.mxu0 0.0
    %2378 = vmatprep.mubr.f32.mxu0 0.0
    %2379 = vmatmul.mubr.f32.gmra.mxu0 %v2312
    %v2380 = vpop.f32.mrf.mxu0
    %v2381 = vadd.f32 0.0, %v2380
    %v2382 = vpop.f32.mrf.mxu0
    %2383 = vdwg.mxu0
    %2384 = vrot.lane.b32.xlu0 %v389, 104
    %v2385 = vpop.permute.xlu0 %2384
    %2386 = vrot.lane.b32.xlu0 %v389, 72
    %v2387 = vpop.permute.xlu0 %2386
    %v2388 = vsel %vm410, %v2385, 0
    %v2390 = vsel %vm410, %v2387, 0
    %2392 = vmatprep.subr.mxu0 0.0
    %2393 = vmatpush1.xpose.msra.mxu0 0.0
    %2394 = vmatprep.subr.mxu0 0.0
    %2395 = vmatpush1.xpose.msra.mxu0 0.0
    %2396 = vmatprep.subr.mxu0 0.0
    %2397 = vmatpush1.xpose.msra.mxu0 0.0
    %2398 = vmatprep.subr.mxu0 0.0
    %2399 = vmatpush1.xpose.msra.mxu0 0.0
    %2400 = vmatprep.subr.mxu0 0.0
    %2401 = vmatpush1.xpose.msra.mxu0 0.0
    %2402 = vmatprep.subr.mxu0 0.0
    %2403 = vmatpush1.xpose.msra.mxu0 0.0
    %2404 = vmatprep.subr.mxu0 0.0
    %2405 = vmatpush1.xpose.msra.mxu0 0.0
    %2406 = vmatprep.subr.mxu0 0.0
    %2407 = vmatpush1.xpose.msra.mxu0 0.0
    %2408 = vmatprep.subr.mxu0 0.0
    %2409 = vmatpush1.xpose.msra.mxu0 0.0
    %2410 = vmatprep.subr.mxu0 0.0
    %2411 = vmatpush1.xpose.msra.mxu0 0.0
    %2412 = vmatprep.subr.mxu0 0.0
    %2413 = vmatpush1.xpose.msra.mxu0 0.0
    %2414 = vmatprep.subr.mxu0 0.0
    %2415 = vmatpush1.xpose.msra.mxu0 0.0
    %2416 = vmatprep.subr.mxu0 0.0
    %2417 = vmatpush1.xpose.msra.mxu0 0.0
    %2418 = vmatprep.subr.mxu0 0.0
    %2419 = vmatpush1.xpose.msra.mxu0 0.0
    %2420 = vmatprep.subr.mxu0 0.0
    %2421 = vmatpush1.xpose.msra.mxu0 0.0
    %2422 = vmatprep.subr.mxu0 0.0
    %2423 = vmatpush1.xpose.msra.mxu0 %v2390
    %2424 = vmatprep.subr.mxu0 0.0
    %2425 = vmatpush2.xpose.msra.mxu0 0.0
    %2426 = vmatprep.subr.mxu0 0.0
    %2427 = vmatpush2.xpose.msra.mxu0 0.0
    %2428 = vmatprep.subr.mxu0 0.0
    %2429 = vmatpush2.xpose.msra.mxu0 0.0
    %2430 = vmatprep.subr.mxu0 0.0
    %2431 = vmatpush2.xpose.msra.mxu0 0.0
    %2432 = vmatprep.subr.mxu0 0.0
    %2433 = vmatpush2.xpose.msra.mxu0 0.0
    %2434 = vmatprep.subr.mxu0 0.0
    %2435 = vmatpush2.xpose.msra.mxu0 0.0
    %2436 = vmatprep.subr.mxu0 0.0
    %2437 = vmatpush2.xpose.msra.mxu0 0.0
    %2438 = vmatprep.subr.mxu0 0.0
    %2439 = vmatpush2.xpose.msra.mxu0 0.0
    %2440 = vmatprep.subr.mxu0 0.0
    %2441 = vmatpush2.xpose.msra.mxu0 0.0
    %2442 = vmatprep.subr.mxu0 0.0
    %2443 = vmatpush2.xpose.msra.mxu0 0.0
    %2444 = vmatprep.subr.mxu0 0.0
    %2445 = vmatpush2.xpose.msra.mxu0 0.0
    %2446 = vmatprep.subr.mxu0 0.0
    %2447 = vmatpush2.xpose.msra.mxu0 0.0
    %2448 = vmatprep.subr.mxu0 0.0
    %2449 = vmatpush2.xpose.msra.mxu0 0.0
    %2450 = vmatprep.subr.mxu0 0.0
    %2451 = vmatpush2.xpose.msra.mxu0 0.0
    %2452 = vmatprep.subr.mxu0 0.0
    %2453 = vmatpush2.xpose.msra.mxu0 0.0
    %2454 = vmatprep.subr.mxu0 0.0
    %2455 = vmatpush2.xpose.msra.mxu0 0.0
    %2456 = vmatprep.mubr.f32.mxu0 0.0
    %2457 = vmatmul.mubr.f32.gmra.mxu0 %v2388
    %v2458 = vpop.f32.mrf.mxu0
    %v2459 = vadd.f32 0.0, %v2458
    %v2460 = vpop.f32.mrf.mxu0
    %2461 = vdwg.mxu0
    %2462 = vrot.lane.b32.xlu0 %v394, 104
    %v2463 = vpop.permute.xlu0 %2462
    %2464 = vrot.lane.b32.xlu0 %v394, 72
    %v2465 = vpop.permute.xlu0 %2464
    %v2466 = vsel %vm410, %v2463, 0
    %v2468 = vsel %vm410, %v2465, 0
    %2470 = vmatprep.subr.mxu0 0.0
    %2471 = vmatpush1.xpose.msra.mxu0 0.0
    %2472 = vmatprep.subr.mxu0 0.0
    %2473 = vmatpush1.xpose.msra.mxu0 0.0
    %2474 = vmatprep.subr.mxu0 0.0
    %2475 = vmatpush1.xpose.msra.mxu0 0.0
    %2476 = vmatprep.subr.mxu0 0.0
    %2477 = vmatpush1.xpose.msra.mxu0 0.0
    %2478 = vmatprep.subr.mxu0 0.0
    %2479 = vmatpush1.xpose.msra.mxu0 0.0
    %2480 = vmatprep.subr.mxu0 0.0
    %2481 = vmatpush1.xpose.msra.mxu0 0.0
    %2482 = vmatprep.subr.mxu0 0.0
    %2483 = vmatpush1.xpose.msra.mxu0 0.0
    %2484 = vmatprep.subr.mxu0 0.0
    %2485 = vmatpush1.xpose.msra.mxu0 0.0
    %2486 = vmatprep.subr.mxu0 0.0
    %2487 = vmatpush1.xpose.msra.mxu0 0.0
    %2488 = vmatprep.subr.mxu0 0.0
    %2489 = vmatpush1.xpose.msra.mxu0 0.0
    %2490 = vmatprep.subr.mxu0 0.0
    %2491 = vmatpush1.xpose.msra.mxu0 0.0
    %2492 = vmatprep.subr.mxu0 0.0
    %2493 = vmatpush1.xpose.msra.mxu0 0.0
    %2494 = vmatprep.subr.mxu0 0.0
    %2495 = vmatpush1.xpose.msra.mxu0 0.0
    %2496 = vmatprep.subr.mxu0 0.0
    %2497 = vmatpush1.xpose.msra.mxu0 0.0
    %2498 = vmatprep.subr.mxu0 0.0
    %2499 = vmatpush1.xpose.msra.mxu0 0.0
    %2500 = vmatprep.subr.mxu0 0.0
    %2501 = vmatpush1.xpose.msra.mxu0 %v2468
    %2502 = vmatprep.subr.mxu0 0.0
    %2503 = vmatpush2.xpose.msra.mxu0 0.0
    %2504 = vmatprep.subr.mxu0 0.0
    %2505 = vmatpush2.xpose.msra.mxu0 0.0
    %2506 = vmatprep.subr.mxu0 0.0
    %2507 = vmatpush2.xpose.msra.mxu0 0.0
    %2508 = vmatprep.subr.mxu0 0.0
    %2509 = vmatpush2.xpose.msra.mxu0 0.0
    %2510 = vmatprep.subr.mxu0 0.0
    %2511 = vmatpush2.xpose.msra.mxu0 0.0
    %2512 = vmatprep.subr.mxu0 0.0
    %2513 = vmatpush2.xpose.msra.mxu0 0.0
    %2514 = vmatprep.subr.mxu0 0.0
    %2515 = vmatpush2.xpose.msra.mxu0 0.0
    %2516 = vmatprep.subr.mxu0 0.0
    %2517 = vmatpush2.xpose.msra.mxu0 0.0
    %2518 = vmatprep.subr.mxu0 0.0
    %2519 = vmatpush2.xpose.msra.mxu0 0.0
    %2520 = vmatprep.subr.mxu0 0.0
    %2521 = vmatpush2.xpose.msra.mxu0 0.0
    %2522 = vmatprep.subr.mxu0 0.0
    %2523 = vmatpush2.xpose.msra.mxu0 0.0
    %2524 = vmatprep.subr.mxu0 0.0
    %2525 = vmatpush2.xpose.msra.mxu0 0.0
    %2526 = vmatprep.subr.mxu0 0.0
    %2527 = vmatpush2.xpose.msra.mxu0 0.0
    %2528 = vmatprep.subr.mxu0 0.0
    %2529 = vmatpush2.xpose.msra.mxu0 0.0
    %2530 = vmatprep.subr.mxu0 0.0
    %2531 = vmatpush2.xpose.msra.mxu0 0.0
    %2532 = vmatprep.subr.mxu0 0.0
    %2533 = vmatpush2.xpose.msra.mxu0 0.0
    %2534 = vmatprep.mubr.f32.mxu0 0.0
    %2535 = vmatmul.mubr.f32.gmra.mxu0 %v2466
    %v2536 = vpop.f32.mrf.mxu0
    %v2537 = vadd.f32 0.0, %v2536
    %v2538 = vpop.f32.mrf.mxu0
    %2539 = vdwg.mxu0
    %2540 = vrot.lane.b32.xlu0 %v399, 104
    %v2541 = vpop.permute.xlu0 %2540
    %2542 = vrot.lane.b32.xlu0 %v399, 72
    %v2543 = vpop.permute.xlu0 %2542
    %v2544 = vsel %vm410, %v2541, 0
    %v2546 = vsel %vm410, %v2543, 0
    %2548 = vmatprep.subr.mxu0 0.0
    %2549 = vmatpush1.xpose.msra.mxu0 0.0
    %2550 = vmatprep.subr.mxu0 0.0
    %2551 = vmatpush1.xpose.msra.mxu0 0.0
    %2552 = vmatprep.subr.mxu0 0.0
    %2553 = vmatpush1.xpose.msra.mxu0 0.0
    %2554 = vmatprep.subr.mxu0 0.0
    %2555 = vmatpush1.xpose.msra.mxu0 0.0
    %2556 = vmatprep.subr.mxu0 0.0
    %2557 = vmatpush1.xpose.msra.mxu0 0.0
    %2558 = vmatprep.subr.mxu0 0.0
    %2559 = vmatpush1.xpose.msra.mxu0 0.0
    %2560 = vmatprep.subr.mxu0 0.0
    %2561 = vmatpush1.xpose.msra.mxu0 0.0
    %2562 = vmatprep.subr.mxu0 0.0
    %2563 = vmatpush1.xpose.msra.mxu0 0.0
    %2564 = vmatprep.subr.mxu0 0.0
    %2565 = vmatpush1.xpose.msra.mxu0 0.0
    %2566 = vmatprep.subr.mxu0 0.0
    %2567 = vmatpush1.xpose.msra.mxu0 0.0
    %2568 = vmatprep.subr.mxu0 0.0
    %2569 = vmatpush1.xpose.msra.mxu0 0.0
    %2570 = vmatprep.subr.mxu0 0.0
    %2571 = vmatpush1.xpose.msra.mxu0 0.0
    %2572 = vmatprep.subr.mxu0 0.0
    %2573 = vmatpush1.xpose.msra.mxu0 0.0
    %2574 = vmatprep.subr.mxu0 0.0
    %2575 = vmatpush1.xpose.msra.mxu0 0.0
    %2576 = vmatprep.subr.mxu0 0.0
    %2577 = vmatpush1.xpose.msra.mxu0 0.0
    %2578 = vmatprep.subr.mxu0 0.0
    %2579 = vmatpush1.xpose.msra.mxu0 %v2546
    %2580 = vmatprep.subr.mxu0 0.0
    %2581 = vmatpush2.xpose.msra.mxu0 0.0
    %2582 = vmatprep.subr.mxu0 0.0
    %2583 = vmatpush2.xpose.msra.mxu0 0.0
    %2584 = vmatprep.subr.mxu0 0.0
    %2585 = vmatpush2.xpose.msra.mxu0 0.0
    %2586 = vmatprep.subr.mxu0 0.0
    %2587 = vmatpush2.xpose.msra.mxu0 0.0
    %2588 = vmatprep.subr.mxu0 0.0
    %2589 = vmatpush2.xpose.msra.mxu0 0.0
    %2590 = vmatprep.subr.mxu0 0.0
    %2591 = vmatpush2.xpose.msra.mxu0 0.0
    %2592 = vmatprep.subr.mxu0 0.0
    %2593 = vmatpush2.xpose.msra.mxu0 0.0
    %2594 = vmatprep.subr.mxu0 0.0
    %2595 = vmatpush2.xpose.msra.mxu0 0.0
    %2596 = vmatprep.subr.mxu0 0.0
    %2597 = vmatpush2.xpose.msra.mxu0 0.0
    %2598 = vmatprep.subr.mxu0 0.0
    %2599 = vmatpush2.xpose.msra.mxu0 0.0
    %2600 = vmatprep.subr.mxu0 0.0
    %2601 = vmatpush2.xpose.msra.mxu0 0.0
    %2602 = vmatprep.subr.mxu0 0.0
    %2603 = vmatpush2.xpose.msra.mxu0 0.0
    %2604 = vmatprep.subr.mxu0 0.0
    %2605 = vmatpush2.xpose.msra.mxu0 0.0
    %2606 = vmatprep.subr.mxu0 0.0
    %2607 = vmatpush2.xpose.msra.mxu0 0.0
    %2608 = vmatprep.subr.mxu0 0.0
    %2609 = vmatpush2.xpose.msra.mxu0 0.0
    %2610 = vmatprep.subr.mxu0 0.0
    %2611 = vmatpush2.xpose.msra.mxu0 0.0
    %2612 = vmatprep.mubr.f32.mxu0 0.0
    %2613 = vmatmul.mubr.f32.gmra.mxu0 %v2544
    %v2614 = vpop.f32.mrf.mxu0
    %v2615 = vadd.f32 0.0, %v2614
    %v2616 = vpop.f32.mrf.mxu0
    %2617 = vdwg.mxu0
    %2618 = vrot.lane.b32.xlu0 %v404, 104
    %v2619 = vpop.permute.xlu0 %2618
    %2620 = vrot.lane.b32.xlu0 %v404, 72
    %v2621 = vpop.permute.xlu0 %2620
    %v2622 = vsel %vm410, %v2619, 0
    %v2624 = vsel %vm410, %v2621, 0
    %2626 = vmatprep.subr.mxu0 0.0
    %2627 = vmatpush1.xpose.msra.mxu0 0.0
    %2628 = vmatprep.subr.mxu0 0.0
    %2629 = vmatpush1.xpose.msra.mxu0 0.0
    %2630 = vmatprep.subr.mxu0 0.0
    %2631 = vmatpush1.xpose.msra.mxu0 0.0
    %2632 = vmatprep.subr.mxu0 0.0
    %2633 = vmatpush1.xpose.msra.mxu0 0.0
    %2634 = vmatprep.subr.mxu0 0.0
    %2635 = vmatpush1.xpose.msra.mxu0 0.0
    %2636 = vmatprep.subr.mxu0 0.0
    %2637 = vmatpush1.xpose.msra.mxu0 0.0
    %2638 = vmatprep.subr.mxu0 0.0
    %2639 = vmatpush1.xpose.msra.mxu0 0.0
    %2640 = vmatprep.subr.mxu0 0.0
    %2641 = vmatpush1.xpose.msra.mxu0 0.0
    %2642 = vmatprep.subr.mxu0 0.0
    %2643 = vmatpush1.xpose.msra.mxu0 0.0
    %2644 = vmatprep.subr.mxu0 0.0
    %2645 = vmatpush1.xpose.msra.mxu0 0.0
    %2646 = vmatprep.subr.mxu0 0.0
    %2647 = vmatpush1.xpose.msra.mxu0 0.0
    %2648 = vmatprep.subr.mxu0 0.0
    %2649 = vmatpush1.xpose.msra.mxu0 0.0
    %2650 = vmatprep.subr.mxu0 0.0
    %2651 = vmatpush1.xpose.msra.mxu0 0.0
    %2652 = vmatprep.subr.mxu0 0.0
    %2653 = vmatpush1.xpose.msra.mxu0 0.0
    %2654 = vmatprep.subr.mxu0 0.0
    %2655 = vmatpush1.xpose.msra.mxu0 0.0
    %2656 = vmatprep.subr.mxu0 0.0
    %2657 = vmatpush1.xpose.msra.mxu0 %v2624
    %2658 = vmatprep.subr.mxu0 0.0
    %2659 = vmatpush2.xpose.msra.mxu0 0.0
    %2660 = vmatprep.subr.mxu0 0.0
    %2661 = vmatpush2.xpose.msra.mxu0 0.0
    %2662 = vmatprep.subr.mxu0 0.0
    %2663 = vmatpush2.xpose.msra.mxu0 0.0
    %2664 = vmatprep.subr.mxu0 0.0
    %2665 = vmatpush2.xpose.msra.mxu0 0.0
    %2666 = vmatprep.subr.mxu0 0.0
    %2667 = vmatpush2.xpose.msra.mxu0 0.0
    %2668 = vmatprep.subr.mxu0 0.0
    %2669 = vmatpush2.xpose.msra.mxu0 0.0
    %2670 = vmatprep.subr.mxu0 0.0
    %2671 = vmatpush2.xpose.msra.mxu0 0.0
    %2672 = vmatprep.subr.mxu0 0.0
    %2673 = vmatpush2.xpose.msra.mxu0 0.0
    %2674 = vmatprep.subr.mxu0 0.0
    %2675 = vmatpush2.xpose.msra.mxu0 0.0
    %2676 = vmatprep.subr.mxu0 0.0
    %2677 = vmatpush2.xpose.msra.mxu0 0.0
    %2678 = vmatprep.subr.mxu0 0.0
    %2679 = vmatpush2.xpose.msra.mxu0 0.0
    %2680 = vmatprep.subr.mxu0 0.0
    %2681 = vmatpush2.xpose.msra.mxu0 0.0
    %2682 = vmatprep.subr.mxu0 0.0
    %2683 = vmatpush2.xpose.msra.mxu0 0.0
    %2684 = vmatprep.subr.mxu0 0.0
    %2685 = vmatpush2.xpose.msra.mxu0 0.0
    %2686 = vmatprep.subr.mxu0 0.0
    %2687 = vmatpush2.xpose.msra.mxu0 0.0
    %2688 = vmatprep.subr.mxu0 0.0
    %2689 = vmatpush2.xpose.msra.mxu0 0.0
    %2690 = vmatprep.mubr.f32.mxu0 0.0
    %2691 = vmatmul.mubr.f32.gmra.mxu0 %v2622
    %v2692 = vpop.f32.mrf.mxu0
    %v2693 = vadd.f32 0.0, %v2692
    %v2694 = vpop.f32.mrf.mxu0
    %2695 = vdwg.mxu0
    %v2696 = vsel %vm410, %v2459, -inf
    %2697 = vmax.xlane.f32.xlu0 %v2696
    %v2698 = vpop.xlane.xlu0 %2697
    %v2699 = vsel %vm410, %v2537, -inf
    %2700 = vmax.xlane.f32.xlu0 %v2699
    %v2701 = vpop.xlane.xlu0 %2700
    %v2702 = vsel %vm410, %v2615, -inf
    %2703 = vmax.xlane.f32.xlu0 %v2702
    %v2704 = vpop.xlane.xlu0 %2703
    %v2705 = vsel %vm410, %v2693, -inf
    %2706 = vmax.xlane.f32.xlu0 %v2705
    %v2707 = vpop.xlane.xlu0 %2706
    %v2708 = vsub.f32 %v2459, %v2698
    %v2709 = vsub.f32 %v2537, %v2701
    %v2710 = vsub.f32 %v2615, %v2704
    %v2711 = vsub.f32 %v2693, %v2707
    %v2712 = vmul.f32 %v2708, 1.442695
    %v2713 = vpow.pop %v2712
    %v2714 = vmul.f32 %v2709, 1.442695
    %v2715 = vpow.pop %v2714
    %v2716 = vmul.f32 %v2710, 1.442695
    %v2717 = vpow.pop %v2716
    %v2718 = vmul.f32 %v2711, 1.442695
    %v2719 = vpow.pop %v2718
    %v2720 = vsel %vm410, %v2713, 0.0
    %2721 = vadd.xlane.f32.xlu0 %v2720
    %v2722 = vpop.xlane.xlu0 %2721
    %v2723 = vsel %vm410, %v2715, 0.0
    %2724 = vadd.xlane.f32.xlu0 %v2723
    %v2725 = vpop.xlane.xlu0 %2724
    %v2726 = vsel %vm410, %v2717, 0.0
    %2727 = vadd.xlane.f32.xlu0 %v2726
    %v2728 = vpop.xlane.xlu0 %2727
    %v2729 = vsel %vm410, %v2719, 0.0
    %2730 = vadd.xlane.f32.xlu0 %v2729
    %v2731 = vpop.xlane.xlu0 %2730
    %v2732 = vrcp.pop %v2722
    %v2733 = vrcp.pop %v2725
    %v2734 = vrcp.pop %v2728
    %v2735 = vrcp.pop %v2731
    %v2736 = vmul.f32 %v2713, %v2732
    %v2737 = vmul.f32 %v2715, %v2733
    %v2738 = vmul.f32 %v2717, %v2734
    %v2739 = vmul.f32 %v2719, %v2735
    %2740 = vrot.lane.b32.xlu0 %v389, 40
    %v2741 = vpop.permute.xlu0 %2740
    %v2744 = vsel %vm410, %v2736, 0
    %2746 = vmatprep.subr.mxu0 0.0
    %2747 = vmatpush1.msra.mxu0 0.0
    %2748 = vmatprep.subr.mxu0 0.0
    %2749 = vmatpush1.msra.mxu0 0.0
    %2750 = vmatprep.subr.mxu0 0.0
    %2751 = vmatpush1.msra.mxu0 0.0
    %2752 = vmatprep.subr.mxu0 0.0
    %2753 = vmatpush1.msra.mxu0 0.0
    %2754 = vmatprep.subr.mxu0 0.0
    %2755 = vmatpush1.msra.mxu0 0.0
    %2756 = vmatprep.subr.mxu0 0.0
    %2757 = vmatpush1.msra.mxu0 0.0
    %2758 = vmatprep.subr.mxu0 0.0
    %2759 = vmatpush1.msra.mxu0 0.0
    %2760 = vmatprep.subr.mxu0 0.0
    %2761 = vmatpush1.msra.mxu0 0.0
    %2762 = vmatprep.subr.mxu0 0.0
    %2763 = vmatpush1.msra.mxu0 0.0
    %2764 = vmatprep.subr.mxu0 0.0
    %2765 = vmatpush1.msra.mxu0 0.0
    %2766 = vmatprep.subr.mxu0 0.0
    %2767 = vmatpush1.msra.mxu0 0.0
    %2768 = vmatprep.subr.mxu0 0.0
    %2769 = vmatpush1.msra.mxu0 0.0
    %2770 = vmatprep.subr.mxu0 0.0
    %2771 = vmatpush1.msra.mxu0 0.0
    %2772 = vmatprep.subr.mxu0 0.0
    %2773 = vmatpush1.msra.mxu0 0.0
    %2774 = vmatprep.subr.mxu0 0.0
    %2775 = vmatpush1.msra.mxu0 0.0
    %2776 = vmatprep.subr.mxu0 0.0
    %2777 = vmatpush1.msra.mxu0 %v2741
    %2778 = vmatprep.subr.mxu0 0.0
    %2779 = vmatpush2.msra.mxu0 0.0
    %2780 = vmatprep.subr.mxu0 0.0
    %2781 = vmatpush2.msra.mxu0 0.0
    %2782 = vmatprep.subr.mxu0 0.0
    %2783 = vmatpush2.msra.mxu0 0.0
    %2784 = vmatprep.subr.mxu0 0.0
    %2785 = vmatpush2.msra.mxu0 0.0
    %2786 = vmatprep.subr.mxu0 0.0
    %2787 = vmatpush2.msra.mxu0 0.0
    %2788 = vmatprep.subr.mxu0 0.0
    %2789 = vmatpush2.msra.mxu0 0.0
    %2790 = vmatprep.subr.mxu0 0.0
    %2791 = vmatpush2.msra.mxu0 0.0
    %2792 = vmatprep.subr.mxu0 0.0
    %2793 = vmatpush2.msra.mxu0 0.0
    %2794 = vmatprep.subr.mxu0 0.0
    %2795 = vmatpush2.msra.mxu0 0.0
    %2796 = vmatprep.subr.mxu0 0.0
    %2797 = vmatpush2.msra.mxu0 0.0
    %2798 = vmatprep.subr.mxu0 0.0
    %2799 = vmatpush2.msra.mxu0 0.0
    %2800 = vmatprep.subr.mxu0 0.0
    %2801 = vmatpush2.msra.mxu0 0.0
    %2802 = vmatprep.subr.mxu0 0.0
    %2803 = vmatpush2.msra.mxu0 0.0
    %2804 = vmatprep.subr.mxu0 0.0
    %2805 = vmatpush2.msra.mxu0 0.0
    %2806 = vmatprep.subr.mxu0 0.0
    %2807 = vmatpush2.msra.mxu0 0.0
    %2808 = vmatprep.subr.mxu0 0.0
    %2809 = vmatpush2.msra.mxu0 0.0
    %2810 = vmatprep.mubr.f32.mxu0 0.0
    %2811 = vmatmul.mubr.f32.gmra.mxu0 %v2744
    %v2812 = vpop.f32.mrf.mxu0
    %v2813 = vadd.f32 0.0, %v2812
    %v2814 = vpop.f32.mrf.mxu0
    %2815 = vdwg.mxu0
    %2816 = vrot.lane.b32.xlu0 %v394, 40
    %v2817 = vpop.permute.xlu0 %2816
    %v2820 = vsel %vm410, %v2737, 0
    %2822 = vmatprep.subr.mxu0 0.0
    %2823 = vmatpush1.msra.mxu0 0.0
    %2824 = vmatprep.subr.mxu0 0.0
    %2825 = vmatpush1.msra.mxu0 0.0
    %2826 = vmatprep.subr.mxu0 0.0
    %2827 = vmatpush1.msra.mxu0 0.0
    %2828 = vmatprep.subr.mxu0 0.0
    %2829 = vmatpush1.msra.mxu0 0.0
    %2830 = vmatprep.subr.mxu0 0.0
    %2831 = vmatpush1.msra.mxu0 0.0
    %2832 = vmatprep.subr.mxu0 0.0
    %2833 = vmatpush1.msra.mxu0 0.0
    %2834 = vmatprep.subr.mxu0 0.0
    %2835 = vmatpush1.msra.mxu0 0.0
    %2836 = vmatprep.subr.mxu0 0.0
    %2837 = vmatpush1.msra.mxu0 0.0
    %2838 = vmatprep.subr.mxu0 0.0
    %2839 = vmatpush1.msra.mxu0 0.0
    %2840 = vmatprep.subr.mxu0 0.0
    %2841 = vmatpush1.msra.mxu0 0.0
    %2842 = vmatprep.subr.mxu0 0.0
    %2843 = vmatpush1.msra.mxu0 0.0
    %2844 = vmatprep.subr.mxu0 0.0
    %2845 = vmatpush1.msra.mxu0 0.0
    %2846 = vmatprep.subr.mxu0 0.0
    %2847 = vmatpush1.msra.mxu0 0.0
    %2848 = vmatprep.subr.mxu0 0.0
    %2849 = vmatpush1.msra.mxu0 0.0
    %2850 = vmatprep.subr.mxu0 0.0
    %2851 = vmatpush1.msra.mxu0 0.0
    %2852 = vmatprep.subr.mxu0 0.0
    %2853 = vmatpush1.msra.mxu0 %v2817
    %2854 = vmatprep.subr.mxu0 0.0
    %2855 = vmatpush2.msra.mxu0 0.0
    %2856 = vmatprep.subr.mxu0 0.0
    %2857 = vmatpush2.msra.mxu0 0.0
    %2858 = vmatprep.subr.mxu0 0.0
    %2859 = vmatpush2.msra.mxu0 0.0
    %2860 = vmatprep.subr.mxu0 0.0
    %2861 = vmatpush2.msra.mxu0 0.0
    %2862 = vmatprep.subr.mxu0 0.0
    %2863 = vmatpush2.msra.mxu0 0.0
    %2864 = vmatprep.subr.mxu0 0.0
    %2865 = vmatpush2.msra.mxu0 0.0
    %2866 = vmatprep.subr.mxu0 0.0
    %2867 = vmatpush2.msra.mxu0 0.0
    %2868 = vmatprep.subr.mxu0 0.0
    %2869 = vmatpush2.msra.mxu0 0.0
    %2870 = vmatprep.subr.mxu0 0.0
    %2871 = vmatpush2.msra.mxu0 0.0
    %2872 = vmatprep.subr.mxu0 0.0
    %2873 = vmatpush2.msra.mxu0 0.0
    %2874 = vmatprep.subr.mxu0 0.0
    %2875 = vmatpush2.msra.mxu0 0.0
    %2876 = vmatprep.subr.mxu0 0.0
    %2877 = vmatpush2.msra.mxu0 0.0
    %2878 = vmatprep.subr.mxu0 0.0
    %2879 = vmatpush2.msra.mxu0 0.0
    %2880 = vmatprep.subr.mxu0 0.0
    %2881 = vmatpush2.msra.mxu0 0.0
    %2882 = vmatprep.subr.mxu0 0.0
    %2883 = vmatpush2.msra.mxu0 0.0
    %2884 = vmatprep.subr.mxu0 0.0
    %2885 = vmatpush2.msra.mxu0 0.0
    %2886 = vmatprep.mubr.f32.mxu0 0.0
    %2887 = vmatmul.mubr.f32.gmra.mxu0 %v2820
    %v2888 = vpop.f32.mrf.mxu0
    %v2889 = vadd.f32 0.0, %v2888
    %v2890 = vpop.f32.mrf.mxu0
    %2891 = vdwg.mxu0
    %2892 = vrot.lane.b32.xlu0 %v399, 40
    %v2893 = vpop.permute.xlu0 %2892
    %v2896 = vsel %vm410, %v2738, 0
    %2898 = vmatprep.subr.mxu0 0.0
    %2899 = vmatpush1.msra.mxu0 0.0
    %2900 = vmatprep.subr.mxu0 0.0
    %2901 = vmatpush1.msra.mxu0 0.0
    %2902 = vmatprep.subr.mxu0 0.0
    %2903 = vmatpush1.msra.mxu0 0.0
    %2904 = vmatprep.subr.mxu0 0.0
    %2905 = vmatpush1.msra.mxu0 0.0
    %2906 = vmatprep.subr.mxu0 0.0
    %2907 = vmatpush1.msra.mxu0 0.0
    %2908 = vmatprep.subr.mxu0 0.0
    %2909 = vmatpush1.msra.mxu0 0.0
    %2910 = vmatprep.subr.mxu0 0.0
    %2911 = vmatpush1.msra.mxu0 0.0
    %2912 = vmatprep.subr.mxu0 0.0
    %2913 = vmatpush1.msra.mxu0 0.0
    %2914 = vmatprep.subr.mxu0 0.0
    %2915 = vmatpush1.msra.mxu0 0.0
    %2916 = vmatprep.subr.mxu0 0.0
    %2917 = vmatpush1.msra.mxu0 0.0
    %2918 = vmatprep.subr.mxu0 0.0
    %2919 = vmatpush1.msra.mxu0 0.0
    %2920 = vmatprep.subr.mxu0 0.0
    %2921 = vmatpush1.msra.mxu0 0.0
    %2922 = vmatprep.subr.mxu0 0.0
    %2923 = vmatpush1.msra.mxu0 0.0
    %2924 = vmatprep.subr.mxu0 0.0
    %2925 = vmatpush1.msra.mxu0 0.0
    %2926 = vmatprep.subr.mxu0 0.0
    %2927 = vmatpush1.msra.mxu0 0.0
    %2928 = vmatprep.subr.mxu0 0.0
    %2929 = vmatpush1.msra.mxu0 %v2893
    %2930 = vmatprep.subr.mxu0 0.0
    %2931 = vmatpush2.msra.mxu0 0.0
    %2932 = vmatprep.subr.mxu0 0.0
    %2933 = vmatpush2.msra.mxu0 0.0
    %2934 = vmatprep.subr.mxu0 0.0
    %2935 = vmatpush2.msra.mxu0 0.0
    %2936 = vmatprep.subr.mxu0 0.0
    %2937 = vmatpush2.msra.mxu0 0.0
    %2938 = vmatprep.subr.mxu0 0.0
    %2939 = vmatpush2.msra.mxu0 0.0
    %2940 = vmatprep.subr.mxu0 0.0
    %2941 = vmatpush2.msra.mxu0 0.0
    %2942 = vmatprep.subr.mxu0 0.0
    %2943 = vmatpush2.msra.mxu0 0.0
    %2944 = vmatprep.subr.mxu0 0.0
    %2945 = vmatpush2.msra.mxu0 0.0
    %2946 = vmatprep.subr.mxu0 0.0
    %2947 = vmatpush2.msra.mxu0 0.0
    %2948 = vmatprep.subr.mxu0 0.0
    %2949 = vmatpush2.msra.mxu0 0.0
    %2950 = vmatprep.subr.mxu0 0.0
    %2951 = vmatpush2.msra.mxu0 0.0
    %2952 = vmatprep.subr.mxu0 0.0
    %2953 = vmatpush2.msra.mxu0 0.0
    %2954 = vmatprep.subr.mxu0 0.0
    %2955 = vmatpush2.msra.mxu0 0.0
    %2956 = vmatprep.subr.mxu0 0.0
    %2957 = vmatpush2.msra.mxu0 0.0
    %2958 = vmatprep.subr.mxu0 0.0
    %2959 = vmatpush2.msra.mxu0 0.0
    %2960 = vmatprep.subr.mxu0 0.0
    %2961 = vmatpush2.msra.mxu0 0.0
    %2962 = vmatprep.mubr.f32.mxu0 0.0
    %2963 = vmatmul.mubr.f32.gmra.mxu0 %v2896
    %v2964 = vpop.f32.mrf.mxu0
    %v2965 = vadd.f32 0.0, %v2964
    %v2966 = vpop.f32.mrf.mxu0
    %2967 = vdwg.mxu0
    %2968 = vrot.lane.b32.xlu0 %v404, 40
    %v2969 = vpop.permute.xlu0 %2968
    %v2972 = vsel %vm410, %v2739, 0
    %2974 = vmatprep.subr.mxu0 0.0
    %2975 = vmatpush1.msra.mxu0 0.0
    %2976 = vmatprep.subr.mxu0 0.0
    %2977 = vmatpush1.msra.mxu0 0.0
    %2978 = vmatprep.subr.mxu0 0.0
    %2979 = vmatpush1.msra.mxu0 0.0
    %2980 = vmatprep.subr.mxu0 0.0
    %2981 = vmatpush1.msra.mxu0 0.0
    %2982 = vmatprep.subr.mxu0 0.0
    %2983 = vmatpush1.msra.mxu0 0.0
    %2984 = vmatprep.subr.mxu0 0.0
    %2985 = vmatpush1.msra.mxu0 0.0
    %2986 = vmatprep.subr.mxu0 0.0
    %2987 = vmatpush1.msra.mxu0 0.0
    %2988 = vmatprep.subr.mxu0 0.0
    %2989 = vmatpush1.msra.mxu0 0.0
    %2990 = vmatprep.subr.mxu0 0.0
    %2991 = vmatpush1.msra.mxu0 0.0
    %2992 = vmatprep.subr.mxu0 0.0
    %2993 = vmatpush1.msra.mxu0 0.0
    %2994 = vmatprep.subr.mxu0 0.0
    %2995 = vmatpush1.msra.mxu0 0.0
    %2996 = vmatprep.subr.mxu0 0.0
    %2997 = vmatpush1.msra.mxu0 0.0
    %2998 = vmatprep.subr.mxu0 0.0
    %2999 = vmatpush1.msra.mxu0 0.0
    %3000 = vmatprep.subr.mxu0 0.0
    %3001 = vmatpush1.msra.mxu0 0.0
    %3002 = vmatprep.subr.mxu0 0.0
    %3003 = vmatpush1.msra.mxu0 0.0
    %3004 = vmatprep.subr.mxu0 0.0
    %3005 = vmatpush1.msra.mxu0 %v2969
    %3006 = vmatprep.subr.mxu0 0.0
    %3007 = vmatpush2.msra.mxu0 0.0
    %3008 = vmatprep.subr.mxu0 0.0
    %3009 = vmatpush2.msra.mxu0 0.0
    %3010 = vmatprep.subr.mxu0 0.0
    %3011 = vmatpush2.msra.mxu0 0.0
    %3012 = vmatprep.subr.mxu0 0.0
    %3013 = vmatpush2.msra.mxu0 0.0
    %3014 = vmatprep.subr.mxu0 0.0
    %3015 = vmatpush2.msra.mxu0 0.0
    %3016 = vmatprep.subr.mxu0 0.0
    %3017 = vmatpush2.msra.mxu0 0.0
    %3018 = vmatprep.subr.mxu0 0.0
    %3019 = vmatpush2.msra.mxu0 0.0
    %3020 = vmatprep.subr.mxu0 0.0
    %3021 = vmatpush2.msra.mxu0 0.0
    %3022 = vmatprep.subr.mxu0 0.0
    %3023 = vmatpush2.msra.mxu0 0.0
    %3024 = vmatprep.subr.mxu0 0.0
    %3025 = vmatpush2.msra.mxu0 0.0
    %3026 = vmatprep.subr.mxu0 0.0
    %3027 = vmatpush2.msra.mxu0 0.0
    %3028 = vmatprep.subr.mxu0 0.0
    %3029 = vmatpush2.msra.mxu0 0.0
    %3030 = vmatprep.subr.mxu0 0.0
    %3031 = vmatpush2.msra.mxu0 0.0
    %3032 = vmatprep.subr.mxu0 0.0
    %3033 = vmatpush2.msra.mxu0 0.0
    %3034 = vmatprep.subr.mxu0 0.0
    %3035 = vmatpush2.msra.mxu0 0.0
    %3036 = vmatprep.subr.mxu0 0.0
    %3037 = vmatpush2.msra.mxu0 0.0
    %3038 = vmatprep.mubr.f32.mxu0 0.0
    %3039 = vmatmul.mubr.f32.gmra.mxu0 %v2972
    %v3040 = vpop.f32.mrf.mxu0
    %v3041 = vadd.f32 0.0, %v3040
    %v3042 = vpop.f32.mrf.mxu0
    %3043 = vdwg.mxu0
    %3048 = vrot.lane.b32.xlu0 %v1493, 8
    %v3049 = vpop.permute.xlu0 %3048
    %3050 = vrot.lane.b32.xlu0 %v1569, 8
    %v3051 = vpop.permute.xlu0 %3050
    %3052 = vrot.lane.b32.xlu0 %v1645, 8
    %v3053 = vpop.permute.xlu0 %3052
    %3054 = vrot.lane.b32.xlu0 %v1721, 8
    %v3055 = vpop.permute.xlu0 %3054
    %3064 = vrot.lane.b32.xlu0 %v2153, 16
    %v3065 = vpop.permute.xlu0 %3064
    %3066 = vrot.lane.b32.xlu0 %v2229, 16
    %v3067 = vpop.permute.xlu0 %3066
    %3068 = vrot.lane.b32.xlu0 %v2305, 16
    %v3069 = vpop.permute.xlu0 %3068
    %3070 = vrot.lane.b32.xlu0 %v2381, 16
    %v3071 = vpop.permute.xlu0 %3070
    %3080 = vrot.lane.b32.xlu0 %v2813, 24
    %v3081 = vpop.permute.xlu0 %3080
    %3082 = vrot.lane.b32.xlu0 %v2889, 24
    %v3083 = vpop.permute.xlu0 %3082
    %3084 = vrot.lane.b32.xlu0 %v2965, 24
    %v3085 = vpop.permute.xlu0 %3084
    %3086 = vrot.lane.b32.xlu0 %v3041, 24
    %v3087 = vpop.permute.xlu0 %3086
    %v3092 = vsel %vm410, %v833, %v3049
    %v3093 = vsel %vm410, %v909, %v3051
    %v3094 = vsel %vm410, %v985, %v3053
    %v3095 = vsel %vm410, %v1061, %v3055
    %vm3096 = vcmask 130048
    %v3097 = vsel %vm3096, %v3092, %v3065
    %v3098 = vsel %vm3096, %v3093, %v3067
    %v3099 = vsel %vm3096, %v3094, %v3069
    %v3100 = vsel %vm3096, %v3095, %v3071
    %vm3101 = vcmask 195584
    %v3102 = vsel %vm3101, %v3097, %v3081
    %v3103 = vsel %vm3101, %v3098, %v3083
    %v3104 = vsel %vm3101, %v3099, %v3085
    %v3105 = vsel %vm3101, %v3100, %v3087
    %v3106 = vld [vmem:[%s5] sm:$0xff]
    %v3107 = vld [vmem:[%s5 + $0x8] sm:$0xff]
    %v3108 = vld [vmem:[%s5 + $0x10] sm:$0xff]
    %v3109 = vld [vmem:[%s5 + $0x18] sm:$0xff]
    %v3110 = vld [vmem:[%s6] sm:$0x1]
    %v3112 = vlaneseq
    %v3113 = vshrl.u32 %v3112, 7
    %v3114 = vsub.s32 0, %v3113
    %v3115 = vrot.slane %v3110, %v3114
    %v3118 = vsel %vm309, %v3102, 0
    %v3121 = vsel %vm309, %v3103, 0
    %v3124 = vsel %vm309, %v3104, 0
    %v3127 = vsel %vm309, %v3105, 0
    %3129 = vmatprep.subr.mxu0 0.0
    %3130 = vmatpush1.msra.mxu0 0.0
    %3131 = vmatprep.subr.mxu0 0.0
    %3132 = vmatpush1.msra.mxu0 0.0
    %3133 = vmatprep.subr.mxu0 0.0
    %3134 = vmatpush1.msra.mxu0 0.0
    %3135 = vmatprep.subr.mxu0 0.0
    %3136 = vmatpush1.msra.mxu0 0.0
    %3137 = vmatprep.subr.mxu0 0.0
    %3138 = vmatpush1.msra.mxu0 0.0
    %3139 = vmatprep.subr.mxu0 0.0
    %3140 = vmatpush1.msra.mxu0 0.0
    %3141 = vmatprep.subr.mxu0 0.0
    %3142 = vmatpush1.msra.mxu0 0.0
    %3143 = vmatprep.subr.mxu0 0.0
    %3144 = vmatpush1.msra.mxu0 0.0
    %3145 = vmatprep.subr.mxu0 0.0
    %3146 = vmatpush1.msra.mxu0 0.0
    %3147 = vmatprep.subr.mxu0 0.0
    %3148 = vmatpush1.msra.mxu0 0.0
    %3149 = vmatprep.subr.mxu0 0.0
    %3150 = vmatpush1.msra.mxu0 0.0
    %3151 = vmatprep.subr.mxu0 0.0
    %3152 = vmatpush1.msra.mxu0 0.0
    %3153 = vmatprep.subr.mxu0 0.0
    %3154 = vmatpush1.msra.mxu0 %v3109
    %3155 = vmatprep.subr.mxu0 0.0
    %3156 = vmatpush1.msra.mxu0 %v3108
    %3157 = vmatprep.subr.mxu0 0.0
    %3158 = vmatpush1.msra.mxu0 %v3107
    %3159 = vmatprep.subr.mxu0 0.0
    %3160 = vmatpush1.msra.mxu0 %v3106
    %3161 = vmatprep.subr.mxu0 0.0
    %3162 = vmatpush2.msra.mxu0 0.0
    %3163 = vmatprep.subr.mxu0 0.0
    %3164 = vmatpush2.msra.mxu0 0.0
    %3165 = vmatprep.subr.mxu0 0.0
    %3166 = vmatpush2.msra.mxu0 0.0
    %3167 = vmatprep.subr.mxu0 0.0
    %3168 = vmatpush2.msra.mxu0 0.0
    %3169 = vmatprep.subr.mxu0 0.0
    %3170 = vmatpush2.msra.mxu0 0.0
    %3171 = vmatprep.subr.mxu0 0.0
    %3172 = vmatpush2.msra.mxu0 0.0
    %3173 = vmatprep.subr.mxu0 0.0
    %3174 = vmatpush2.msra.mxu0 0.0
    %3175 = vmatprep.subr.mxu0 0.0
    %3176 = vmatpush2.msra.mxu0 0.0
    %3177 = vmatprep.subr.mxu0 0.0
    %3178 = vmatpush2.msra.mxu0 0.0
    %3179 = vmatprep.subr.mxu0 0.0
    %3180 = vmatpush2.msra.mxu0 0.0
    %3181 = vmatprep.subr.mxu0 0.0
    %3182 = vmatpush2.msra.mxu0 0.0
    %3183 = vmatprep.subr.mxu0 0.0
    %3184 = vmatpush2.msra.mxu0 0.0
    %3185 = vmatprep.subr.mxu0 0.0
    %3186 = vmatpush2.msra.mxu0 0.0
    %3187 = vmatprep.subr.mxu0 0.0
    %3188 = vmatpush2.msra.mxu0 0.0
    %3189 = vmatprep.subr.mxu0 0.0
    %3190 = vmatpush2.msra.mxu0 0.0
    %3191 = vmatprep.subr.mxu0 0.0
    %3192 = vmatpush2.msra.mxu0 0.0
    %3193 = vmatprep.mubr.f32.mxu0 0.0
    %3194 = vmatmul.mubr.f32.gmra.mxu0 %v3118
    %v3195 = vpop.f32.mrf.mxu0
    %v3196 = vadd.f32 %v3115, %v3195
    %v3197 = vpop.f32.mrf.mxu0
    %3198 = vmatprep.mubr.f32.mxu0 0.0
    %3199 = vmatmul.mubr.f32.gmra.mxu0 %v3121
    %v3200 = vpop.f32.mrf.mxu0
    %v3201 = vadd.f32 %v3115, %v3200
    %v3202 = vpop.f32.mrf.mxu0
    %3203 = vmatprep.mubr.f32.mxu0 0.0
    %3204 = vmatmul.mubr.f32.gmra.mxu0 %v3124
    %v3205 = vpop.f32.mrf.mxu0
    %v3206 = vadd.f32 %v3115, %v3205
    %v3207 = vpop.f32.mrf.mxu0
    %3208 = vmatprep.mubr.f32.mxu0 0.0
    %3209 = vmatmul.mubr.f32.gmra.mxu0 %v3127
    %v3210 = vpop.f32.mrf.mxu0
    %v3211 = vadd.f32 %v3115, %v3210
    %v3212 = vpop.f32.mrf.mxu0
    %3213 = vdwg.mxu0
    %v3214 = vadd.f32 %v280, %v3196
    %v3215 = vadd.f32 %v285, %v3201
    %v3216 = vadd.f32 %v290, %v3206
    %v3217 = vadd.f32 %v295, %v3211
    %v3218 = vld [vmem:[#allocation7] sm:$0x1]
    %v3219 = vld [vmem:[#allocation8] sm:$0x1]
    %v3220 = vsel %vm309, %v3214, 0.0
    %3221 = vadd.xlane.f32.xlu0 %v3220
    %v3222 = vpop.xlane.xlu0 %3221
    %v3223 = vsel %vm309, %v3215, 0.0
    %3224 = vadd.xlane.f32.xlu0 %v3223
    %v3225 = vpop.xlane.xlu0 %3224
    %v3226 = vsel %vm309, %v3216, 0.0
    %3227 = vadd.xlane.f32.xlu0 %v3226
    %v3228 = vpop.xlane.xlu0 %3227
    %v3229 = vsel %vm309, %v3217, 0.0
    %3230 = vadd.xlane.f32.xlu0 %v3229
    %v3231 = vpop.xlane.xlu0 %3230
    %v3232 = vrcp.pop 32.0
    %v3233 = vmul.f32 %v3222, %v3232
    %v3234 = vmul.f32 %v3225, %v3232
    %v3235 = vmul.f32 %v3228, %v3232
    %v3236 = vmul.f32 %v3231, %v3232
    %v3237 = vsub.f32 %v3214, %v3233
    %v3238 = vsub.f32 %v3215, %v3234
    %v3239 = vsub.f32 %v3216, %v3235
    %v3240 = vsub.f32 %v3217, %v3236
    %v3241 = vmul.f32 %v3237, %v3237
    %v3242 = vmul.f32 %v3238, %v3238
    %v3243 = vmul.f32 %v3239, %v3239
    %v3244 = vmul.f32 %v3240, %v3240
    %v3245 = vsel %vm309, %v3241, 0.0
    %3246 = vadd.xlane.f32.xlu0 %v3245
    %v3247 = vpop.xlane.xlu0 %3246
    %v3248 = vsel %vm309, %v3242, 0.0
    %3249 = vadd.xlane.f32.xlu0 %v3248
    %v3250 = vpop.xlane.xlu0 %3249
    %v3251 = vsel %vm309, %v3243, 0.0
    %3252 = vadd.xlane.f32.xlu0 %v3251
    %v3253 = vpop.xlane.xlu0 %3252
    %v3254 = vsel %vm309, %v3244, 0.0
    %3255 = vadd.xlane.f32.xlu0 %v3254
    %v3256 = vpop.xlane.xlu0 %3255
    %v3257 = vmul.f32 %v3247, %v3232
    %v3258 = vmul.f32 %v3250, %v3232
    %v3259 = vmul.f32 %v3253, %v3232
    %v3260 = vmul.f32 %v3256, %v3232
    %v3261 = vadd.f32 %v3257, 1e-05
    %v3262 = vadd.f32 %v3258, 1e-05
    %v3263 = vadd.f32 %v3259, 1e-05
    %v3264 = vadd.f32 %v3260, 1e-05
    %v3265 = vrsqrt.pop %v3261
    %v3266 = vrsqrt.pop %v3262
    %v3267 = vrsqrt.pop %v3263
    %v3268 = vrsqrt.pop %v3264
    %v3269 = vmul.f32 %v3237, %v3265
    %v3270 = vmul.f32 %v3238, %v3266
    %v3271 = vmul.f32 %v3239, %v3267
    %v3272 = vmul.f32 %v3240, %v3268
    %v3274 = vlaneseq
    %v3275 = vshrl.u32 %v3274, 7
    %v3276 = vsub.s32 0, %v3275
    %v3277 = vrot.slane %v3218, %v3276
    %v3279 = vmul.f32 %v3269, %v3277
    %v3280 = vmul.f32 %v3270, %v3277
    %v3281 = vmul.f32 %v3271, %v3277
    %v3282 = vmul.f32 %v3272, %v3277
    %v3284 = vlaneseq
    %v3285 = vshrl.u32 %v3284, 7
    %v3286 = vsub.s32 0, %v3285
    %v3287 = vrot.slane %v3219, %v3286
    %v3289 = vadd.f32 %v3279, %v3287
    %v3290 = vadd.f32 %v3280, %v3287
    %v3291 = vadd.f32 %v3281, %v3287
    %v3292 = vadd.f32 %v3282, %v3287
    %v3293 = vld [vmem:[%s9] sm:$0xff]
    %v3294 = vld [vmem:[%s9 + $0x8] sm:$0xff]
    %v3295 = vld [vmem:[%s9 + $0x10] sm:$0xff]
    %v3296 = vld [vmem:[%s9 + $0x18] sm:$0xff]
    %v3297 = vld [vmem:[#allocation10] sm:$0x1]
    %v3299 = vlaneseq
    %v3300 = vshrl.u32 %v3299, 7
    %v3301 = vsub.s32 0, %v3300
    %v3302 = vrot.slane %v3297, %v3301
    %v3305 = vsel %vm309, %v3289, 0
    %v3308 = vsel %vm309, %v3290, 0
    %v3311 = vsel %vm309, %v3291, 0
    %v3314 = vsel %vm309, %v3292, 0
    %3316 = vmatprep.subr.mxu0 0.0
    %3317 = vmatpush1.msra.mxu0 0.0
    %3318 = vmatprep.subr.mxu0 0.0
    %3319 = vmatpush1.msra.mxu0 0.0
    %3320 = vmatprep.subr.mxu0 0.0
    %3321 = vmatpush1.msra.mxu0 0.0
    %3322 = vmatprep.subr.mxu0 0.0
    %3323 = vmatpush1.msra.mxu0 0.0
    %3324 = vmatprep.subr.mxu0 0.0
    %3325 = vmatpush1.msra.mxu0 0.0
    %3326 = vmatprep.subr.mxu0 0.0
    %3327 = vmatpush1.msra.mxu0 0.0
    %3328 = vmatprep.subr.mxu0 0.0
    %3329 = vmatpush1.msra.mxu0 0.0
    %3330 = vmatprep.subr.mxu0 0.0
    %3331 = vmatpush1.msra.mxu0 0.0
    %3332 = vmatprep.subr.mxu0 0.0
    %3333 = vmatpush1.msra.mxu0 0.0
    %3334 = vmatprep.subr.mxu0 0.0
    %3335 = vmatpush1.msra.mxu0 0.0
    %3336 = vmatprep.subr.mxu0 0.0
    %3337 = vmatpush1.msra.mxu0 0.0
    %3338 = vmatprep.subr.mxu0 0.0
    %3339 = vmatpush1.msra.mxu0 0.0
    %3340 = vmatprep.subr.mxu0 0.0
    %3341 = vmatpush1.msra.mxu0 %v3296
    %3342 = vmatprep.subr.mxu0 0.0
    %3343 = vmatpush1.msra.mxu0 %v3295
    %3344 = vmatprep.subr.mxu0 0.0
    %3345 = vmatpush1.msra.mxu0 %v3294
    %3346 = vmatprep.subr.mxu0 0.0
    %3347 = vmatpush1.msra.mxu0 %v3293
    %3348 = vmatprep.subr.mxu0 0.0
    %3349 = vmatpush2.msra.mxu0 0.0
    %3350 = vmatprep.subr.mxu0 0.0
    %3351 = vmatpush2.msra.mxu0 0.0
    %3352 = vmatprep.subr.mxu0 0.0
    %3353 = vmatpush2.msra.mxu0 0.0
    %3354 = vmatprep.subr.mxu0 0.0
    %3355 = vmatpush2.msra.mxu0 0.0
    %3356 = vmatprep.subr.mxu0 0.0
    %3357 = vmatpush2.msra.mxu0 0.0
    %3358 = vmatprep.subr.mxu0 0.0
    %3359 = vmatpush2.msra.mxu0 0.0
    %3360 = vmatprep.subr.mxu0 0.0
    %3361 = vmatpush2.msra.mxu0 0.0
    %3362 = vmatprep.subr.mxu0 0.0
    %3363 = vmatpush2.msra.mxu0 0.0
    %3364 = vmatprep.subr.mxu0 0.0
    %3365 = vmatpush2.msra.mxu0 0.0
    %3366 = vmatprep.subr.mxu0 0.0
    %3367 = vmatpush2.msra.mxu0 0.0
    %3368 = vmatprep.subr.mxu0 0.0
    %3369 = vmatpush2.msra.mxu0 0.0
    %3370 = vmatprep.subr.mxu0 0.0
    %3371 = vmatpush2.msra.mxu0 0.0
    %3372 = vmatprep.subr.mxu0 0.0
    %3373 = vmatpush2.msra.mxu0 0.0
    %3374 = vmatprep.subr.mxu0 0.0
    %3375 = vmatpush2.msra.mxu0 0.0
    %3376 = vmatprep.subr.mxu0 0.0
    %3377 = vmatpush2.msra.mxu0 0.0
    %3378 = vmatprep.subr.mxu0 0.0
    %3379 = vmatpush2.msra.mxu0 0.0
    %3380 = vmatprep.mubr.f32.mxu0 0.0
    %3381 = vmatmul.mubr.f32.gmra.mxu0 %v3305
    %v3382 = vpop.f32.mrf.mxu0
    %v3383 = vadd.f32 %v3302, %v3382
    %v3384 = vpop.f32.mrf.mxu0
    %3385 = vmatprep.mubr.f32.mxu0 0.0
    %3386 = vmatmul.mubr.f32.gmra.mxu0 %v3308
    %v3387 = vpop.f32.mrf.mxu0
    %v3388 = vadd.f32 %v3302, %v3387
    %v3389 = vpop.f32.mrf.mxu0
    %3390 = vmatprep.mubr.f32.mxu0 0.0
    %3391 = vmatmul.mubr.f32.gmra.mxu0 %v3311
    %v3392 = vpop.f32.mrf.mxu0
    %v3393 = vadd.f32 %v3302, %v3392
    %v3394 = vpop.f32.mrf.mxu0
    %3395 = vmatprep.mubr.f32.mxu0 0.0
    %3396 = vmatmul.mubr.f32.gmra.mxu0 %v3314
    %v3397 = vpop.f32.mrf.mxu0
    %v3398 = vadd.f32 %v3302, %v3397
    %v3399 = vpop.f32.mrf.mxu0
    %3400 = vdwg.mxu0
    %v3401 = vmax.f32 %v3383, 0.0
    %v3402 = vmax.f32 %v3388, 0.0
    %v3403 = vmax.f32 %v3393, 0.0
    %v3404 = vmax.f32 %v3398, 0.0
    %v3405 = vld [vmem:[%s11] sm:$0xff]
    %v3406 = vld [vmem:[%s11 + $0x8] sm:$0xff]
    %v3407 = vld [vmem:[%s11 + $0x10] sm:$0xff]
    %v3408 = vld [vmem:[%s11 + $0x18] sm:$0xff]
    %v3409 = vld [vmem:[%s11 + $0x20] sm:$0xff]
    %v3410 = vld [vmem:[%s11 + $0x28] sm:$0xff]
    %v3411 = vld [vmem:[%s11 + $0x30] sm:$0xff]
    %v3412 = vld [vmem:[%s11 + $0x38] sm:$0xff]
    %v3413 = vld [vmem:[#allocation11] sm:$0x1]
    %v3415 = vlaneseq
    %v3416 = vshrl.u32 %v3415, 7
    %v3417 = vsub.s32 0, %v3416
    %v3418 = vrot.slane %v3413, %v3417
    %vm3420 = vcmask 523264
    %v3422 = vsel %vm3420, %v3401, 0
    %v3425 = vsel %vm3420, %v3402, 0
    %v3428 = vsel %vm3420, %v3403, 0
    %v3431 = vsel %vm3420, %v3404, 0
    %3433 = vmatprep.subr.mxu0 0.0
    %3434 = vmatpush1.msra.mxu0 0.0
    %3435 = vmatprep.subr.mxu0 0.0
    %3436 = vmatpush1.msra.mxu0 0.0
    %3437 = vmatprep.subr.mxu0 0.0
    %3438 = vmatpush1.msra.mxu0 0.0
    %3439 = vmatprep.subr.mxu0 0.0
    %3440 = vmatpush1.msra.mxu0 0.0
    %3441 = vmatprep.subr.mxu0 0.0
    %3442 = vmatpush1.msra.mxu0 0.0
    %3443 = vmatprep.subr.mxu0 0.0
    %3444 = vmatpush1.msra.mxu0 0.0
    %3445 = vmatprep.subr.mxu0 0.0
    %3446 = vmatpush1.msra.mxu0 0.0
    %3447 = vmatprep.subr.mxu0 0.0
    %3448 = vmatpush1.msra.mxu0 0.0
    %3449 = vmatprep.subr.mxu0 0.0
    %3450 = vmatpush1.msra.mxu0 %v3412
    %3451 = vmatprep.subr.mxu0 0.0
    %3452 = vmatpush1.msra.mxu0 %v3411
    %3453 = vmatprep.subr.mxu0 0.0
    %3454 = vmatpush1.msra.mxu0 %v3410
    %3455 = vmatprep.subr.mxu0 0.0
    %3456 = vmatpush1.msra.mxu0 %v3409
    %3457 = vmatprep.subr.mxu0 0.0
    %3458 = vmatpush1.msra.mxu0 %v3408
    %3459 = vmatprep.subr.mxu0 0.0
    %3460 = vmatpush1.msra.mxu0 %v3407
    %3461 = vmatprep.subr.mxu0 0.0
    %3462 = vmatpush1.msra.mxu0 %v3406
    %3463 = vmatprep.subr.mxu0 0.0
    %3464 = vmatpush1.msra.mxu0 %v3405
    %3465 = vmatprep.subr.mxu0 0.0
    %3466 = vmatpush2.msra.mxu0 0.0
    %3467 = vmatprep.subr.mxu0 0.0
    %3468 = vmatpush2.msra.mxu0 0.0
    %3469 = vmatprep.subr.mxu0 0.0
    %3470 = vmatpush2.msra.mxu0 0.0
    %3471 = vmatprep.subr.mxu0 0.0
    %3472 = vmatpush2.msra.mxu0 0.0
    %3473 = vmatprep.subr.mxu0 0.0
    %3474 = vmatpush2.msra.mxu0 0.0
    %3475 = vmatprep.subr.mxu0 0.0
    %3476 = vmatpush2.msra.mxu0 0.0
    %3477 = vmatprep.subr.mxu0 0.0
    %3478 = vmatpush2.msra.mxu0 0.0
    %3479 = vmatprep.subr.mxu0 0.0
    %3480 = vmatpush2.msra.mxu0 0.0
    %3481 = vmatprep.subr.mxu0 0.0
    %3482 = vmatpush2.msra.mxu0 0.0
    %3483 = vmatprep.subr.mxu0 0.0
    %3484 = vmatpush2.msra.mxu0 0.0
    %3485 = vmatprep.subr.mxu0 0.0
    %3486 = vmatpush2.msra.mxu0 0.0
    %3487 = vmatprep.subr.mxu0 0.0
    %3488 = vmatpush2.msra.mxu0 0.0
    %3489 = vmatprep.subr.mxu0 0.0
    %3490 = vmatpush2.msra.mxu0 0.0
    %3491 = vmatprep.subr.mxu0 0.0
    %3492 = vmatpush2.msra.mxu0 0.0
    %3493 = vmatprep.subr.mxu0 0.0
    %3494 = vmatpush2.msra.mxu0 0.0
    %3495 = vmatprep.subr.mxu0 0.0
    %3496 = vmatpush2.msra.mxu0 0.0
    %3497 = vmatprep.mubr.f32.mxu0 0.0
    %3498 = vmatmul.mubr.f32.gmra.mxu0 %v3422
    %v3499 = vpop.f32.mrf.mxu0
    %v3500 = vadd.f32 %v3418, %v3499
    %v3501 = vpop.f32.mrf.mxu0
    %3502 = vmatprep.mubr.f32.mxu0 0.0
    %3503 = vmatmul.mubr.f32.gmra.mxu0 %v3425
    %v3504 = vpop.f32.mrf.mxu0
    %v3505 = vadd.f32 %v3418, %v3504
    %v3506 = vpop.f32.mrf.mxu0
    %3507 = vmatprep.mubr.f32.mxu0 0.0
    %3508 = vmatmul.mubr.f32.gmra.mxu0 %v3428
    %v3509 = vpop.f32.mrf.mxu0
    %v3510 = vadd.f32 %v3418, %v3509
    %v3511 = vpop.f32.mrf.mxu0
    %3512 = vmatprep.mubr.f32.mxu0 0.0
    %3513 = vmatmul.mubr.f32.gmra.mxu0 %v3431
    %v3514 = vpop.f32.mrf.mxu0
    %v3515 = vadd.f32 %v3418, %v3514
    %v3516 = vpop.f32.mrf.mxu0
    %3517 = vdwg.mxu0
    %v3518 = vadd.f32 %v3289, %v3500
    %v3519 = vadd.f32 %v3290, %v3505
    %v3520 = vadd.f32 %v3291, %v3510
    %v3521 = vadd.f32 %v3292, %v3515
    %v3522 = vld [vmem:[#allocation13] sm:$0x1]
    %v3523 = vld [vmem:[%s14] sm:$0x1]
    %v3524 = vsel %vm309, %v3518, 0.0
    %3525 = vadd.xlane.f32.xlu0 %v3524
    %v3526 = vpop.xlane.xlu0 %3525
    %v3527 = vsel %vm309, %v3519, 0.0
    %3528 = vadd.xlane.f32.xlu0 %v3527
    %v3529 = vpop.xlane.xlu0 %3528
    %v3530 = vsel %vm309, %v3520, 0.0
    %3531 = vadd.xlane.f32.xlu0 %v3530
    %v3532 = vpop.xlane.xlu0 %3531
    %v3533 = vsel %vm309, %v3521, 0.0
    %3534 = vadd.xlane.f32.xlu0 %v3533
    %v3535 = vpop.xlane.xlu0 %3534
    %v3536 = vmul.f32 %v3526, %v3232
    %v3537 = vmul.f32 %v3529, %v3232
    %v3538 = vmul.f32 %v3532, %v3232
    %v3539 = vmul.f32 %v3535, %v3232
    %v3540 = vsub.f32 %v3518, %v3536
    %v3541 = vsub.f32 %v3519, %v3537
    %v3542 = vsub.f32 %v3520, %v3538
    %v3543 = vsub.f32 %v3521, %v3539
    %v3544 = vmul.f32 %v3540, %v3540
    %v3545 = vmul.f32 %v3541, %v3541
    %v3546 = vmul.f32 %v3542, %v3542
    %v3547 = vmul.f32 %v3543, %v3543
    %v3548 = vsel %vm309, %v3544, 0.0
    %3549 = vadd.xlane.f32.xlu0 %v3548
    %v3550 = vpop.xlane.xlu0 %3549
    %v3551 = vsel %vm309, %v3545, 0.0
    %3552 = vadd.xlane.f32.xlu0 %v3551
    %v3553 = vpop.xlane.xlu0 %3552
    %v3554 = vsel %vm309, %v3546, 0.0
    %3555 = vadd.xlane.f32.xlu0 %v3554
    %v3556 = vpop.xlane.xlu0 %3555
    %v3557 = vsel %vm309, %v3547, 0.0
    %3558 = vadd.xlane.f32.xlu0 %v3557
    %v3559 = vpop.xlane.xlu0 %3558
    %v3560 = vmul.f32 %v3550, %v3232
    %v3561 = vmul.f32 %v3553, %v3232
    %v3562 = vmul.f32 %v3556, %v3232
    %v3563 = vmul.f32 %v3559, %v3232
    %v3564 = vadd.f32 %v3560, 1e-05
    %v3565 = vadd.f32 %v3561, 1e-05
    %v3566 = vadd.f32 %v3562, 1e-05
    %v3567 = vadd.f32 %v3563, 1e-05
    %v3568 = vrsqrt.pop %v3564
    %v3569 = vrsqrt.pop %v3565
    %v3570 = vrsqrt.pop %v3566
    %v3571 = vrsqrt.pop %v3567
    %v3572 = vmul.f32 %v3540, %v3568
    %v3573 = vmul.f32 %v3541, %v3569
    %v3574 = vmul.f32 %v3542, %v3570
    %v3575 = vmul.f32 %v3543, %v3571
    %v3577 = vlaneseq
    %v3578 = vshrl.u32 %v3577, 7
    %v3579 = vsub.s32 0, %v3578
    %v3580 = vrot.slane %v3522, %v3579
    %v3582 = vmul.f32 %v3572, %v3580
    %v3583 = vmul.f32 %v3573, %v3580
    %v3584 = vmul.f32 %v3574, %v3580
    %v3585 = vmul.f32 %v3575, %v3580
    %v3587 = vlaneseq
    %v3588 = vshrl.u32 %v3587, 7
    %v3589 = vsub.s32 0, %v3588
    %v3590 = vrot.slane %v3523, %v3589
    %v3592 = vadd.f32 %v3582, %v3590
    %v3593 = vadd.f32 %v3583, %v3590
    %v3594 = vadd.f32 %v3584, %v3590
    %v3595 = vadd.f32 %v3585, %v3590
    %s3596 = scalar_lea.vmem %s3, 32
    %v3597 = vld [vmem:[%s3596] sm:$0xff]
    %v3598 = vld [vmem:[%s3596 + $0x8] sm:$0xff]
    %v3599 = vld [vmem:[%s3596 + $0x10] sm:$0xff]
    %v3600 = vld [vmem:[%s3596 + $0x18] sm:$0xff]
    %s3601 = scalar_lea.vmem %s4, 1
    %v3602 = vld [vmem:[%s3601] sm:$0x1]
    %v3604 = vlaneseq
    %v3605 = vshrl.u32 %v3604, 7
    %v3606 = vsub.s32 0, %v3605
    %v3607 = vrot.slane %v3602, %v3606
    %v3610 = vsel %vm309, %v3592, 0
    %v3613 = vsel %vm309, %v3593, 0
    %v3616 = vsel %vm309, %v3594, 0
    %v3619 = vsel %vm309, %v3595, 0
    %3621 = vmatprep.subr.mxu0 0.0
    %3622 = vmatpush1.msra.mxu0 0.0
    %3623 = vmatprep.subr.mxu0 0.0
    %3624 = vmatpush1.msra.mxu0 0.0
    %3625 = vmatprep.subr.mxu0 0.0
    %3626 = vmatpush1.msra.mxu0 0.0
    %3627 = vmatprep.subr.mxu0 0.0
    %3628 = vmatpush1.msra.mxu0 0.0
    %3629 = vmatprep.subr.mxu0 0.0
    %3630 = vmatpush1.msra.mxu0 0.0
    %3631 = vmatprep.subr.mxu0 0.0
    %3632 = vmatpush1.msra.mxu0 0.0
    %3633 = vmatprep.subr.mxu0 0.0
    %3634 = vmatpush1.msra.mxu0 0.0
    %3635 = vmatprep.subr.mxu0 0.0
    %3636 = vmatpush1.msra.mxu0 0.0
    %3637 = vmatprep.subr.mxu0 0.0
    %3638 = vmatpush1.msra.mxu0 0.0
    %3639 = vmatprep.subr.mxu0 0.0
    %3640 = vmatpush1.msra.mxu0 0.0
    %3641 = vmatprep.subr.mxu0 0.0
    %3642 = vmatpush1.msra.mxu0 0.0
    %3643 = vmatprep.subr.mxu0 0.0
    %3644 = vmatpush1.msra.mxu0 0.0
    %3645 = vmatprep.subr.mxu0 0.0
    %3646 = vmatpush1.msra.mxu0 %v3600
    %3647 = vmatprep.subr.mxu0 0.0
    %3648 = vmatpush1.msra.mxu0 %v3599
    %3649 = vmatprep.subr.mxu0 0.0
    %3650 = vmatpush1.msra.mxu0 %v3598
    %3651 = vmatprep.subr.mxu0 0.0
    %3652 = vmatpush1.msra.mxu0 %v3597
    %3653 = vmatprep.subr.mxu0 0.0
    %3654 = vmatpush2.msra.mxu0 0.0
    %3655 = vmatprep.subr.mxu0 0.0
    %3656 = vmatpush2.msra.mxu0 0.0
    %3657 = vmatprep.subr.mxu0 0.0
    %3658 = vmatpush2.msra.mxu0 0.0
    %3659 = vmatprep.subr.mxu0 0.0
    %3660 = vmatpush2.msra.mxu0 0.0
    %3661 = vmatprep.subr.mxu0 0.0
    %3662 = vmatpush2.msra.mxu0 0.0
    %3663 = vmatprep.subr.mxu0 0.0
    %3664 = vmatpush2.msra.mxu0 0.0
    %3665 = vmatprep.subr.mxu0 0.0
    %3666 = vmatpush2.msra.mxu0 0.0
    %3667 = vmatprep.subr.mxu0 0.0
    %3668 = vmatpush2.msra.mxu0 0.0
    %3669 = vmatprep.subr.mxu0 0.0
    %3670 = vmatpush2.msra.mxu0 0.0
    %3671 = vmatprep.subr.mxu0 0.0
    %3672 = vmatpush2.msra.mxu0 0.0
    %3673 = vmatprep.subr.mxu0 0.0
    %3674 = vmatpush2.msra.mxu0 0.0
    %3675 = vmatprep.subr.mxu0 0.0
    %3676 = vmatpush2.msra.mxu0 0.0
    %3677 = vmatprep.subr.mxu0 0.0
    %3678 = vmatpush2.msra.mxu0 0.0
    %3679 = vmatprep.subr.mxu0 0.0
    %3680 = vmatpush2.msra.mxu0 0.0
    %3681 = vmatprep.subr.mxu0 0.0
    %3682 = vmatpush2.msra.mxu0 0.0
    %3683 = vmatprep.subr.mxu0 0.0
    %3684 = vmatpush2.msra.mxu0 0.0
    %3685 = vmatprep.mubr.f32.mxu0 0.0
    %3686 = vmatmul.mubr.f32.gmra.mxu0 %v3610
    %v3687 = vpop.f32.mrf.mxu0
    %v3688 = vadd.f32 %v3607, %v3687
    %v3689 = vpop.f32.mrf.mxu0
    %3690 = vmatprep.mubr.f32.mxu0 0.0
    %3691 = vmatmul.mubr.f32.gmra.mxu0 %v3613
    %v3692 = vpop.f32.mrf.mxu0
    %v3693 = vadd.f32 %v3607, %v3692
    %v3694 = vpop.f32.mrf.mxu0
    %3695 = vmatprep.mubr.f32.mxu0 0.0
    %3696 = vmatmul.mubr.f32.gmra.mxu0 %v3616
    %v3697 = vpop.f32.mrf.mxu0
    %v3698 = vadd.f32 %v3607, %v3697
    %v3699 = vpop.f32.mrf.mxu0
    %3700 = vmatprep.mubr.f32.mxu0 0.0
    %3701 = vmatmul.mubr.f32.gmra.mxu0 %v3619
    %v3702 = vpop.f32.mrf.mxu0
    %v3703 = vadd.f32 %v3607, %v3702
    %v3704 = vpop.f32.mrf.mxu0
    %3705 = vdwg.mxu0
    %3707 = vrot.lane.b32.xlu0 %v3688, 96
    %v3708 = vpop.permute.xlu0 %3707
    %v3709 = vsel %vm410, %v3688, 0
    %v3711 = vsel %vm410, %v3708, 0
    %3713 = vmatprep.subr.mxu0 0.0
    %3714 = vmatpush1.xpose.msra.mxu0 0.0
    %3715 = vmatprep.subr.mxu0 0.0
    %3716 = vmatpush1.xpose.msra.mxu0 0.0
    %3717 = vmatprep.subr.mxu0 0.0
    %3718 = vmatpush1.xpose.msra.mxu0 0.0
    %3719 = vmatprep.subr.mxu0 0.0
    %3720 = vmatpush1.xpose.msra.mxu0 0.0
    %3721 = vmatprep.subr.mxu0 0.0
    %3722 = vmatpush1.xpose.msra.mxu0 0.0
    %3723 = vmatprep.subr.mxu0 0.0
    %3724 = vmatpush1.xpose.msra.mxu0 0.0
    %3725 = vmatprep.subr.mxu0 0.0
    %3726 = vmatpush1.xpose.msra.mxu0 0.0
    %3727 = vmatprep.subr.mxu0 0.0
    %3728 = vmatpush1.xpose.msra.mxu0 0.0
    %3729 = vmatprep.subr.mxu0 0.0
    %3730 = vmatpush1.xpose.msra.mxu0 0.0
    %3731 = vmatprep.subr.mxu0 0.0
    %3732 = vmatpush1.xpose.msra.mxu0 0.0
    %3733 = vmatprep.subr.mxu0 0.0
    %3734 = vmatpush1.xpose.msra.mxu0 0.0
    %3735 = vmatprep.subr.mxu0 0.0
    %3736 = vmatpush1.xpose.msra.mxu0 0.0
    %3737 = vmatprep.subr.mxu0 0.0
    %3738 = vmatpush1.xpose.msra.mxu0 0.0
    %3739 = vmatprep.subr.mxu0 0.0
    %3740 = vmatpush1.xpose.msra.mxu0 0.0
    %3741 = vmatprep.subr.mxu0 0.0
    %3742 = vmatpush1.xpose.msra.mxu0 0.0
    %3743 = vmatprep.subr.mxu0 0.0
    %3744 = vmatpush1.xpose.msra.mxu0 %v3711
    %3745 = vmatprep.subr.mxu0 0.0
    %3746 = vmatpush2.xpose.msra.mxu0 0.0
    %3747 = vmatprep.subr.mxu0 0.0
    %3748 = vmatpush2.xpose.msra.mxu0 0.0
    %3749 = vmatprep.subr.mxu0 0.0
    %3750 = vmatpush2.xpose.msra.mxu0 0.0
    %3751 = vmatprep.subr.mxu0 0.0
    %3752 = vmatpush2.xpose.msra.mxu0 0.0
    %3753 = vmatprep.subr.mxu0 0.0
    %3754 = vmatpush2.xpose.msra.mxu0 0.0
    %3755 = vmatprep.subr.mxu0 0.0
    %3756 = vmatpush2.xpose.msra.mxu0 0.0
    %3757 = vmatprep.subr.mxu0 0.0
    %3758 = vmatpush2.xpose.msra.mxu0 0.0
    %3759 = vmatprep.subr.mxu0 0.0
    %3760 = vmatpush2.xpose.msra.mxu0 0.0
    %3761 = vmatprep.subr.mxu0 0.0
    %3762 = vmatpush2.xpose.msra.mxu0 0.0
    %3763 = vmatprep.subr.mxu0 0.0
    %3764 = vmatpush2.xpose.msra.mxu0 0.0
    %3765 = vmatprep.subr.mxu0 0.0
    %3766 = vmatpush2.xpose.msra.mxu0 0.0
    %3767 = vmatprep.subr.mxu0 0.0
    %3768 = vmatpush2.xpose.msra.mxu0 0.0
    %3769 = vmatprep.subr.mxu0 0.0
    %3770 = vmatpush2.xpose.msra.mxu0 0.0
    %3771 = vmatprep.subr.mxu0 0.0
    %3772 = vmatpush2.xpose.msra.mxu0 0.0
    %3773 = vmatprep.subr.mxu0 0.0
    %3774 = vmatpush2.xpose.msra.mxu0 0.0
    %3775 = vmatprep.subr.mxu0 0.0
    %3776 = vmatpush2.xpose.msra.mxu0 0.0
    %3777 = vmatprep.mubr.f32.mxu0 0.0
    %3778 = vmatmul.mubr.f32.gmra.mxu0 %v3709
    %v3779 = vpop.f32.mrf.mxu0
    %v3780 = vadd.f32 0.0, %v3779
    %v3781 = vpop.f32.mrf.mxu0
    %3782 = vdwg.mxu0
    %3784 = vrot.lane.b32.xlu0 %v3693, 96
    %v3785 = vpop.permute.xlu0 %3784
    %v3786 = vsel %vm410, %v3693, 0
    %v3788 = vsel %vm410, %v3785, 0
    %3790 = vmatprep.subr.mxu0 0.0
    %3791 = vmatpush1.xpose.msra.mxu0 0.0
    %3792 = vmatprep.subr.mxu0 0.0
    %3793 = vmatpush1.xpose.msra.mxu0 0.0
    %3794 = vmatprep.subr.mxu0 0.0
    %3795 = vmatpush1.xpose.msra.mxu0 0.0
    %3796 = vmatprep.subr.mxu0 0.0
    %3797 = vmatpush1.xpose.msra.mxu0 0.0
    %3798 = vmatprep.subr.mxu0 0.0
    %3799 = vmatpush1.xpose.msra.mxu0 0.0
    %3800 = vmatprep.subr.mxu0 0.0
    %3801 = vmatpush1.xpose.msra.mxu0 0.0
    %3802 = vmatprep.subr.mxu0 0.0
    %3803 = vmatpush1.xpose.msra.mxu0 0.0
    %3804 = vmatprep.subr.mxu0 0.0
    %3805 = vmatpush1.xpose.msra.mxu0 0.0
    %3806 = vmatprep.subr.mxu0 0.0
    %3807 = vmatpush1.xpose.msra.mxu0 0.0
    %3808 = vmatprep.subr.mxu0 0.0
    %3809 = vmatpush1.xpose.msra.mxu0 0.0
    %3810 = vmatprep.subr.mxu0 0.0
    %3811 = vmatpush1.xpose.msra.mxu0 0.0
    %3812 = vmatprep.subr.mxu0 0.0
    %3813 = vmatpush1.xpose.msra.mxu0 0.0
    %3814 = vmatprep.subr.mxu0 0.0
    %3815 = vmatpush1.xpose.msra.mxu0 0.0
    %3816 = vmatprep.subr.mxu0 0.0
    %3817 = vmatpush1.xpose.msra.mxu0 0.0
    %3818 = vmatprep.subr.mxu0 0.0
    %3819 = vmatpush1.xpose.msra.mxu0 0.0
    %3820 = vmatprep.subr.mxu0 0.0
    %3821 = vmatpush1.xpose.msra.mxu0 %v3788
    %3822 = vmatprep.subr.mxu0 0.0
    %3823 = vmatpush2.xpose.msra.mxu0 0.0
    %3824 = vmatprep.subr.mxu0 0.0
    %3825 = vmatpush2.xpose.msra.mxu0 0.0
    %3826 = vmatprep.subr.mxu0 0.0
    %3827 = vmatpush2.xpose.msra.mxu0 0.0
    %3828 = vmatprep.subr.mxu0 0.0
    %3829 = vmatpush2.xpose.msra.mxu0 0.0
    %3830 = vmatprep.subr.mxu0 0.0
    %3831 = vmatpush2.xpose.msra.mxu0 0.0
    %3832 = vmatprep.subr.mxu0 0.0
    %3833 = vmatpush2.xpose.msra.mxu0 0.0
    %3834 = vmatprep.subr.mxu0 0.0
    %3835 = vmatpush2.xpose.msra.mxu0 0.0
    %3836 = vmatprep.subr.mxu0 0.0
    %3837 = vmatpush2.xpose.msra.mxu0 0.0
    %3838 = vmatprep.subr.mxu0 0.0
    %3839 = vmatpush2.xpose.msra.mxu0 0.0
    %3840 = vmatprep.subr.mxu0 0.0
    %3841 = vmatpush2.xpose.msra.mxu0 0.0
    %3842 = vmatprep.subr.mxu0 0.0
    %3843 = vmatpush2.xpose.msra.mxu0 0.0
    %3844 = vmatprep.subr.mxu0 0.0
    %3845 = vmatpush2.xpose.msra.mxu0 0.0
    %3846 = vmatprep.subr.mxu0 0.0
    %3847 = vmatpush2.xpose.msra.mxu0 0.0
    %3848 = vmatprep.subr.mxu0 0.0
    %3849 = vmatpush2.xpose.msra.mxu0 0.0
    %3850 = vmatprep.subr.mxu0 0.0
    %3851 = vmatpush2.xpose.msra.mxu0 0.0
    %3852 = vmatprep.subr.mxu0 0.0
    %3853 = vmatpush2.xpose.msra.mxu0 0.0
    %3854 = vmatprep.mubr.f32.mxu0 0.0
    %3855 = vmatmul.mubr.f32.gmra.mxu0 %v3786
    %v3856 = vpop.f32.mrf.mxu0
    %v3857 = vadd.f32 0.0, %v3856
    %v3858 = vpop.f32.mrf.mxu0
    %3859 = vdwg.mxu0
    %3861 = vrot.lane.b32.xlu0 %v3698, 96
    %v3862 = vpop.permute.xlu0 %3861
    %v3863 = vsel %vm410, %v3698, 0
    %v3865 = vsel %vm410, %v3862, 0
    %3867 = vmatprep.subr.mxu0 0.0
    %3868 = vmatpush1.xpose.msra.mxu0 0.0
    %3869 = vmatprep.subr.mxu0 0.0
    %3870 = vmatpush1.xpose.msra.mxu0 0.0
    %3871 = vmatprep.subr.mxu0 0.0
    %3872 = vmatpush1.xpose.msra.mxu0 0.0
    %3873 = vmatprep.subr.mxu0 0.0
    %3874 = vmatpush1.xpose.msra.mxu0 0.0
    %3875 = vmatprep.subr.mxu0 0.0
    %3876 = vmatpush1.xpose.msra.mxu0 0.0
    %3877 = vmatprep.subr.mxu0 0.0
    %3878 = vmatpush1.xpose.msra.mxu0 0.0
    %3879 = vmatprep.subr.mxu0 0.0
    %3880 = vmatpush1.xpose.msra.mxu0 0.0
    %3881 = vmatprep.subr.mxu0 0.0
    %3882 = vmatpush1.xpose.msra.mxu0 0.0
    %3883 = vmatprep.subr.mxu0 0.0
    %3884 = vmatpush1.xpose.msra.mxu0 0.0
    %3885 = vmatprep.subr.mxu0 0.0
    %3886 = vmatpush1.xpose.msra.mxu0 0.0
    %3887 = vmatprep.subr.mxu0 0.0
    %3888 = vmatpush1.xpose.msra.mxu0 0.0
    %3889 = vmatprep.subr.mxu0 0.0
    %3890 = vmatpush1.xpose.msra.mxu0 0.0
    %3891 = vmatprep.subr.mxu0 0.0
    %3892 = vmatpush1.xpose.msra.mxu0 0.0
    %3893 = vmatprep.subr.mxu0 0.0
    %3894 = vmatpush1.xpose.msra.mxu0 0.0
    %3895 = vmatprep.subr.mxu0 0.0
    %3896 = vmatpush1.xpose.msra.mxu0 0.0
    %3897 = vmatprep.subr.mxu0 0.0
    %3898 = vmatpush1.xpose.msra.mxu0 %v3865
    %3899 = vmatprep.subr.mxu0 0.0
    %3900 = vmatpush2.xpose.msra.mxu0 0.0
    %3901 = vmatprep.subr.mxu0 0.0
    %3902 = vmatpush2.xpose.msra.mxu0 0.0
    %3903 = vmatprep.subr.mxu0 0.0
    %3904 = vmatpush2.xpose.msra.mxu0 0.0
    %3905 = vmatprep.subr.mxu0 0.0
    %3906 = vmatpush2.xpose.msra.mxu0 0.0
    %3907 = vmatprep.subr.mxu0 0.0
    %3908 = vmatpush2.xpose.msra.mxu0 0.0
    %3909 = vmatprep.subr.mxu0 0.0
    %3910 = vmatpush2.xpose.msra.mxu0 0.0
    %3911 = vmatprep.subr.mxu0 0.0
    %3912 = vmatpush2.xpose.msra.mxu0 0.0
    %3913 = vmatprep.subr.mxu0 0.0
    %3914 = vmatpush2.xpose.msra.mxu0 0.0
    %3915 = vmatprep.subr.mxu0 0.0
    %3916 = vmatpush2.xpose.msra.mxu0 0.0
    %3917 = vmatprep.subr.mxu0 0.0
    %3918 = vmatpush2.xpose.msra.mxu0 0.0
    %3919 = vmatprep.subr.mxu0 0.0
    %3920 = vmatpush2.xpose.msra.mxu0 0.0
    %3921 = vmatprep.subr.mxu0 0.0
    %3922 = vmatpush2.xpose.msra.mxu0 0.0
    %3923 = vmatprep.subr.mxu0 0.0
    %3924 = vmatpush2.xpose.msra.mxu0 0.0
    %3925 = vmatprep.subr.mxu0 0.0
    %3926 = vmatpush2.xpose.msra.mxu0 0.0
    %3927 = vmatprep.subr.mxu0 0.0
    %3928 = vmatpush2.xpose.msra.mxu0 0.0
    %3929 = vmatprep.subr.mxu0 0.0
    %3930 = vmatpush2.xpose.msra.mxu0 0.0
    %3931 = vmatprep.mubr.f32.mxu0 0.0
    %3932 = vmatmul.mubr.f32.gmra.mxu0 %v3863
    %v3933 = vpop.f32.mrf.mxu0
    %v3934 = vadd.f32 0.0, %v3933
    %v3935 = vpop.f32.mrf.mxu0
    %3936 = vdwg.mxu0
    %3938 = vrot.lane.b32.xlu0 %v3703, 96
    %v3939 = vpop.permute.xlu0 %3938
    %v3940 = vsel %vm410, %v3703, 0
    %v3942 = vsel %vm410, %v3939, 0
    %3944 = vmatprep.subr.mxu0 0.0
    %3945 = vmatpush1.xpose.msra.mxu0 0.0
    %3946 = vmatprep.subr.mxu0 0.0
    %3947 = vmatpush1.xpose.msra.mxu0 0.0
    %3948 = vmatprep.subr.mxu0 0.0
    %3949 = vmatpush1.xpose.msra.mxu0 0.0
    %3950 = vmatprep.subr.mxu0 0.0
    %3951 = vmatpush1.xpose.msra.mxu0 0.0
    %3952 = vmatprep.subr.mxu0 0.0
    %3953 = vmatpush1.xpose.msra.mxu0 0.0
    %3954 = vmatprep.subr.mxu0 0.0
    %3955 = vmatpush1.xpose.msra.mxu0 0.0
    %3956 = vmatprep.subr.mxu0 0.0
    %3957 = vmatpush1.xpose.msra.mxu0 0.0
    %3958 = vmatprep.subr.mxu0 0.0
    %3959 = vmatpush1.xpose.msra.mxu0 0.0
    %3960 = vmatprep.subr.mxu0 0.0
    %3961 = vmatpush1.xpose.msra.mxu0 0.0
    %3962 = vmatprep.subr.mxu0 0.0
    %3963 = vmatpush1.xpose.msra.mxu0 0.0
    %3964 = vmatprep.subr.mxu0 0.0
    %3965 = vmatpush1.xpose.msra.mxu0 0.0
    %3966 = vmatprep.subr.mxu0 0.0
    %3967 = vmatpush1.xpose.msra.mxu0 0.0
    %3968 = vmatprep.subr.mxu0 0.0
    %3969 = vmatpush1.xpose.msra.mxu0 0.0
    %3970 = vmatprep.subr.mxu0 0.0
    %3971 = vmatpush1.xpose.msra.mxu0 0.0
    %3972 = vmatprep.subr.mxu0 0.0
    %3973 = vmatpush1.xpose.msra.mxu0 0.0
    %3974 = vmatprep.subr.mxu0 0.0
    %3975 = vmatpush1.xpose.msra.mxu0 %v3942
    %3976 = vmatprep.subr.mxu0 0.0
    %3977 = vmatpush2.xpose.msra.mxu0 0.0
    %3978 = vmatprep.subr.mxu0 0.0
    %3979 = vmatpush2.xpose.msra.mxu0 0.0
    %3980 = vmatprep.subr.mxu0 0.0
    %3981 = vmatpush2.xpose.msra.mxu0 0.0
    %3982 = vmatprep.subr.mxu0 0.0
    %3983 = vmatpush2.xpose.msra.mxu0 0.0
    %3984 = vmatprep.subr.mxu0 0.0
    %3985 = vmatpush2.xpose.msra.mxu0 0.0
    %3986 = vmatprep.subr.mxu0 0.0
    %3987 = vmatpush2.xpose.msra.mxu0 0.0
    %3988 = vmatprep.subr.mxu0 0.0
    %3989 = vmatpush2.xpose.msra.mxu0 0.0
    %3990 = vmatprep.subr.mxu0 0.0
    %3991 = vmatpush2.xpose.msra.mxu0 0.0
    %3992 = vmatprep.subr.mxu0 0.0
    %3993 = vmatpush2.xpose.msra.mxu0 0.0
    %3994 = vmatprep.subr.mxu0 0.0
    %3995 = vmatpush2.xpose.msra.mxu0 0.0
    %3996 = vmatprep.subr.mxu0 0.0
    %3997 = vmatpush2.xpose.msra.mxu0 0.0
    %3998 = vmatprep.subr.mxu0 0.0
    %3999 = vmatpush2.xpose.msra.mxu0 0.0
    %4000 = vmatprep.subr.mxu0 0.0
    %4001 = vmatpush2.xpose.msra.mxu0 0.0
    %4002 = vmatprep.subr.mxu0 0.0
    %4003 = vmatpush2.xpose.msra.mxu0 0.0
    %4004 = vmatprep.subr.mxu0 0.0
    %4005 = vmatpush2.xpose.msra.mxu0 0.0
    %4006 = vmatprep.subr.mxu0 0.0
    %4007 = vmatpush2.xpose.msra.mxu0 0.0
    %4008 = vmatprep.mubr.f32.mxu0 0.0
    %4009 = vmatmul.mubr.f32.gmra.mxu0 %v3940
    %v4010 = vpop.f32.mrf.mxu0
    %v4011 = vadd.f32 0.0, %v4010
    %v4012 = vpop.f32.mrf.mxu0
    %4013 = vdwg.mxu0
    %v4014 = vsel %vm410, %v3780, -inf
    %4015 = vmax.xlane.f32.xlu0 %v4014
    %v4016 = vpop.xlane.xlu0 %4015
    %v4017 = vsel %vm410, %v3857, -inf
    %4018 = vmax.xlane.f32.xlu0 %v4017
    %v4019 = vpop.xlane.xlu0 %4018
    %v4020 = vsel %vm410, %v3934, -inf
    %4021 = vmax.xlane.f32.xlu0 %v4020
    %v4022 = vpop.xlane.xlu0 %4021
    %v4023 = vsel %vm410, %v4011, -inf
    %4024 = vmax.xlane.f32.xlu0 %v4023
    %v4025 = vpop.xlane.xlu0 %4024
    %v4026 = vsub.f32 %v3780, %v4016
    %v4027 = vsub.f32 %v3857, %v4019
    %v4028 = vsub.f32 %v3934, %v4022
    %v4029 = vsub.f32 %v4011, %v4025
    %v4030 = vmul.f32 %v4026, 1.442695
    %v4031 = vpow.pop %v4030
    %v4032 = vmul.f32 %v4027, 1.442695
    %v4033 = vpow.pop %v4032
    %v4034 = vmul.f32 %v4028, 1.442695
    %v4035 = vpow.pop %v4034
    %v4036 = vmul.f32 %v4029, 1.442695
    %v4037 = vpow.pop %v4036
    %v4038 = vsel %vm410, %v4031, 0.0
    %4039 = vadd.xlane.f32.xlu0 %v4038
    %v4040 = vpop.xlane.xlu0 %4039
    %v4041 = vsel %vm410, %v4033, 0.0
    %4042 = vadd.xlane.f32.xlu0 %v4041
    %v4043 = vpop.xlane.xlu0 %4042
    %v4044 = vsel %vm410, %v4035, 0.0
    %4045 = vadd.xlane.f32.xlu0 %v4044
    %v4046 = vpop.xlane.xlu0 %4045
    %v4047 = vsel %vm410, %v4037, 0.0
    %4048 = vadd.xlane.f32.xlu0 %v4047
    %v4049 = vpop.xlane.xlu0 %4048
    %v4050 = vrcp.pop %v4040
    %v4051 = vrcp.pop %v4043
    %v4052 = vrcp.pop %v4046
    %v4053 = vrcp.pop %v4049
    %v4054 = vmul.f32 %v4031, %v4050
    %v4055 = vmul.f32 %v4033, %v4051
    %v4056 = vmul.f32 %v4035, %v4052
    %v4057 = vmul.f32 %v4037, %v4053
    %4058 = vrot.lane.b32.xlu0 %v3688, 64
    %v4059 = vpop.permute.xlu0 %4058
    %v4062 = vsel %vm410, %v4054, 0
    %4064 = vmatprep.subr.mxu0 0.0
    %4065 = vmatpush1.msra.mxu0 0.0
    %4066 = vmatprep.subr.mxu0 0.0
    %4067 = vmatpush1.msra.mxu0 0.0
    %4068 = vmatprep.subr.mxu0 0.0
    %4069 = vmatpush1.msra.mxu0 0.0
    %4070 = vmatprep.subr.mxu0 0.0
    %4071 = vmatpush1.msra.mxu0 0.0
    %4072 = vmatprep.subr.mxu0 0.0
    %4073 = vmatpush1.msra.mxu0 0.0
    %4074 = vmatprep.subr.mxu0 0.0
    %4075 = vmatpush1.msra.mxu0 0.0
    %4076 = vmatprep.subr.mxu0 0.0
    %4077 = vmatpush1.msra.mxu0 0.0
    %4078 = vmatprep.subr.mxu0 0.0
    %4079 = vmatpush1.msra.mxu0 0.0
    %4080 = vmatprep.subr.mxu0 0.0
    %4081 = vmatpush1.msra.mxu0 0.0
    %4082 = vmatprep.subr.mxu0 0.0
    %4083 = vmatpush1.msra.mxu0 0.0
    %4084 = vmatprep.subr.mxu0 0.0
    %4085 = vmatpush1.msra.mxu0 0.0
    %4086 = vmatprep.subr.mxu0 0.0
    %4087 = vmatpush1.msra.mxu0 0.0
    %4088 = vmatprep.subr.mxu0 0.0
    %4089 = vmatpush1.msra.mxu0 0.0
    %4090 = vmatprep.subr.mxu0 0.0
    %4091 = vmatpush1.msra.mxu0 0.0
    %4092 = vmatprep.subr.mxu0 0.0
    %4093 = vmatpush1.msra.mxu0 0.0
    %4094 = vmatprep.subr.mxu0 0.0
    %4095 = vmatpush1.msra.mxu0 %v4059
    %4096 = vmatprep.subr.mxu0 0.0
    %4097 = vmatpush2.msra.mxu0 0.0
    %4098 = vmatprep.subr.mxu0 0.0
    %4099 = vmatpush2.msra.mxu0 0.0
    %4100 = vmatprep.subr.mxu0 0.0
    %4101 = vmatpush2.msra.mxu0 0.0
    %4102 = vmatprep.subr.mxu0 0.0
    %4103 = vmatpush2.msra.mxu0 0.0
    %4104 = vmatprep.subr.mxu0 0.0
    %4105 = vmatpush2.msra.mxu0 0.0
    %4106 = vmatprep.subr.mxu0 0.0
    %4107 = vmatpush2.msra.mxu0 0.0
    %4108 = vmatprep.subr.mxu0 0.0
    %4109 = vmatpush2.msra.mxu0 0.0
    %4110 = vmatprep.subr.mxu0 0.0
    %4111 = vmatpush2.msra.mxu0 0.0
    %4112 = vmatprep.subr.mxu0 0.0
    %4113 = vmatpush2.msra.mxu0 0.0
    %4114 = vmatprep.subr.mxu0 0.0
    %4115 = vmatpush2.msra.mxu0 0.0
    %4116 = vmatprep.subr.mxu0 0.0
    %4117 = vmatpush2.msra.mxu0 0.0
    %4118 = vmatprep.subr.mxu0 0.0
    %4119 = vmatpush2.msra.mxu0 0.0
    %4120 = vmatprep.subr.mxu0 0.0
    %4121 = vmatpush2.msra.mxu0 0.0
    %4122 = vmatprep.subr.mxu0 0.0
    %4123 = vmatpush2.msra.mxu0 0.0
    %4124 = vmatprep.subr.mxu0 0.0
    %4125 = vmatpush2.msra.mxu0 0.0
    %4126 = vmatprep.subr.mxu0 0.0
    %4127 = vmatpush2.msra.mxu0 0.0
    %4128 = vmatprep.mubr.f32.mxu0 0.0
    %4129 = vmatmul.mubr.f32.gmra.mxu0 %v4062
    %v4130 = vpop.f32.mrf.mxu0
    %v4131 = vadd.f32 0.0, %v4130
    %v4132 = vpop.f32.mrf.mxu0
    %4133 = vdwg.mxu0
    %4134 = vrot.lane.b32.xlu0 %v3693, 64
    %v4135 = vpop.permute.xlu0 %4134
    %v4138 = vsel %vm410, %v4055, 0
    %4140 = vmatprep.subr.mxu0 0.0
    %4141 = vmatpush1.msra.mxu0 0.0
    %4142 = vmatprep.subr.mxu0 0.0
    %4143 = vmatpush1.msra.mxu0 0.0
    %4144 = vmatprep.subr.mxu0 0.0
    %4145 = vmatpush1.msra.mxu0 0.0
    %4146 = vmatprep.subr.mxu0 0.0
    %4147 = vmatpush1.msra.mxu0 0.0
    %4148 = vmatprep.subr.mxu0 0.0
    %4149 = vmatpush1.msra.mxu0 0.0
    %4150 = vmatprep.subr.mxu0 0.0
    %4151 = vmatpush1.msra.mxu0 0.0
    %4152 = vmatprep.subr.mxu0 0.0
    %4153 = vmatpush1.msra.mxu0 0.0
    %4154 = vmatprep.subr.mxu0 0.0
    %4155 = vmatpush1.msra.mxu0 0.0
    %4156 = vmatprep.subr.mxu0 0.0
    %4157 = vmatpush1.msra.mxu0 0.0
    %4158 = vmatprep.subr.mxu0 0.0
    %4159 = vmatpush1.msra.mxu0 0.0
    %4160 = vmatprep.subr.mxu0 0.0
    %4161 = vmatpush1.msra.mxu0 0.0
    %4162 = vmatprep.subr.mxu0 0.0
    %4163 = vmatpush1.msra.mxu0 0.0
    %4164 = vmatprep.subr.mxu0 0.0
    %4165 = vmatpush1.msra.mxu0 0.0
    %4166 = vmatprep.subr.mxu0 0.0
    %4167 = vmatpush1.msra.mxu0 0.0
    %4168 = vmatprep.subr.mxu0 0.0
    %4169 = vmatpush1.msra.mxu0 0.0
    %4170 = vmatprep.subr.mxu0 0.0
    %4171 = vmatpush1.msra.mxu0 %v4135
    %4172 = vmatprep.subr.mxu0 0.0
    %4173 = vmatpush2.msra.mxu0 0.0
    %4174 = vmatprep.subr.mxu0 0.0
    %4175 = vmatpush2.msra.mxu0 0.0
    %4176 = vmatprep.subr.mxu0 0.0
    %4177 = vmatpush2.msra.mxu0 0.0
    %4178 = vmatprep.subr.mxu0 0.0
    %4179 = vmatpush2.msra.mxu0 0.0
    %4180 = vmatprep.subr.mxu0 0.0
    %4181 = vmatpush2.msra.mxu0 0.0
    %4182 = vmatprep.subr.mxu0 0.0
    %4183 = vmatpush2.msra.mxu0 0.0
    %4184 = vmatprep.subr.mxu0 0.0
    %4185 = vmatpush2.msra.mxu0 0.0
    %4186 = vmatprep.subr.mxu0 0.0
    %4187 = vmatpush2.msra.mxu0 0.0
    %4188 = vmatprep.subr.mxu0 0.0
    %4189 = vmatpush2.msra.mxu0 0.0
    %4190 = vmatprep.subr.mxu0 0.0
    %4191 = vmatpush2.msra.mxu0 0.0
    %4192 = vmatprep.subr.mxu0 0.0
    %4193 = vmatpush2.msra.mxu0 0.0
    %4194 = vmatprep.subr.mxu0 0.0
    %4195 = vmatpush2.msra.mxu0 0.0
    %4196 = vmatprep.subr.mxu0 0.0
    %4197 = vmatpush2.msra.mxu0 0.0
    %4198 = vmatprep.subr.mxu0 0.0
    %4199 = vmatpush2.msra.mxu0 0.0
    %4200 = vmatprep.subr.mxu0 0.0
    %4201 = vmatpush2.msra.mxu0 0.0
    %4202 = vmatprep.subr.mxu0 0.0
    %4203 = vmatpush2.msra.mxu0 0.0
    %4204 = vmatprep.mubr.f32.mxu0 0.0
    %4205 = vmatmul.mubr.f32.gmra.mxu0 %v4138
    %v4206 = vpop.f32.mrf.mxu0
    %v4207 = vadd.f32 0.0, %v4206
    %v4208 = vpop.f32.mrf.mxu0
    %4209 = vdwg.mxu0
    %4210 = vrot.lane.b32.xlu0 %v3698, 64
    %v4211 = vpop.permute.xlu0 %4210
    %v4214 = vsel %vm410, %v4056, 0
    %4216 = vmatprep.subr.mxu0 0.0
    %4217 = vmatpush1.msra.mxu0 0.0
    %4218 = vmatprep.subr.mxu0 0.0
    %4219 = vmatpush1.msra.mxu0 0.0
    %4220 = vmatprep.subr.mxu0 0.0
    %4221 = vmatpush1.msra.mxu0 0.0
    %4222 = vmatprep.subr.mxu0 0.0
    %4223 = vmatpush1.msra.mxu0 0.0
    %4224 = vmatprep.subr.mxu0 0.0
    %4225 = vmatpush1.msra.mxu0 0.0
    %4226 = vmatprep.subr.mxu0 0.0
    %4227 = vmatpush1.msra.mxu0 0.0
    %4228 = vmatprep.subr.mxu0 0.0
    %4229 = vmatpush1.msra.mxu0 0.0
    %4230 = vmatprep.subr.mxu0 0.0
    %4231 = vmatpush1.msra.mxu0 0.0
    %4232 = vmatprep.subr.mxu0 0.0
    %4233 = vmatpush1.msra.mxu0 0.0
    %4234 = vmatprep.subr.mxu0 0.0
    %4235 = vmatpush1.msra.mxu0 0.0
    %4236 = vmatprep.subr.mxu0 0.0
    %4237 = vmatpush1.msra.mxu0 0.0
    %4238 = vmatprep.subr.mxu0 0.0
    %4239 = vmatpush1.msra.mxu0 0.0
    %4240 = vmatprep.subr.mxu0 0.0
    %4241 = vmatpush1.msra.mxu0 0.0
    %4242 = vmatprep.subr.mxu0 0.0
    %4243 = vmatpush1.msra.mxu0 0.0
    %4244 = vmatprep.subr.mxu0 0.0
    %4245 = vmatpush1.msra.mxu0 0.0
    %4246 = vmatprep.subr.mxu0 0.0
    %4247 = vmatpush1.msra.mxu0 %v4211
    %4248 = vmatprep.subr.mxu0 0.0
    %4249 = vmatpush2.msra.mxu0 0.0
    %4250 = vmatprep.subr.mxu0 0.0
    %4251 = vmatpush2.msra.mxu0 0.0
    %4252 = vmatprep.subr.mxu0 0.0
    %4253 = vmatpush2.msra.mxu0 0.0
    %4254 = vmatprep.subr.mxu0 0.0
    %4255 = vmatpush2.msra.mxu0 0.0
    %4256 = vmatprep.subr.mxu0 0.0
    %4257 = vmatpush2.msra.mxu0 0.0
    %4258 = vmatprep.subr.mxu0 0.0
    %4259 = vmatpush2.msra.mxu0 0.0
    %4260 = vmatprep.subr.mxu0 0.0
    %4261 = vmatpush2.msra.mxu0 0.0
    %4262 = vmatprep.subr.mxu0 0.0
    %4263 = vmatpush2.msra.mxu0 0.0
    %4264 = vmatprep.subr.mxu0 0.0
    %4265 = vmatpush2.msra.mxu0 0.0
    %4266 = vmatprep.subr.mxu0 0.0
    %4267 = vmatpush2.msra.mxu0 0.0
    %4268 = vmatprep.subr.mxu0 0.0
    %4269 = vmatpush2.msra.mxu0 0.0
    %4270 = vmatprep.subr.mxu0 0.0
    %4271 = vmatpush2.msra.mxu0 0.0
    %4272 = vmatprep.subr.mxu0 0.0
    %4273 = vmatpush2.msra.mxu0 0.0
    %4274 = vmatprep.subr.mxu0 0.0
    %4275 = vmatpush2.msra.mxu0 0.0
    %4276 = vmatprep.subr.mxu0 0.0
    %4277 = vmatpush2.msra.mxu0 0.0
    %4278 = vmatprep.subr.mxu0 0.0
    %4279 = vmatpush2.msra.mxu0 0.0
    %4280 = vmatprep.mubr.f32.mxu0 0.0
    %4281 = vmatmul.mubr.f32.gmra.mxu0 %v4214
    %v4282 = vpop.f32.mrf.mxu0
    %v4283 = vadd.f32 0.0, %v4282
    %v4284 = vpop.f32.mrf.mxu0
    %4285 = vdwg.mxu0
    %4286 = vrot.lane.b32.xlu0 %v3703, 64
    %v4287 = vpop.permute.xlu0 %4286
    %v4290 = vsel %vm410, %v4057, 0
    %4292 = vmatprep.subr.mxu0 0.0
    %4293 = vmatpush1.msra.mxu0 0.0
    %4294 = vmatprep.subr.mxu0 0.0
    %4295 = vmatpush1.msra.mxu0 0.0
    %4296 = vmatprep.subr.mxu0 0.0
    %4297 = vmatpush1.msra.mxu0 0.0
    %4298 = vmatprep.subr.mxu0 0.0
    %4299 = vmatpush1.msra.mxu0 0.0
    %4300 = vmatprep.subr.mxu0 0.0
    %4301 = vmatpush1.msra.mxu0 0.0
    %4302 = vmatprep.subr.mxu0 0.0
    %4303 = vmatpush1.msra.mxu0 0.0
    %4304 = vmatprep.subr.mxu0 0.0
    %4305 = vmatpush1.msra.mxu0 0.0
    %4306 = vmatprep.subr.mxu0 0.0
    %4307 = vmatpush1.msra.mxu0 0.0
    %4308 = vmatprep.subr.mxu0 0.0
    %4309 = vmatpush1.msra.mxu0 0.0
    %4310 = vmatprep.subr.mxu0 0.0
    %4311 = vmatpush1.msra.mxu0 0.0
    %4312 = vmatprep.subr.mxu0 0.0
    %4313 = vmatpush1.msra.mxu0 0.0
    %4314 = vmatprep.subr.mxu0 0.0
    %4315 = vmatpush1.msra.mxu0 0.0
    %4316 = vmatprep.subr.mxu0 0.0
    %4317 = vmatpush1.msra.mxu0 0.0
    %4318 = vmatprep.subr.mxu0 0.0
    %4319 = vmatpush1.msra.mxu0 0.0
    %4320 = vmatprep.subr.mxu0 0.0
    %4321 = vmatpush1.msra.mxu0 0.0
    %4322 = vmatprep.subr.mxu0 0.0
    %4323 = vmatpush1.msra.mxu0 %v4287
    %4324 = vmatprep.subr.mxu0 0.0
    %4325 = vmatpush2.msra.mxu0 0.0
    %4326 = vmatprep.subr.mxu0 0.0
    %4327 = vmatpush2.msra.mxu0 0.0
    %4328 = vmatprep.subr.mxu0 0.0
    %4329 = vmatpush2.msra.mxu0 0.0
    %4330 = vmatprep.subr.mxu0 0.0
    %4331 = vmatpush2.msra.mxu0 0.0
    %4332 = vmatprep.subr.mxu0 0.0
    %4333 = vmatpush2.msra.mxu0 0.0
    %4334 = vmatprep.subr.mxu0 0.0
    %4335 = vmatpush2.msra.mxu0 0.0
    %4336 = vmatprep.subr.mxu0 0.0
    %4337 = vmatpush2.msra.mxu0 0.0
    %4338 = vmatprep.subr.mxu0 0.0
    %4339 = vmatpush2.msra.mxu0 0.0
    %4340 = vmatprep.subr.mxu0 0.0
    %4341 = vmatpush2.msra.mxu0 0.0
    %4342 = vmatprep.subr.mxu0 0.0
    %4343 = vmatpush2.msra.mxu0 0.0
    %4344 = vmatprep.subr.mxu0 0.0
    %4345 = vmatpush2.msra.mxu0 0.0
    %4346 = vmatprep.subr.mxu0 0.0
    %4347 = vmatpush2.msra.mxu0 0.0
    %4348 = vmatprep.subr.mxu0 0.0
    %4349 = vmatpush2.msra.mxu0 0.0
    %4350 = vmatprep.subr.mxu0 0.0
    %4351 = vmatpush2.msra.mxu0 0.0
    %4352 = vmatprep.subr.mxu0 0.0
    %4353 = vmatpush2.msra.mxu0 0.0
    %4354 = vmatprep.subr.mxu0 0.0
    %4355 = vmatpush2.msra.mxu0 0.0
    %4356 = vmatprep.mubr.f32.mxu0 0.0
    %4357 = vmatmul.mubr.f32.gmra.mxu0 %v4290
    %v4358 = vpop.f32.mrf.mxu0
    %v4359 = vadd.f32 0.0, %v4358
    %v4360 = vpop.f32.mrf.mxu0
    %4361 = vdwg.mxu0
    %4362 = vrot.lane.b32.xlu0 %v3688, 120
    %v4363 = vpop.permute.xlu0 %4362
    %4364 = vrot.lane.b32.xlu0 %v3688, 88
    %v4365 = vpop.permute.xlu0 %4364
    %v4366 = vsel %vm410, %v4363, 0
    %v4368 = vsel %vm410, %v4365, 0
    %4370 = vmatprep.subr.mxu0 0.0
    %4371 = vmatpush1.xpose.msra.mxu0 0.0
    %4372 = vmatprep.subr.mxu0 0.0
    %4373 = vmatpush1.xpose.msra.mxu0 0.0
    %4374 = vmatprep.subr.mxu0 0.0
    %4375 = vmatpush1.xpose.msra.mxu0 0.0
    %4376 = vmatprep.subr.mxu0 0.0
    %4377 = vmatpush1.xpose.msra.mxu0 0.0
    %4378 = vmatprep.subr.mxu0 0.0
    %4379 = vmatpush1.xpose.msra.mxu0 0.0
    %4380 = vmatprep.subr.mxu0 0.0
    %4381 = vmatpush1.xpose.msra.mxu0 0.0
    %4382 = vmatprep.subr.mxu0 0.0
    %4383 = vmatpush1.xpose.msra.mxu0 0.0
    %4384 = vmatprep.subr.mxu0 0.0
    %4385 = vmatpush1.xpose.msra.mxu0 0.0
    %4386 = vmatprep.subr.mxu0 0.0
    %4387 = vmatpush1.xpose.msra.mxu0 0.0
    %4388 = vmatprep.subr.mxu0 0.0
    %4389 = vmatpush1.xpose.msra.mxu0 0.0
    %4390 = vmatprep.subr.mxu0 0.0
    %4391 = vmatpush1.xpose.msra.mxu0 0.0
    %4392 = vmatprep.subr.mxu0 0.0
    %4393 = vmatpush1.xpose.msra.mxu0 0.0
    %4394 = vmatprep.subr.mxu0 0.0
    %4395 = vmatpush1.xpose.msra.mxu0 0.0
    %4396 = vmatprep.subr.mxu0 0.0
    %4397 = vmatpush1.xpose.msra.mxu0 0.0
    %4398 = vmatprep.subr.mxu0 0.0
    %4399 = vmatpush1.xpose.msra.mxu0 0.0
    %4400 = vmatprep.subr.mxu0 0.0
    %4401 = vmatpush1.xpose.msra.mxu0 %v4368
    %4402 = vmatprep.subr.mxu0 0.0
    %4403 = vmatpush2.xpose.msra.mxu0 0.0
    %4404 = vmatprep.subr.mxu0 0.0
    %4405 = vmatpush2.xpose.msra.mxu0 0.0
    %4406 = vmatprep.subr.mxu0 0.0
    %4407 = vmatpush2.xpose.msra.mxu0 0.0
    %4408 = vmatprep.subr.mxu0 0.0
    %4409 = vmatpush2.xpose.msra.mxu0 0.0
    %4410 = vmatprep.subr.mxu0 0.0
    %4411 = vmatpush2.xpose.msra.mxu0 0.0
    %4412 = vmatprep.subr.mxu0 0.0
    %4413 = vmatpush2.xpose.msra.mxu0 0.0
    %4414 = vmatprep.subr.mxu0 0.0
    %4415 = vmatpush2.xpose.msra.mxu0 0.0
    %4416 = vmatprep.subr.mxu0 0.0
    %4417 = vmatpush2.xpose.msra.mxu0 0.0
    %4418 = vmatprep.subr.mxu0 0.0
    %4419 = vmatpush2.xpose.msra.mxu0 0.0
    %4420 = vmatprep.subr.mxu0 0.0
    %4421 = vmatpush2.xpose.msra.mxu0 0.0
    %4422 = vmatprep.subr.mxu0 0.0
    %4423 = vmatpush2.xpose.msra.mxu0 0.0
    %4424 = vmatprep.subr.mxu0 0.0
    %4425 = vmatpush2.xpose.msra.mxu0 0.0
    %4426 = vmatprep.subr.mxu0 0.0
    %4427 = vmatpush2.xpose.msra.mxu0 0.0
    %4428 = vmatprep.subr.mxu0 0.0
    %4429 = vmatpush2.xpose.msra.mxu0 0.0
    %4430 = vmatprep.subr.mxu0 0.0
    %4431 = vmatpush2.xpose.msra.mxu0 0.0
    %4432 = vmatprep.subr.mxu0 0.0
    %4433 = vmatpush2.xpose.msra.mxu0 0.0
    %4434 = vmatprep.mubr.f32.mxu0 0.0
    %4435 = vmatmul.mubr.f32.gmra.mxu0 %v4366
    %v4436 = vpop.f32.mrf.mxu0
    %v4437 = vadd.f32 0.0, %v4436
    %v4438 = vpop.f32.mrf.mxu0
    %4439 = vdwg.mxu0
    %4440 = vrot.lane.b32.xlu0 %v3693, 120
    %v4441 = vpop.permute.xlu0 %4440
    %4442 = vrot.lane.b32.xlu0 %v3693, 88
    %v4443 = vpop.permute.xlu0 %4442
    %v4444 = vsel %vm410, %v4441, 0
    %v4446 = vsel %vm410, %v4443, 0
    %4448 = vmatprep.subr.mxu0 0.0
    %4449 = vmatpush1.xpose.msra.mxu0 0.0
    %4450 = vmatprep.subr.mxu0 0.0
    %4451 = vmatpush1.xpose.msra.mxu0 0.0
    %4452 = vmatprep.subr.mxu0 0.0
    %4453 = vmatpush1.xpose.msra.mxu0 0.0
    %4454 = vmatprep.subr.mxu0 0.0
    %4455 = vmatpush1.xpose.msra.mxu0 0.0
    %4456 = vmatprep.subr.mxu0 0.0
    %4457 = vmatpush1.xpose.msra.mxu0 0.0
    %4458 = vmatprep.subr.mxu0 0.0
    %4459 = vmatpush1.xpose.msra.mxu0 0.0
    %4460 = vmatprep.subr.mxu0 0.0
    %4461 = vmatpush1.xpose.msra.mxu0 0.0
    %4462 = vmatprep.subr.mxu0 0.0
    %4463 = vmatpush1.xpose.msra.mxu0 0.0
    %4464 = vmatprep.subr.mxu0 0.0
    %4465 = vmatpush1.xpose.msra.mxu0 0.0
    %4466 = vmatprep.subr.mxu0 0.0
    %4467 = vmatpush1.xpose.msra.mxu0 0.0
    %4468 = vmatprep.subr.mxu0 0.0
    %4469 = vmatpush1.xpose.msra.mxu0 0.0
    %4470 = vmatprep.subr.mxu0 0.0
    %4471 = vmatpush1.xpose.msra.mxu0 0.0
    %4472 = vmatprep.subr.mxu0 0.0
    %4473 = vmatpush1.xpose.msra.mxu0 0.0
    %4474 = vmatprep.subr.mxu0 0.0
    %4475 = vmatpush1.xpose.msra.mxu0 0.0
    %4476 = vmatprep.subr.mxu0 0.0
    %4477 = vmatpush1.xpose.msra.mxu0 0.0
    %4478 = vmatprep.subr.mxu0 0.0
    %4479 = vmatpush1.xpose.msra.mxu0 %v4446
    %4480 = vmatprep.subr.mxu0 0.0
    %4481 = vmatpush2.xpose.msra.mxu0 0.0
    %4482 = vmatprep.subr.mxu0 0.0
    %4483 = vmatpush2.xpose.msra.mxu0 0.0
    %4484 = vmatprep.subr.mxu0 0.0
    %4485 = vmatpush2.xpose.msra.mxu0 0.0
    %4486 = vmatprep.subr.mxu0 0.0
    %4487 = vmatpush2.xpose.msra.mxu0 0.0
    %4488 = vmatprep.subr.mxu0 0.0
    %4489 = vmatpush2.xpose.msra.mxu0 0.0
    %4490 = vmatprep.subr.mxu0 0.0
    %4491 = vmatpush2.xpose.msra.mxu0 0.0
    %4492 = vmatprep.subr.mxu0 0.0
    %4493 = vmatpush2.xpose.msra.mxu0 0.0
    %4494 = vmatprep.subr.mxu0 0.0
    %4495 = vmatpush2.xpose.msra.mxu0 0.0
    %4496 = vmatprep.subr.mxu0 0.0
    %4497 = vmatpush2.xpose.msra.mxu0 0.0
    %4498 = vmatprep.subr.mxu0 0.0
    %4499 = vmatpush2.xpose.msra.mxu0 0.0
    %4500 = vmatprep.subr.mxu0 0.0
    %4501 = vmatpush2.xpose.msra.mxu0 0.0
    %4502 = vmatprep.subr.mxu0 0.0
    %4503 = vmatpush2.xpose.msra.mxu0 0.0
    %4504 = vmatprep.subr.mxu0 0.0
    %4505 = vmatpush2.xpose.msra.mxu0 0.0
    %4506 = vmatprep.subr.mxu0 0.0
    %4507 = vmatpush2.xpose.msra.mxu0 0.0
    %4508 = vmatprep.subr.mxu0 0.0
    %4509 = vmatpush2.xpose.msra.mxu0 0.0
    %4510 = vmatprep.subr.mxu0 0.0
    %4511 = vmatpush2.xpose.msra.mxu0 0.0
    %4512 = vmatprep.mubr.f32.mxu0 0.0
    %4513 = vmatmul.mubr.f32.gmra.mxu0 %v4444
    %v4514 = vpop.f32.mrf.mxu0
    %v4515 = vadd.f32 0.0, %v4514
    %v4516 = vpop.f32.mrf.mxu0
    %4517 = vdwg.mxu0
    %4518 = vrot.lane.b32.xlu0 %v3698, 120
    %v4519 = vpop.permute.xlu0 %4518
    %4520 = vrot.lane.b32.xlu0 %v3698, 88
    %v4521 = vpop.permute.xlu0 %4520
    %v4522 = vsel %vm410, %v4519, 0
    %v4524 = vsel %vm410, %v4521, 0
    %4526 = vmatprep.subr.mxu0 0.0
    %4527 = vmatpush1.xpose.msra.mxu0 0.0
    %4528 = vmatprep.subr.mxu0 0.0
    %4529 = vmatpush1.xpose.msra.mxu0 0.0
    %4530 = vmatprep.subr.mxu0 0.0
    %4531 = vmatpush1.xpose.msra.mxu0 0.0
    %4532 = vmatprep.subr.mxu0 0.0
    %4533 = vmatpush1.xpose.msra.mxu0 0.0
    %4534 = vmatprep.subr.mxu0 0.0
    %4535 = vmatpush1.xpose.msra.mxu0 0.0
    %4536 = vmatprep.subr.mxu0 0.0
    %4537 = vmatpush1.xpose.msra.mxu0 0.0
    %4538 = vmatprep.subr.mxu0 0.0
    %4539 = vmatpush1.xpose.msra.mxu0 0.0
    %4540 = vmatprep.subr.mxu0 0.0
    %4541 = vmatpush1.xpose.msra.mxu0 0.0
    %4542 = vmatprep.subr.mxu0 0.0
    %4543 = vmatpush1.xpose.msra.mxu0 0.0
    %4544 = vmatprep.subr.mxu0 0.0
    %4545 = vmatpush1.xpose.msra.mxu0 0.0
    %4546 = vmatprep.subr.mxu0 0.0
    %4547 = vmatpush1.xpose.msra.mxu0 0.0
    %4548 = vmatprep.subr.mxu0 0.0
    %4549 = vmatpush1.xpose.msra.mxu0 0.0
    %4550 = vmatprep.subr.mxu0 0.0
    %4551 = vmatpush1.xpose.msra.mxu0 0.0
    %4552 = vmatprep.subr.mxu0 0.0
    %4553 = vmatpush1.xpose.msra.mxu0 0.0
    %4554 = vmatprep.subr.mxu0 0.0
    %4555 = vmatpush1.xpose.msra.mxu0 0.0
    %4556 = vmatprep.subr.mxu0 0.0
    %4557 = vmatpush1.xpose.msra.mxu0 %v4524
    %4558 = vmatprep.subr.mxu0 0.0
    %4559 = vmatpush2.xpose.msra.mxu0 0.0
    %4560 = vmatprep.subr.mxu0 0.0
    %4561 = vmatpush2.xpose.msra.mxu0 0.0
    %4562 = vmatprep.subr.mxu0 0.0
    %4563 = vmatpush2.xpose.msra.mxu0 0.0
    %4564 = vmatprep.subr.mxu0 0.0
    %4565 = vmatpush2.xpose.msra.mxu0 0.0
    %4566 = vmatprep.subr.mxu0 0.0
    %4567 = vmatpush2.xpose.msra.mxu0 0.0
    %4568 = vmatprep.subr.mxu0 0.0
    %4569 = vmatpush2.xpose.msra.mxu0 0.0
    %4570 = vmatprep.subr.mxu0 0.0
    %4571 = vmatpush2.xpose.msra.mxu0 0.0
    %4572 = vmatprep.subr.mxu0 0.0
    %4573 = vmatpush2.xpose.msra.mxu0 0.0
    %4574 = vmatprep.subr.mxu0 0.0
    %4575 = vmatpush2.xpose.msra.mxu0 0.0
    %4576 = vmatprep.subr.mxu0 0.0
    %4577 = vmatpush2.xpose.msra.mxu0 0.0
    %4578 = vmatprep.subr.mxu0 0.0
    %4579 = vmatpush2.xpose.msra.mxu0 0.0
    %4580 = vmatprep.subr.mxu0 0.0
    %4581 = vmatpush2.xpose.msra.mxu0 0.0
    %4582 = vmatprep.subr.mxu0 0.0
    %4583 = vmatpush2.xpose.msra.mxu0 0.0
    %4584 = vmatprep.subr.mxu0 0.0
    %4585 = vmatpush2.xpose.msra.mxu0 0.0
    %4586 = vmatprep.subr.mxu0 0.0
    %4587 = vmatpush2.xpose.msra.mxu0 0.0
    %4588 = vmatprep.subr.mxu0 0.0
    %4589 = vmatpush2.xpose.msra.mxu0 0.0
    %4590 = vmatprep.mubr.f32.mxu0 0.0
    %4591 = vmatmul.mubr.f32.gmra.mxu0 %v4522
    %v4592 = vpop.f32.mrf.mxu0
    %v4593 = vadd.f32 0.0, %v4592
    %v4594 = vpop.f32.mrf.mxu0
    %4595 = vdwg.mxu0
    %4596 = vrot.lane.b32.xlu0 %v3703, 120
    %v4597 = vpop.permute.xlu0 %4596
    %4598 = vrot.lane.b32.xlu0 %v3703, 88
    %v4599 = vpop.permute.xlu0 %4598
    %v4600 = vsel %vm410, %v4597, 0
    %v4602 = vsel %vm410, %v4599, 0
    %4604 = vmatprep.subr.mxu0 0.0
    %4605 = vmatpush1.xpose.msra.mxu0 0.0
    %4606 = vmatprep.subr.mxu0 0.0
    %4607 = vmatpush1.xpose.msra.mxu0 0.0
    %4608 = vmatprep.subr.mxu0 0.0
    %4609 = vmatpush1.xpose.msra.mxu0 0.0
    %4610 = vmatprep.subr.mxu0 0.0
    %4611 = vmatpush1.xpose.msra.mxu0 0.0
    %4612 = vmatprep.subr.mxu0 0.0
    %4613 = vmatpush1.xpose.msra.mxu0 0.0
    %4614 = vmatprep.subr.mxu0 0.0
    %4615 = vmatpush1.xpose.msra.mxu0 0.0
    %4616 = vmatprep.subr.mxu0 0.0
    %4617 = vmatpush1.xpose.msra.mxu0 0.0
    %4618 = vmatprep.subr.mxu0 0.0
    %4619 = vmatpush1.xpose.msra.mxu0 0.0
    %4620 = vmatprep.subr.mxu0 0.0
    %4621 = vmatpush1.xpose.msra.mxu0 0.0
    %4622 = vmatprep.subr.mxu0 0.0
    %4623 = vmatpush1.xpose.msra.mxu0 0.0
    %4624 = vmatprep.subr.mxu0 0.0
    %4625 = vmatpush1.xpose.msra.mxu0 0.0
    %4626 = vmatprep.subr.mxu0 0.0
    %4627 = vmatpush1.xpose.msra.mxu0 0.0
    %4628 = vmatprep.subr.mxu0 0.0
    %4629 = vmatpush1.xpose.msra.mxu0 0.0
    %4630 = vmatprep.subr.mxu0 0.0
    %4631 = vmatpush1.xpose.msra.mxu0 0.0
    %4632 = vmatprep.subr.mxu0 0.0
    %4633 = vmatpush1.xpose.msra.mxu0 0.0
    %4634 = vmatprep.subr.mxu0 0.0
    %4635 = vmatpush1.xpose.msra.mxu0 %v4602
    %4636 = vmatprep.subr.mxu0 0.0
    %4637 = vmatpush2.xpose.msra.mxu0 0.0
    %4638 = vmatprep.subr.mxu0 0.0
    %4639 = vmatpush2.xpose.msra.mxu0 0.0
    %4640 = vmatprep.subr.mxu0 0.0
    %4641 = vmatpush2.xpose.msra.mxu0 0.0
    %4642 = vmatprep.subr.mxu0 0.0
    %4643 = vmatpush2.xpose.msra.mxu0 0.0
    %4644 = vmatprep.subr.mxu0 0.0
    %4645 = vmatpush2.xpose.msra.mxu0 0.0
    %4646 = vmatprep.subr.mxu0 0.0
    %4647 = vmatpush2.xpose.msra.mxu0 0.0
    %4648 = vmatprep.subr.mxu0 0.0
    %4649 = vmatpush2.xpose.msra.mxu0 0.0
    %4650 = vmatprep.subr.mxu0 0.0
    %4651 = vmatpush2.xpose.msra.mxu0 0.0
    %4652 = vmatprep.subr.mxu0 0.0
    %4653 = vmatpush2.xpose.msra.mxu0 0.0
    %4654 = vmatprep.subr.mxu0 0.0
    %4655 = vmatpush2.xpose.msra.mxu0 0.0
    %4656 = vmatprep.subr.mxu0 0.0
    %4657 = vmatpush2.xpose.msra.mxu0 0.0
    %4658 = vmatprep.subr.mxu0 0.0
    %4659 = vmatpush2.xpose.msra.mxu0 0.0
    %4660 = vmatprep.subr.mxu0 0.0
    %4661 = vmatpush2.xpose.msra.mxu0 0.0
    %4662 = vmatprep.subr.mxu0 0.0
    %4663 = vmatpush2.xpose.msra.mxu0 0.0
    %4664 = vmatprep.subr.mxu0 0.0
    %4665 = vmatpush2.xpose.msra.mxu0 0.0
    %4666 = vmatprep.subr.mxu0 0.0
    %4667 = vmatpush2.xpose.msra.mxu0 0.0
    %4668 = vmatprep.mubr.f32.mxu0 0.0
    %4669 = vmatmul.mubr.f32.gmra.mxu0 %v4600
    %v4670 = vpop.f32.mrf.mxu0
    %v4671 = vadd.f32 0.0, %v4670
    %v4672 = vpop.f32.mrf.mxu0
    %4673 = vdwg.mxu0
    %v4674 = vsel %vm410, %v4437, -inf
    %4675 = vmax.xlane.f32.xlu0 %v4674
    %v4676 = vpop.xlane.xlu0 %4675
    %v4677 = vsel %vm410, %v4515, -inf
    %4678 = vmax.xlane.f32.xlu0 %v4677
    %v4679 = vpop.xlane.xlu0 %4678
    %v4680 = vsel %vm410, %v4593, -inf
    %4681 = vmax.xlane.f32.xlu0 %v4680
    %v4682 = vpop.xlane.xlu0 %4681
    %v4683 = vsel %vm410, %v4671, -inf
    %4684 = vmax.xlane.f32.xlu0 %v4683
    %v4685 = vpop.xlane.xlu0 %4684
    %v4686 = vsub.f32 %v4437, %v4676
    %v4687 = vsub.f32 %v4515, %v4679
    %v4688 = vsub.f32 %v4593, %v4682
    %v4689 = vsub.f32 %v4671, %v4685
    %v4690 = vmul.f32 %v4686, 1.442695
    %v4691 = vpow.pop %v4690
    %v4692 = vmul.f32 %v4687, 1.442695
    %v4693 = vpow.pop %v4692
    %v4694 = vmul.f32 %v4688, 1.442695
    %v4695 = vpow.pop %v4694
    %v4696 = vmul.f32 %v4689, 1.442695
    %v4697 = vpow.pop %v4696
    %v4698 = vsel %vm410, %v4691, 0.0
    %4699 = vadd.xlane.f32.xlu0 %v4698
    %v4700 = vpop.xlane.xlu0 %4699
    %v4701 = vsel %vm410, %v4693, 0.0
    %4702 = vadd.xlane.f32.xlu0 %v4701
    %v4703 = vpop.xlane.xlu0 %4702
    %v4704 = vsel %vm410, %v4695, 0.0
    %4705 = vadd.xlane.f32.xlu0 %v4704
    %v4706 = vpop.xlane.xlu0 %4705
    %v4707 = vsel %vm410, %v4697, 0.0
    %4708 = vadd.xlane.f32.xlu0 %v4707
    %v4709 = vpop.xlane.xlu0 %4708
    %v4710 = vrcp.pop %v4700
    %v4711 = vrcp.pop %v4703
    %v4712 = vrcp.pop %v4706
    %v4713 = vrcp.pop %v4709
    %v4714 = vmul.f32 %v4691, %v4710
    %v4715 = vmul.f32 %v4693, %v4711
    %v4716 = vmul.f32 %v4695, %v4712
    %v4717 = vmul.f32 %v4697, %v4713
    %4718 = vrot.lane.b32.xlu0 %v3688, 56
    %v4719 = vpop.permute.xlu0 %4718
    %v4722 = vsel %vm410, %v4714, 0
    %4724 = vmatprep.subr.mxu0 0.0
    %4725 = vmatpush1.msra.mxu0 0.0
    %4726 = vmatprep.subr.mxu0 0.0
    %4727 = vmatpush1.msra.mxu0 0.0
    %4728 = vmatprep.subr.mxu0 0.0
    %4729 = vmatpush1.msra.mxu0 0.0
    %4730 = vmatprep.subr.mxu0 0.0
    %4731 = vmatpush1.msra.mxu0 0.0
    %4732 = vmatprep.subr.mxu0 0.0
    %4733 = vmatpush1.msra.mxu0 0.0
    %4734 = vmatprep.subr.mxu0 0.0
    %4735 = vmatpush1.msra.mxu0 0.0
    %4736 = vmatprep.subr.mxu0 0.0
    %4737 = vmatpush1.msra.mxu0 0.0
    %4738 = vmatprep.subr.mxu0 0.0
    %4739 = vmatpush1.msra.mxu0 0.0
    %4740 = vmatprep.subr.mxu0 0.0
    %4741 = vmatpush1.msra.mxu0 0.0
    %4742 = vmatprep.subr.mxu0 0.0
    %4743 = vmatpush1.msra.mxu0 0.0
    %4744 = vmatprep.subr.mxu0 0.0
    %4745 = vmatpush1.msra.mxu0 0.0
    %4746 = vmatprep.subr.mxu0 0.0
    %4747 = vmatpush1.msra.mxu0 0.0
    %4748 = vmatprep.subr.mxu0 0.0
    %4749 = vmatpush1.msra.mxu0 0.0
    %4750 = vmatprep.subr.mxu0 0.0
    %4751 = vmatpush1.msra.mxu0 0.0
    %4752 = vmatprep.subr.mxu0 0.0
    %4753 = vmatpush1.msra.mxu0 0.0
    %4754 = vmatprep.subr.mxu0 0.0
    %4755 = vmatpush1.msra.mxu0 %v4719
    %4756 = vmatprep.subr.mxu0 0.0
    %4757 = vmatpush2.msra.mxu0 0.0
    %4758 = vmatprep.subr.mxu0 0.0
    %4759 = vmatpush2.msra.mxu0 0.0
    %4760 = vmatprep.subr.mxu0 0.0
    %4761 = vmatpush2.msra.mxu0 0.0
    %4762 = vmatprep.subr.mxu0 0.0
    %4763 = vmatpush2.msra.mxu0 0.0
    %4764 = vmatprep.subr.mxu0 0.0
    %4765 = vmatpush2.msra.mxu0 0.0
    %4766 = vmatprep.subr.mxu0 0.0
    %4767 = vmatpush2.msra.mxu0 0.0
    %4768 = vmatprep.subr.mxu0 0.0
    %4769 = vmatpush2.msra.mxu0 0.0
    %4770 = vmatprep.subr.mxu0 0.0
    %4771 = vmatpush2.msra.mxu0 0.0
    %4772 = vmatprep.subr.mxu0 0.0
    %4773 = vmatpush2.msra.mxu0 0.0
    %4774 = vmatprep.subr.mxu0 0.0
    %4775 = vmatpush2.msra.mxu0 0.0
    %4776 = vmatprep.subr.mxu0 0.0
    %4777 = vmatpush2.msra.mxu0 0.0
    %4778 = vmatprep.subr.mxu0 0.0
    %4779 = vmatpush2.msra.mxu0 0.0
    %4780 = vmatprep.subr.mxu0 0.0
    %4781 = vmatpush2.msra.mxu0 0.0
    %4782 = vmatprep.subr.mxu0 0.0
    %4783 = vmatpush2.msra.mxu0 0.0
    %4784 = vmatprep.subr.mxu0 0.0
    %4785 = vmatpush2.msra.mxu0 0.0
    %4786 = vmatprep.subr.mxu0 0.0
    %4787 = vmatpush2.msra.mxu0 0.0
    %4788 = vmatprep.mubr.f32.mxu0 0.0
    %4789 = vmatmul.mubr.f32.gmra.mxu0 %v4722
    %v4790 = vpop.f32.mrf.mxu0
    %v4791 = vadd.f32 0.0, %v4790
    %v4792 = vpop.f32.mrf.mxu0
    %4793 = vdwg.mxu0
    %4794 = vrot.lane.b32.xlu0 %v3693, 56
    %v4795 = vpop.permute.xlu0 %4794
    %v4798 = vsel %vm410, %v4715, 0
    %4800 = vmatprep.subr.mxu0 0.0
    %4801 = vmatpush1.msra.mxu0 0.0
    %4802 = vmatprep.subr.mxu0 0.0
    %4803 = vmatpush1.msra.mxu0 0.0
    %4804 = vmatprep.subr.mxu0 0.0
    %4805 = vmatpush1.msra.mxu0 0.0
    %4806 = vmatprep.subr.mxu0 0.0
    %4807 = vmatpush1.msra.mxu0 0.0
    %4808 = vmatprep.subr.mxu0 0.0
    %4809 = vmatpush1.msra.mxu0 0.0
    %4810 = vmatprep.subr.mxu0 0.0
    %4811 = vmatpush1.msra.mxu0 0.0
    %4812 = vmatprep.subr.mxu0 0.0
    %4813 = vmatpush1.msra.mxu0 0.0
    %4814 = vmatprep.subr.mxu0 0.0
    %4815 = vmatpush1.msra.mxu0 0.0
    %4816 = vmatprep.subr.mxu0 0.0
    %4817 = vmatpush1.msra.mxu0 0.0
    %4818 = vmatprep.subr.mxu0 0.0
    %4819 = vmatpush1.msra.mxu0 0.0
    %4820 = vmatprep.subr.mxu0 0.0
    %4821 = vmatpush1.msra.mxu0 0.0
    %4822 = vmatprep.subr.mxu0 0.0
    %4823 = vmatpush1.msra.mxu0 0.0
    %4824 = vmatprep.subr.mxu0 0.0
    %4825 = vmatpush1.msra.mxu0 0.0
    %4826 = vmatprep.subr.mxu0 0.0
    %4827 = vmatpush1.msra.mxu0 0.0
    %4828 = vmatprep.subr.mxu0 0.0
    %4829 = vmatpush1.msra.mxu0 0.0
    %4830 = vmatprep.subr.mxu0 0.0
    %4831 = vmatpush1.msra.mxu0 %v4795
    %4832 = vmatprep.subr.mxu0 0.0
    %4833 = vmatpush2.msra.mxu0 0.0
    %4834 = vmatprep.subr.mxu0 0.0
    %4835 = vmatpush2.msra.mxu0 0.0
    %4836 = vmatprep.subr.mxu0 0.0
    %4837 = vmatpush2.msra.mxu0 0.0
    %4838 = vmatprep.subr.mxu0 0.0
    %4839 = vmatpush2.msra.mxu0 0.0
    %4840 = vmatprep.subr.mxu0 0.0
    %4841 = vmatpush2.msra.mxu0 0.0
    %4842 = vmatprep.subr.mxu0 0.0
    %4843 = vmatpush2.msra.mxu0 0.0
    %4844 = vmatprep.subr.mxu0 0.0
    %4845 = vmatpush2.msra.mxu0 0.0
    %4846 = vmatprep.subr.mxu0 0.0
    %4847 = vmatpush2.msra.mxu0 0.0
    %4848 = vmatprep.subr.mxu0 0.0
    %4849 = vmatpush2.msra.mxu0 0.0
    %4850 = vmatprep.subr.mxu0 0.0
    %4851 = vmatpush2.msra.mxu0 0.0
    %4852 = vmatprep.subr.mxu0 0.0
    %4853 = vmatpush2.msra.mxu0 0.0
    %4854 = vmatprep.subr.mxu0 0.0
    %4855 = vmatpush2.msra.mxu0 0.0
    %4856 = vmatprep.subr.mxu0 0.0
    %4857 = vmatpush2.msra.mxu0 0.0
    %4858 = vmatprep.subr.mxu0 0.0
    %4859 = vmatpush2.msra.mxu0 0.0
    %4860 = vmatprep.subr.mxu0 0.0
    %4861 = vmatpush2.msra.mxu0 0.0
    %4862 = vmatprep.subr.mxu0 0.0
    %4863 = vmatpush2.msra.mxu0 0.0
    %4864 = vmatprep.mubr.f32.mxu0 0.0
    %4865 = vmatmul.mubr.f32.gmra.mxu0 %v4798
    %v4866 = vpop.f32.mrf.mxu0
    %v4867 = vadd.f32 0.0, %v4866
    %v4868 = vpop.f32.mrf.mxu0
    %4869 = vdwg.mxu0
    %4870 = vrot.lane.b32.xlu0 %v3698, 56
    %v4871 = vpop.permute.xlu0 %4870
    %v4874 = vsel %vm410, %v4716, 0
    %4876 = vmatprep.subr.mxu0 0.0
    %4877 = vmatpush1.msra.mxu0 0.0
    %4878 = vmatprep.subr.mxu0 0.0
    %4879 = vmatpush1.msra.mxu0 0.0
    %4880 = vmatprep.subr.mxu0 0.0
    %4881 = vmatpush1.msra.mxu0 0.0
    %4882 = vmatprep.subr.mxu0 0.0
    %4883 = vmatpush1.msra.mxu0 0.0
    %4884 = vmatprep.subr.mxu0 0.0
    %4885 = vmatpush1.msra.mxu0 0.0
    %4886 = vmatprep.subr.mxu0 0.0
    %4887 = vmatpush1.msra.mxu0 0.0
    %4888 = vmatprep.subr.mxu0 0.0
    %4889 = vmatpush1.msra.mxu0 0.0
    %4890 = vmatprep.subr.mxu0 0.0
    %4891 = vmatpush1.msra.mxu0 0.0
    %4892 = vmatprep.subr.mxu0 0.0
    %4893 = vmatpush1.msra.mxu0 0.0
    %4894 = vmatprep.subr.mxu0 0.0
    %4895 = vmatpush1.msra.mxu0 0.0
    %4896 = vmatprep.subr.mxu0 0.0
    %4897 = vmatpush1.msra.mxu0 0.0
    %4898 = vmatprep.subr.mxu0 0.0
    %4899 = vmatpush1.msra.mxu0 0.0
    %4900 = vmatprep.subr.mxu0 0.0
    %4901 = vmatpush1.msra.mxu0 0.0
    %4902 = vmatprep.subr.mxu0 0.0
    %4903 = vmatpush1.msra.mxu0 0.0
    %4904 = vmatprep.subr.mxu0 0.0
    %4905 = vmatpush1.msra.mxu0 0.0
    %4906 = vmatprep.subr.mxu0 0.0
    %4907 = vmatpush1.msra.mxu0 %v4871
    %4908 = vmatprep.subr.mxu0 0.0
    %4909 = vmatpush2.msra.mxu0 0.0
    %4910 = vmatprep.subr.mxu0 0.0
    %4911 = vmatpush2.msra.mxu0 0.0
    %4912 = vmatprep.subr.mxu0 0.0
    %4913 = vmatpush2.msra.mxu0 0.0
    %4914 = vmatprep.subr.mxu0 0.0
    %4915 = vmatpush2.msra.mxu0 0.0
    %4916 = vmatprep.subr.mxu0 0.0
    %4917 = vmatpush2.msra.mxu0 0.0
    %4918 = vmatprep.subr.mxu0 0.0
    %4919 = vmatpush2.msra.mxu0 0.0
    %4920 = vmatprep.subr.mxu0 0.0
    %4921 = vmatpush2.msra.mxu0 0.0
    %4922 = vmatprep.subr.mxu0 0.0
    %4923 = vmatpush2.msra.mxu0 0.0
    %4924 = vmatprep.subr.mxu0 0.0
    %4925 = vmatpush2.msra.mxu0 0.0
    %4926 = vmatprep.subr.mxu0 0.0
    %4927 = vmatpush2.msra.mxu0 0.0
    %4928 = vmatprep.subr.mxu0 0.0
    %4929 = vmatpush2.msra.mxu0 0.0
    %4930 = vmatprep.subr.mxu0 0.0
    %4931 = vmatpush2.msra.mxu0 0.0
    %4932 = vmatprep.subr.mxu0 0.0
    %4933 = vmatpush2.msra.mxu0 0.0
    %4934 = vmatprep.subr.mxu0 0.0
    %4935 = vmatpush2.msra.mxu0 0.0
    %4936 = vmatprep.subr.mxu0 0.0
    %4937 = vmatpush2.msra.mxu0 0.0
    %4938 = vmatprep.subr.mxu0 0.0
    %4939 = vmatpush2.msra.mxu0 0.0
    %4940 = vmatprep.mubr.f32.mxu0 0.0
    %4941 = vmatmul.mubr.f32.gmra.mxu0 %v4874
    %v4942 = vpop.f32.mrf.mxu0
    %v4943 = vadd.f32 0.0, %v4942
    %v4944 = vpop.f32.mrf.mxu0
    %4945 = vdwg.mxu0
    %4946 = vrot.lane.b32.xlu0 %v3703, 56
    %v4947 = vpop.permute.xlu0 %4946
    %v4950 = vsel %vm410, %v4717, 0
    %4952 = vmatprep.subr.mxu0 0.0
    %4953 = vmatpush1.msra.mxu0 0.0
    %4954 = vmatprep.subr.mxu0 0.0
    %4955 = vmatpush1.msra.mxu0 0.0
    %4956 = vmatprep.subr.mxu0 0.0
    %4957 = vmatpush1.msra.mxu0 0.0
    %4958 = vmatprep.subr.mxu0 0.0
    %4959 = vmatpush1.msra.mxu0 0.0
    %4960 = vmatprep.subr.mxu0 0.0
    %4961 = vmatpush1.msra.mxu0 0.0
    %4962 = vmatprep.subr.mxu0 0.0
    %4963 = vmatpush1.msra.mxu0 0.0
    %4964 = vmatprep.subr.mxu0 0.0
    %4965 = vmatpush1.msra.mxu0 0.0
    %4966 = vmatprep.subr.mxu0 0.0
    %4967 = vmatpush1.msra.mxu0 0.0
    %4968 = vmatprep.subr.mxu0 0.0
    %4969 = vmatpush1.msra.mxu0 0.0
    %4970 = vmatprep.subr.mxu0 0.0
    %4971 = vmatpush1.msra.mxu0 0.0
    %4972 = vmatprep.subr.mxu0 0.0
    %4973 = vmatpush1.msra.mxu0 0.0
    %4974 = vmatprep.subr.mxu0 0.0
    %4975 = vmatpush1.msra.mxu0 0.0
    %4976 = vmatprep.subr.mxu0 0.0
    %4977 = vmatpush1.msra.mxu0 0.0
    %4978 = vmatprep.subr.mxu0 0.0
    %4979 = vmatpush1.msra.mxu0 0.0
    %4980 = vmatprep.subr.mxu0 0.0
    %4981 = vmatpush1.msra.mxu0 0.0
    %4982 = vmatprep.subr.mxu0 0.0
    %4983 = vmatpush1.msra.mxu0 %v4947
    %4984 = vmatprep.subr.mxu0 0.0
    %4985 = vmatpush2.msra.mxu0 0.0
    %4986 = vmatprep.subr.mxu0 0.0
    %4987 = vmatpush2.msra.mxu0 0.0
    %4988 = vmatprep.subr.mxu0 0.0
    %4989 = vmatpush2.msra.mxu0 0.0
    %4990 = vmatprep.subr.mxu0 0.0
    %4991 = vmatpush2.msra.mxu0 0.0
    %4992 = vmatprep.subr.mxu0 0.0
    %4993 = vmatpush2.msra.mxu0 0.0
    %4994 = vmatprep.subr.mxu0 0.0
    %4995 = vmatpush2.msra.mxu0 0.0
    %4996 = vmatprep.subr.mxu0 0.0
    %4997 = vmatpush2.msra.mxu0 0.0
    %4998 = vmatprep.subr.mxu0 0.0
    %4999 = vmatpush2.msra.mxu0 0.0
    %5000 = vmatprep.subr.mxu0 0.0
    %5001 = vmatpush2.msra.mxu0 0.0
    %5002 = vmatprep.subr.mxu0 0.0
    %5003 = vmatpush2.msra.mxu0 0.0
    %5004 = vmatprep.subr.mxu0 0.0
    %5005 = vmatpush2.msra.mxu0 0.0
    %5006 = vmatprep.subr.mxu0 0.0
    %5007 = vmatpush2.msra.mxu0 0.0
    %5008 = vmatprep.subr.mxu0 0.0
    %5009 = vmatpush2.msra.mxu0 0.0
    %5010 = vmatprep.subr.mxu0 0.0
    %5011 = vmatpush2.msra.mxu0 0.0
    %5012 = vmatprep.subr.mxu0 0.0
    %5013 = vmatpush2.msra.mxu0 0.0
    %5014 = vmatprep.subr.mxu0 0.0
    %5015 = vmatpush2.msra.mxu0 0.0
    %5016 = vmatprep.mubr.f32.mxu0 0.0
    %5017 = vmatmul.mubr.f32.gmra.mxu0 %v4950
    %v5018 = vpop.f32.mrf.mxu0
    %v5019 = vadd.f32 0.0, %v5018
    %v5020 = vpop.f32.mrf.mxu0
    %5021 = vdwg.mxu0
    %5022 = vrot.lane.b32.xlu0 %v3688, 112
    %v5023 = vpop.permute.xlu0 %5022
    %5024 = vrot.lane.b32.xlu0 %v3688, 80
    %v5025 = vpop.permute.xlu0 %5024
    %v5026 = vsel %vm410, %v5023, 0
    %v5028 = vsel %vm410, %v5025, 0
    %5030 = vmatprep.subr.mxu0 0.0
    %5031 = vmatpush1.xpose.msra.mxu0 0.0
    %5032 = vmatprep.subr.mxu0 0.0
    %5033 = vmatpush1.xpose.msra.mxu0 0.0
    %5034 = vmatprep.subr.mxu0 0.0
    %5035 = vmatpush1.xpose.msra.mxu0 0.0
    %5036 = vmatprep.subr.mxu0 0.0
    %5037 = vmatpush1.xpose.msra.mxu0 0.0
    %5038 = vmatprep.subr.mxu0 0.0
    %5039 = vmatpush1.xpose.msra.mxu0 0.0
    %5040 = vmatprep.subr.mxu0 0.0
    %5041 = vmatpush1.xpose.msra.mxu0 0.0
    %5042 = vmatprep.subr.mxu0 0.0
    %5043 = vmatpush1.xpose.msra.mxu0 0.0
    %5044 = vmatprep.subr.mxu0 0.0
    %5045 = vmatpush1.xpose.msra.mxu0 0.0
    %5046 = vmatprep.subr.mxu0 0.0
    %5047 = vmatpush1.xpose.msra.mxu0 0.0
    %5048 = vmatprep.subr.mxu0 0.0
    %5049 = vmatpush1.xpose.msra.mxu0 0.0
    %5050 = vmatprep.subr.mxu0 0.0
    %5051 = vmatpush1.xpose.msra.mxu0 0.0
    %5052 = vmatprep.subr.mxu0 0.0
    %5053 = vmatpush1.xpose.msra.mxu0 0.0
    %5054 = vmatprep.subr.mxu0 0.0
    %5055 = vmatpush1.xpose.msra.mxu0 0.0
    %5056 = vmatprep.subr.mxu0 0.0
    %5057 = vmatpush1.xpose.msra.mxu0 0.0
    %5058 = vmatprep.subr.mxu0 0.0
    %5059 = vmatpush1.xpose.msra.mxu0 0.0
    %5060 = vmatprep.subr.mxu0 0.0
    %5061 = vmatpush1.xpose.msra.mxu0 %v5028
    %5062 = vmatprep.subr.mxu0 0.0
    %5063 = vmatpush2.xpose.msra.mxu0 0.0
    %5064 = vmatprep.subr.mxu0 0.0
    %5065 = vmatpush2.xpose.msra.mxu0 0.0
    %5066 = vmatprep.subr.mxu0 0.0
    %5067 = vmatpush2.xpose.msra.mxu0 0.0
    %5068 = vmatprep.subr.mxu0 0.0
    %5069 = vmatpush2.xpose.msra.mxu0 0.0
    %5070 = vmatprep.subr.mxu0 0.0
    %5071 = vmatpush2.xpose.msra.mxu0 0.0
    %5072 = vmatprep.subr.mxu0 0.0
    %5073 = vmatpush2.xpose.msra.mxu0 0.0
    %5074 = vmatprep.subr.mxu0 0.0
    %5075 = vmatpush2.xpose.msra.mxu0 0.0
    %5076 = vmatprep.subr.mxu0 0.0
    %5077 = vmatpush2.xpose.msra.mxu0 0.0
    %5078 = vmatprep.subr.mxu0 0.0
    %5079 = vmatpush2.xpose.msra.mxu0 0.0
    %5080 = vmatprep.subr.mxu0 0.0
    %5081 = vmatpush2.xpose.msra.mxu0 0.0
    %5082 = vmatprep.subr.mxu0 0.0
    %5083 = vmatpush2.xpose.msra.mxu0 0.0
    %5084 = vmatprep.subr.mxu0 0.0
    %5085 = vmatpush2.xpose.msra.mxu0 0.0
    %5086 = vmatprep.subr.mxu0 0.0
    %5087 = vmatpush2.xpose.msra.mxu0 0.0
    %5088 = vmatprep.subr.mxu0 0.0
    %5089 = vmatpush2.xpose.msra.mxu0 0.0
    %5090 = vmatprep.subr.mxu0 0.0
    %5091 = vmatpush2.xpose.msra.mxu0 0.0
    %5092 = vmatprep.subr.mxu0 0.0
    %5093 = vmatpush2.xpose.msra.mxu0 0.0
    %5094 = vmatprep.mubr.f32.mxu0 0.0
    %5095 = vmatmul.mubr.f32.gmra.mxu0 %v5026
    %v5096 = vpop.f32.mrf.mxu0
    %v5097 = vadd.f32 0.0, %v5096
    %v5098 = vpop.f32.mrf.mxu0
    %5099 = vdwg.mxu0
    %5100 = vrot.lane.b32.xlu0 %v3693, 112
    %v5101 = vpop.permute.xlu0 %5100
    %5102 = vrot.lane.b32.xlu0 %v3693, 80
    %v5103 = vpop.permute.xlu0 %5102
    %v5104 = vsel %vm410, %v5101, 0
    %v5106 = vsel %vm410, %v5103, 0
    %5108 = vmatprep.subr.mxu0 0.0
    %5109 = vmatpush1.xpose.msra.mxu0 0.0
    %5110 = vmatprep.subr.mxu0 0.0
    %5111 = vmatpush1.xpose.msra.mxu0 0.0
    %5112 = vmatprep.subr.mxu0 0.0
    %5113 = vmatpush1.xpose.msra.mxu0 0.0
    %5114 = vmatprep.subr.mxu0 0.0
    %5115 = vmatpush1.xpose.msra.mxu0 0.0
    %5116 = vmatprep.subr.mxu0 0.0
    %5117 = vmatpush1.xpose.msra.mxu0 0.0
    %5118 = vmatprep.subr.mxu0 0.0
    %5119 = vmatpush1.xpose.msra.mxu0 0.0
    %5120 = vmatprep.subr.mxu0 0.0
    %5121 = vmatpush1.xpose.msra.mxu0 0.0
    %5122 = vmatprep.subr.mxu0 0.0
    %5123 = vmatpush1.xpose.msra.mxu0 0.0
    %5124 = vmatprep.subr.mxu0 0.0
    %5125 = vmatpush1.xpose.msra.mxu0 0.0
    %5126 = vmatprep.subr.mxu0 0.0
    %5127 = vmatpush1.xpose.msra.mxu0 0.0
    %5128 = vmatprep.subr.mxu0 0.0
    %5129 = vmatpush1.xpose.msra.mxu0 0.0
    %5130 = vmatprep.subr.mxu0 0.0
    %5131 = vmatpush1.xpose.msra.mxu0 0.0
    %5132 = vmatprep.subr.mxu0 0.0
    %5133 = vmatpush1.xpose.msra.mxu0 0.0
    %5134 = vmatprep.subr.mxu0 0.0
    %5135 = vmatpush1.xpose.msra.mxu0 0.0
    %5136 = vmatprep.subr.mxu0 0.0
    %5137 = vmatpush1.xpose.msra.mxu0 0.0
    %5138 = vmatprep.subr.mxu0 0.0
    %5139 = vmatpush1.xpose.msra.mxu0 %v5106
    %5140 = vmatprep.subr.mxu0 0.0
    %5141 = vmatpush2.xpose.msra.mxu0 0.0
    %5142 = vmatprep.subr.mxu0 0.0
    %5143 = vmatpush2.xpose.msra.mxu0 0.0
    %5144 = vmatprep.subr.mxu0 0.0
    %5145 = vmatpush2.xpose.msra.mxu0 0.0
    %5146 = vmatprep.subr.mxu0 0.0
    %5147 = vmatpush2.xpose.msra.mxu0 0.0
    %5148 = vmatprep.subr.mxu0 0.0
    %5149 = vmatpush2.xpose.msra.mxu0 0.0
    %5150 = vmatprep.subr.mxu0 0.0
    %5151 = vmatpush2.xpose.msra.mxu0 0.0
    %5152 = vmatprep.subr.mxu0 0.0
    %5153 = vmatpush2.xpose.msra.mxu0 0.0
    %5154 = vmatprep.subr.mxu0 0.0
    %5155 = vmatpush2.xpose.msra.mxu0 0.0
    %5156 = vmatprep.subr.mxu0 0.0
    %5157 = vmatpush2.xpose.msra.mxu0 0.0
    %5158 = vmatprep.subr.mxu0 0.0
    %5159 = vmatpush2.xpose.msra.mxu0 0.0
    %5160 = vmatprep.subr.mxu0 0.0
    %5161 = vmatpush2.xpose.msra.mxu0 0.0
    %5162 = vmatprep.subr.mxu0 0.0
    %5163 = vmatpush2.xpose.msra.mxu0 0.0
    %5164 = vmatprep.subr.mxu0 0.0
    %5165 = vmatpush2.xpose.msra.mxu0 0.0
    %5166 = vmatprep.subr.mxu0 0.0
    %5167 = vmatpush2.xpose.msra.mxu0 0.0
    %5168 = vmatprep.subr.mxu0 0.0
    %5169 = vmatpush2.xpose.msra.mxu0 0.0
    %5170 = vmatprep.subr.mxu0 0.0
    %5171 = vmatpush2.xpose.msra.mxu0 0.0
    %5172 = vmatprep.mubr.f32.mxu0 0.0
    %5173 = vmatmul.mubr.f32.gmra.mxu0 %v5104
    %v5174 = vpop.f32.mrf.mxu0
    %v5175 = vadd.f32 0.0, %v5174
    %v5176 = vpop.f32.mrf.mxu0
    %5177 = vdwg.mxu0
    %5178 = vrot.lane.b32.xlu0 %v3698, 112
    %v5179 = vpop.permute.xlu0 %5178
    %5180 = vrot.lane.b32.xlu0 %v3698, 80
    %v5181 = vpop.permute.xlu0 %5180
    %v5182 = vsel %vm410, %v5179, 0
    %v5184 = vsel %vm410, %v5181, 0
    %5186 = vmatprep.subr.mxu0 0.0
    %5187 = vmatpush1.xpose.msra.mxu0 0.0
    %5188 = vmatprep.subr.mxu0 0.0
    %5189 = vmatpush1.xpose.msra.mxu0 0.0
    %5190 = vmatprep.subr.mxu0 0.0
    %5191 = vmatpush1.xpose.msra.mxu0 0.0
    %5192 = vmatprep.subr.mxu0 0.0
    %5193 = vmatpush1.xpose.msra.mxu0 0.0
    %5194 = vmatprep.subr.mxu0 0.0
    %5195 = vmatpush1.xpose.msra.mxu0 0.0
    %5196 = vmatprep.subr.mxu0 0.0
    %5197 = vmatpush1.xpose.msra.mxu0 0.0
    %5198 = vmatprep.subr.mxu0 0.0
    %5199 = vmatpush1.xpose.msra.mxu0 0.0
    %5200 = vmatprep.subr.mxu0 0.0
    %5201 = vmatpush1.xpose.msra.mxu0 0.0
    %5202 = vmatprep.subr.mxu0 0.0
    %5203 = vmatpush1.xpose.msra.mxu0 0.0
    %5204 = vmatprep.subr.mxu0 0.0
    %5205 = vmatpush1.xpose.msra.mxu0 0.0
    %5206 = vmatprep.subr.mxu0 0.0
    %5207 = vmatpush1.xpose.msra.mxu0 0.0
    %5208 = vmatprep.subr.mxu0 0.0
    %5209 = vmatpush1.xpose.msra.mxu0 0.0
    %5210 = vmatprep.subr.mxu0 0.0
    %5211 = vmatpush1.xpose.msra.mxu0 0.0
    %5212 = vmatprep.subr.mxu0 0.0
    %5213 = vmatpush1.xpose.msra.mxu0 0.0
    %5214 = vmatprep.subr.mxu0 0.0
    %5215 = vmatpush1.xpose.msra.mxu0 0.0
    %5216 = vmatprep.subr.mxu0 0.0
    %5217 = vmatpush1.xpose.msra.mxu0 %v5184
    %5218 = vmatprep.subr.mxu0 0.0
    %5219 = vmatpush2.xpose.msra.mxu0 0.0
    %5220 = vmatprep.subr.mxu0 0.0
    %5221 = vmatpush2.xpose.msra.mxu0 0.0
    %5222 = vmatprep.subr.mxu0 0.0
    %5223 = vmatpush2.xpose.msra.mxu0 0.0
    %5224 = vmatprep.subr.mxu0 0.0
    %5225 = vmatpush2.xpose.msra.mxu0 0.0
    %5226 = vmatprep.subr.mxu0 0.0
    %5227 = vmatpush2.xpose.msra.mxu0 0.0
    %5228 = vmatprep.subr.mxu0 0.0
    %5229 = vmatpush2.xpose.msra.mxu0 0.0
    %5230 = vmatprep.subr.mxu0 0.0
    %5231 = vmatpush2.xpose.msra.mxu0 0.0
    %5232 = vmatprep.subr.mxu0 0.0
    %5233 = vmatpush2.xpose.msra.mxu0 0.0
    %5234 = vmatprep.subr.mxu0 0.0
    %5235 = vmatpush2.xpose.msra.mxu0 0.0
    %5236 = vmatprep.subr.mxu0 0.0
    %5237 = vmatpush2.xpose.msra.mxu0 0.0
    %5238 = vmatprep.subr.mxu0 0.0
    %5239 = vmatpush2.xpose.msra.mxu0 0.0
    %5240 = vmatprep.subr.mxu0 0.0
    %5241 = vmatpush2.xpose.msra.mxu0 0.0
    %5242 = vmatprep.subr.mxu0 0.0
    %5243 = vmatpush2.xpose.msra.mxu0 0.0
    %5244 = vmatprep.subr.mxu0 0.0
    %5245 = vmatpush2.xpose.msra.mxu0 0.0
    %5246 = vmatprep.subr.mxu0 0.0
    %5247 = vmatpush2.xpose.msra.mxu0 0.0
    %5248 = vmatprep.subr.mxu0 0.0
    %5249 = vmatpush2.xpose.msra.mxu0 0.0
    %5250 = vmatprep.mubr.f32.mxu0 0.0
    %5251 = vmatmul.mubr.f32.gmra.mxu0 %v5182
    %v5252 = vpop.f32.mrf.mxu0
    %v5253 = vadd.f32 0.0, %v5252
    %v5254 = vpop.f32.mrf.mxu0
    %5255 = vdwg.mxu0
    %5256 = vrot.lane.b32.xlu0 %v3703, 112
    %v5257 = vpop.permute.xlu0 %5256
    %5258 = vrot.lane.b32.xlu0 %v3703, 80
    %v5259 = vpop.permute.xlu0 %5258
    %v5260 = vsel %vm410, %v5257, 0
    %v5262 = vsel %vm410, %v5259, 0
    %5264 = vmatprep.subr.mxu0 0.0
    %5265 = vmatpush1.xpose.msra.mxu0 0.0
    %5266 = vmatprep.subr.mxu0 0.0
    %5267 = vmatpush1.xpose.msra.mxu0 0.0
    %5268 = vmatprep.subr.mxu0 0.0
    %5269 = vmatpush1.xpose.msra.mxu0 0.0
    %5270 = vmatprep.subr.mxu0 0.0
    %5271 = vmatpush1.xpose.msra.mxu0 0.0
    %5272 = vmatprep.subr.mxu0 0.0
    %5273 = vmatpush1.xpose.msra.mxu0 0.0
    %5274 = vmatprep.subr.mxu0 0.0
    %5275 = vmatpush1.xpose.msra.mxu0 0.0
    %5276 = vmatprep.subr.mxu0 0.0
    %5277 = vmatpush1.xpose.msra.mxu0 0.0
    %5278 = vmatprep.subr.mxu0 0.0
    %5279 = vmatpush1.xpose.msra.mxu0 0.0
    %5280 = vmatprep.subr.mxu0 0.0
    %5281 = vmatpush1.xpose.msra.mxu0 0.0
    %5282 = vmatprep.subr.mxu0 0.0
    %5283 = vmatpush1.xpose.msra.mxu0 0.0
    %5284 = vmatprep.subr.mxu0 0.0
    %5285 = vmatpush1.xpose.msra.mxu0 0.0
    %5286 = vmatprep.subr.mxu0 0.0
    %5287 = vmatpush1.xpose.msra.mxu0 0.0
    %5288 = vmatprep.subr.mxu0 0.0
    %5289 = vmatpush1.xpose.msra.mxu0 0.0
    %5290 = vmatprep.subr.mxu0 0.0
    %5291 = vmatpush1.xpose.msra.mxu0 0.0
    %5292 = vmatprep.subr.mxu0 0.0
    %5293 = vmatpush1.xpose.msra.mxu0 0.0
    %5294 = vmatprep.subr.mxu0 0.0
    %5295 = vmatpush1.xpose.msra.mxu0 %v5262
    %5296 = vmatprep.subr.mxu0 0.0
    %5297 = vmatpush2.xpose.msra.mxu0 0.0
    %5298 = vmatprep.subr.mxu0 0.0
    %5299 = vmatpush2.xpose.msra.mxu0 0.0
    %5300 = vmatprep.subr.mxu0 0.0
    %5301 = vmatpush2.xpose.msra.mxu0 0.0
    %5302 = vmatprep.subr.mxu0 0.0
    %5303 = vmatpush2.xpose.msra.mxu0 0.0
    %5304 = vmatprep.subr.mxu0 0.0
    %5305 = vmatpush2.xpose.msra.mxu0 0.0
    %5306 = vmatprep.subr.mxu0 0.0
    %5307 = vmatpush2.xpose.msra.mxu0 0.0
    %5308 = vmatprep.subr.mxu0 0.0
    %5309 = vmatpush2.xpose.msra.mxu0 0.0
    %5310 = vmatprep.subr.mxu0 0.0
    %5311 = vmatpush2.xpose.msra.mxu0 0.0
    %5312 = vmatprep.subr.mxu0 0.0
    %5313 = vmatpush2.xpose.msra.mxu0 0.0
    %5314 = vmatprep.subr.mxu0 0.0
    %5315 = vmatpush2.xpose.msra.mxu0 0.0
    %5316 = vmatprep.subr.mxu0 0.0
    %5317 = vmatpush2.xpose.msra.mxu0 0.0
    %5318 = vmatprep.subr.mxu0 0.0
    %5319 = vmatpush2.xpose.msra.mxu0 0.0
    %5320 = vmatprep.subr.mxu0 0.0
    %5321 = vmatpush2.xpose.msra.mxu0 0.0
    %5322 = vmatprep.subr.mxu0 0.0
    %5323 = vmatpush2.xpose.msra.mxu0 0.0
    %5324 = vmatprep.subr.mxu0 0.0
    %5325 = vmatpush2.xpose.msra.mxu0 0.0
    %5326 = vmatprep.subr.mxu0 0.0
    %5327 = vmatpush2.xpose.msra.mxu0 0.0
    %5328 = vmatprep.mubr.f32.mxu0 0.0
    %5329 = vmatmul.mubr.f32.gmra.mxu0 %v5260
    %v5330 = vpop.f32.mrf.mxu0
    %v5331 = vadd.f32 0.0, %v5330
    %v5332 = vpop.f32.mrf.mxu0
    %5333 = vdwg.mxu0
    %v5334 = vsel %vm410, %v5097, -inf
    %5335 = vmax.xlane.f32.xlu0 %v5334
    %v5336 = vpop.xlane.xlu0 %5335
    %v5337 = vsel %vm410, %v5175, -inf
    %5338 = vmax.xlane.f32.xlu0 %v5337
    %v5339 = vpop.xlane.xlu0 %5338
    %v5340 = vsel %vm410, %v5253, -inf
    %5341 = vmax.xlane.f32.xlu0 %v5340
    %v5342 = vpop.xlane.xlu0 %5341
    %v5343 = vsel %vm410, %v5331, -inf
    %5344 = vmax.xlane.f32.xlu0 %v5343
    %v5345 = vpop.xlane.xlu0 %5344
    %v5346 = vsub.f32 %v5097, %v5336
    %v5347 = vsub.f32 %v5175, %v5339
    %v5348 = vsub.f32 %v5253, %v5342
    %v5349 = vsub.f32 %v5331, %v5345
    %v5350 = vmul.f32 %v5346, 1.442695
    %v5351 = vpow.pop %v5350
    %v5352 = vmul.f32 %v5347, 1.442695
    %v5353 = vpow.pop %v5352
    %v5354 = vmul.f32 %v5348, 1.442695
    %v5355 = vpow.pop %v5354
    %v5356 = vmul.f32 %v5349, 1.442695
    %v5357 = vpow.pop %v5356
    %v5358 = vsel %vm410, %v5351, 0.0
    %5359 = vadd.xlane.f32.xlu0 %v5358
    %v5360 = vpop.xlane.xlu0 %5359
    %v5361 = vsel %vm410, %v5353, 0.0
    %5362 = vadd.xlane.f32.xlu0 %v5361
    %v5363 = vpop.xlane.xlu0 %5362
    %v5364 = vsel %vm410, %v5355, 0.0
    %5365 = vadd.xlane.f32.xlu0 %v5364
    %v5366 = vpop.xlane.xlu0 %5365
    %v5367 = vsel %vm410, %v5357, 0.0
    %5368 = vadd.xlane.f32.xlu0 %v5367
    %v5369 = vpop.xlane.xlu0 %5368
    %v5370 = vrcp.pop %v5360
    %v5371 = vrcp.pop %v5363
    %v5372 = vrcp.pop %v5366
    %v5373 = vrcp.pop %v5369
    %v5374 = vmul.f32 %v5351, %v5370
    %v5375 = vmul.f32 %v5353, %v5371
    %v5376 = vmul.f32 %v5355, %v5372
    %v5377 = vmul.f32 %v5357, %v5373
    %5378 = vrot.lane.b32.xlu0 %v3688, 48
    %v5379 = vpop.permute.xlu0 %5378
    %v5382 = vsel %vm410, %v5374, 0
    %5384 = vmatprep.subr.mxu0 0.0
    %5385 = vmatpush1.msra.mxu0 0.0
    %5386 = vmatprep.subr.mxu0 0.0
    %5387 = vmatpush1.msra.mxu0 0.0
    %5388 = vmatprep.subr.mxu0 0.0
    %5389 = vmatpush1.msra.mxu0 0.0
    %5390 = vmatprep.subr.mxu0 0.0
    %5391 = vmatpush1.msra.mxu0 0.0
    %5392 = vmatprep.subr.mxu0 0.0
    %5393 = vmatpush1.msra.mxu0 0.0
    %5394 = vmatprep.subr.mxu0 0.0
    %5395 = vmatpush1.msra.mxu0 0.0
    %5396 = vmatprep.subr.mxu0 0.0
    %5397 = vmatpush1.msra.mxu0 0.0
    %5398 = vmatprep.subr.mxu0 0.0
    %5399 = vmatpush1.msra.mxu0 0.0
    %5400 = vmatprep.subr.mxu0 0.0
    %5401 = vmatpush1.msra.mxu0 0.0
    %5402 = vmatprep.subr.mxu0 0.0
    %5403 = vmatpush1.msra.mxu0 0.0
    %5404 = vmatprep.subr.mxu0 0.0
    %5405 = vmatpush1.msra.mxu0 0.0
    %5406 = vmatprep.subr.mxu0 0.0
    %5407 = vmatpush1.msra.mxu0 0.0
    %5408 = vmatprep.subr.mxu0 0.0
    %5409 = vmatpush1.msra.mxu0 0.0
    %5410 = vmatprep.subr.mxu0 0.0
    %5411 = vmatpush1.msra.mxu0 0.0
    %5412 = vmatprep.subr.mxu0 0.0
    %5413 = vmatpush1.msra.mxu0 0.0
    %5414 = vmatprep.subr.mxu0 0.0
    %5415 = vmatpush1.msra.mxu0 %v5379
    %5416 = vmatprep.subr.mxu0 0.0
    %5417 = vmatpush2.msra.mxu0 0.0
    %5418 = vmatprep.subr.mxu0 0.0
    %5419 = vmatpush2.msra.mxu0 0.0
    %5420 = vmatprep.subr.mxu0 0.0
    %5421 = vmatpush2.msra.mxu0 0.0
    %5422 = vmatprep.subr.mxu0 0.0
    %5423 = vmatpush2.msra.mxu0 0.0
    %5424 = vmatprep.subr.mxu0 0.0
    %5425 = vmatpush2.msra.mxu0 0.0
    %5426 = vmatprep.subr.mxu0 0.0
    %5427 = vmatpush2.msra.mxu0 0.0
    %5428 = vmatprep.subr.mxu0 0.0
    %5429 = vmatpush2.msra.mxu0 0.0
    %5430 = vmatprep.subr.mxu0 0.0
    %5431 = vmatpush2.msra.mxu0 0.0
    %5432 = vmatprep.subr.mxu0 0.0
    %5433 = vmatpush2.msra.mxu0 0.0
    %5434 = vmatprep.subr.mxu0 0.0
    %5435 = vmatpush2.msra.mxu0 0.0
    %5436 = vmatprep.subr.mxu0 0.0
    %5437 = vmatpush2.msra.mxu0 0.0
    %5438 = vmatprep.subr.mxu0 0.0
    %5439 = vmatpush2.msra.mxu0 0.0
    %5440 = vmatprep.subr.mxu0 0.0
    %5441 = vmatpush2.msra.mxu0 0.0
    %5442 = vmatprep.subr.mxu0 0.0
    %5443 = vmatpush2.msra.mxu0 0.0
    %5444 = vmatprep.subr.mxu0 0.0
    %5445 = vmatpush2.msra.mxu0 0.0
    %5446 = vmatprep.subr.mxu0 0.0
    %5447 = vmatpush2.msra.mxu0 0.0
    %5448 = vmatprep.mubr.f32.mxu0 0.0
    %5449 = vmatmul.mubr.f32.gmra.mxu0 %v5382
    %v5450 = vpop.f32.mrf.mxu0
    %v5451 = vadd.f32 0.0, %v5450
    %v5452 = vpop.f32.mrf.mxu0
    %5453 = vdwg.mxu0
    %5454 = vrot.lane.b32.xlu0 %v3693, 48
    %v5455 = vpop.permute.xlu0 %5454
    %v5458 = vsel %vm410, %v5375, 0
    %5460 = vmatprep.subr.mxu0 0.0
    %5461 = vmatpush1.msra.mxu0 0.0
    %5462 = vmatprep.subr.mxu0 0.0
    %5463 = vmatpush1.msra.mxu0 0.0
    %5464 = vmatprep.subr.mxu0 0.0
    %5465 = vmatpush1.msra.mxu0 0.0
    %5466 = vmatprep.subr.mxu0 0.0
    %5467 = vmatpush1.msra.mxu0 0.0
    %5468 = vmatprep.subr.mxu0 0.0
    %5469 = vmatpush1.msra.mxu0 0.0
    %5470 = vmatprep.subr.mxu0 0.0
    %5471 = vmatpush1.msra.mxu0 0.0
    %5472 = vmatprep.subr.mxu0 0.0
    %5473 = vmatpush1.msra.mxu0 0.0
    %5474 = vmatprep.subr.mxu0 0.0
    %5475 = vmatpush1.msra.mxu0 0.0
    %5476 = vmatprep.subr.mxu0 0.0
    %5477 = vmatpush1.msra.mxu0 0.0
    %5478 = vmatprep.subr.mxu0 0.0
    %5479 = vmatpush1.msra.mxu0 0.0
    %5480 = vmatprep.subr.mxu0 0.0
    %5481 = vmatpush1.msra.mxu0 0.0
    %5482 = vmatprep.subr.mxu0 0.0
    %5483 = vmatpush1.msra.mxu0 0.0
    %5484 = vmatprep.subr.mxu0 0.0
    %5485 = vmatpush1.msra.mxu0 0.0
    %5486 = vmatprep.subr.mxu0 0.0
    %5487 = vmatpush1.msra.mxu0 0.0
    %5488 = vmatprep.subr.mxu0 0.0
    %5489 = vmatpush1.msra.mxu0 0.0
    %5490 = vmatprep.subr.mxu0 0.0
    %5491 = vmatpush1.msra.mxu0 %v5455
    %5492 = vmatprep.subr.mxu0 0.0
    %5493 = vmatpush2.msra.mxu0 0.0
    %5494 = vmatprep.subr.mxu0 0.0
    %5495 = vmatpush2.msra.mxu0 0.0
    %5496 = vmatprep.subr.mxu0 0.0
    %5497 = vmatpush2.msra.mxu0 0.0
    %5498 = vmatprep.subr.mxu0 0.0
    %5499 = vmatpush2.msra.mxu0 0.0
    %5500 = vmatprep.subr.mxu0 0.0
    %5501 = vmatpush2.msra.mxu0 0.0
    %5502 = vmatprep.subr.mxu0 0.0
    %5503 = vmatpush2.msra.mxu0 0.0
    %5504 = vmatprep.subr.mxu0 0.0
    %5505 = vmatpush2.msra.mxu0 0.0
    %5506 = vmatprep.subr.mxu0 0.0
    %5507 = vmatpush2.msra.mxu0 0.0
    %5508 = vmatprep.subr.mxu0 0.0
    %5509 = vmatpush2.msra.mxu0 0.0
    %5510 = vmatprep.subr.mxu0 0.0
    %5511 = vmatpush2.msra.mxu0 0.0
    %5512 = vmatprep.subr.mxu0 0.0
    %5513 = vmatpush2.msra.mxu0 0.0
    %5514 = vmatprep.subr.mxu0 0.0
    %5515 = vmatpush2.msra.mxu0 0.0
    %5516 = vmatprep.subr.mxu0 0.0
    %5517 = vmatpush2.msra.mxu0 0.0
    %5518 = vmatprep.subr.mxu0 0.0
    %5519 = vmatpush2.msra.mxu0 0.0
    %5520 = vmatprep.subr.mxu0 0.0
    %5521 = vmatpush2.msra.mxu0 0.0
    %5522 = vmatprep.subr.mxu0 0.0
    %5523 = vmatpush2.msra.mxu0 0.0
    %5524 = vmatprep.mubr.f32.mxu0 0.0
    %5525 = vmatmul.mubr.f32.gmra.mxu0 %v5458
    %v5526 = vpop.f32.mrf.mxu0
    %v5527 = vadd.f32 0.0, %v5526
    %v5528 = vpop.f32.mrf.mxu0
    %5529 = vdwg.mxu0
    %5530 = vrot.lane.b32.xlu0 %v3698, 48
    %v5531 = vpop.permute.xlu0 %5530
    %v5534 = vsel %vm410, %v5376, 0
    %5536 = vmatprep.subr.mxu0 0.0
    %5537 = vmatpush1.msra.mxu0 0.0
    %5538 = vmatprep.subr.mxu0 0.0
    %5539 = vmatpush1.msra.mxu0 0.0
    %5540 = vmatprep.subr.mxu0 0.0
    %5541 = vmatpush1.msra.mxu0 0.0
    %5542 = vmatprep.subr.mxu0 0.0
    %5543 = vmatpush1.msra.mxu0 0.0
    %5544 = vmatprep.subr.mxu0 0.0
    %5545 = vmatpush1.msra.mxu0 0.0
    %5546 = vmatprep.subr.mxu0 0.0
    %5547 = vmatpush1.msra.mxu0 0.0
    %5548 = vmatprep.subr.mxu0 0.0
    %5549 = vmatpush1.msra.mxu0 0.0
    %5550 = vmatprep.subr.mxu0 0.0
    %5551 = vmatpush1.msra.mxu0 0.0
    %5552 = vmatprep.subr.mxu0 0.0
    %5553 = vmatpush1.msra.mxu0 0.0
    %5554 = vmatprep.subr.mxu0 0.0
    %5555 = vmatpush1.msra.mxu0 0.0
    %5556 = vmatprep.subr.mxu0 0.0
    %5557 = vmatpush1.msra.mxu0 0.0
    %5558 = vmatprep.subr.mxu0 0.0
    %5559 = vmatpush1.msra.mxu0 0.0
    %5560 = vmatprep.subr.mxu0 0.0
    %5561 = vmatpush1.msra.mxu0 0.0
    %5562 = vmatprep.subr.mxu0 0.0
    %5563 = vmatpush1.msra.mxu0 0.0
    %5564 = vmatprep.subr.mxu0 0.0
    %5565 = vmatpush1.msra.mxu0 0.0
    %5566 = vmatprep.subr.mxu0 0.0
    %5567 = vmatpush1.msra.mxu0 %v5531
    %5568 = vmatprep.subr.mxu0 0.0
    %5569 = vmatpush2.msra.mxu0 0.0
    %5570 = vmatprep.subr.mxu0 0.0
    %5571 = vmatpush2.msra.mxu0 0.0
    %5572 = vmatprep.subr.mxu0 0.0
    %5573 = vmatpush2.msra.mxu0 0.0
    %5574 = vmatprep.subr.mxu0 0.0
    %5575 = vmatpush2.msra.mxu0 0.0
    %5576 = vmatprep.subr.mxu0 0.0
    %5577 = vmatpush2.msra.mxu0 0.0
    %5578 = vmatprep.subr.mxu0 0.0
    %5579 = vmatpush2.msra.mxu0 0.0
    %5580 = vmatprep.subr.mxu0 0.0
    %5581 = vmatpush2.msra.mxu0 0.0
    %5582 = vmatprep.subr.mxu0 0.0
    %5583 = vmatpush2.msra.mxu0 0.0
    %5584 = vmatprep.subr.mxu0 0.0
    %5585 = vmatpush2.msra.mxu0 0.0
    %5586 = vmatprep.subr.mxu0 0.0
    %5587 = vmatpush2.msra.mxu0 0.0
    %5588 = vmatprep.subr.mxu0 0.0
    %5589 = vmatpush2.msra.mxu0 0.0
    %5590 = vmatprep.subr.mxu0 0.0
    %5591 = vmatpush2.msra.mxu0 0.0
    %5592 = vmatprep.subr.mxu0 0.0
    %5593 = vmatpush2.msra.mxu0 0.0
    %5594 = vmatprep.subr.mxu0 0.0
    %5595 = vmatpush2.msra.mxu0 0.0
    %5596 = vmatprep.subr.mxu0 0.0
    %5597 = vmatpush2.msra.mxu0 0.0
    %5598 = vmatprep.subr.mxu0 0.0
    %5599 = vmatpush2.msra.mxu0 0.0
    %5600 = vmatprep.mubr.f32.mxu0 0.0
    %5601 = vmatmul.mubr.f32.gmra.mxu0 %v5534
    %v5602 = vpop.f32.mrf.mxu0
    %v5603 = vadd.f32 0.0, %v5602
    %v5604 = vpop.f32.mrf.mxu0
    %5605 = vdwg.mxu0
    %5606 = vrot.lane.b32.xlu0 %v3703, 48
    %v5607 = vpop.permute.xlu0 %5606
    %v5610 = vsel %vm410, %v5377, 0
    %5612 = vmatprep.subr.mxu0 0.0
    %5613 = vmatpush1.msra.mxu0 0.0
    %5614 = vmatprep.subr.mxu0 0.0
    %5615 = vmatpush1.msra.mxu0 0.0
    %5616 = vmatprep.subr.mxu0 0.0
    %5617 = vmatpush1.msra.mxu0 0.0
    %5618 = vmatprep.subr.mxu0 0.0
    %5619 = vmatpush1.msra.mxu0 0.0
    %5620 = vmatprep.subr.mxu0 0.0
    %5621 = vmatpush1.msra.mxu0 0.0
    %5622 = vmatprep.subr.mxu0 0.0
    %5623 = vmatpush1.msra.mxu0 0.0
    %5624 = vmatprep.subr.mxu0 0.0
    %5625 = vmatpush1.msra.mxu0 0.0
    %5626 = vmatprep.subr.mxu0 0.0
    %5627 = vmatpush1.msra.mxu0 0.0
    %5628 = vmatprep.subr.mxu0 0.0
    %5629 = vmatpush1.msra.mxu0 0.0
    %5630 = vmatprep.subr.mxu0 0.0
    %5631 = vmatpush1.msra.mxu0 0.0
    %5632 = vmatprep.subr.mxu0 0.0
    %5633 = vmatpush1.msra.mxu0 0.0
    %5634 = vmatprep.subr.mxu0 0.0
    %5635 = vmatpush1.msra.mxu0 0.0
    %5636 = vmatprep.subr.mxu0 0.0
    %5637 = vmatpush1.msra.mxu0 0.0
    %5638 = vmatprep.subr.mxu0 0.0
    %5639 = vmatpush1.msra.mxu0 0.0
    %5640 = vmatprep.subr.mxu0 0.0
    %5641 = vmatpush1.msra.mxu0 0.0
    %5642 = vmatprep.subr.mxu0 0.0
    %5643 = vmatpush1.msra.mxu0 %v5607
    %5644 = vmatprep.subr.mxu0 0.0
    %5645 = vmatpush2.msra.mxu0 0.0
    %5646 = vmatprep.subr.mxu0 0.0
    %5647 = vmatpush2.msra.mxu0 0.0
    %5648 = vmatprep.subr.mxu0 0.0
    %5649 = vmatpush2.msra.mxu0 0.0
    %5650 = vmatprep.subr.mxu0 0.0
    %5651 = vmatpush2.msra.mxu0 0.0
    %5652 = vmatprep.subr.mxu0 0.0
    %5653 = vmatpush2.msra.mxu0 0.0
    %5654 = vmatprep.subr.mxu0 0.0
    %5655 = vmatpush2.msra.mxu0 0.0
    %5656 = vmatprep.subr.mxu0 0.0
    %5657 = vmatpush2.msra.mxu0 0.0
    %5658 = vmatprep.subr.mxu0 0.0
    %5659 = vmatpush2.msra.mxu0 0.0
    %5660 = vmatprep.subr.mxu0 0.0
    %5661 = vmatpush2.msra.mxu0 0.0
    %5662 = vmatprep.subr.mxu0 0.0
    %5663 = vmatpush2.msra.mxu0 0.0
    %5664 = vmatprep.subr.mxu0 0.0
    %5665 = vmatpush2.msra.mxu0 0.0
    %5666 = vmatprep.subr.mxu0 0.0
    %5667 = vmatpush2.msra.mxu0 0.0
    %5668 = vmatprep.subr.mxu0 0.0
    %5669 = vmatpush2.msra.mxu0 0.0
    %5670 = vmatprep.subr.mxu0 0.0
    %5671 = vmatpush2.msra.mxu0 0.0
    %5672 = vmatprep.subr.mxu0 0.0
    %5673 = vmatpush2.msra.mxu0 0.0
    %5674 = vmatprep.subr.mxu0 0.0
    %5675 = vmatpush2.msra.mxu0 0.0
    %5676 = vmatprep.mubr.f32.mxu0 0.0
    %5677 = vmatmul.mubr.f32.gmra.mxu0 %v5610
    %v5678 = vpop.f32.mrf.mxu0
    %v5679 = vadd.f32 0.0, %v5678
    %v5680 = vpop.f32.mrf.mxu0
    %5681 = vdwg.mxu0
    %5682 = vrot.lane.b32.xlu0 %v3688, 104
    %v5683 = vpop.permute.xlu0 %5682
    %5684 = vrot.lane.b32.xlu0 %v3688, 72
    %v5685 = vpop.permute.xlu0 %5684
    %v5686 = vsel %vm410, %v5683, 0
    %v5688 = vsel %vm410, %v5685, 0
    %5690 = vmatprep.subr.mxu0 0.0
    %5691 = vmatpush1.xpose.msra.mxu0 0.0
    %5692 = vmatprep.subr.mxu0 0.0
    %5693 = vmatpush1.xpose.msra.mxu0 0.0
    %5694 = vmatprep.subr.mxu0 0.0
    %5695 = vmatpush1.xpose.msra.mxu0 0.0
    %5696 = vmatprep.subr.mxu0 0.0
    %5697 = vmatpush1.xpose.msra.mxu0 0.0
    %5698 = vmatprep.subr.mxu0 0.0
    %5699 = vmatpush1.xpose.msra.mxu0 0.0
    %5700 = vmatprep.subr.mxu0 0.0
    %5701 = vmatpush1.xpose.msra.mxu0 0.0
    %5702 = vmatprep.subr.mxu0 0.0
    %5703 = vmatpush1.xpose.msra.mxu0 0.0
    %5704 = vmatprep.subr.mxu0 0.0
    %5705 = vmatpush1.xpose.msra.mxu0 0.0
    %5706 = vmatprep.subr.mxu0 0.0
    %5707 = vmatpush1.xpose.msra.mxu0 0.0
    %5708 = vmatprep.subr.mxu0 0.0
    %5709 = vmatpush1.xpose.msra.mxu0 0.0
    %5710 = vmatprep.subr.mxu0 0.0
    %5711 = vmatpush1.xpose.msra.mxu0 0.0
    %5712 = vmatprep.subr.mxu0 0.0
    %5713 = vmatpush1.xpose.msra.mxu0 0.0
    %5714 = vmatprep.subr.mxu0 0.0
    %5715 = vmatpush1.xpose.msra.mxu0 0.0
    %5716 = vmatprep.subr.mxu0 0.0
    %5717 = vmatpush1.xpose.msra.mxu0 0.0
    %5718 = vmatprep.subr.mxu0 0.0
    %5719 = vmatpush1.xpose.msra.mxu0 0.0
    %5720 = vmatprep.subr.mxu0 0.0
    %5721 = vmatpush1.xpose.msra.mxu0 %v5688
    %5722 = vmatprep.subr.mxu0 0.0
    %5723 = vmatpush2.xpose.msra.mxu0 0.0
    %5724 = vmatprep.subr.mxu0 0.0
    %5725 = vmatpush2.xpose.msra.mxu0 0.0
    %5726 = vmatprep.subr.mxu0 0.0
    %5727 = vmatpush2.xpose.msra.mxu0 0.0
    %5728 = vmatprep.subr.mxu0 0.0
    %5729 = vmatpush2.xpose.msra.mxu0 0.0
    %5730 = vmatprep.subr.mxu0 0.0
    %5731 = vmatpush2.xpose.msra.mxu0 0.0
    %5732 = vmatprep.subr.mxu0 0.0
    %5733 = vmatpush2.xpose.msra.mxu0 0.0
    %5734 = vmatprep.subr.mxu0 0.0
    %5735 = vmatpush2.xpose.msra.mxu0 0.0
    %5736 = vmatprep.subr.mxu0 0.0
    %5737 = vmatpush2.xpose.msra.mxu0 0.0
    %5738 = vmatprep.subr.mxu0 0.0
    %5739 = vmatpush2.xpose.msra.mxu0 0.0
    %5740 = vmatprep.subr.mxu0 0.0
    %5741 = vmatpush2.xpose.msra.mxu0 0.0
    %5742 = vmatprep.subr.mxu0 0.0
    %5743 = vmatpush2.xpose.msra.mxu0 0.0
    %5744 = vmatprep.subr.mxu0 0.0
    %5745 = vmatpush2.xpose.msra.mxu0 0.0
    %5746 = vmatprep.subr.mxu0 0.0
    %5747 = vmatpush2.xpose.msra.mxu0 0.0
    %5748 = vmatprep.subr.mxu0 0.0
    %5749 = vmatpush2.xpose.msra.mxu0 0.0
    %5750 = vmatprep.subr.mxu0 0.0
    %5751 = vmatpush2.xpose.msra.mxu0 0.0
    %5752 = vmatprep.subr.mxu0 0.0
    %5753 = vmatpush2.xpose.msra.mxu0 0.0
    %5754 = vmatprep.mubr.f32.mxu0 0.0
    %5755 = vmatmul.mubr.f32.gmra.mxu0 %v5686
    %v5756 = vpop.f32.mrf.mxu0
    %v5757 = vadd.f32 0.0, %v5756
    %v5758 = vpop.f32.mrf.mxu0
    %5759 = vdwg.mxu0
    %5760 = vrot.lane.b32.xlu0 %v3693, 104
    %v5761 = vpop.permute.xlu0 %5760
    %5762 = vrot.lane.b32.xlu0 %v3693, 72
    %v5763 = vpop.permute.xlu0 %5762
    %v5764 = vsel %vm410, %v5761, 0
    %v5766 = vsel %vm410, %v5763, 0
    %5768 = vmatprep.subr.mxu0 0.0
    %5769 = vmatpush1.xpose.msra.mxu0 0.0
    %5770 = vmatprep.subr.mxu0 0.0
    %5771 = vmatpush1.xpose.msra.mxu0 0.0
    %5772 = vmatprep.subr.mxu0 0.0
    %5773 = vmatpush1.xpose.msra.mxu0 0.0
    %5774 = vmatprep.subr.mxu0 0.0
    %5775 = vmatpush1.xpose.msra.mxu0 0.0
    %5776 = vmatprep.subr.mxu0 0.0
    %5777 = vmatpush1.xpose.msra.mxu0 0.0
    %5778 = vmatprep.subr.mxu0 0.0
    %5779 = vmatpush1.xpose.msra.mxu0 0.0
    %5780 = vmatprep.subr.mxu0 0.0
    %5781 = vmatpush1.xpose.msra.mxu0 0.0
    %5782 = vmatprep.subr.mxu0 0.0
    %5783 = vmatpush1.xpose.msra.mxu0 0.0
    %5784 = vmatprep.subr.mxu0 0.0
    %5785 = vmatpush1.xpose.msra.mxu0 0.0
    %5786 = vmatprep.subr.mxu0 0.0
    %5787 = vmatpush1.xpose.msra.mxu0 0.0
    %5788 = vmatprep.subr.mxu0 0.0
    %5789 = vmatpush1.xpose.msra.mxu0 0.0
    %5790 = vmatprep.subr.mxu0 0.0
    %5791 = vmatpush1.xpose.msra.mxu0 0.0
    %5792 = vmatprep.subr.mxu0 0.0
    %5793 = vmatpush1.xpose.msra.mxu0 0.0
    %5794 = vmatprep.subr.mxu0 0.0
    %5795 = vmatpush1.xpose.msra.mxu0 0.0
    %5796 = vmatprep.subr.mxu0 0.0
    %5797 = vmatpush1.xpose.msra.mxu0 0.0
    %5798 = vmatprep.subr.mxu0 0.0
    %5799 = vmatpush1.xpose.msra.mxu0 %v5766
    %5800 = vmatprep.subr.mxu0 0.0
    %5801 = vmatpush2.xpose.msra.mxu0 0.0
    %5802 = vmatprep.subr.mxu0 0.0
    %5803 = vmatpush2.xpose.msra.mxu0 0.0
    %5804 = vmatprep.subr.mxu0 0.0
    %5805 = vmatpush2.xpose.msra.mxu0 0.0
    %5806 = vmatprep.subr.mxu0 0.0
    %5807 = vmatpush2.xpose.msra.mxu0 0.0
    %5808 = vmatprep.subr.mxu0 0.0
    %5809 = vmatpush2.xpose.msra.mxu0 0.0
    %5810 = vmatprep.subr.mxu0 0.0
    %5811 = vmatpush2.xpose.msra.mxu0 0.0
    %5812 = vmatprep.subr.mxu0 0.0
    %5813 = vmatpush2.xpose.msra.mxu0 0.0
    %5814 = vmatprep.subr.mxu0 0.0
    %5815 = vmatpush2.xpose.msra.mxu0 0.0
    %5816 = vmatprep.subr.mxu0 0.0
    %5817 = vmatpush2.xpose.msra.mxu0 0.0
    %5818 = vmatprep.subr.mxu0 0.0
    %5819 = vmatpush2.xpose.msra.mxu0 0.0
    %5820 = vmatprep.subr.mxu0 0.0
    %5821 = vmatpush2.xpose.msra.mxu0 0.0
    %5822 = vmatprep.subr.mxu0 0.0
    %5823 = vmatpush2.xpose.msra.mxu0 0.0
    %5824 = vmatprep.subr.mxu0 0.0
    %5825 = vmatpush2.xpose.msra.mxu0 0.0
    %5826 = vmatprep.subr.mxu0 0.0
    %5827 = vmatpush2.xpose.msra.mxu0 0.0
    %5828 = vmatprep.subr.mxu0 0.0
    %5829 = vmatpush2.xpose.msra.mxu0 0.0
    %5830 = vmatprep.subr.mxu0 0.0
    %5831 = vmatpush2.xpose.msra.mxu0 0.0
    %5832 = vmatprep.mubr.f32.mxu0 0.0
    %5833 = vmatmul.mubr.f32.gmra.mxu0 %v5764
    %v5834 = vpop.f32.mrf.mxu0
    %v5835 = vadd.f32 0.0, %v5834
    %v5836 = vpop.f32.mrf.mxu0
    %5837 = vdwg.mxu0
    %5838 = vrot.lane.b32.xlu0 %v3698, 104
    %v5839 = vpop.permute.xlu0 %5838
    %5840 = vrot.lane.b32.xlu0 %v3698, 72
    %v5841 = vpop.permute.xlu0 %5840
    %v5842 = vsel %vm410, %v5839, 0
    %v5844 = vsel %vm410, %v5841, 0
    %5846 = vmatprep.subr.mxu0 0.0
    %5847 = vmatpush1.xpose.msra.mxu0 0.0
    %5848 = vmatprep.subr.mxu0 0.0
    %5849 = vmatpush1.xpose.msra.mxu0 0.0
    %5850 = vmatprep.subr.mxu0 0.0
    %5851 = vmatpush1.xpose.msra.mxu0 0.0
    %5852 = vmatprep.subr.mxu0 0.0
    %5853 = vmatpush1.xpose.msra.mxu0 0.0
    %5854 = vmatprep.subr.mxu0 0.0
    %5855 = vmatpush1.xpose.msra.mxu0 0.0
    %5856 = vmatprep.subr.mxu0 0.0
    %5857 = vmatpush1.xpose.msra.mxu0 0.0
    %5858 = vmatprep.subr.mxu0 0.0
    %5859 = vmatpush1.xpose.msra.mxu0 0.0
    %5860 = vmatprep.subr.mxu0 0.0
    %5861 = vmatpush1.xpose.msra.mxu0 0.0
    %5862 = vmatprep.subr.mxu0 0.0
    %5863 = vmatpush1.xpose.msra.mxu0 0.0
    %5864 = vmatprep.subr.mxu0 0.0
    %5865 = vmatpush1.xpose.msra.mxu0 0.0
    %5866 = vmatprep.subr.mxu0 0.0
    %5867 = vmatpush1.xpose.msra.mxu0 0.0
    %5868 = vmatprep.subr.mxu0 0.0
    %5869 = vmatpush1.xpose.msra.mxu0 0.0
    %5870 = vmatprep.subr.mxu0 0.0
    %5871 = vmatpush1.xpose.msra.mxu0 0.0
    %5872 = vmatprep.subr.mxu0 0.0
    %5873 = vmatpush1.xpose.msra.mxu0 0.0
    %5874 = vmatprep.subr.mxu0 0.0
    %5875 = vmatpush1.xpose.msra.mxu0 0.0
    %5876 = vmatprep.subr.mxu0 0.0
    %5877 = vmatpush1.xpose.msra.mxu0 %v5844
    %5878 = vmatprep.subr.mxu0 0.0
    %5879 = vmatpush2.xpose.msra.mxu0 0.0
    %5880 = vmatprep.subr.mxu0 0.0
    %5881 = vmatpush2.xpose.msra.mxu0 0.0
    %5882 = vmatprep.subr.mxu0 0.0
    %5883 = vmatpush2.xpose.msra.mxu0 0.0
    %5884 = vmatprep.subr.mxu0 0.0
    %5885 = vmatpush2.xpose.msra.mxu0 0.0
    %5886 = vmatprep.subr.mxu0 0.0
    %5887 = vmatpush2.xpose.msra.mxu0 0.0
    %5888 = vmatprep.subr.mxu0 0.0
    %5889 = vmatpush2.xpose.msra.mxu0 0.0
    %5890 = vmatprep.subr.mxu0 0.0
    %5891 = vmatpush2.xpose.msra.mxu0 0.0
    %5892 = vmatprep.subr.mxu0 0.0
    %5893 = vmatpush2.xpose.msra.mxu0 0.0
    %5894 = vmatprep.subr.mxu0 0.0
    %5895 = vmatpush2.xpose.msra.mxu0 0.0
    %5896 = vmatprep.subr.mxu0 0.0
    %5897 = vmatpush2.xpose.msra.mxu0 0.0
    %5898 = vmatprep.subr.mxu0 0.0
    %5899 = vmatpush2.xpose.msra.mxu0 0.0
    %5900 = vmatprep.subr.mxu0 0.0
    %5901 = vmatpush2.xpose.msra.mxu0 0.0
    %5902 = vmatprep.subr.mxu0 0.0
    %5903 = vmatpush2.xpose.msra.mxu0 0.0
    %5904 = vmatprep.subr.mxu0 0.0
    %5905 = vmatpush2.xpose.msra.mxu0 0.0
    %5906 = vmatprep.subr.mxu0 0.0
    %5907 = vmatpush2.xpose.msra.mxu0 0.0
    %5908 = vmatprep.subr.mxu0 0.0
    %5909 = vmatpush2.xpose.msra.mxu0 0.0
    %5910 = vmatprep.mubr.f32.mxu0 0.0
    %5911 = vmatmul.mubr.f32.gmra.mxu0 %v5842
    %v5912 = vpop.f32.mrf.mxu0
    %v5913 = vadd.f32 0.0, %v5912
    %v5914 = vpop.f32.mrf.mxu0
    %5915 = vdwg.mxu0
    %5916 = vrot.lane.b32.xlu0 %v3703, 104
    %v5917 = vpop.permute.xlu0 %5916
    %5918 = vrot.lane.b32.xlu0 %v3703, 72
    %v5919 = vpop.permute.xlu0 %5918
    %v5920 = vsel %vm410, %v5917, 0
    %v5922 = vsel %vm410, %v5919, 0
    %5924 = vmatprep.subr.mxu0 0.0
    %5925 = vmatpush1.xpose.msra.mxu0 0.0
    %5926 = vmatprep.subr.mxu0 0.0
    %5927 = vmatpush1.xpose.msra.mxu0 0.0
    %5928 = vmatprep.subr.mxu0 0.0
    %5929 = vmatpush1.xpose.msra.mxu0 0.0
    %5930 = vmatprep.subr.mxu0 0.0
    %5931 = vmatpush1.xpose.msra.mxu0 0.0
    %5932 = vmatprep.subr.mxu0 0.0
    %5933 = vmatpush1.xpose.msra.mxu0 0.0
    %5934 = vmatprep.subr.mxu0 0.0
    %5935 = vmatpush1.xpose.msra.mxu0 0.0
    %5936 = vmatprep.subr.mxu0 0.0
    %5937 = vmatpush1.xpose.msra.mxu0 0.0
    %5938 = vmatprep.subr.mxu0 0.0
    %5939 = vmatpush1.xpose.msra.mxu0 0.0
    %5940 = vmatprep.subr.mxu0 0.0
    %5941 = vmatpush1.xpose.msra.mxu0 0.0
    %5942 = vmatprep.subr.mxu0 0.0
    %5943 = vmatpush1.xpose.msra.mxu0 0.0
    %5944 = vmatprep.subr.mxu0 0.0
    %5945 = vmatpush1.xpose.msra.mxu0 0.0
    %5946 = vmatprep.subr.mxu0 0.0
    %5947 = vmatpush1.xpose.msra.mxu0 0.0
    %5948 = vmatprep.subr.mxu0 0.0
    %5949 = vmatpush1.xpose.msra.mxu0 0.0
    %5950 = vmatprep.subr.mxu0 0.0
    %5951 = vmatpush1.xpose.msra.mxu0 0.0
    %5952 = vmatprep.subr.mxu0 0.0
    %5953 = vmatpush1.xpose.msra.mxu0 0.0
    %5954 = vmatprep.subr.mxu0 0.0
    %5955 = vmatpush1.xpose.msra.mxu0 %v5922
    %5956 = vmatprep.subr.mxu0 0.0
    %5957 = vmatpush2.xpose.msra.mxu0 0.0
    %5958 = vmatprep.subr.mxu0 0.0
    %5959 = vmatpush2.xpose.msra.mxu0 0.0
    %5960 = vmatprep.subr.mxu0 0.0
    %5961 = vmatpush2.xpose.msra.mxu0 0.0
    %5962 = vmatprep.subr.mxu0 0.0
    %5963 = vmatpush2.xpose.msra.mxu0 0.0
    %5964 = vmatprep.subr.mxu0 0.0
    %5965 = vmatpush2.xpose.msra.mxu0 0.0
    %5966 = vmatprep.subr.mxu0 0.0
    %5967 = vmatpush2.xpose.msra.mxu0 0.0
    %5968 = vmatprep.subr.mxu0 0.0
    %5969 = vmatpush2.xpose.msra.mxu0 0.0
    %5970 = vmatprep.subr.mxu0 0.0
    %5971 = vmatpush2.xpose.msra.mxu0 0.0
    %5972 = vmatprep.subr.mxu0 0.0
    %5973 = vmatpush2.xpose.msra.mxu0 0.0
    %5974 = vmatprep.subr.mxu0 0.0
    %5975 = vmatpush2.xpose.msra.mxu0 0.0
    %5976 = vmatprep.subr.mxu0 0.0
    %5977 = vmatpush2.xpose.msra.mxu0 0.0
    %5978 = vmatprep.subr.mxu0 0.0
    %5979 = vmatpush2.xpose.msra.mxu0 0.0
    %5980 = vmatprep.subr.mxu0 0.0
    %5981 = vmatpush2.xpose.msra.mxu0 0.0
    %5982 = vmatprep.subr.mxu0 0.0
    %5983 = vmatpush2.xpose.msra.mxu0 0.0
    %5984 = vmatprep.subr.mxu0 0.0
    %5985 = vmatpush2.xpose.msra.mxu0 0.0
    %5986 = vmatprep.subr.mxu0 0.0
    %5987 = vmatpush2.xpose.msra.mxu0 0.0
    %5988 = vmatprep.mubr.f32.mxu0 0.0
    %5989 = vmatmul.mubr.f32.gmra.mxu0 %v5920
    %v5990 = vpop.f32.mrf.mxu0
    %v5991 = vadd.f32 0.0, %v5990
    %v5992 = vpop.f32.mrf.mxu0
    %5993 = vdwg.mxu0
    %v5994 = vsel %vm410, %v5757, -inf
    %5995 = vmax.xlane.f32.xlu0 %v5994
    %v5996 = vpop.xlane.xlu0 %5995
    %v5997 = vsel %vm410, %v5835, -inf
    %5998 = vmax.xlane.f32.xlu0 %v5997
    %v5999 = vpop.xlane.xlu0 %5998
    %v6000 = vsel %vm410, %v5913, -inf
    %6001 = vmax.xlane.f32.xlu0 %v6000
    %v6002 = vpop.xlane.xlu0 %6001
    %v6003 = vsel %vm410, %v5991, -inf
    %6004 = vmax.xlane.f32.xlu0 %v6003
    %v6005 = vpop.xlane.xlu0 %6004
    %v6006 = vsub.f32 %v5757, %v5996
    %v6007 = vsub.f32 %v5835, %v5999
    %v6008 = vsub.f32 %v5913, %v6002
    %v6009 = vsub.f32 %v5991, %v6005
    %v6010 = vmul.f32 %v6006, 1.442695
    %v6011 = vpow.pop %v6010
    %v6012 = vmul.f32 %v6007, 1.442695
    %v6013 = vpow.pop %v6012
    %v6014 = vmul.f32 %v6008, 1.442695
    %v6015 = vpow.pop %v6014
    %v6016 = vmul.f32 %v6009, 1.442695
    %v6017 = vpow.pop %v6016
    %v6018 = vsel %vm410, %v6011, 0.0
    %6019 = vadd.xlane.f32.xlu0 %v6018
    %v6020 = vpop.xlane.xlu0 %6019
    %v6021 = vsel %vm410, %v6013, 0.0
    %6022 = vadd.xlane.f32.xlu0 %v6021
    %v6023 = vpop.xlane.xlu0 %6022
    %v6024 = vsel %vm410, %v6015, 0.0
    %6025 = vadd.xlane.f32.xlu0 %v6024
    %v6026 = vpop.xlane.xlu0 %6025
    %v6027 = vsel %vm410, %v6017, 0.0
    %6028 = vadd.xlane.f32.xlu0 %v6027
    %v6029 = vpop.xlane.xlu0 %6028
    %v6030 = vrcp.pop %v6020
    %v6031 = vrcp.pop %v6023
    %v6032 = vrcp.pop %v6026
    %v6033 = vrcp.pop %v6029
    %v6034 = vmul.f32 %v6011, %v6030
    %v6035 = vmul.f32 %v6013, %v6031
    %v6036 = vmul.f32 %v6015, %v6032
    %v6037 = vmul.f32 %v6017, %v6033
    %6038 = vrot.lane.b32.xlu0 %v3688, 40
    %v6039 = vpop.permute.xlu0 %6038
    %v6042 = vsel %vm410, %v6034, 0
    %6044 = vmatprep.subr.mxu0 0.0
    %6045 = vmatpush1.msra.mxu0 0.0
    %6046 = vmatprep.subr.mxu0 0.0
    %6047 = vmatpush1.msra.mxu0 0.0
    %6048 = vmatprep.subr.mxu0 0.0
    %6049 = vmatpush1.msra.mxu0 0.0
    %6050 = vmatprep.subr.mxu0 0.0
    %6051 = vmatpush1.msra.mxu0 0.0
    %6052 = vmatprep.subr.mxu0 0.0
    %6053 = vmatpush1.msra.mxu0 0.0
    %6054 = vmatprep.subr.mxu0 0.0
    %6055 = vmatpush1.msra.mxu0 0.0
    %6056 = vmatprep.subr.mxu0 0.0
    %6057 = vmatpush1.msra.mxu0 0.0
    %6058 = vmatprep.subr.mxu0 0.0
    %6059 = vmatpush1.msra.mxu0 0.0
    %6060 = vmatprep.subr.mxu0 0.0
    %6061 = vmatpush1.msra.mxu0 0.0
    %6062 = vmatprep.subr.mxu0 0.0
    %6063 = vmatpush1.msra.mxu0 0.0
    %6064 = vmatprep.subr.mxu0 0.0
    %6065 = vmatpush1.msra.mxu0 0.0
    %6066 = vmatprep.subr.mxu0 0.0
    %6067 = vmatpush1.msra.mxu0 0.0
    %6068 = vmatprep.subr.mxu0 0.0
    %6069 = vmatpush1.msra.mxu0 0.0
    %6070 = vmatprep.subr.mxu0 0.0
    %6071 = vmatpush1.msra.mxu0 0.0
    %6072 = vmatprep.subr.mxu0 0.0
    %6073 = vmatpush1.msra.mxu0 0.0
    %6074 = vmatprep.subr.mxu0 0.0
    %6075 = vmatpush1.msra.mxu0 %v6039
    %6076 = vmatprep.subr.mxu0 0.0
    %6077 = vmatpush2.msra.mxu0 0.0
    %6078 = vmatprep.subr.mxu0 0.0
    %6079 = vmatpush2.msra.mxu0 0.0
    %6080 = vmatprep.subr.mxu0 0.0
    %6081 = vmatpush2.msra.mxu0 0.0
    %6082 = vmatprep.subr.mxu0 0.0
    %6083 = vmatpush2.msra.mxu0 0.0
    %6084 = vmatprep.subr.mxu0 0.0
    %6085 = vmatpush2.msra.mxu0 0.0
    %6086 = vmatprep.subr.mxu0 0.0
    %6087 = vmatpush2.msra.mxu0 0.0
    %6088 = vmatprep.subr.mxu0 0.0
    %6089 = vmatpush2.msra.mxu0 0.0
    %6090 = vmatprep.subr.mxu0 0.0
    %6091 = vmatpush2.msra.mxu0 0.0
    %6092 = vmatprep.subr.mxu0 0.0
    %6093 = vmatpush2.msra.mxu0 0.0
    %6094 = vmatprep.subr.mxu0 0.0
    %6095 = vmatpush2.msra.mxu0 0.0
    %6096 = vmatprep.subr.mxu0 0.0
    %6097 = vmatpush2.msra.mxu0 0.0
    %6098 = vmatprep.subr.mxu0 0.0
    %6099 = vmatpush2.msra.mxu0 0.0
    %6100 = vmatprep.subr.mxu0 0.0
    %6101 = vmatpush2.msra.mxu0 0.0
    %6102 = vmatprep.subr.mxu0 0.0
    %6103 = vmatpush2.msra.mxu0 0.0
    %6104 = vmatprep.subr.mxu0 0.0
    %6105 = vmatpush2.msra.mxu0 0.0
    %6106 = vmatprep.subr.mxu0 0.0
    %6107 = vmatpush2.msra.mxu0 0.0
    %6108 = vmatprep.mubr.f32.mxu0 0.0
    %6109 = vmatmul.mubr.f32.gmra.mxu0 %v6042
    %v6110 = vpop.f32.mrf.mxu0
    %v6111 = vadd.f32 0.0, %v6110
    %v6112 = vpop.f32.mrf.mxu0
    %6113 = vdwg.mxu0
    %6114 = vrot.lane.b32.xlu0 %v3693, 40
    %v6115 = vpop.permute.xlu0 %6114
    %v6118 = vsel %vm410, %v6035, 0
    %6120 = vmatprep.subr.mxu0 0.0
    %6121 = vmatpush1.msra.mxu0 0.0
    %6122 = vmatprep.subr.mxu0 0.0
    %6123 = vmatpush1.msra.mxu0 0.0
    %6124 = vmatprep.subr.mxu0 0.0
    %6125 = vmatpush1.msra.mxu0 0.0
    %6126 = vmatprep.subr.mxu0 0.0
    %6127 = vmatpush1.msra.mxu0 0.0
    %6128 = vmatprep.subr.mxu0 0.0
    %6129 = vmatpush1.msra.mxu0 0.0
    %6130 = vmatprep.subr.mxu0 0.0
    %6131 = vmatpush1.msra.mxu0 0.0
    %6132 = vmatprep.subr.mxu0 0.0
    %6133 = vmatpush1.msra.mxu0 0.0
    %6134 = vmatprep.subr.mxu0 0.0
    %6135 = vmatpush1.msra.mxu0 0.0
    %6136 = vmatprep.subr.mxu0 0.0
    %6137 = vmatpush1.msra.mxu0 0.0
    %6138 = vmatprep.subr.mxu0 0.0
    %6139 = vmatpush1.msra.mxu0 0.0
    %6140 = vmatprep.subr.mxu0 0.0
    %6141 = vmatpush1.msra.mxu0 0.0
    %6142 = vmatprep.subr.mxu0 0.0
    %6143 = vmatpush1.msra.mxu0 0.0
    %6144 = vmatprep.subr.mxu0 0.0
    %6145 = vmatpush1.msra.mxu0 0.0
    %6146 = vmatprep.subr.mxu0 0.0
    %6147 = vmatpush1.msra.mxu0 0.0
    %6148 = vmatprep.subr.mxu0 0.0
    %6149 = vmatpush1.msra.mxu0 0.0
    %6150 = vmatprep.subr.mxu0 0.0
    %6151 = vmatpush1.msra.mxu0 %v6115
    %6152 = vmatprep.subr.mxu0 0.0
    %6153 = vmatpush2.msra.mxu0 0.0
    %6154 = vmatprep.subr.mxu0 0.0
    %6155 = vmatpush2.msra.mxu0 0.0
    %6156 = vmatprep.subr.mxu0 0.0
    %6157 = vmatpush2.msra.mxu0 0.0
    %6158 = vmatprep.subr.mxu0 0.0
    %6159 = vmatpush2.msra.mxu0 0.0
    %6160 = vmatprep.subr.mxu0 0.0
    %6161 = vmatpush2.msra.mxu0 0.0
    %6162 = vmatprep.subr.mxu0 0.0
    %6163 = vmatpush2.msra.mxu0 0.0
    %6164 = vmatprep.subr.mxu0 0.0
    %6165 = vmatpush2.msra.mxu0 0.0
    %6166 = vmatprep.subr.mxu0 0.0
    %6167 = vmatpush2.msra.mxu0 0.0
    %6168 = vmatprep.subr.mxu0 0.0
    %6169 = vmatpush2.msra.mxu0 0.0
    %6170 = vmatprep.subr.mxu0 0.0
    %6171 = vmatpush2.msra.mxu0 0.0
    %6172 = vmatprep.subr.mxu0 0.0
    %6173 = vmatpush2.msra.mxu0 0.0
    %6174 = vmatprep.subr.mxu0 0.0
    %6175 = vmatpush2.msra.mxu0 0.0
    %6176 = vmatprep.subr.mxu0 0.0
    %6177 = vmatpush2.msra.mxu0 0.0
    %6178 = vmatprep.subr.mxu0 0.0
    %6179 = vmatpush2.msra.mxu0 0.0
    %6180 = vmatprep.subr.mxu0 0.0
    %6181 = vmatpush2.msra.mxu0 0.0
    %6182 = vmatprep.subr.mxu0 0.0
    %6183 = vmatpush2.msra.mxu0 0.0
    %6184 = vmatprep.mubr.f32.mxu0 0.0
    %6185 = vmatmul.mubr.f32.gmra.mxu0 %v6118
    %v6186 = vpop.f32.mrf.mxu0
    %v6187 = vadd.f32 0.0, %v6186
    %v6188 = vpop.f32.mrf.mxu0
    %6189 = vdwg.mxu0
    %6190 = vrot.lane.b32.xlu0 %v3698, 40
    %v6191 = vpop.permute.xlu0 %6190
    %v6194 = vsel %vm410, %v6036, 0
    %6196 = vmatprep.subr.mxu0 0.0
    %6197 = vmatpush1.msra.mxu0 0.0
    %6198 = vmatprep.subr.mxu0 0.0
    %6199 = vmatpush1.msra.mxu0 0.0
    %6200 = vmatprep.subr.mxu0 0.0
    %6201 = vmatpush1.msra.mxu0 0.0
    %6202 = vmatprep.subr.mxu0 0.0
    %6203 = vmatpush1.msra.mxu0 0.0
    %6204 = vmatprep.subr.mxu0 0.0
    %6205 = vmatpush1.msra.mxu0 0.0
    %6206 = vmatprep.subr.mxu0 0.0
    %6207 = vmatpush1.msra.mxu0 0.0
    %6208 = vmatprep.subr.mxu0 0.0
    %6209 = vmatpush1.msra.mxu0 0.0
    %6210 = vmatprep.subr.mxu0 0.0
    %6211 = vmatpush1.msra.mxu0 0.0
    %6212 = vmatprep.subr.mxu0 0.0
    %6213 = vmatpush1.msra.mxu0 0.0
    %6214 = vmatprep.subr.mxu0 0.0
    %6215 = vmatpush1.msra.mxu0 0.0
    %6216 = vmatprep.subr.mxu0 0.0
    %6217 = vmatpush1.msra.mxu0 0.0
    %6218 = vmatprep.subr.mxu0 0.0
    %6219 = vmatpush1.msra.mxu0 0.0
    %6220 = vmatprep.subr.mxu0 0.0
    %6221 = vmatpush1.msra.mxu0 0.0
    %6222 = vmatprep.subr.mxu0 0.0
    %6223 = vmatpush1.msra.mxu0 0.0
    %6224 = vmatprep.subr.mxu0 0.0
    %6225 = vmatpush1.msra.mxu0 0.0
    %6226 = vmatprep.subr.mxu0 0.0
    %6227 = vmatpush1.msra.mxu0 %v6191
    %6228 = vmatprep.subr.mxu0 0.0
    %6229 = vmatpush2.msra.mxu0 0.0
    %6230 = vmatprep.subr.mxu0 0.0
    %6231 = vmatpush2.msra.mxu0 0.0
    %6232 = vmatprep.subr.mxu0 0.0
    %6233 = vmatpush2.msra.mxu0 0.0
    %6234 = vmatprep.subr.mxu0 0.0
    %6235 = vmatpush2.msra.mxu0 0.0
    %6236 = vmatprep.subr.mxu0 0.0
    %6237 = vmatpush2.msra.mxu0 0.0
    %6238 = vmatprep.subr.mxu0 0.0
    %6239 = vmatpush2.msra.mxu0 0.0
    %6240 = vmatprep.subr.mxu0 0.0
    %6241 = vmatpush2.msra.mxu0 0.0
    %6242 = vmatprep.subr.mxu0 0.0
    %6243 = vmatpush2.msra.mxu0 0.0
    %6244 = vmatprep.subr.mxu0 0.0
    %6245 = vmatpush2.msra.mxu0 0.0
    %6246 = vmatprep.subr.mxu0 0.0
    %6247 = vmatpush2.msra.mxu0 0.0
    %6248 = vmatprep.subr.mxu0 0.0
    %6249 = vmatpush2.msra.mxu0 0.0
    %6250 = vmatprep.subr.mxu0 0.0
    %6251 = vmatpush2.msra.mxu0 0.0
    %6252 = vmatprep.subr.mxu0 0.0
    %6253 = vmatpush2.msra.mxu0 0.0
    %6254 = vmatprep.subr.mxu0 0.0
    %6255 = vmatpush2.msra.mxu0 0.0
    %6256 = vmatprep.subr.mxu0 0.0
    %6257 = vmatpush2.msra.mxu0 0.0
    %6258 = vmatprep.subr.mxu0 0.0
    %6259 = vmatpush2.msra.mxu0 0.0
    %6260 = vmatprep.mubr.f32.mxu0 0.0
    %6261 = vmatmul.mubr.f32.gmra.mxu0 %v6194
    %v6262 = vpop.f32.mrf.mxu0
    %v6263 = vadd.f32 0.0, %v6262
    %v6264 = vpop.f32.mrf.mxu0
    %6265 = vdwg.mxu0
    %6266 = vrot.lane.b32.xlu0 %v3703, 40
    %v6267 = vpop.permute.xlu0 %6266
    %v6270 = vsel %vm410, %v6037, 0
    %6272 = vmatprep.subr.mxu0 0.0
    %6273 = vmatpush1.msra.mxu0 0.0
    %6274 = vmatprep.subr.mxu0 0.0
    %6275 = vmatpush1.msra.mxu0 0.0
    %6276 = vmatprep.subr.mxu0 0.0
    %6277 = vmatpush1.msra.mxu0 0.0
    %6278 = vmatprep.subr.mxu0 0.0
    %6279 = vmatpush1.msra.mxu0 0.0
    %6280 = vmatprep.subr.mxu0 0.0
    %6281 = vmatpush1.msra.mxu0 0.0
    %6282 = vmatprep.subr.mxu0 0.0
    %6283 = vmatpush1.msra.mxu0 0.0
    %6284 = vmatprep.subr.mxu0 0.0
    %6285 = vmatpush1.msra.mxu0 0.0
    %6286 = vmatprep.subr.mxu0 0.0
    %6287 = vmatpush1.msra.mxu0 0.0
    %6288 = vmatprep.subr.mxu0 0.0
    %6289 = vmatpush1.msra.mxu0 0.0
    %6290 = vmatprep.subr.mxu0 0.0
    %6291 = vmatpush1.msra.mxu0 0.0
    %6292 = vmatprep.subr.mxu0 0.0
    %6293 = vmatpush1.msra.mxu0 0.0
    %6294 = vmatprep.subr.mxu0 0.0
    %6295 = vmatpush1.msra.mxu0 0.0
    %6296 = vmatprep.subr.mxu0 0.0
    %6297 = vmatpush1.msra.mxu0 0.0
    %6298 = vmatprep.subr.mxu0 0.0
    %6299 = vmatpush1.msra.mxu0 0.0
    %6300 = vmatprep.subr.mxu0 0.0
    %6301 = vmatpush1.msra.mxu0 0.0
    %6302 = vmatprep.subr.mxu0 0.0
    %6303 = vmatpush1.msra.mxu0 %v6267
    %6304 = vmatprep.subr.mxu0 0.0
    %6305 = vmatpush2.msra.mxu0 0.0
    %6306 = vmatprep.subr.mxu0 0.0
    %6307 = vmatpush2.msra.mxu0 0.0
    %6308 = vmatprep.subr.mxu0 0.0
    %6309 = vmatpush2.msra.mxu0 0.0
    %6310 = vmatprep.subr.mxu0 0.0
    %6311 = vmatpush2.msra.mxu0 0.0
    %6312 = vmatprep.subr.mxu0 0.0
    %6313 = vmatpush2.msra.mxu0 0.0
    %6314 = vmatprep.subr.mxu0 0.0
    %6315 = vmatpush2.msra.mxu0 0.0
    %6316 = vmatprep.subr.mxu0 0.0
    %6317 = vmatpush2.msra.mxu0 0.0
    %6318 = vmatprep.subr.mxu0 0.0
    %6319 = vmatpush2.msra.mxu0 0.0
    %6320 = vmatprep.subr.mxu0 0.0
    %6321 = vmatpush2.msra.mxu0 0.0
    %6322 = vmatprep.subr.mxu0 0.0
    %6323 = vmatpush2.msra.mxu0 0.0
    %6324 = vmatprep.subr.mxu0 0.0
    %6325 = vmatpush2.msra.mxu0 0.0
    %6326 = vmatprep.subr.mxu0 0.0
    %6327 = vmatpush2.msra.mxu0 0.0
    %6328 = vmatprep.subr.mxu0 0.0
    %6329 = vmatpush2.msra.mxu0 0.0
    %6330 = vmatprep.subr.mxu0 0.0
    %6331 = vmatpush2.msra.mxu0 0.0
    %6332 = vmatprep.subr.mxu0 0.0
    %6333 = vmatpush2.msra.mxu0 0.0
    %6334 = vmatprep.subr.mxu0 0.0
    %6335 = vmatpush2.msra.mxu0 0.0
    %6336 = vmatprep.mubr.f32.mxu0 0.0
    %6337 = vmatmul.mubr.f32.gmra.mxu0 %v6270
    %v6338 = vpop.f32.mrf.mxu0
    %v6339 = vadd.f32 0.0, %v6338
    %v6340 = vpop.f32.mrf.mxu0
    %6341 = vdwg.mxu0
    %6346 = vrot.lane.b32.xlu0 %v4791, 8
    %v6347 = vpop.permute.xlu0 %6346
    %6348 = vrot.lane.b32.xlu0 %v4867, 8
    %v6349 = vpop.permute.xlu0 %6348
    %6350 = vrot.lane.b32.xlu0 %v4943, 8
    %v6351 = vpop.permute.xlu0 %6350
    %6352 = vrot.lane.b32.xlu0 %v5019, 8
    %v6353 = vpop.permute.xlu0 %6352
    %6362 = vrot.lane.b32.xlu0 %v5451, 16
    %v6363 = vpop.permute.xlu0 %6362
    %6364 = vrot.lane.b32.xlu0 %v5527, 16
    %v6365 = vpop.permute.xlu0 %6364
    %6366 = vrot.lane.b32.xlu0 %v5603, 16
    %v6367 = vpop.permute.xlu0 %6366
    %6368 = vrot.lane.b32.xlu0 %v5679, 16
    %v6369 = vpop.permute.xlu0 %6368
    %6378 = vrot.lane.b32.xlu0 %v6111, 24
    %v6379 = vpop.permute.xlu0 %6378
    %6380 = vrot.lane.b32.xlu0 %v6187, 24
    %v6381 = vpop.permute.xlu0 %6380
    %6382 = vrot.lane.b32.xlu0 %v6263, 24
    %v6383 = vpop.permute.xlu0 %6382
    %6384 = vrot.lane.b32.xlu0 %v6339, 24
    %v6385 = vpop.permute.xlu0 %6384
    %v6390 = vsel %vm410, %v4131, %v6347
    %v6391 = vsel %vm410, %v4207, %v6349
    %v6392 = vsel %vm410, %v4283, %v6351
    %v6393 = vsel %vm410, %v4359, %v6353
    %v6394 = vsel %vm3096, %v6390, %v6363
    %v6395 = vsel %vm3096, %v6391, %v6365
    %v6396 = vsel %vm3096, %v6392, %v6367
    %v6397 = vsel %vm3096, %v6393, %v6369
    %v6398 = vsel %vm3101, %v6394, %v6379
    %v6399 = vsel %vm3101, %v6395, %v6381
    %v6400 = vsel %vm3101, %v6396, %v6383
    %v6401 = vsel %vm3101, %v6397, %v6385
    %s6402 = scalar_lea.vmem %s5, 32
    %v6403 = vld [vmem:[%s6402] sm:$0xff]
    %v6404 = vld [vmem:[%s6402 + $0x8] sm:$0xff]
    %v6405 = vld [vmem:[%s6402 + $0x10] sm:$0xff]
    %v6406 = vld [vmem:[%s6402 + $0x18] sm:$0xff]
    %s6407 = scalar_lea.vmem %s6, 1
    %v6408 = vld [vmem:[%s6407] sm:$0x1]
    %v6410 = vlaneseq
    %v6411 = vshrl.u32 %v6410, 7
    %v6412 = vsub.s32 0, %v6411
    %v6413 = vrot.slane %v6408, %v6412
    %v6416 = vsel %vm309, %v6398, 0
    %v6419 = vsel %vm309, %v6399, 0
    %v6422 = vsel %vm309, %v6400, 0
    %v6425 = vsel %vm309, %v6401, 0
    %6427 = vmatprep.subr.mxu0 0.0
    %6428 = vmatpush1.msra.mxu0 0.0
    %6429 = vmatprep.subr.mxu0 0.0
    %6430 = vmatpush1.msra.mxu0 0.0
    %6431 = vmatprep.subr.mxu0 0.0
    %6432 = vmatpush1.msra.mxu0 0.0
    %6433 = vmatprep.subr.mxu0 0.0
    %6434 = vmatpush1.msra.mxu0 0.0
    %6435 = vmatprep.subr.mxu0 0.0
    %6436 = vmatpush1.msra.mxu0 0.0
    %6437 = vmatprep.subr.mxu0 0.0
    %6438 = vmatpush1.msra.mxu0 0.0
    %6439 = vmatprep.subr.mxu0 0.0
    %6440 = vmatpush1.msra.mxu0 0.0
    %6441 = vmatprep.subr.mxu0 0.0
    %6442 = vmatpush1.msra.mxu0 0.0
    %6443 = vmatprep.subr.mxu0 0.0
    %6444 = vmatpush1.msra.mxu0 0.0
    %6445 = vmatprep.subr.mxu0 0.0
    %6446 = vmatpush1.msra.mxu0 0.0
    %6447 = vmatprep.subr.mxu0 0.0
    %6448 = vmatpush1.msra.mxu0 0.0
    %6449 = vmatprep.subr.mxu0 0.0
    %6450 = vmatpush1.msra.mxu0 0.0
    %6451 = vmatprep.subr.mxu0 0.0
    %6452 = vmatpush1.msra.mxu0 %v6406
    %6453 = vmatprep.subr.mxu0 0.0
    %6454 = vmatpush1.msra.mxu0 %v6405
    %6455 = vmatprep.subr.mxu0 0.0
    %6456 = vmatpush1.msra.mxu0 %v6404
    %6457 = vmatprep.subr.mxu0 0.0
    %6458 = vmatpush1.msra.mxu0 %v6403
    %6459 = vmatprep.subr.mxu0 0.0
    %6460 = vmatpush2.msra.mxu0 0.0
    %6461 = vmatprep.subr.mxu0 0.0
    %6462 = vmatpush2.msra.mxu0 0.0
    %6463 = vmatprep.subr.mxu0 0.0
    %6464 = vmatpush2.msra.mxu0 0.0
    %6465 = vmatprep.subr.mxu0 0.0
    %6466 = vmatpush2.msra.mxu0 0.0
    %6467 = vmatprep.subr.mxu0 0.0
    %6468 = vmatpush2.msra.mxu0 0.0
    %6469 = vmatprep.subr.mxu0 0.0
    %6470 = vmatpush2.msra.mxu0 0.0
    %6471 = vmatprep.subr.mxu0 0.0
    %6472 = vmatpush2.msra.mxu0 0.0
    %6473 = vmatprep.subr.mxu0 0.0
    %6474 = vmatpush2.msra.mxu0 0.0
    %6475 = vmatprep.subr.mxu0 0.0
    %6476 = vmatpush2.msra.mxu0 0.0
    %6477 = vmatprep.subr.mxu0 0.0
    %6478 = vmatpush2.msra.mxu0 0.0
    %6479 = vmatprep.subr.mxu0 0.0
    %6480 = vmatpush2.msra.mxu0 0.0
    %6481 = vmatprep.subr.mxu0 0.0
    %6482 = vmatpush2.msra.mxu0 0.0
    %6483 = vmatprep.subr.mxu0 0.0
    %6484 = vmatpush2.msra.mxu0 0.0
    %6485 = vmatprep.subr.mxu0 0.0
    %6486 = vmatpush2.msra.mxu0 0.0
    %6487 = vmatprep.subr.mxu0 0.0
    %6488 = vmatpush2.msra.mxu0 0.0
    %6489 = vmatprep.subr.mxu0 0.0
    %6490 = vmatpush2.msra.mxu0 0.0
    %6491 = vmatprep.mubr.f32.mxu0 0.0
    %6492 = vmatmul.mubr.f32.gmra.mxu0 %v6416
    %v6493 = vpop.f32.mrf.mxu0
    %v6494 = vadd.f32 %v6413, %v6493
    %v6495 = vpop.f32.mrf.mxu0
    %6496 = vmatprep.mubr.f32.mxu0 0.0
    %6497 = vmatmul.mubr.f32.gmra.mxu0 %v6419
    %v6498 = vpop.f32.mrf.mxu0
    %v6499 = vadd.f32 %v6413, %v6498
    %v6500 = vpop.f32.mrf.mxu0
    %6501 = vmatprep.mubr.f32.mxu0 0.0
    %6502 = vmatmul.mubr.f32.gmra.mxu0 %v6422
    %v6503 = vpop.f32.mrf.mxu0
    %v6504 = vadd.f32 %v6413, %v6503
    %v6505 = vpop.f32.mrf.mxu0
    %6506 = vmatprep.mubr.f32.mxu0 0.0
    %6507 = vmatmul.mubr.f32.gmra.mxu0 %v6425
    %v6508 = vpop.f32.mrf.mxu0
    %v6509 = vadd.f32 %v6413, %v6508
    %v6510 = vpop.f32.mrf.mxu0
    %6511 = vdwg.mxu0
    %v6512 = vadd.f32 %v3592, %v6494
    %v6513 = vadd.f32 %v3593, %v6499
    %v6514 = vadd.f32 %v3594, %v6504
    %v6515 = vadd.f32 %v3595, %v6509
    %s6516 = scalar_lea.vmem [#allocation7], 1
    %v6517 = vld [vmem:[%s6516] sm:$0x1]
    %s6518 = scalar_lea.vmem [#allocation8], 1
    %v6519 = vld [vmem:[%s6518] sm:$0x1]
    %v6520 = vsel %vm309, %v6512, 0.0
    %6521 = vadd.xlane.f32.xlu0 %v6520
    %v6522 = vpop.xlane.xlu0 %6521
    %v6523 = vsel %vm309, %v6513, 0.0
    %6524 = vadd.xlane.f32.xlu0 %v6523
    %v6525 = vpop.xlane.xlu0 %6524
    %v6526 = vsel %vm309, %v6514, 0.0
    %6527 = vadd.xlane.f32.xlu0 %v6526
    %v6528 = vpop.xlane.xlu0 %6527
    %v6529 = vsel %vm309, %v6515, 0.0
    %6530 = vadd.xlane.f32.xlu0 %v6529
    %v6531 = vpop.xlane.xlu0 %6530
    %v6532 = vmul.f32 %v6522, %v3232
    %v6533 = vmul.f32 %v6525, %v3232
    %v6534 = vmul.f32 %v6528, %v3232
    %v6535 = vmul.f32 %v6531, %v3232
    %v6536 = vsub.f32 %v6512, %v6532
    %v6537 = vsub.f32 %v6513, %v6533
    %v6538 = vsub.f32 %v6514, %v6534
    %v6539 = vsub.f32 %v6515, %v6535
    %v6540 = vmul.f32 %v6536, %v6536
    %v6541 = vmul.f32 %v6537, %v6537
    %v6542 = vmul.f32 %v6538, %v6538
    %v6543 = vmul.f32 %v6539, %v6539
    %v6544 = vsel %vm309, %v6540, 0.0
    %6545 = vadd.xlane.f32.xlu0 %v6544
    %v6546 = vpop.xlane.xlu0 %6545
    %v6547 = vsel %vm309, %v6541, 0.0
    %6548 = vadd.xlane.f32.xlu0 %v6547
    %v6549 = vpop.xlane.xlu0 %6548
    %v6550 = vsel %vm309, %v6542, 0.0
    %6551 = vadd.xlane.f32.xlu0 %v6550
    %v6552 = vpop.xlane.xlu0 %6551
    %v6553 = vsel %vm309, %v6543, 0.0
    %6554 = vadd.xlane.f32.xlu0 %v6553
    %v6555 = vpop.xlane.xlu0 %6554
    %v6556 = vmul.f32 %v6546, %v3232
    %v6557 = vmul.f32 %v6549, %v3232
    %v6558 = vmul.f32 %v6552, %v3232
    %v6559 = vmul.f32 %v6555, %v3232
    %v6560 = vadd.f32 %v6556, 1e-05
    %v6561 = vadd.f32 %v6557, 1e-05
    %v6562 = vadd.f32 %v6558, 1e-05
    %v6563 = vadd.f32 %v6559, 1e-05
    %v6564 = vrsqrt.pop %v6560
    %v6565 = vrsqrt.pop %v6561
    %v6566 = vrsqrt.pop %v6562
    %v6567 = vrsqrt.pop %v6563
    %v6568 = vmul.f32 %v6536, %v6564
    %v6569 = vmul.f32 %v6537, %v6565
    %v6570 = vmul.f32 %v6538, %v6566
    %v6571 = vmul.f32 %v6539, %v6567
    %v6573 = vlaneseq
    %v6574 = vshrl.u32 %v6573, 7
    %v6575 = vsub.s32 0, %v6574
    %v6576 = vrot.slane %v6517, %v6575
    %v6578 = vmul.f32 %v6568, %v6576
    %v6579 = vmul.f32 %v6569, %v6576
    %v6580 = vmul.f32 %v6570, %v6576
    %v6581 = vmul.f32 %v6571, %v6576
    %v6583 = vlaneseq
    %v6584 = vshrl.u32 %v6583, 7
    %v6585 = vsub.s32 0, %v6584
    %v6586 = vrot.slane %v6519, %v6585
    %v6588 = vadd.f32 %v6578, %v6586
    %v6589 = vadd.f32 %v6579, %v6586
    %v6590 = vadd.f32 %v6580, %v6586
    %v6591 = vadd.f32 %v6581, %v6586
    %s6592 = scalar_lea.vmem %s9, 32
    %v6593 = vld [vmem:[%s6592] sm:$0xff]
    %v6594 = vld [vmem:[%s6592 + $0x8] sm:$0xff]
    %v6595 = vld [vmem:[%s6592 + $0x10] sm:$0xff]
    %v6596 = vld [vmem:[%s6592 + $0x18] sm:$0xff]
    %s6597 = scalar_lea.vmem [#allocation10], 1
    %v6598 = vld [vmem:[%s6597] sm:$0x1]
    %v6600 = vlaneseq
    %v6601 = vshrl.u32 %v6600, 7
    %v6602 = vsub.s32 0, %v6601
    %v6603 = vrot.slane %v6598, %v6602
    %v6606 = vsel %vm309, %v6588, 0
    %v6609 = vsel %vm309, %v6589, 0
    %v6612 = vsel %vm309, %v6590, 0
    %v6615 = vsel %vm309, %v6591, 0
    %6617 = vmatprep.subr.mxu0 0.0
    %6618 = vmatpush1.msra.mxu0 0.0
    %6619 = vmatprep.subr.mxu0 0.0
    %6620 = vmatpush1.msra.mxu0 0.0
    %6621 = vmatprep.subr.mxu0 0.0
    %6622 = vmatpush1.msra.mxu0 0.0
    %6623 = vmatprep.subr.mxu0 0.0
    %6624 = vmatpush1.msra.mxu0 0.0
    %6625 = vmatprep.subr.mxu0 0.0
    %6626 = vmatpush1.msra.mxu0 0.0
    %6627 = vmatprep.subr.mxu0 0.0
    %6628 = vmatpush1.msra.mxu0 0.0
    %6629 = vmatprep.subr.mxu0 0.0
    %6630 = vmatpush1.msra.mxu0 0.0
    %6631 = vmatprep.subr.mxu0 0.0
    %6632 = vmatpush1.msra.mxu0 0.0
    %6633 = vmatprep.subr.mxu0 0.0
    %6634 = vmatpush1.msra.mxu0 0.0
    %6635 = vmatprep.subr.mxu0 0.0
    %6636 = vmatpush1.msra.mxu0 0.0
    %6637 = vmatprep.subr.mxu0 0.0
    %6638 = vmatpush1.msra.mxu0 0.0
    %6639 = vmatprep.subr.mxu0 0.0
    %6640 = vmatpush1.msra.mxu0 0.0
    %6641 = vmatprep.subr.mxu0 0.0
    %6642 = vmatpush1.msra.mxu0 %v6596
    %6643 = vmatprep.subr.mxu0 0.0
    %6644 = vmatpush1.msra.mxu0 %v6595
    %6645 = vmatprep.subr.mxu0 0.0
    %6646 = vmatpush1.msra.mxu0 %v6594
    %6647 = vmatprep.subr.mxu0 0.0
    %6648 = vmatpush1.msra.mxu0 %v6593
    %6649 = vmatprep.subr.mxu0 0.0
    %6650 = vmatpush2.msra.mxu0 0.0
    %6651 = vmatprep.subr.mxu0 0.0
    %6652 = vmatpush2.msra.mxu0 0.0
    %6653 = vmatprep.subr.mxu0 0.0
    %6654 = vmatpush2.msra.mxu0 0.0
    %6655 = vmatprep.subr.mxu0 0.0
    %6656 = vmatpush2.msra.mxu0 0.0
    %6657 = vmatprep.subr.mxu0 0.0
    %6658 = vmatpush2.msra.mxu0 0.0
    %6659 = vmatprep.subr.mxu0 0.0
    %6660 = vmatpush2.msra.mxu0 0.0
    %6661 = vmatprep.subr.mxu0 0.0
    %6662 = vmatpush2.msra.mxu0 0.0
    %6663 = vmatprep.subr.mxu0 0.0
    %6664 = vmatpush2.msra.mxu0 0.0
    %6665 = vmatprep.subr.mxu0 0.0
    %6666 = vmatpush2.msra.mxu0 0.0
    %6667 = vmatprep.subr.mxu0 0.0
    %6668 = vmatpush2.msra.mxu0 0.0
    %6669 = vmatprep.subr.mxu0 0.0
    %6670 = vmatpush2.msra.mxu0 0.0
    %6671 = vmatprep.subr.mxu0 0.0
    %6672 = vmatpush2.msra.mxu0 0.0
    %6673 = vmatprep.subr.mxu0 0.0
    %6674 = vmatpush2.msra.mxu0 0.0
    %6675 = vmatprep.subr.mxu0 0.0
    %6676 = vmatpush2.msra.mxu0 0.0
    %6677 = vmatprep.subr.mxu0 0.0
    %6678 = vmatpush2.msra.mxu0 0.0
    %6679 = vmatprep.subr.mxu0 0.0
    %6680 = vmatpush2.msra.mxu0 0.0
    %6681 = vmatprep.mubr.f32.mxu0 0.0
    %6682 = vmatmul.mubr.f32.gmra.mxu0 %v6606
    %v6683 = vpop.f32.mrf.mxu0
    %v6684 = vadd.f32 %v6603, %v6683
    %v6685 = vpop.f32.mrf.mxu0
    %6686 = vmatprep.mubr.f32.mxu0 0.0
    %6687 = vmatmul.mubr.f32.gmra.mxu0 %v6609
    %v6688 = vpop.f32.mrf.mxu0
    %v6689 = vadd.f32 %v6603, %v6688
    %v6690 = vpop.f32.mrf.mxu0
    %6691 = vmatprep.mubr.f32.mxu0 0.0
    %6692 = vmatmul.mubr.f32.gmra.mxu0 %v6612
    %v6693 = vpop.f32.mrf.mxu0
    %v6694 = vadd.f32 %v6603, %v6693
    %v6695 = vpop.f32.mrf.mxu0
    %6696 = vmatprep.mubr.f32.mxu0 0.0
    %6697 = vmatmul.mubr.f32.gmra.mxu0 %v6615
    %v6698 = vpop.f32.mrf.mxu0
    %v6699 = vadd.f32 %v6603, %v6698
    %v6700 = vpop.f32.mrf.mxu0
    %6701 = vdwg.mxu0
    %v6702 = vmax.f32 %v6684, 0.0
    %v6703 = vmax.f32 %v6689, 0.0
    %v6704 = vmax.f32 %v6694, 0.0
    %v6705 = vmax.f32 %v6699, 0.0
    %s6706 = scalar_lea.vmem %s11, 64
    %v6707 = vld [vmem:[%s6706] sm:$0xff]
    %v6708 = vld [vmem:[%s6706 + $0x8] sm:$0xff]
    %v6709 = vld [vmem:[%s6706 + $0x10] sm:$0xff]
    %v6710 = vld [vmem:[%s6706 + $0x18] sm:$0xff]
    %v6711 = vld [vmem:[%s6706 + $0x20] sm:$0xff]
    %v6712 = vld [vmem:[%s6706 + $0x28] sm:$0xff]
    %v6713 = vld [vmem:[%s6706 + $0x30] sm:$0xff]
    %v6714 = vld [vmem:[%s6706 + $0x38] sm:$0xff]
    %s6715 = scalar_lea.vmem [#allocation11], 1
    %v6716 = vld [vmem:[%s6715] sm:$0x1]
    %v6718 = vlaneseq
    %v6719 = vshrl.u32 %v6718, 7
    %v6720 = vsub.s32 0, %v6719
    %v6721 = vrot.slane %v6716, %v6720
    %v6724 = vsel %vm3420, %v6702, 0
    %v6727 = vsel %vm3420, %v6703, 0
    %v6730 = vsel %vm3420, %v6704, 0
    %v6733 = vsel %vm3420, %v6705, 0
    %6735 = vmatprep.subr.mxu0 0.0
    %6736 = vmatpush1.msra.mxu0 0.0
    %6737 = vmatprep.subr.mxu0 0.0
    %6738 = vmatpush1.msra.mxu0 0.0
    %6739 = vmatprep.subr.mxu0 0.0
    %6740 = vmatpush1.msra.mxu0 0.0
    %6741 = vmatprep.subr.mxu0 0.0
    %6742 = vmatpush1.msra.mxu0 0.0
    %6743 = vmatprep.subr.mxu0 0.0
    %6744 = vmatpush1.msra.mxu0 0.0
    %6745 = vmatprep.subr.mxu0 0.0
    %6746 = vmatpush1.msra.mxu0 0.0
    %6747 = vmatprep.subr.mxu0 0.0
    %6748 = vmatpush1.msra.mxu0 0.0
    %6749 = vmatprep.subr.mxu0 0.0
    %6750 = vmatpush1.msra.mxu0 0.0
    %6751 = vmatprep.subr.mxu0 0.0
    %6752 = vmatpush1.msra.mxu0 %v6714
    %6753 = vmatprep.subr.mxu0 0.0
    %6754 = vmatpush1.msra.mxu0 %v6713
    %6755 = vmatprep.subr.mxu0 0.0
    %6756 = vmatpush1.msra.mxu0 %v6712
    %6757 = vmatprep.subr.mxu0 0.0
    %6758 = vmatpush1.msra.mxu0 %v6711
    %6759 = vmatprep.subr.mxu0 0.0
    %6760 = vmatpush1.msra.mxu0 %v6710
    %6761 = vmatprep.subr.mxu0 0.0
    %6762 = vmatpush1.msra.mxu0 %v6709
    %6763 = vmatprep.subr.mxu0 0.0
    %6764 = vmatpush1.msra.mxu0 %v6708
    %6765 = vmatprep.subr.mxu0 0.0
    %6766 = vmatpush1.msra.mxu0 %v6707
    %6767 = vmatprep.subr.mxu0 0.0
    %6768 = vmatpush2.msra.mxu0 0.0
    %6769 = vmatprep.subr.mxu0 0.0
    %6770 = vmatpush2.msra.mxu0 0.0
    %6771 = vmatprep.subr.mxu0 0.0
    %6772 = vmatpush2.msra.mxu0 0.0
    %6773 = vmatprep.subr.mxu0 0.0
    %6774 = vmatpush2.msra.mxu0 0.0
    %6775 = vmatprep.subr.mxu0 0.0
    %6776 = vmatpush2.msra.mxu0 0.0
    %6777 = vmatprep.subr.mxu0 0.0
    %6778 = vmatpush2.msra.mxu0 0.0
    %6779 = vmatprep.subr.mxu0 0.0
    %6780 = vmatpush2.msra.mxu0 0.0
    %6781 = vmatprep.subr.mxu0 0.0
    %6782 = vmatpush2.msra.mxu0 0.0
    %6783 = vmatprep.subr.mxu0 0.0
    %6784 = vmatpush2.msra.mxu0 0.0
    %6785 = vmatprep.subr.mxu0 0.0
    %6786 = vmatpush2.msra.mxu0 0.0
    %6787 = vmatprep.subr.mxu0 0.0
    %6788 = vmatpush2.msra.mxu0 0.0
    %6789 = vmatprep.subr.mxu0 0.0
    %6790 = vmatpush2.msra.mxu0 0.0
    %6791 = vmatprep.subr.mxu0 0.0
    %6792 = vmatpush2.msra.mxu0 0.0
    %6793 = vmatprep.subr.mxu0 0.0
    %6794 = vmatpush2.msra.mxu0 0.0
    %6795 = vmatprep.subr.mxu0 0.0
    %6796 = vmatpush2.msra.mxu0 0.0
    %6797 = vmatprep.subr.mxu0 0.0
    %6798 = vmatpush2.msra.mxu0 0.0
    %6799 = vmatprep.mubr.f32.mxu0 0.0
    %6800 = vmatmul.mubr.f32.gmra.mxu0 %v6724
    %v6801 = vpop.f32.mrf.mxu0
    %v6802 = vadd.f32 %v6721, %v6801
    %v6803 = vpop.f32.mrf.mxu0
    %6804 = vmatprep.mubr.f32.mxu0 0.0
    %6805 = vmatmul.mubr.f32.gmra.mxu0 %v6727
    %v6806 = vpop.f32.mrf.mxu0
    %v6807 = vadd.f32 %v6721, %v6806
    %v6808 = vpop.f32.mrf.mxu0
    %6809 = vmatprep.mubr.f32.mxu0 0.0
    %6810 = vmatmul.mubr.f32.gmra.mxu0 %v6730
    %v6811 = vpop.f32.mrf.mxu0
    %v6812 = vadd.f32 %v6721, %v6811
    %v6813 = vpop.f32.mrf.mxu0
    %6814 = vmatprep.mubr.f32.mxu0 0.0
    %6815 = vmatmul.mubr.f32.gmra.mxu0 %v6733
    %v6816 = vpop.f32.mrf.mxu0
    %v6817 = vadd.f32 %v6721, %v6816
    %v6818 = vpop.f32.mrf.mxu0
    %6819 = vdwg.mxu0
    %v6820 = vadd.f32 %v6588, %v6802
    %v6821 = vadd.f32 %v6589, %v6807
    %v6822 = vadd.f32 %v6590, %v6812
    %v6823 = vadd.f32 %v6591, %v6817
    %s6824 = scalar_lea.vmem [#allocation13], 1
    %v6825 = vld [vmem:[%s6824] sm:$0x1]
    %s6826 = scalar_lea.vmem %s14, 1
    %v6827 = vld [vmem:[%s6826] sm:$0x1]
    %v6828 = vsel %vm309, %v6820, 0.0
    %6829 = vadd.xlane.f32.xlu0 %v6828
    %v6830 = vpop.xlane.xlu0 %6829
    %v6831 = vsel %vm309, %v6821, 0.0
    %6832 = vadd.xlane.f32.xlu0 %v6831
    %v6833 = vpop.xlane.xlu0 %6832
    %v6834 = vsel %vm309, %v6822, 0.0
    %6835 = vadd.xlane.f32.xlu0 %v6834
    %v6836 = vpop.xlane.xlu0 %6835
    %v6837 = vsel %vm309, %v6823, 0.0
    %6838 = vadd.xlane.f32.xlu0 %v6837
    %v6839 = vpop.xlane.xlu0 %6838
    %v6840 = vmul.f32 %v6830, %v3232
    %v6841 = vmul.f32 %v6833, %v3232
    %v6842 = vmul.f32 %v6836, %v3232
    %v6843 = vmul.f32 %v6839, %v3232
    %v6844 = vsub.f32 %v6820, %v6840
    %v6845 = vsub.f32 %v6821, %v6841
    %v6846 = vsub.f32 %v6822, %v6842
    %v6847 = vsub.f32 %v6823, %v6843
    %v6848 = vmul.f32 %v6844, %v6844
    %v6849 = vmul.f32 %v6845, %v6845
    %v6850 = vmul.f32 %v6846, %v6846
    %v6851 = vmul.f32 %v6847, %v6847
    %v6852 = vsel %vm309, %v6848, 0.0
    %6853 = vadd.xlane.f32.xlu0 %v6852
    %v6854 = vpop.xlane.xlu0 %6853
    %v6855 = vsel %vm309, %v6849, 0.0
    %6856 = vadd.xlane.f32.xlu0 %v6855
    %v6857 = vpop.xlane.xlu0 %6856
    %v6858 = vsel %vm309, %v6850, 0.0
    %6859 = vadd.xlane.f32.xlu0 %v6858
    %v6860 = vpop.xlane.xlu0 %6859
    %v6861 = vsel %vm309, %v6851, 0.0
    %6862 = vadd.xlane.f32.xlu0 %v6861
    %v6863 = vpop.xlane.xlu0 %6862
    %v6864 = vmul.f32 %v6854, %v3232
    %v6865 = vmul.f32 %v6857, %v3232
    %v6866 = vmul.f32 %v6860, %v3232
    %v6867 = vmul.f32 %v6863, %v3232
    %v6868 = vadd.f32 %v6864, 1e-05
    %v6869 = vadd.f32 %v6865, 1e-05
    %v6870 = vadd.f32 %v6866, 1e-05
    %v6871 = vadd.f32 %v6867, 1e-05
    %v6872 = vrsqrt.pop %v6868
    %v6873 = vrsqrt.pop %v6869
    %v6874 = vrsqrt.pop %v6870
    %v6875 = vrsqrt.pop %v6871
    %v6876 = vmul.f32 %v6844, %v6872
    %v6877 = vmul.f32 %v6845, %v6873
    %v6878 = vmul.f32 %v6846, %v6874
    %v6879 = vmul.f32 %v6847, %v6875
    %v6881 = vlaneseq
    %v6882 = vshrl.u32 %v6881, 7
    %v6883 = vsub.s32 0, %v6882
    %v6884 = vrot.slane %v6825, %v6883
    %v6886 = vmul.f32 %v6876, %v6884
    %v6887 = vmul.f32 %v6877, %v6884
    %v6888 = vmul.f32 %v6878, %v6884
    %v6889 = vmul.f32 %v6879, %v6884
    %v6891 = vlaneseq
    %v6892 = vshrl.u32 %v6891, 7
    %v6893 = vsub.s32 0, %v6892
    %v6894 = vrot.slane %v6827, %v6893
    %v6896 = vadd.f32 %v6886, %v6894
    %v6897 = vadd.f32 %v6887, %v6894
    %v6898 = vadd.f32 %v6888, %v6894
    %v6899 = vadd.f32 %v6889, %v6894
    %v6900 = vld [vmem:[#allocation14] sm:$0xff]
    %v6901 = vld [vmem:[#allocation14 + $0x8] sm:$0xff]
    %v6902 = vld [vmem:[#allocation14 + $0x10] sm:$0xff]
    %v6903 = vld [vmem:[#allocation14 + $0x18] sm:$0xff]
    %v6904 = vld [vmem:[%s16] sm:$0x1]
    %v6906 = vlaneseq
    %v6907 = vshrl.u32 %v6906, 7
    %v6908 = vsub.s32 0, %v6907
    %v6909 = vrot.slane %v6904, %v6908
    %v6912 = vsel %vm309, %v6896, 0
    %v6915 = vsel %vm309, %v6897, 0
    %v6918 = vsel %vm309, %v6898, 0
    %v6921 = vsel %vm309, %v6899, 0
    %6923 = vmatprep.subr.mxu0 0.0
    %6924 = vmatpush1.msra.mxu0 0.0
    %6925 = vmatprep.subr.mxu0 0.0
    %6926 = vmatpush1.msra.mxu0 0.0
    %6927 = vmatprep.subr.mxu0 0.0
    %6928 = vmatpush1.msra.mxu0 0.0
    %6929 = vmatprep.subr.mxu0 0.0
    %6930 = vmatpush1.msra.mxu0 0.0
    %6931 = vmatprep.subr.mxu0 0.0
    %6932 = vmatpush1.msra.mxu0 0.0
    %6933 = vmatprep.subr.mxu0 0.0
    %6934 = vmatpush1.msra.mxu0 0.0
    %6935 = vmatprep.subr.mxu0 0.0
    %6936 = vmatpush1.msra.mxu0 0.0
    %6937 = vmatprep.subr.mxu0 0.0
    %6938 = vmatpush1.msra.mxu0 0.0
    %6939 = vmatprep.subr.mxu0 0.0
    %6940 = vmatpush1.msra.mxu0 0.0
    %6941 = vmatprep.subr.mxu0 0.0
    %6942 = vmatpush1.msra.mxu0 0.0
    %6943 = vmatprep.subr.mxu0 0.0
    %6944 = vmatpush1.msra.mxu0 0.0
    %6945 = vmatprep.subr.mxu0 0.0
    %6946 = vmatpush1.msra.mxu0 0.0
    %6947 = vmatprep.subr.mxu0 0.0
    %6948 = vmatpush1.msra.mxu0 %v6903
    %6949 = vmatprep.subr.mxu0 0.0
    %6950 = vmatpush1.msra.mxu0 %v6902
    %6951 = vmatprep.subr.mxu0 0.0
    %6952 = vmatpush1.msra.mxu0 %v6901
    %6953 = vmatprep.subr.mxu0 0.0
    %6954 = vmatpush1.msra.mxu0 %v6900
    %6955 = vmatprep.subr.mxu0 0.0
    %6956 = vmatpush2.msra.mxu0 0.0
    %6957 = vmatprep.subr.mxu0 0.0
    %6958 = vmatpush2.msra.mxu0 0.0
    %6959 = vmatprep.subr.mxu0 0.0
    %6960 = vmatpush2.msra.mxu0 0.0
    %6961 = vmatprep.subr.mxu0 0.0
    %6962 = vmatpush2.msra.mxu0 0.0
    %6963 = vmatprep.subr.mxu0 0.0
    %6964 = vmatpush2.msra.mxu0 0.0
    %6965 = vmatprep.subr.mxu0 0.0
    %6966 = vmatpush2.msra.mxu0 0.0
    %6967 = vmatprep.subr.mxu0 0.0
    %6968 = vmatpush2.msra.mxu0 0.0
    %6969 = vmatprep.subr.mxu0 0.0
    %6970 = vmatpush2.msra.mxu0 0.0
    %6971 = vmatprep.subr.mxu0 0.0
    %6972 = vmatpush2.msra.mxu0 0.0
    %6973 = vmatprep.subr.mxu0 0.0
    %6974 = vmatpush2.msra.mxu0 0.0
    %6975 = vmatprep.subr.mxu0 0.0
    %6976 = vmatpush2.msra.mxu0 0.0
    %6977 = vmatprep.subr.mxu0 0.0
    %6978 = vmatpush2.msra.mxu0 0.0
    %6979 = vmatprep.subr.mxu0 0.0
    %6980 = vmatpush2.msra.mxu0 0.0
    %6981 = vmatprep.subr.mxu0 0.0
    %6982 = vmatpush2.msra.mxu0 0.0
    %6983 = vmatprep.subr.mxu0 0.0
    %6984 = vmatpush2.msra.mxu0 0.0
    %6985 = vmatprep.subr.mxu0 0.0
    %6986 = vmatpush2.msra.mxu0 0.0
    %6987 = vmatprep.mubr.f32.mxu0 0.0
    %6988 = vmatmul.mubr.f32.gmra.mxu0 %v6912
    %v6989 = vpop.f32.mrf.mxu0
    %v6990 = vadd.f32 %v6909, %v6989
    %v6991 = vpop.f32.mrf.mxu0
    %6992 = vmatprep.mubr.f32.mxu0 0.0
    %6993 = vmatmul.mubr.f32.gmra.mxu0 %v6915
    %v6994 = vpop.f32.mrf.mxu0
    %v6995 = vadd.f32 %v6909, %v6994
    %v6996 = vpop.f32.mrf.mxu0
    %6997 = vmatprep.mubr.f32.mxu0 0.0
    %6998 = vmatmul.mubr.f32.gmra.mxu0 %v6918
    %v6999 = vpop.f32.mrf.mxu0
    %v7000 = vadd.f32 %v6909, %v6999
    %v7001 = vpop.f32.mrf.mxu0
    %7002 = vmatprep.mubr.f32.mxu0 0.0
    %7003 = vmatmul.mubr.f32.gmra.mxu0 %v6921
    %v7004 = vpop.f32.mrf.mxu0
    %v7005 = vadd.f32 %v6909, %v7004
    %v7006 = vpop.f32.mrf.mxu0
    %7007 = vdwg.mxu0
    %v7008 = vmax.f32 %v6990, 0.0
    %v7009 = vmax.f32 %v6995, 0.0
    %v7010 = vmax.f32 %v7000, 0.0
    %v7011 = vmax.f32 %v7005, 0.0
    %v7012 = vld [vmem:[#allocation16] sm:$0xff]
    %v7013 = vld [vmem:[#allocation16 + $0x8] sm:$0xff]
    %v7014 = vld [vmem:[#allocation16 + $0x10] sm:$0xff]
    %v7015 = vld [vmem:[#allocation16 + $0x18] sm:$0xff]
    %v7016 = vld [vmem:[#allocation16 + $0x20] sm:$0xff]
    %v7017 = vld [vmem:[#allocation16 + $0x28] sm:$0xff]
    %v7018 = vld [vmem:[#allocation16 + $0x30] sm:$0xff]
    %v7019 = vld [vmem:[#allocation16 + $0x38] sm:$0xff]
    %v7020 = vld [vmem:[%s18] sm:$0x1]
    %v7022 = vlaneseq
    %v7023 = vshrl.u32 %v7022, 7
    %v7024 = vsub.s32 0, %v7023
    %v7025 = vrot.slane %v7020, %v7024
    %v7028 = vsel %vm3420, %v7008, 0
    %v7031 = vsel %vm3420, %v7009, 0
    %v7034 = vsel %vm3420, %v7010, 0
    %v7037 = vsel %vm3420, %v7011, 0
    %7039 = vmatprep.subr.mxu0 0.0
    %7040 = vmatpush1.msra.mxu0 0.0
    %7041 = vmatprep.subr.mxu0 0.0
    %7042 = vmatpush1.msra.mxu0 0.0
    %7043 = vmatprep.subr.mxu0 0.0
    %7044 = vmatpush1.msra.mxu0 0.0
    %7045 = vmatprep.subr.mxu0 0.0
    %7046 = vmatpush1.msra.mxu0 0.0
    %7047 = vmatprep.subr.mxu0 0.0
    %7048 = vmatpush1.msra.mxu0 0.0
    %7049 = vmatprep.subr.mxu0 0.0
    %7050 = vmatpush1.msra.mxu0 0.0
    %7051 = vmatprep.subr.mxu0 0.0
    %7052 = vmatpush1.msra.mxu0 0.0
    %7053 = vmatprep.subr.mxu0 0.0
    %7054 = vmatpush1.msra.mxu0 0.0
    %7055 = vmatprep.subr.mxu0 0.0
    %7056 = vmatpush1.msra.mxu0 %v7019
    %7057 = vmatprep.subr.mxu0 0.0
    %7058 = vmatpush1.msra.mxu0 %v7018
    %7059 = vmatprep.subr.mxu0 0.0
    %7060 = vmatpush1.msra.mxu0 %v7017
    %7061 = vmatprep.subr.mxu0 0.0
    %7062 = vmatpush1.msra.mxu0 %v7016
    %7063 = vmatprep.subr.mxu0 0.0
    %7064 = vmatpush1.msra.mxu0 %v7015
    %7065 = vmatprep.subr.mxu0 0.0
    %7066 = vmatpush1.msra.mxu0 %v7014
    %7067 = vmatprep.subr.mxu0 0.0
    %7068 = vmatpush1.msra.mxu0 %v7013
    %7069 = vmatprep.subr.mxu0 0.0
    %7070 = vmatpush1.msra.mxu0 %v7012
    %7071 = vmatprep.subr.mxu0 0.0
    %7072 = vmatpush2.msra.mxu0 0.0
    %7073 = vmatprep.subr.mxu0 0.0
    %7074 = vmatpush2.msra.mxu0 0.0
    %7075 = vmatprep.subr.mxu0 0.0
    %7076 = vmatpush2.msra.mxu0 0.0
    %7077 = vmatprep.subr.mxu0 0.0
    %7078 = vmatpush2.msra.mxu0 0.0
    %7079 = vmatprep.subr.mxu0 0.0
    %7080 = vmatpush2.msra.mxu0 0.0
    %7081 = vmatprep.subr.mxu0 0.0
    %7082 = vmatpush2.msra.mxu0 0.0
    %7083 = vmatprep.subr.mxu0 0.0
    %7084 = vmatpush2.msra.mxu0 0.0
    %7085 = vmatprep.subr.mxu0 0.0
    %7086 = vmatpush2.msra.mxu0 0.0
    %7087 = vmatprep.subr.mxu0 0.0
    %7088 = vmatpush2.msra.mxu0 0.0
    %7089 = vmatprep.subr.mxu0 0.0
    %7090 = vmatpush2.msra.mxu0 0.0
    %7091 = vmatprep.subr.mxu0 0.0
    %7092 = vmatpush2.msra.mxu0 0.0
    %7093 = vmatprep.subr.mxu0 0.0
    %7094 = vmatpush2.msra.mxu0 0.0
    %7095 = vmatprep.subr.mxu0 0.0
    %7096 = vmatpush2.msra.mxu0 0.0
    %7097 = vmatprep.subr.mxu0 0.0
    %7098 = vmatpush2.msra.mxu0 0.0
    %7099 = vmatprep.subr.mxu0 0.0
    %7100 = vmatpush2.msra.mxu0 0.0
    %7101 = vmatprep.subr.mxu0 0.0
    %7102 = vmatpush2.msra.mxu0 0.0
    %7103 = vmatprep.mubr.f32.mxu0 0.0
    %7104 = vmatmul.mubr.f32.gmra.mxu0 %v7028
    %v7105 = vpop.f32.mrf.mxu0
    %v7106 = vadd.f32 %v7025, %v7105
    %v7107 = vpop.f32.mrf.mxu0
    %7108 = vmatprep.mubr.f32.mxu0 0.0
    %7109 = vmatmul.mubr.f32.gmra.mxu0 %v7031
    %v7110 = vpop.f32.mrf.mxu0
    %v7111 = vadd.f32 %v7025, %v7110
    %v7112 = vpop.f32.mrf.mxu0
    %7113 = vmatprep.mubr.f32.mxu0 0.0
    %7114 = vmatmul.mubr.f32.gmra.mxu0 %v7034
    %v7115 = vpop.f32.mrf.mxu0
    %v7116 = vadd.f32 %v7025, %v7115
    %v7117 = vpop.f32.mrf.mxu0
    %7118 = vmatprep.mubr.f32.mxu0 0.0
    %7119 = vmatmul.mubr.f32.gmra.mxu0 %v7037
    %v7120 = vpop.f32.mrf.mxu0
    %v7121 = vadd.f32 %v7025, %v7120
    %v7122 = vpop.f32.mrf.mxu0
    %7123 = vdwg.mxu0
    %7124 = vst [vmem:[#allocation17] sm:$0xff] %v7106
    %7125 = vst [vmem:[#allocation17 + $0x8] sm:$0xff] %v7111
    %7126 = vst [vmem:[#allocation17 + $0x10] sm:$0xff] %v7116
    %7127 = vst [vmem:[#allocation17 + $0x18] sm:$0xff] %v7121
    // Predicated region
    $region114: #{tpu_custom_call.1} parent=1 // pred_check
      _
    $region115: #{tpu_custom_call.1} parent=1 // pred_check_branch
      %7129 = sbr.rel (0) target = $region117
    $region116: #{tpu_custom_call.1} parent=1 // pred_region
      %s7131 = ssub.s32 512, 512
      %7132 = vsyncadd [#allocation4], %s7131
      %s7133 = sshll.u32 [#allocation17], 4
      %s7134 = int_to_ptr.vmem [resolvable:$true] %s7133
      %7139 = dma.vmem_to_hbm [thread:$0]  %s7134, 512, %s19, [#allocation4], 128, 128, 8
    $region117: #{tpu_custom_call.1} parent=1 // pred_fallthru
      _
    // Predicated region
    $region118: #{tpu_custom_call.1} parent=1 // pred_check
      _
    $region119: #{tpu_custom_call.1} parent=1 // pred_check_branch
      %7141 = sbr.rel (0) target = $region121
    $region120: #{tpu_custom_call.1} parent=1 // pred_region
      %7142 = dma.done [#allocation4], 512
    $region121: #{tpu_custom_call.1} parent=1 // pred_fallthru
      _
    %7143 = vsyncpa [#allocation3], 1
    %7144 = vsyncpa [#allocation6], 1
    %7145 = vsyncpa [#allocation9], 1
    %7146 = vsyncpa [#allocation12], 1
    %7147 = vsyncpa [#allocation15], 1
    %7148 = vsyncpa [#allocation4], 1

</llo_original>
